<compile_context>
chip_gen: v7x
topology: tpu7x:2x2x1
jax: 0.10.0
libtpu: 0.0.40
codegen_flags: <defaults>
</compile_context>

<pallas_src>
import functools

import jax
import jax.numpy as jnp
from jax import lax
from jax.experimental import pallas as pl
from jax.experimental.pallas import tpu as pltpu


def _round_up(a, m):
    return (a + m - 1) // m * m


# ---------------------------------------------------------------------------
# The single fused kernel: EIRNN recurrence + classifier head
# ---------------------------------------------------------------------------
def _fused_kernel(
    x_ref,       # (C8, STOT)          input image, padded layout, f32
    mask_ref,    # (C8, SPAD)          1.0 at real pixels, 0.0 elsewhere, f32
    w_in_ref,    # (C8, 9*C8)          bf16
    w_exc_ref,   # (C8, 9*C8)          bf16
    w_inh_ref,   # (C8, 9*C8)          bf16
    w_ei_ref,    # (C8, 9*C8)          bf16
    b_in_ref,    # (C8, 1)             f32
    b_ei_ref,    # (C8, 1)             f32
    w1_ref,      # (C8*SPB, FC)        fc1, columns pre-permuted to state layout
    b1_ref,      # (1, FC)
    w2_ref,      # (FC, NCLS)
    b2_ref,      # (1, NCLS)
    out_ref,     # (N, NCLS)           logits
    hpyr_ref,    # scratch (C8, STOT)  f32
    hint_ref,    # scratch (C8, STOT)  f32
    stk_ref,     # scratch (9*C8, SPAD) f32  stacked shifted state
    ff_ref,      # scratch (C8, SPAD)  f32
    *,
    num_steps,
    w_padded,    # W + 2   (row stride of the flattened padded image)
    spad,        # N * SPB (multiple of 128)
    spb,         # per-image padded spatial block (multiple of 128)
    marg,        # lane margin (128) so every shifted slice stays in bounds
    c8,          # common channel count padded to a multiple of 8
    batch,
):
    # Each 3x3 tap is a static lane shift of the flattened padded feature map.
    shifts = [(ki - 1) * w_padded + (kj - 1) for ki in range(3) for kj in range(3)]

    def conv(state_ref, w_ref):
        # Build the stacked (9*C8, SPAD) shifted state (tile-aligned f32
        # stores), then ONE MXU dot with bf16 operands and f32 accumulation.
        for tap, s in enumerate(shifts):
            stk_ref[tap * c8:(tap + 1) * c8, :] = (
                state_ref[:, marg + s: marg + s + spad])
        return jnp.dot(w_ref[...], stk_ref[...].astype(jnp.bfloat16),
                       preferred_element_type=jnp.float32)

    # Zero state once: margins + pad ring stay zero forever => SAME zero padding.
    hpyr_ref[...] = jnp.zeros_like(hpyr_ref)
    hint_ref[...] = jnp.zeros_like(hint_ref)

    # Hoisted loop invariants (no per-step broadcasts).
    mask = mask_ref[...]
    b_in = b_in_ref[...]
    b_ei = b_ei_ref[...]

    # Static feed-forward drive: computed once, kept in VMEM scratch.
    ff_ref[...] = conv(x_ref, w_in_ref) + b_in

    def step(_, carry):
        exc = conv(hpyr_ref, w_exc_ref)                               # (C8, SPAD)
        inh = conv(hint_ref, w_inh_ref)                               # (C8, SPAD)
        new_pyr = mask * jnp.tanh(ff_ref[...] + exc - jnp.maximum(inh, 0.0))
        hpyr_ref[:, marg:marg + spad] = new_pyr
        ei = conv(hpyr_ref, w_ei_ref) + b_ei                          # (C8, SPAD)
        hint_ref[:, marg:marg + spad] = mask * jnp.tanh(ei)
        return carry

    lax.fori_loop(0, num_steps, step, 0, unroll=True)

    # -----------------------------------------------------------------------
    # Fused classifier head: Flatten(1) -> fc1 -> ReLU -> Dropout -> fc2.
    # fc1's columns were pre-permuted/zero-padded on the host to the
    # (channel, padded-spatial) lane layout, so the pad ring / pad lanes /
    # padded channels contribute nothing.  Head matmuls stay in f32.
    # nn.Dropout(0.2) is identity at inference (.eval()).
    # TODO(synk): training-mode dropout would use pltpu.prng_seed/prng_random_bits.
    # -----------------------------------------------------------------------
    b1 = b1_ref[...]
    b2 = b2_ref[...]
    w2 = w2_ref[...]
    for n in range(batch):
        base = marg + n * spb            # lane-tile aligned (marg, spb mult of 128)
        z = b1
        for c in range(c8):
            feat_c = hpyr_ref[c:c + 1, base:base + spb]               # (1, SPB)
            z = z + jnp.dot(feat_c, w1_ref[c * spb:(c + 1) * spb, :],
                            preferred_element_type=jnp.float32)
        z = jnp.maximum(z, 0.0)
        out_ref[n:n + 1, :] = (
            jnp.dot(z, w2, preferred_element_type=jnp.float32) + b2)


def _full_block(a):
    nd = a.ndim
    return pl.BlockSpec(a.shape, lambda *_: (0,) * nd)


# ---------------------------------------------------------------------------
# One-time (loop-invariant) layout / weight preparation — hoisted glue
# ---------------------------------------------------------------------------
def _pack_conv_w(w_oihw, c8):
    # (Cout, Cin, 3, 3) -> (C8, 9*C8) bf16, column index = tap*C8 + ci.
    cout, cin = w_oihw.shape[0], w_oihw.shape[1]
    wp = jnp.pad(w_oihw, ((0, c8 - cout), (0, c8 - cin), (0, 0), (0, 0)))
    return (jnp.transpose(wp, (0, 2, 3, 1))
            .reshape(c8, 9 * c8).astype(jnp.bfloat16))


def _pack_state(x_nchw, c8, hp, wp, spb, marg):
    # (N, C, H, W) -> (C8, STOT): channels padded to C8, spatial zero-padded by
    # 1, each image's flattened padded spatial padded to SPB lanes, with `marg`
    # zero lanes on each side.
    n, c, h, w = x_nchw.shape
    xp = jnp.pad(x_nchw, ((0, 0), (0, c8 - c), (1, 1), (1, 1)))      # (N,C8,HP,WP)
    flat = jnp.transpose(xp, (1, 0, 2, 3)).reshape(c8, n, hp * wp)
    flat = jnp.pad(flat, ((0, 0), (0, 0), (0, spb - hp * wp)))
    flat = flat.reshape(c8, n * spb)
    return jnp.pad(flat, ((0, 0), (marg, marg)))


# ---------------------------------------------------------------------------
# ImageClassifier forward (loss_all_timesteps=False, return_activations=False)
# ---------------------------------------------------------------------------
def image_classifier_forward(x, params, num_steps=3):
    n, cin, h, w = x.shape
    cp = params["w_in"].shape[0]
    ci = params["w_ei"].shape[0]
    fc_dim = params["w_fc1"].shape[0]
    ncls = params["w_fc2"].shape[0]

    c8 = max(_round_up(cin, 8), _round_up(cp, 8), _round_up(ci, 8))
    hp, wp = h + 2, w + 2
    spb = _round_up(hp * wp, 128)          # per-image lane block (lane-dense)
    spad = n * spb                          # total active lanes (mult of 128)
    marg = 128                              # >= max 3x3 lane shift, tile aligned
    stot = spad + 2 * marg

    # ----- one-time layout / weight packing (loop-invariant glue) -----
    x_state = _pack_state(x, c8, hp, wp, spb, marg)                  # (C8, STOT)

    mask1 = jnp.zeros((hp, wp), jnp.float32).at[1:h + 1, 1:w + 1].set(1.0)
    mask1 = jnp.pad(mask1.reshape(hp * wp), (0, spb - hp * wp))
    mask = jnp.broadcast_to(jnp.tile(mask1, n)[None, :], (c8, spad))  # (C8, SPAD)

    w_in_m = _pack_conv_w(params["w_in"], c8)
    w_exc_m = _pack_conv_w(params["w_exc"], c8)
    w_inh_m = _pack_conv_w(params["w_inh"], c8)
    w_ei_m = _pack_conv_w(params["w_ei"], c8)
    b_in2 = jnp.pad(params["b_in"], (0, c8 - cp)).reshape(c8, 1)
    b_ei2 = jnp.pad(params["b_ei"], (0, c8 - ci)).reshape(c8, 1)

    # fc1 columns permuted + zero-padded once so fc1 contracts directly against
    # the (C8, N*SPB) in-VMEM state layout (pad ring / pad lanes get 0 weight).
    w1 = params["w_fc1"].reshape(fc_dim, cp, h, w)
    w1 = jnp.pad(w1, ((0, 0), (0, c8 - cp), (1, 1), (1, 1)))         # (FC,C8,HP,WP)
    w1 = jnp.pad(w1.reshape(fc_dim, c8, hp * wp),
                 ((0, 0), (0, 0), (0, spb - hp * wp)))
    w1_head = jnp.transpose(w1, (1, 2, 0)).reshape(c8 * spb, fc_dim)  # (C8*SPB,FC)
    b1 = params["b_fc1"].reshape(1, fc_dim)
    w2 = params["w_fc2"].T                                            # (FC, NCLS)
    b2 = params["b_fc2"].reshape(1, ncls)

    ins = [x_state, mask, w_in_m, w_exc_m, w_inh_m, w_ei_m, b_in2, b_ei2,
           w1_head, b1, w2, b2]

    kernel = functools.partial(
        _fused_kernel, num_steps=num_steps, w_padded=wp, spad=spad, spb=spb,
        marg=marg, c8=c8, batch=n)

    cost = pl.CostEstimate(
        flops=(2 * (3 * num_steps + 1) * c8 * (9 * c8) * spad
               + 2 * n * (c8 * spb * fc_dim + fc_dim * ncls)),
        transcendentals=num_steps * 2 * c8 * spad,
        bytes_accessed=(sum(int(a.size) * a.dtype.itemsize for a in ins)
                        + n * ncls * 4),
    )

    return pl.pallas_call(
        kernel,
        out_shape=jax.ShapeDtypeStruct((n, ncls), jnp.float32),
        grid=(1,),
        in_specs=[_full_block(a) for a in ins],
        out_specs=pl.BlockSpec((n, ncls), lambda i: (0, 0)),
        scratch_shapes=[
            pltpu.VMEM((c8, stot), jnp.float32),        # h_pyr  (padded+margins)
            pltpu.VMEM((c8, stot), jnp.float32),        # h_inter
            pltpu.VMEM((9 * c8, spad), jnp.float32),    # stacked conv taps
            pltpu.VMEM((c8, spad), jnp.float32),        # feed-forward drive
        ],
        compiler_params=pltpu.CompilerParams(dimension_semantics=("arbitrary",)),
        cost_estimate=cost,
    )(*ins)


# ---------------------------------------------------------------------------
# Pure-JAX reference (same simplified EIRNN math) for correctness checking
# ---------------------------------------------------------------------------
def _conv3x3_ref(x, w, b=None):
    out = lax.conv_general_dilated(
        x, w, window_strides=(1, 1), padding="SAME",
        dimension_numbers=("NCHW", "OIHW", "NCHW"),
        precision=lax.Precision.HIGHEST)
    if b is not None:
        out = out + b[None, :, None, None]
    return out


def reference_forward(x, params, num_steps=3):
    n = x.shape[0]
    cp = params["w_in"].shape[0]
    ci = params["w_ei"].shape[0]
    h, w = x.shape[2], x.shape[3]
    h_pyr = jnp.zeros((n, cp, h, w), jnp.float32)
    h_int = jnp.zeros((n, ci, h, w), jnp.float32)
    ff = _conv3x3_ref(x, params["w_in"], params["b_in"])
    for _ in range(num_steps):
        exc = _conv3x3_ref(h_pyr, params["w_exc"])
        inh = _conv3x3_ref(h_int, params["w_inh"])
        h_pyr = jnp.tanh(ff + exc - jnp.maximum(inh, 0.0))
        h_int = jnp.tanh(_conv3x3_ref(h_pyr, params["w_ei"], params["b_ei"]))
    feat = h_pyr.reshape(n, -1)
    z = jnp.maximum(
        jnp.dot(feat, params["w_fc1"].T, precision=lax.Precision.HIGHEST)
        + params["b_fc1"], 0.0)
    return (jnp.dot(z, params["w_fc2"].T, precision=lax.Precision.HIGHEST)
            + params["b_fc2"])


# ---------------------------------------------------------------------------
# Deterministic parameter construction
# ---------------------------------------------------------------------------
def make_params(key, in_ch, pyr_ch, inter_ch, H, W, fc_dim, num_classes):
    ks = jax.random.split(key, 8)
    scale = 0.1
    flat_dim = pyr_ch * H * W   # == out_channels * prod(out_size)
    return {
        "w_in": scale * jax.random.normal(ks[0], (pyr_ch, in_ch, 3, 3), jnp.float32),
        "b_in": scale * jax.random.normal(ks[1], (pyr_ch,), jnp.float32),
        "w_exc": scale * jax.random.normal(ks[2], (pyr_ch, pyr_ch, 3, 3), jnp.float32),
        "w_inh": scale * jax.random.normal(ks[3], (pyr_ch, inter_ch, 3, 3), jnp.float32),
        "w_ei": scale * jax.random.normal(ks[4], (inter_ch, pyr_ch, 3, 3), jnp.float32),
        "b_ei": scale * jax.random.normal(ks[5], (inter_ch,), jnp.float32),
        "w_fc1": scale * jax.random.normal(ks[6], (fc_dim, flat_dim), jnp.float32),
        "b_fc1": jnp.zeros((fc_dim,), jnp.float32),
        "w_fc2": scale * jax.random.normal(ks[7], (num_classes, fc_dim), jnp.float32),
        "b_fc2": jnp.zeros((num_classes,), jnp.float32),
    }


if __name__ == "__main__":
    key = jax.random.PRNGKey(0)
    k_x, k_p = jax.random.split(key)

    batch, in_ch, H, W = 2, 4, 16, 16
    pyr_ch, inter_ch = 8, 4
    fc_dim, num_classes = 32, 6
    num_steps = 3

    x = jax.random.normal(k_x, (batch, in_ch, H, W), jnp.float32)  # NCHW
    params = make_params(k_p, in_ch, pyr_ch, inter_ch, H, W, fc_dim, num_classes)

    fwd = jax.jit(functools.partial(image_classifier_forward, num_steps=num_steps))
    logits = jax.block_until_ready(fwd(x, params))

    assert logits.shape == (batch, num_classes), logits.shape
    assert bool(jnp.all(jnp.isfinite(logits)))

    ref = jax.block_until_ready(reference_forward(x, params, num_steps))
    # Tolerance sized for bf16 MXU operands in the recurrent convolutions
    # (per performance review); elementwise math and the head stay in f32.
    assert jnp.allclose(logits, ref, atol=1e-1, rtol=1e-1), (logits, ref)

    print("KERNEL_OK")
</pallas_src>

<mosaic_0001>
module attributes {stable_mosaic.version = 11 : i64} {
  func.func @_fused_kernel(%arg0: i32, %arg1: memref<8x1024xf32, #tpu.memory_space<vmem>>, %arg2: memref<8x768xf32, #tpu.memory_space<vmem>>, %arg3: memref<8x72xbf16, #tpu.memory_space<vmem>>, %arg4: memref<8x72xbf16, #tpu.memory_space<vmem>>, %arg5: memref<8x72xbf16, #tpu.memory_space<vmem>>, %arg6: memref<8x72xbf16, #tpu.memory_space<vmem>>, %arg7: memref<8x1xf32, #tpu.memory_space<vmem>>, %arg8: memref<8x1xf32, #tpu.memory_space<vmem>>, %arg9: memref<3072x32xf32, #tpu.memory_space<vmem>>, %arg10: memref<1x32xf32, #tpu.memory_space<vmem>>, %arg11: memref<32x6xf32, #tpu.memory_space<vmem>>, %arg12: memref<1x6xf32, #tpu.memory_space<vmem>>, %arg13: memref<2x6xf32, #tpu.memory_space<vmem>>, %arg14: memref<8x1024xf32, #tpu.memory_space<vmem>>, %arg15: memref<8x1024xf32, #tpu.memory_space<vmem>>, %arg16: memref<72x768xf32, #tpu.memory_space<vmem>>, %arg17: memref<8x768xf32, #tpu.memory_space<vmem>>) attributes {dimension_semantics = [#tpu.dimension_semantics<arbitrary>], iteration_bounds = array<i64: 1>, scalar_prefetch = 0 : i64, scratch_operands = 4 : i64, tpu.core_type = #tpu.core_type<tc>, window_params = [{pipeline_mode = #tpu.pipeline_mode<synchronous>, transform_indices = @transform_0, window_bounds = array<i64: 8, 1024>}, {pipeline_mode = #tpu.pipeline_mode<synchronous>, transform_indices = @transform_1, window_bounds = array<i64: 8, 768>}, {pipeline_mode = #tpu.pipeline_mode<synchronous>, transform_indices = @transform_2, window_bounds = array<i64: 8, 72>}, {pipeline_mode = #tpu.pipeline_mode<synchronous>, transform_indices = @transform_3, window_bounds = array<i64: 8, 72>}, {pipeline_mode = #tpu.pipeline_mode<synchronous>, transform_indices = @transform_4, window_bounds = array<i64: 8, 72>}, {pipeline_mode = #tpu.pipeline_mode<synchronous>, transform_indices = @transform_5, window_bounds = array<i64: 8, 72>}, {pipeline_mode = #tpu.pipeline_mode<synchronous>, transform_indices = @transform_6, window_bounds = array<i64: 8, 1>}, {pipeline_mode = #tpu.pipeline_mode<synchronous>, transform_indices = @transform_7, window_bounds = array<i64: 8, 1>}, {pipeline_mode = #tpu.pipeline_mode<synchronous>, transform_indices = @transform_8, window_bounds = array<i64: 3072, 32>}, {pipeline_mode = #tpu.pipeline_mode<synchronous>, transform_indices = @transform_9, window_bounds = array<i64: 1, 32>}, {pipeline_mode = #tpu.pipeline_mode<synchronous>, transform_indices = @transform_10, window_bounds = array<i64: 32, 6>}, {pipeline_mode = #tpu.pipeline_mode<synchronous>, transform_indices = @transform_11, window_bounds = array<i64: 1, 6>}, {pipeline_mode = #tpu.pipeline_mode<synchronous>, transform_indices = @transform_12, window_bounds = array<i64: 2, 6>}]} {
    %cst = arith.constant 0.000000e+00 : f32
    %0 = vector.broadcast %cst : f32 to vector<8x1024xf32>
    %c0 = arith.constant 0 : index
    %c0_0 = arith.constant 0 : index
    %1 = vector.load %arg14[%c0, %c0_0] : memref<8x1024xf32, #tpu.memory_space<vmem>>, vector<8x1024xf32>
    tpu.vector_store %arg14[%c0, %c0_0], %0 {strides = array<i32>} : memref<8x1024xf32, #tpu.memory_space<vmem>>, vector<8x1024xf32>,
    %cst_1 = arith.constant 0.000000e+00 : f32
    %2 = vector.broadcast %cst_1 : f32 to vector<8x1024xf32>
    %c0_2 = arith.constant 0 : index
    %c0_3 = arith.constant 0 : index
    %3 = vector.load %arg15[%c0_2, %c0_3] : memref<8x1024xf32, #tpu.memory_space<vmem>>, vector<8x1024xf32>
    tpu.vector_store %arg15[%c0_2, %c0_3], %2 {strides = array<i32>} : memref<8x1024xf32, #tpu.memory_space<vmem>>, vector<8x1024xf32>,
    %c0_4 = arith.constant 0 : index
    %c0_5 = arith.constant 0 : index
    %4 = vector.load %arg2[%c0_4, %c0_5] : memref<8x768xf32, #tpu.memory_space<vmem>>, vector<8x768xf32>
    %c0_6 = arith.constant 0 : index
    %c0_7 = arith.constant 0 : index
    %5 = vector.load %arg7[%c0_6, %c0_7] : memref<8x1xf32, #tpu.memory_space<vmem>>, vector<8x1xf32>
    %c0_8 = arith.constant 0 : index
    %c0_9 = arith.constant 0 : index
    %6 = vector.load %arg8[%c0_8, %c0_9] : memref<8x1xf32, #tpu.memory_space<vmem>>, vector<8x1xf32>
    %c0_10 = arith.constant 0 : index
    %c109 = arith.constant 109 : index
    %7 = vector.load %arg1[%c0_10, %c109] : memref<8x1024xf32, #tpu.memory_space<vmem>>, vector<8x768xf32>
    %c0_11 = arith.constant 0 : index
    %c0_12 = arith.constant 0 : index
    %8 = vector.load %arg16[%c0_11, %c0_12] : memref<72x768xf32, #tpu.memory_space<vmem>>, vector<8x768xf32>
    tpu.vector_store %arg16[%c0_11, %c0_12], %7 {strides = array<i32>} : memref<72x768xf32, #tpu.memory_space<vmem>>, vector<8x768xf32>,
    %c0_13 = arith.constant 0 : index
    %c110 = arith.constant 110 : index
    %9 = vector.load %arg1[%c0_13, %c110] : memref<8x1024xf32, #tpu.memory_space<vmem>>, vector<8x768xf32>
    %c8 = arith.constant 8 : index
    %c0_14 = arith.constant 0 : index
    %10 = vector.load %arg16[%c8, %c0_14] : memref<72x768xf32, #tpu.memory_space<vmem>>, vector<8x768xf32>
    tpu.vector_store %arg16[%c8, %c0_14], %9 {strides = array<i32>} : memref<72x768xf32, #tpu.memory_space<vmem>>, vector<8x768xf32>,
    %c0_15 = arith.constant 0 : index
    %c111 = arith.constant 111 : index
    %11 = vector.load %arg1[%c0_15, %c111] : memref<8x1024xf32, #tpu.memory_space<vmem>>, vector<8x768xf32>
    %c16 = arith.constant 16 : index
    %c0_16 = arith.constant 0 : index
    %12 = vector.load %arg16[%c16, %c0_16] : memref<72x768xf32, #tpu.memory_space<vmem>>, vector<8x768xf32>
    tpu.vector_store %arg16[%c16, %c0_16], %11 {strides = array<i32>} : memref<72x768xf32, #tpu.memory_space<vmem>>, vector<8x768xf32>,
    %c0_17 = arith.constant 0 : index
    %c127 = arith.constant 127 : index
    %13 = vector.load %arg1[%c0_17, %c127] : memref<8x1024xf32, #tpu.memory_space<vmem>>, vector<8x768xf32>
    %c24 = arith.constant 24 : index
    %c0_18 = arith.constant 0 : index
    %14 = vector.load %arg16[%c24, %c0_18] : memref<72x768xf32, #tpu.memory_space<vmem>>, vector<8x768xf32>
    tpu.vector_store %arg16[%c24, %c0_18], %13 {strides = array<i32>} : memref<72x768xf32, #tpu.memory_space<vmem>>, vector<8x768xf32>,
    %c0_19 = arith.constant 0 : index
    %c128 = arith.constant 128 : index
    %15 = vector.load %arg1[%c0_19, %c128] : memref<8x1024xf32, #tpu.memory_space<vmem>>, vector<8x768xf32>
    %c32 = arith.constant 32 : index
    %c0_20 = arith.constant 0 : index
    %16 = vector.load %arg16[%c32, %c0_20] : memref<72x768xf32, #tpu.memory_space<vmem>>, vector<8x768xf32>
    tpu.vector_store %arg16[%c32, %c0_20], %15 {strides = array<i32>} : memref<72x768xf32, #tpu.memory_space<vmem>>, vector<8x768xf32>,
    %c0_21 = arith.constant 0 : index
    %c129 = arith.constant 129 : index
    %17 = vector.load %arg1[%c0_21, %c129] : memref<8x1024xf32, #tpu.memory_space<vmem>>, vector<8x768xf32>
    %c40 = arith.constant 40 : index
    %c0_22 = arith.constant 0 : index
    %18 = vector.load %arg16[%c40, %c0_22] : memref<72x768xf32, #tpu.memory_space<vmem>>, vector<8x768xf32>
    tpu.vector_store %arg16[%c40, %c0_22], %17 {strides = array<i32>} : memref<72x768xf32, #tpu.memory_space<vmem>>, vector<8x768xf32>,
    %c0_23 = arith.constant 0 : index
    %c145 = arith.constant 145 : index
    %19 = vector.load %arg1[%c0_23, %c145] : memref<8x1024xf32, #tpu.memory_space<vmem>>, vector<8x768xf32>
    %c48 = arith.constant 48 : index
    %c0_24 = arith.constant 0 : index
    %20 = vector.load %arg16[%c48, %c0_24] : memref<72x768xf32, #tpu.memory_space<vmem>>, vector<8x768xf32>
    tpu.vector_store %arg16[%c48, %c0_24], %19 {strides = array<i32>} : memref<72x768xf32, #tpu.memory_space<vmem>>, vector<8x768xf32>,
    %c0_25 = arith.constant 0 : index
    %c146 = arith.constant 146 : index
    %21 = vector.load %arg1[%c0_25, %c146] : memref<8x1024xf32, #tpu.memory_space<vmem>>, vector<8x768xf32>
    %c56 = arith.constant 56 : index
    %c0_26 = arith.constant 0 : index
    %22 = vector.load %arg16[%c56, %c0_26] : memref<72x768xf32, #tpu.memory_space<vmem>>, vector<8x768xf32>
    tpu.vector_store %arg16[%c56, %c0_26], %21 {strides = array<i32>} : memref<72x768xf32, #tpu.memory_space<vmem>>, vector<8x768xf32>,
    %c0_27 = arith.constant 0 : index
    %c147 = arith.constant 147 : index
    %23 = vector.load %arg1[%c0_27, %c147] : memref<8x1024xf32, #tpu.memory_space<vmem>>, vector<8x768xf32>
    %c64 = arith.constant 64 : index
    %c0_28 = arith.constant 0 : index
    %24 = vector.load %arg16[%c64, %c0_28] : memref<72x768xf32, #tpu.memory_space<vmem>>, vector<8x768xf32>
    tpu.vector_store %arg16[%c64, %c0_28], %23 {strides = array<i32>} : memref<72x768xf32, #tpu.memory_space<vmem>>, vector<8x768xf32>,
    %c0_29 = arith.constant 0 : index
    %c0_30 = arith.constant 0 : index
    %25 = vector.load %arg3[%c0_29, %c0_30] : memref<8x72xbf16, #tpu.memory_space<vmem>>, vector<8x72xbf16>
    %c0_31 = arith.constant 0 : index
    %c0_32 = arith.constant 0 : index
    %26 = vector.load %arg16[%c0_31, %c0_32] : memref<72x768xf32, #tpu.memory_space<vmem>>, vector<72x768xf32>
    %27 = arith.truncf %26 : vector<72x768xf32> to vector<72x768xbf16>
    %cst_33 = arith.constant dense<0.000000e+00> : vector<8x768xf32>
    %28 = tpu.matmul %25, %27, %cst_33 {dimension_numbers = #tpu.dot_dimension_numbers<[1], [0], [0], [1], [0, 0, 1, 1], [], []>} : vector<8x72xbf16>, vector<72x768xbf16>, vector<8x768xf32> -> vector<8x768xf32>
    %29 = vector.broadcast %5 : vector<8x1xf32> to vector<8x768xf32>
    %30 = arith.addf %28, %29 : vector<8x768xf32>
    %c0_34 = arith.constant 0 : index
    %c0_35 = arith.constant 0 : index
    %31 = vector.load %arg17[%c0_34, %c0_35] : memref<8x768xf32, #tpu.memory_space<vmem>>, vector<8x768xf32>
    tpu.vector_store %arg17[%c0_34, %c0_35], %30 {strides = array<i32>} : memref<8x768xf32, #tpu.memory_space<vmem>>, vector<8x768xf32>,
    %c0_i32 = arith.constant 0 : i32
    %c0_36 = arith.constant 0 : index
    %c109_37 = arith.constant 109 : index
    %32 = vector.load %arg14[%c0_36, %c109_37] : memref<8x1024xf32, #tpu.memory_space<vmem>>, vector<8x768xf32>
    %c0_38 = arith.constant 0 : index
    %c0_39 = arith.constant 0 : index
    %33 = vector.load %arg16[%c0_38, %c0_39] : memref<72x768xf32, #tpu.memory_space<vmem>>, vector<8x768xf32>
    tpu.vector_store %arg16[%c0_38, %c0_39], %32 {strides = array<i32>} : memref<72x768xf32, #tpu.memory_space<vmem>>, vector<8x768xf32>,
    %c0_40 = arith.constant 0 : index
    %c110_41 = arith.constant 110 : index
    %34 = vector.load %arg14[%c0_40, %c110_41] : memref<8x1024xf32, #tpu.memory_space<vmem>>, vector<8x768xf32>
    %c8_42 = arith.constant 8 : index
    %c0_43 = arith.constant 0 : index
    %35 = vector.load %arg16[%c8_42, %c0_43] : memref<72x768xf32, #tpu.memory_space<vmem>>, vector<8x768xf32>
    tpu.vector_store %arg16[%c8_42, %c0_43], %34 {strides = array<i32>} : memref<72x768xf32, #tpu.memory_space<vmem>>, vector<8x768xf32>,
    %c0_44 = arith.constant 0 : index
    %c111_45 = arith.constant 111 : index
    %36 = vector.load %arg14[%c0_44, %c111_45] : memref<8x1024xf32, #tpu.memory_space<vmem>>, vector<8x768xf32>
    %c16_46 = arith.constant 16 : index
    %c0_47 = arith.constant 0 : index
    %37 = vector.load %arg16[%c16_46, %c0_47] : memref<72x768xf32, #tpu.memory_space<vmem>>, vector<8x768xf32>
    tpu.vector_store %arg16[%c16_46, %c0_47], %36 {strides = array<i32>} : memref<72x768xf32, #tpu.memory_space<vmem>>, vector<8x768xf32>,
    %c0_48 = arith.constant 0 : index
    %c127_49 = arith.constant 127 : index
    %38 = vector.load %arg14[%c0_48, %c127_49] : memref<8x1024xf32, #tpu.memory_space<vmem>>, vector<8x768xf32>
    %c24_50 = arith.constant 24 : index
    %c0_51 = arith.constant 0 : index
    %39 = vector.load %arg16[%c24_50, %c0_51] : memref<72x768xf32, #tpu.memory_space<vmem>>, vector<8x768xf32>
    tpu.vector_store %arg16[%c24_50, %c0_51], %38 {strides = array<i32>} : memref<72x768xf32, #tpu.memory_space<vmem>>, vector<8x768xf32>,
    %c0_52 = arith.constant 0 : index
    %c128_53 = arith.constant 128 : index
    %40 = vector.load %arg14[%c0_52, %c128_53] : memref<8x1024xf32, #tpu.memory_space<vmem>>, vector<8x768xf32>
    %c32_54 = arith.constant 32 : index
    %c0_55 = arith.constant 0 : index
    %41 = vector.load %arg16[%c32_54, %c0_55] : memref<72x768xf32, #tpu.memory_space<vmem>>, vector<8x768xf32>
    tpu.vector_store %arg16[%c32_54, %c0_55], %40 {strides = array<i32>} : memref<72x768xf32, #tpu.memory_space<vmem>>, vector<8x768xf32>,
    %c0_56 = arith.constant 0 : index
    %c129_57 = arith.constant 129 : index
    %42 = vector.load %arg14[%c0_56, %c129_57] : memref<8x1024xf32, #tpu.memory_space<vmem>>, vector<8x768xf32>
    %c40_58 = arith.constant 40 : index
    %c0_59 = arith.constant 0 : index
    %43 = vector.load %arg16[%c40_58, %c0_59] : memref<72x768xf32, #tpu.memory_space<vmem>>, vector<8x768xf32>
    tpu.vector_store %arg16[%c40_58, %c0_59], %42 {strides = array<i32>} : memref<72x768xf32, #tpu.memory_space<vmem>>, vector<8x768xf32>,
    %c0_60 = arith.constant 0 : index
    %c145_61 = arith.constant 145 : index
    %44 = vector.load %arg14[%c0_60, %c145_61] : memref<8x1024xf32, #tpu.memory_space<vmem>>, vector<8x768xf32>
    %c48_62 = arith.constant 48 : index
    %c0_63 = arith.constant 0 : index
    %45 = vector.load %arg16[%c48_62, %c0_63] : memref<72x768xf32, #tpu.memory_space<vmem>>, vector<8x768xf32>
    tpu.vector_store %arg16[%c48_62, %c0_63], %44 {strides = array<i32>} : memref<72x768xf32, #tpu.memory_space<vmem>>, vector<8x768xf32>,
    %c0_64 = arith.constant 0 : index
    %c146_65 = arith.constant 146 : index
    %46 = vector.load %arg14[%c0_64, %c146_65] : memref<8x1024xf32, #tpu.memory_space<vmem>>, vector<8x768xf32>
    %c56_66 = arith.constant 56 : index
    %c0_67 = arith.constant 0 : index
    %47 = vector.load %arg16[%c56_66, %c0_67] : memref<72x768xf32, #tpu.memory_space<vmem>>, vector<8x768xf32>
    tpu.vector_store %arg16[%c56_66, %c0_67], %46 {strides = array<i32>} : memref<72x768xf32, #tpu.memory_space<vmem>>, vector<8x768xf32>,
    %c0_68 = arith.constant 0 : index
    %c147_69 = arith.constant 147 : index
    %48 = vector.load %arg14[%c0_68, %c147_69] : memref<8x1024xf32, #tpu.memory_space<vmem>>, vector<8x768xf32>
    %c64_70 = arith.constant 64 : index
    %c0_71 = arith.constant 0 : index
    %49 = vector.load %arg16[%c64_70, %c0_71] : memref<72x768xf32, #tpu.memory_space<vmem>>, vector<8x768xf32>
    tpu.vector_store %arg16[%c64_70, %c0_71], %48 {strides = array<i32>} : memref<72x768xf32, #tpu.memory_space<vmem>>, vector<8x768xf32>,
    %c0_72 = arith.constant 0 : index
    %c0_73 = arith.constant 0 : index
    %50 = vector.load %arg4[%c0_72, %c0_73] : memref<8x72xbf16, #tpu.memory_space<vmem>>, vector<8x72xbf16>
    %c0_74 = arith.constant 0 : index
    %c0_75 = arith.constant 0 : index
    %51 = vector.load %arg16[%c0_74, %c0_75] : memref<72x768xf32, #tpu.memory_space<vmem>>, vector<72x768xf32>
    %52 = arith.truncf %51 : vector<72x768xf32> to vector<72x768xbf16>
    %cst_76 = arith.constant dense<0.000000e+00> : vector<8x768xf32>
    %53 = tpu.matmul %50, %52, %cst_76 {dimension_numbers = #tpu.dot_dimension_numbers<[1], [0], [0], [1], [0, 0, 1, 1], [], []>} : vector<8x72xbf16>, vector<72x768xbf16>, vector<8x768xf32> -> vector<8x768xf32>
    %c0_77 = arith.constant 0 : index
    %c109_78 = arith.constant 109 : index
    %54 = vector.load %arg15[%c0_77, %c109_78] : memref<8x1024xf32, #tpu.memory_space<vmem>>, vector<8x768xf32>
    %c0_79 = arith.constant 0 : index
    %c0_80 = arith.constant 0 : index
    %55 = vector.load %arg16[%c0_79, %c0_80] : memref<72x768xf32, #tpu.memory_space<vmem>>, vector<8x768xf32>
    tpu.vector_store %arg16[%c0_79, %c0_80], %54 {strides = array<i32>} : memref<72x768xf32, #tpu.memory_space<vmem>>, vector<8x768xf32>,
    %c0_81 = arith.constant 0 : index
    %c110_82 = arith.constant 110 : index
    %56 = vector.load %arg15[%c0_81, %c110_82] : memref<8x1024xf32, #tpu.memory_space<vmem>>, vector<8x768xf32>
    %c8_83 = arith.constant 8 : index
    %c0_84 = arith.constant 0 : index
    %57 = vector.load %arg16[%c8_83, %c0_84] : memref<72x768xf32, #tpu.memory_space<vmem>>, vector<8x768xf32>
    tpu.vector_store %arg16[%c8_83, %c0_84], %56 {strides = array<i32>} : memref<72x768xf32, #tpu.memory_space<vmem>>, vector<8x768xf32>,
    %c0_85 = arith.constant 0 : index
    %c111_86 = arith.constant 111 : index
    %58 = vector.load %arg15[%c0_85, %c111_86] : memref<8x1024xf32, #tpu.memory_space<vmem>>, vector<8x768xf32>
    %c16_87 = arith.constant 16 : index
    %c0_88 = arith.constant 0 : index
    %59 = vector.load %arg16[%c16_87, %c0_88] : memref<72x768xf32, #tpu.memory_space<vmem>>, vector<8x768xf32>
    tpu.vector_store %arg16[%c16_87, %c0_88], %58 {strides = array<i32>} : memref<72x768xf32, #tpu.memory_space<vmem>>, vector<8x768xf32>,
    %c0_89 = arith.constant 0 : index
    %c127_90 = arith.constant 127 : index
    %60 = vector.load %arg15[%c0_89, %c127_90] : memref<8x1024xf32, #tpu.memory_space<vmem>>, vector<8x768xf32>
    %c24_91 = arith.constant 24 : index
    %c0_92 = arith.constant 0 : index
    %61 = vector.load %arg16[%c24_91, %c0_92] : memref<72x768xf32, #tpu.memory_space<vmem>>, vector<8x768xf32>
    tpu.vector_store %arg16[%c24_91, %c0_92], %60 {strides = array<i32>} : memref<72x768xf32, #tpu.memory_space<vmem>>, vector<8x768xf32>,
    %c0_93 = arith.constant 0 : index
    %c128_94 = arith.constant 128 : index
    %62 = vector.load %arg15[%c0_93, %c128_94] : memref<8x1024xf32, #tpu.memory_space<vmem>>, vector<8x768xf32>
    %c32_95 = arith.constant 32 : index
    %c0_96 = arith.constant 0 : index
    %63 = vector.load %arg16[%c32_95, %c0_96] : memref<72x768xf32, #tpu.memory_space<vmem>>, vector<8x768xf32>
    tpu.vector_store %arg16[%c32_95, %c0_96], %62 {strides = array<i32>} : memref<72x768xf32, #tpu.memory_space<vmem>>, vector<8x768xf32>,
    %c0_97 = arith.constant 0 : index
    %c129_98 = arith.constant 129 : index
    %64 = vector.load %arg15[%c0_97, %c129_98] : memref<8x1024xf32, #tpu.memory_space<vmem>>, vector<8x768xf32>
    %c40_99 = arith.constant 40 : index
    %c0_100 = arith.constant 0 : index
    %65 = vector.load %arg16[%c40_99, %c0_100] : memref<72x768xf32, #tpu.memory_space<vmem>>, vector<8x768xf32>
    tpu.vector_store %arg16[%c40_99, %c0_100], %64 {strides = array<i32>} : memref<72x768xf32, #tpu.memory_space<vmem>>, vector<8x768xf32>,
    %c0_101 = arith.constant 0 : index
    %c145_102 = arith.constant 145 : index
    %66 = vector.load %arg15[%c0_101, %c145_102] : memref<8x1024xf32, #tpu.memory_space<vmem>>, vector<8x768xf32>
    %c48_103 = arith.constant 48 : index
    %c0_104 = arith.constant 0 : index
    %67 = vector.load %arg16[%c48_103, %c0_104] : memref<72x768xf32, #tpu.memory_space<vmem>>, vector<8x768xf32>
    tpu.vector_store %arg16[%c48_103, %c0_104], %66 {strides = array<i32>} : memref<72x768xf32, #tpu.memory_space<vmem>>, vector<8x768xf32>,
    %c0_105 = arith.constant 0 : index
    %c146_106 = arith.constant 146 : index
    %68 = vector.load %arg15[%c0_105, %c146_106] : memref<8x1024xf32, #tpu.memory_space<vmem>>, vector<8x768xf32>
    %c56_107 = arith.constant 56 : index
    %c0_108 = arith.constant 0 : index
    %69 = vector.load %arg16[%c56_107, %c0_108] : memref<72x768xf32, #tpu.memory_space<vmem>>, vector<8x768xf32>
    tpu.vector_store %arg16[%c56_107, %c0_108], %68 {strides = array<i32>} : memref<72x768xf32, #tpu.memory_space<vmem>>, vector<8x768xf32>,
    %c0_109 = arith.constant 0 : index
    %c147_110 = arith.constant 147 : index
    %70 = vector.load %arg15[%c0_109, %c147_110] : memref<8x1024xf32, #tpu.memory_space<vmem>>, vector<8x768xf32>
    %c64_111 = arith.constant 64 : index
    %c0_112 = arith.constant 0 : index
    %71 = vector.load %arg16[%c64_111, %c0_112] : memref<72x768xf32, #tpu.memory_space<vmem>>, vector<8x768xf32>
    tpu.vector_store %arg16[%c64_111, %c0_112], %70 {strides = array<i32>} : memref<72x768xf32, #tpu.memory_space<vmem>>, vector<8x768xf32>,
    %c0_113 = arith.constant 0 : index
    %c0_114 = arith.constant 0 : index
    %72 = vector.load %arg5[%c0_113, %c0_114] : memref<8x72xbf16, #tpu.memory_space<vmem>>, vector<8x72xbf16>
    %c0_115 = arith.constant 0 : index
    %c0_116 = arith.constant 0 : index
    %73 = vector.load %arg16[%c0_115, %c0_116] : memref<72x768xf32, #tpu.memory_space<vmem>>, vector<72x768xf32>
    %74 = arith.truncf %73 : vector<72x768xf32> to vector<72x768xbf16>
    %cst_117 = arith.constant dense<0.000000e+00> : vector<8x768xf32>
    %75 = tpu.matmul %72, %74, %cst_117 {dimension_numbers = #tpu.dot_dimension_numbers<[1], [0], [0], [1], [0, 0, 1, 1], [], []>} : vector<8x72xbf16>, vector<72x768xbf16>, vector<8x768xf32> -> vector<8x768xf32>
    %c0_118 = arith.constant 0 : index
    %c0_119 = arith.constant 0 : index
    %76 = vector.load %arg17[%c0_118, %c0_119] : memref<8x768xf32, #tpu.memory_space<vmem>>, vector<8x768xf32>
    %77 = arith.addf %76, %53 : vector<8x768xf32>
    %cst_120 = arith.constant 0.000000e+00 : f32
    %78 = vector.broadcast %cst_120 : f32 to vector<8x768xf32>
    %79 = arith.maximumf %75, %78 : vector<8x768xf32>
    %80 = arith.subf %77, %79 : vector<8x768xf32>
    %81 = math.tanh %80 : vector<8x768xf32>
    %82 = arith.mulf %4, %81 : vector<8x768xf32>
    %c0_121 = arith.constant 0 : index
    %c128_122 = arith.constant 128 : index
    %83 = vector.load %arg14[%c0_121, %c128_122] : memref<8x1024xf32, #tpu.memory_space<vmem>>, vector<8x768xf32>
    tpu.vector_store %arg14[%c0_121, %c128_122], %82 {strides = array<i32>} : memref<8x1024xf32, #tpu.memory_space<vmem>>, vector<8x768xf32>,
    %c0_123 = arith.constant 0 : index
    %c109_124 = arith.constant 109 : index
    %84 = vector.load %arg14[%c0_123, %c109_124] : memref<8x1024xf32, #tpu.memory_space<vmem>>, vector<8x768xf32>
    %c0_125 = arith.constant 0 : index
    %c0_126 = arith.constant 0 : index
    %85 = vector.load %arg16[%c0_125, %c0_126] : memref<72x768xf32, #tpu.memory_space<vmem>>, vector<8x768xf32>
    tpu.vector_store %arg16[%c0_125, %c0_126], %84 {strides = array<i32>} : memref<72x768xf32, #tpu.memory_space<vmem>>, vector<8x768xf32>,
    %c0_127 = arith.constant 0 : index
    %c110_128 = arith.constant 110 : index
    %86 = vector.load %arg14[%c0_127, %c110_128] : memref<8x1024xf32, #tpu.memory_space<vmem>>, vector<8x768xf32>
    %c8_129 = arith.constant 8 : index
    %c0_130 = arith.constant 0 : index
    %87 = vector.load %arg16[%c8_129, %c0_130] : memref<72x768xf32, #tpu.memory_space<vmem>>, vector<8x768xf32>
    tpu.vector_store %arg16[%c8_129, %c0_130], %86 {strides = array<i32>} : memref<72x768xf32, #tpu.memory_space<vmem>>, vector<8x768xf32>,
    %c0_131 = arith.constant 0 : index
    %c111_132 = arith.constant 111 : index
    %88 = vector.load %arg14[%c0_131, %c111_132] : memref<8x1024xf32, #tpu.memory_space<vmem>>, vector<8x768xf32>
    %c16_133 = arith.constant 16 : index
    %c0_134 = arith.constant 0 : index
    %89 = vector.load %arg16[%c16_133, %c0_134] : memref<72x768xf32, #tpu.memory_space<vmem>>, vector<8x768xf32>
    tpu.vector_store %arg16[%c16_133, %c0_134], %88 {strides = array<i32>} : memref<72x768xf32, #tpu.memory_space<vmem>>, vector<8x768xf32>,
    %c0_135 = arith.constant 0 : index
    %c127_136 = arith.constant 127 : index
    %90 = vector.load %arg14[%c0_135, %c127_136] : memref<8x1024xf32, #tpu.memory_space<vmem>>, vector<8x768xf32>
    %c24_137 = arith.constant 24 : index
    %c0_138 = arith.constant 0 : index
    %91 = vector.load %arg16[%c24_137, %c0_138] : memref<72x768xf32, #tpu.memory_space<vmem>>, vector<8x768xf32>
    tpu.vector_store %arg16[%c24_137, %c0_138], %90 {strides = array<i32>} : memref<72x768xf32, #tpu.memory_space<vmem>>, vector<8x768xf32>,
    %c0_139 = arith.constant 0 : index
    %c128_140 = arith.constant 128 : index
    %92 = vector.load %arg14[%c0_139, %c128_140] : memref<8x1024xf32, #tpu.memory_space<vmem>>, vector<8x768xf32>
    %c32_141 = arith.constant 32 : index
    %c0_142 = arith.constant 0 : index
    %93 = vector.load %arg16[%c32_141, %c0_142] : memref<72x768xf32, #tpu.memory_space<vmem>>, vector<8x768xf32>
    tpu.vector_store %arg16[%c32_141, %c0_142], %92 {strides = array<i32>} : memref<72x768xf32, #tpu.memory_space<vmem>>, vector<8x768xf32>,
    %c0_143 = arith.constant 0 : index
    %c129_144 = arith.constant 129 : index
    %94 = vector.load %arg14[%c0_143, %c129_144] : memref<8x1024xf32, #tpu.memory_space<vmem>>, vector<8x768xf32>
    %c40_145 = arith.constant 40 : index
    %c0_146 = arith.constant 0 : index
    %95 = vector.load %arg16[%c40_145, %c0_146] : memref<72x768xf32, #tpu.memory_space<vmem>>, vector<8x768xf32>
    tpu.vector_store %arg16[%c40_145, %c0_146], %94 {strides = array<i32>} : memref<72x768xf32, #tpu.memory_space<vmem>>, vector<8x768xf32>,
    %c0_147 = arith.constant 0 : index
    %c145_148 = arith.constant 145 : index
    %96 = vector.load %arg14[%c0_147, %c145_148] : memref<8x1024xf32, #tpu.memory_space<vmem>>, vector<8x768xf32>
    %c48_149 = arith.constant 48 : index
    %c0_150 = arith.constant 0 : index
    %97 = vector.load %arg16[%c48_149, %c0_150] : memref<72x768xf32, #tpu.memory_space<vmem>>, vector<8x768xf32>
    tpu.vector_store %arg16[%c48_149, %c0_150], %96 {strides = array<i32>} : memref<72x768xf32, #tpu.memory_space<vmem>>, vector<8x768xf32>,
    %c0_151 = arith.constant 0 : index
    %c146_152 = arith.constant 146 : index
    %98 = vector.load %arg14[%c0_151, %c146_152] : memref<8x1024xf32, #tpu.memory_space<vmem>>, vector<8x768xf32>
    %c56_153 = arith.constant 56 : index
    %c0_154 = arith.constant 0 : index
    %99 = vector.load %arg16[%c56_153, %c0_154] : memref<72x768xf32, #tpu.memory_space<vmem>>, vector<8x768xf32>
    tpu.vector_store %arg16[%c56_153, %c0_154], %98 {strides = array<i32>} : memref<72x768xf32, #tpu.memory_space<vmem>>, vector<8x768xf32>,
    %c0_155 = arith.constant 0 : index
    %c147_156 = arith.constant 147 : index
    %100 = vector.load %arg14[%c0_155, %c147_156] : memref<8x1024xf32, #tpu.memory_space<vmem>>, vector<8x768xf32>
    %c64_157 = arith.constant 64 : index
    %c0_158 = arith.constant 0 : index
    %101 = vector.load %arg16[%c64_157, %c0_158] : memref<72x768xf32, #tpu.memory_space<vmem>>, vector<8x768xf32>
    tpu.vector_store %arg16[%c64_157, %c0_158], %100 {strides = array<i32>} : memref<72x768xf32, #tpu.memory_space<vmem>>, vector<8x768xf32>,
    %c0_159 = arith.constant 0 : index
    %c0_160 = arith.constant 0 : index
    %102 = vector.load %arg6[%c0_159, %c0_160] : memref<8x72xbf16, #tpu.memory_space<vmem>>, vector<8x72xbf16>
    %c0_161 = arith.constant 0 : index
    %c0_162 = arith.constant 0 : index
    %103 = vector.load %arg16[%c0_161, %c0_162] : memref<72x768xf32, #tpu.memory_space<vmem>>, vector<72x768xf32>
    %104 = arith.truncf %103 : vector<72x768xf32> to vector<72x768xbf16>
    %cst_163 = arith.constant dense<0.000000e+00> : vector<8x768xf32>
    %105 = tpu.matmul %102, %104, %cst_163 {dimension_numbers = #tpu.dot_dimension_numbers<[1], [0], [0], [1], [0, 0, 1, 1], [], []>} : vector<8x72xbf16>, vector<72x768xbf16>, vector<8x768xf32> -> vector<8x768xf32>
    %106 = vector.broadcast %6 : vector<8x1xf32> to vector<8x768xf32>
    %107 = arith.addf %105, %106 : vector<8x768xf32>
    %108 = math.tanh %107 : vector<8x768xf32>
    %109 = arith.mulf %4, %108 : vector<8x768xf32>
    %c0_164 = arith.constant 0 : index
    %c128_165 = arith.constant 128 : index
    %110 = vector.load %arg15[%c0_164, %c128_165] : memref<8x1024xf32, #tpu.memory_space<vmem>>, vector<8x768xf32>
    tpu.vector_store %arg15[%c0_164, %c128_165], %109 {strides = array<i32>} : memref<8x1024xf32, #tpu.memory_space<vmem>>, vector<8x768xf32>,
    %c1_i32 = arith.constant 1 : i32
    %c0_166 = arith.constant 0 : index
    %c109_167 = arith.constant 109 : index
    %111 = vector.load %arg14[%c0_166, %c109_167] : memref<8x1024xf32, #tpu.memory_space<vmem>>, vector<8x768xf32>
    %c0_168 = arith.constant 0 : index
    %c0_169 = arith.constant 0 : index
    %112 = vector.load %arg16[%c0_168, %c0_169] : memref<72x768xf32, #tpu.memory_space<vmem>>, vector<8x768xf32>
    tpu.vector_store %arg16[%c0_168, %c0_169], %111 {strides = array<i32>} : memref<72x768xf32, #tpu.memory_space<vmem>>, vector<8x768xf32>,
    %c0_170 = arith.constant 0 : index
    %c110_171 = arith.constant 110 : index
    %113 = vector.load %arg14[%c0_170, %c110_171] : memref<8x1024xf32, #tpu.memory_space<vmem>>, vector<8x768xf32>
    %c8_172 = arith.constant 8 : index
    %c0_173 = arith.constant 0 : index
    %114 = vector.load %arg16[%c8_172, %c0_173] : memref<72x768xf32, #tpu.memory_space<vmem>>, vector<8x768xf32>
    tpu.vector_store %arg16[%c8_172, %c0_173], %113 {strides = array<i32>} : memref<72x768xf32, #tpu.memory_space<vmem>>, vector<8x768xf32>,
    %c0_174 = arith.constant 0 : index
    %c111_175 = arith.constant 111 : index
    %115 = vector.load %arg14[%c0_174, %c111_175] : memref<8x1024xf32, #tpu.memory_space<vmem>>, vector<8x768xf32>
    %c16_176 = arith.constant 16 : index
    %c0_177 = arith.constant 0 : index
    %116 = vector.load %arg16[%c16_176, %c0_177] : memref<72x768xf32, #tpu.memory_space<vmem>>, vector<8x768xf32>
    tpu.vector_store %arg16[%c16_176, %c0_177], %115 {strides = array<i32>} : memref<72x768xf32, #tpu.memory_space<vmem>>, vector<8x768xf32>,
    %c0_178 = arith.constant 0 : index
    %c127_179 = arith.constant 127 : index
    %117 = vector.load %arg14[%c0_178, %c127_179] : memref<8x1024xf32, #tpu.memory_space<vmem>>, vector<8x768xf32>
    %c24_180 = arith.constant 24 : index
    %c0_181 = arith.constant 0 : index
    %118 = vector.load %arg16[%c24_180, %c0_181] : memref<72x768xf32, #tpu.memory_space<vmem>>, vector<8x768xf32>
    tpu.vector_store %arg16[%c24_180, %c0_181], %117 {strides = array<i32>} : memref<72x768xf32, #tpu.memory_space<vmem>>, vector<8x768xf32>,
    %c0_182 = arith.constant 0 : index
    %c128_183 = arith.constant 128 : index
    %119 = vector.load %arg14[%c0_182, %c128_183] : memref<8x1024xf32, #tpu.memory_space<vmem>>, vector<8x768xf32>
    %c32_184 = arith.constant 32 : index
    %c0_185 = arith.constant 0 : index
    %120 = vector.load %arg16[%c32_184, %c0_185] : memref<72x768xf32, #tpu.memory_space<vmem>>, vector<8x768xf32>
    tpu.vector_store %arg16[%c32_184, %c0_185], %119 {strides = array<i32>} : memref<72x768xf32, #tpu.memory_space<vmem>>, vector<8x768xf32>,
    %c0_186 = arith.constant 0 : index
    %c129_187 = arith.constant 129 : index
    %121 = vector.load %arg14[%c0_186, %c129_187] : memref<8x1024xf32, #tpu.memory_space<vmem>>, vector<8x768xf32>
    %c40_188 = arith.constant 40 : index
    %c0_189 = arith.constant 0 : index
    %122 = vector.load %arg16[%c40_188, %c0_189] : memref<72x768xf32, #tpu.memory_space<vmem>>, vector<8x768xf32>
    tpu.vector_store %arg16[%c40_188, %c0_189], %121 {strides = array<i32>} : memref<72x768xf32, #tpu.memory_space<vmem>>, vector<8x768xf32>,
    %c0_190 = arith.constant 0 : index
    %c145_191 = arith.constant 145 : index
    %123 = vector.load %arg14[%c0_190, %c145_191] : memref<8x1024xf32, #tpu.memory_space<vmem>>, vector<8x768xf32>
    %c48_192 = arith.constant 48 : index
    %c0_193 = arith.constant 0 : index
    %124 = vector.load %arg16[%c48_192, %c0_193] : memref<72x768xf32, #tpu.memory_space<vmem>>, vector<8x768xf32>
    tpu.vector_store %arg16[%c48_192, %c0_193], %123 {strides = array<i32>} : memref<72x768xf32, #tpu.memory_space<vmem>>, vector<8x768xf32>,
    %c0_194 = arith.constant 0 : index
    %c146_195 = arith.constant 146 : index
    %125 = vector.load %arg14[%c0_194, %c146_195] : memref<8x1024xf32, #tpu.memory_space<vmem>>, vector<8x768xf32>
    %c56_196 = arith.constant 56 : index
    %c0_197 = arith.constant 0 : index
    %126 = vector.load %arg16[%c56_196, %c0_197] : memref<72x768xf32, #tpu.memory_space<vmem>>, vector<8x768xf32>
    tpu.vector_store %arg16[%c56_196, %c0_197], %125 {strides = array<i32>} : memref<72x768xf32, #tpu.memory_space<vmem>>, vector<8x768xf32>,
    %c0_198 = arith.constant 0 : index
    %c147_199 = arith.constant 147 : index
    %127 = vector.load %arg14[%c0_198, %c147_199] : memref<8x1024xf32, #tpu.memory_space<vmem>>, vector<8x768xf32>
    %c64_200 = arith.constant 64 : index
    %c0_201 = arith.constant 0 : index
    %128 = vector.load %arg16[%c64_200, %c0_201] : memref<72x768xf32, #tpu.memory_space<vmem>>, vector<8x768xf32>
    tpu.vector_store %arg16[%c64_200, %c0_201], %127 {strides = array<i32>} : memref<72x768xf32, #tpu.memory_space<vmem>>, vector<8x768xf32>,
    %c0_202 = arith.constant 0 : index
    %c0_203 = arith.constant 0 : index
    %129 = vector.load %arg4[%c0_202, %c0_203] : memref<8x72xbf16, #tpu.memory_space<vmem>>, vector<8x72xbf16>
    %c0_204 = arith.constant 0 : index
    %c0_205 = arith.constant 0 : index
    %130 = vector.load %arg16[%c0_204, %c0_205] : memref<72x768xf32, #tpu.memory_space<vmem>>, vector<72x768xf32>
    %131 = arith.truncf %130 : vector<72x768xf32> to vector<72x768xbf16>
    %cst_206 = arith.constant dense<0.000000e+00> : vector<8x768xf32>
    %132 = tpu.matmul %129, %131, %cst_206 {dimension_numbers = #tpu.dot_dimension_numbers<[1], [0], [0], [1], [0, 0, 1, 1], [], []>} : vector<8x72xbf16>, vector<72x768xbf16>, vector<8x768xf32> -> vector<8x768xf32>
    %c0_207 = arith.constant 0 : index
    %c109_208 = arith.constant 109 : index
    %133 = vector.load %arg15[%c0_207, %c109_208] : memref<8x1024xf32, #tpu.memory_space<vmem>>, vector<8x768xf32>
    %c0_209 = arith.constant 0 : index
    %c0_210 = arith.constant 0 : index
    %134 = vector.load %arg16[%c0_209, %c0_210] : memref<72x768xf32, #tpu.memory_space<vmem>>, vector<8x768xf32>
    tpu.vector_store %arg16[%c0_209, %c0_210], %133 {strides = array<i32>} : memref<72x768xf32, #tpu.memory_space<vmem>>, vector<8x768xf32>,
    %c0_211 = arith.constant 0 : index
    %c110_212 = arith.constant 110 : index
    %135 = vector.load %arg15[%c0_211, %c110_212] : memref<8x1024xf32, #tpu.memory_space<vmem>>, vector<8x768xf32>
    %c8_213 = arith.constant 8 : index
    %c0_214 = arith.constant 0 : index
    %136 = vector.load %arg16[%c8_213, %c0_214] : memref<72x768xf32, #tpu.memory_space<vmem>>, vector<8x768xf32>
    tpu.vector_store %arg16[%c8_213, %c0_214], %135 {strides = array<i32>} : memref<72x768xf32, #tpu.memory_space<vmem>>, vector<8x768xf32>,
    %c0_215 = arith.constant 0 : index
    %c111_216 = arith.constant 111 : index
    %137 = vector.load %arg15[%c0_215, %c111_216] : memref<8x1024xf32, #tpu.memory_space<vmem>>, vector<8x768xf32>
    %c16_217 = arith.constant 16 : index
    %c0_218 = arith.constant 0 : index
    %138 = vector.load %arg16[%c16_217, %c0_218] : memref<72x768xf32, #tpu.memory_space<vmem>>, vector<8x768xf32>
    tpu.vector_store %arg16[%c16_217, %c0_218], %137 {strides = array<i32>} : memref<72x768xf32, #tpu.memory_space<vmem>>, vector<8x768xf32>,
    %c0_219 = arith.constant 0 : index
    %c127_220 = arith.constant 127 : index
    %139 = vector.load %arg15[%c0_219, %c127_220] : memref<8x1024xf32, #tpu.memory_space<vmem>>, vector<8x768xf32>
    %c24_221 = arith.constant 24 : index
    %c0_222 = arith.constant 0 : index
    %140 = vector.load %arg16[%c24_221, %c0_222] : memref<72x768xf32, #tpu.memory_space<vmem>>, vector<8x768xf32>
    tpu.vector_store %arg16[%c24_221, %c0_222], %139 {strides = array<i32>} : memref<72x768xf32, #tpu.memory_space<vmem>>, vector<8x768xf32>,
    %c0_223 = arith.constant 0 : index
    %c128_224 = arith.constant 128 : index
    %141 = vector.load %arg15[%c0_223, %c128_224] : memref<8x1024xf32, #tpu.memory_space<vmem>>, vector<8x768xf32>
    %c32_225 = arith.constant 32 : index
    %c0_226 = arith.constant 0 : index
    %142 = vector.load %arg16[%c32_225, %c0_226] : memref<72x768xf32, #tpu.memory_space<vmem>>, vector<8x768xf32>
    tpu.vector_store %arg16[%c32_225, %c0_226], %141 {strides = array<i32>} : memref<72x768xf32, #tpu.memory_space<vmem>>, vector<8x768xf32>,
    %c0_227 = arith.constant 0 : index
    %c129_228 = arith.constant 129 : index
    %143 = vector.load %arg15[%c0_227, %c129_228] : memref<8x1024xf32, #tpu.memory_space<vmem>>, vector<8x768xf32>
    %c40_229 = arith.constant 40 : index
    %c0_230 = arith.constant 0 : index
    %144 = vector.load %arg16[%c40_229, %c0_230] : memref<72x768xf32, #tpu.memory_space<vmem>>, vector<8x768xf32>
    tpu.vector_store %arg16[%c40_229, %c0_230], %143 {strides = array<i32>} : memref<72x768xf32, #tpu.memory_space<vmem>>, vector<8x768xf32>,
    %c0_231 = arith.constant 0 : index
    %c145_232 = arith.constant 145 : index
    %145 = vector.load %arg15[%c0_231, %c145_232] : memref<8x1024xf32, #tpu.memory_space<vmem>>, vector<8x768xf32>
    %c48_233 = arith.constant 48 : index
    %c0_234 = arith.constant 0 : index
    %146 = vector.load %arg16[%c48_233, %c0_234] : memref<72x768xf32, #tpu.memory_space<vmem>>, vector<8x768xf32>
    tpu.vector_store %arg16[%c48_233, %c0_234], %145 {strides = array<i32>} : memref<72x768xf32, #tpu.memory_space<vmem>>, vector<8x768xf32>,
    %c0_235 = arith.constant 0 : index
    %c146_236 = arith.constant 146 : index
    %147 = vector.load %arg15[%c0_235, %c146_236] : memref<8x1024xf32, #tpu.memory_space<vmem>>, vector<8x768xf32>
    %c56_237 = arith.constant 56 : index
    %c0_238 = arith.constant 0 : index
    %148 = vector.load %arg16[%c56_237, %c0_238] : memref<72x768xf32, #tpu.memory_space<vmem>>, vector<8x768xf32>
    tpu.vector_store %arg16[%c56_237, %c0_238], %147 {strides = array<i32>} : memref<72x768xf32, #tpu.memory_space<vmem>>, vector<8x768xf32>,
    %c0_239 = arith.constant 0 : index
    %c147_240 = arith.constant 147 : index
    %149 = vector.load %arg15[%c0_239, %c147_240] : memref<8x1024xf32, #tpu.memory_space<vmem>>, vector<8x768xf32>
    %c64_241 = arith.constant 64 : index
    %c0_242 = arith.constant 0 : index
    %150 = vector.load %arg16[%c64_241, %c0_242] : memref<72x768xf32, #tpu.memory_space<vmem>>, vector<8x768xf32>
    tpu.vector_store %arg16[%c64_241, %c0_242], %149 {strides = array<i32>} : memref<72x768xf32, #tpu.memory_space<vmem>>, vector<8x768xf32>,
    %c0_243 = arith.constant 0 : index
    %c0_244 = arith.constant 0 : index
    %151 = vector.load %arg5[%c0_243, %c0_244] : memref<8x72xbf16, #tpu.memory_space<vmem>>, vector<8x72xbf16>
    %c0_245 = arith.constant 0 : index
    %c0_246 = arith.constant 0 : index
    %152 = vector.load %arg16[%c0_245, %c0_246] : memref<72x768xf32, #tpu.memory_space<vmem>>, vector<72x768xf32>
    %153 = arith.truncf %152 : vector<72x768xf32> to vector<72x768xbf16>
    %cst_247 = arith.constant dense<0.000000e+00> : vector<8x768xf32>
    %154 = tpu.matmul %151, %153, %cst_247 {dimension_numbers = #tpu.dot_dimension_numbers<[1], [0], [0], [1], [0, 0, 1, 1], [], []>} : vector<8x72xbf16>, vector<72x768xbf16>, vector<8x768xf32> -> vector<8x768xf32>
    %c0_248 = arith.constant 0 : index
    %c0_249 = arith.constant 0 : index
    %155 = vector.load %arg17[%c0_248, %c0_249] : memref<8x768xf32, #tpu.memory_space<vmem>>, vector<8x768xf32>
    %156 = arith.addf %155, %132 : vector<8x768xf32>
    %cst_250 = arith.constant 0.000000e+00 : f32
    %157 = vector.broadcast %cst_250 : f32 to vector<8x768xf32>
    %158 = arith.maximumf %154, %157 : vector<8x768xf32>
    %159 = arith.subf %156, %158 : vector<8x768xf32>
    %160 = math.tanh %159 : vector<8x768xf32>
    %161 = arith.mulf %4, %160 : vector<8x768xf32>
    %c0_251 = arith.constant 0 : index
    %c128_252 = arith.constant 128 : index
    %162 = vector.load %arg14[%c0_251, %c128_252] : memref<8x1024xf32, #tpu.memory_space<vmem>>, vector<8x768xf32>
    tpu.vector_store %arg14[%c0_251, %c128_252], %161 {strides = array<i32>} : memref<8x1024xf32, #tpu.memory_space<vmem>>, vector<8x768xf32>,
    %c0_253 = arith.constant 0 : index
    %c109_254 = arith.constant 109 : index
    %163 = vector.load %arg14[%c0_253, %c109_254] : memref<8x1024xf32, #tpu.memory_space<vmem>>, vector<8x768xf32>
    %c0_255 = arith.constant 0 : index
    %c0_256 = arith.constant 0 : index
    %164 = vector.load %arg16[%c0_255, %c0_256] : memref<72x768xf32, #tpu.memory_space<vmem>>, vector<8x768xf32>
    tpu.vector_store %arg16[%c0_255, %c0_256], %163 {strides = array<i32>} : memref<72x768xf32, #tpu.memory_space<vmem>>, vector<8x768xf32>,
    %c0_257 = arith.constant 0 : index
    %c110_258 = arith.constant 110 : index
    %165 = vector.load %arg14[%c0_257, %c110_258] : memref<8x1024xf32, #tpu.memory_space<vmem>>, vector<8x768xf32>
    %c8_259 = arith.constant 8 : index
    %c0_260 = arith.constant 0 : index
    %166 = vector.load %arg16[%c8_259, %c0_260] : memref<72x768xf32, #tpu.memory_space<vmem>>, vector<8x768xf32>
    tpu.vector_store %arg16[%c8_259, %c0_260], %165 {strides = array<i32>} : memref<72x768xf32, #tpu.memory_space<vmem>>, vector<8x768xf32>,
    %c0_261 = arith.constant 0 : index
    %c111_262 = arith.constant 111 : index
    %167 = vector.load %arg14[%c0_261, %c111_262] : memref<8x1024xf32, #tpu.memory_space<vmem>>, vector<8x768xf32>
    %c16_263 = arith.constant 16 : index
    %c0_264 = arith.constant 0 : index
    %168 = vector.load %arg16[%c16_263, %c0_264] : memref<72x768xf32, #tpu.memory_space<vmem>>, vector<8x768xf32>
    tpu.vector_store %arg16[%c16_263, %c0_264], %167 {strides = array<i32>} : memref<72x768xf32, #tpu.memory_space<vmem>>, vector<8x768xf32>,
    %c0_265 = arith.constant 0 : index
    %c127_266 = arith.constant 127 : index
    %169 = vector.load %arg14[%c0_265, %c127_266] : memref<8x1024xf32, #tpu.memory_space<vmem>>, vector<8x768xf32>
    %c24_267 = arith.constant 24 : index
    %c0_268 = arith.constant 0 : index
    %170 = vector.load %arg16[%c24_267, %c0_268] : memref<72x768xf32, #tpu.memory_space<vmem>>, vector<8x768xf32>
    tpu.vector_store %arg16[%c24_267, %c0_268], %169 {strides = array<i32>} : memref<72x768xf32, #tpu.memory_space<vmem>>, vector<8x768xf32>,
    %c0_269 = arith.constant 0 : index
    %c128_270 = arith.constant 128 : index
    %171 = vector.load %arg14[%c0_269, %c128_270] : memref<8x1024xf32, #tpu.memory_space<vmem>>, vector<8x768xf32>
    %c32_271 = arith.constant 32 : index
    %c0_272 = arith.constant 0 : index
    %172 = vector.load %arg16[%c32_271, %c0_272] : memref<72x768xf32, #tpu.memory_space<vmem>>, vector<8x768xf32>
    tpu.vector_store %arg16[%c32_271, %c0_272], %171 {strides = array<i32>} : memref<72x768xf32, #tpu.memory_space<vmem>>, vector<8x768xf32>,
    %c0_273 = arith.constant 0 : index
    %c129_274 = arith.constant 129 : index
    %173 = vector.load %arg14[%c0_273, %c129_274] : memref<8x1024xf32, #tpu.memory_space<vmem>>, vector<8x768xf32>
    %c40_275 = arith.constant 40 : index
    %c0_276 = arith.constant 0 : index
    %174 = vector.load %arg16[%c40_275, %c0_276] : memref<72x768xf32, #tpu.memory_space<vmem>>, vector<8x768xf32>
    tpu.vector_store %arg16[%c40_275, %c0_276], %173 {strides = array<i32>} : memref<72x768xf32, #tpu.memory_space<vmem>>, vector<8x768xf32>,
    %c0_277 = arith.constant 0 : index
    %c145_278 = arith.constant 145 : index
    %175 = vector.load %arg14[%c0_277, %c145_278] : memref<8x1024xf32, #tpu.memory_space<vmem>>, vector<8x768xf32>
    %c48_279 = arith.constant 48 : index
    %c0_280 = arith.constant 0 : index
    %176 = vector.load %arg16[%c48_279, %c0_280] : memref<72x768xf32, #tpu.memory_space<vmem>>, vector<8x768xf32>
    tpu.vector_store %arg16[%c48_279, %c0_280], %175 {strides = array<i32>} : memref<72x768xf32, #tpu.memory_space<vmem>>, vector<8x768xf32>,
    %c0_281 = arith.constant 0 : index
    %c146_282 = arith.constant 146 : index
    %177 = vector.load %arg14[%c0_281, %c146_282] : memref<8x1024xf32, #tpu.memory_space<vmem>>, vector<8x768xf32>
    %c56_283 = arith.constant 56 : index
    %c0_284 = arith.constant 0 : index
    %178 = vector.load %arg16[%c56_283, %c0_284] : memref<72x768xf32, #tpu.memory_space<vmem>>, vector<8x768xf32>
    tpu.vector_store %arg16[%c56_283, %c0_284], %177 {strides = array<i32>} : memref<72x768xf32, #tpu.memory_space<vmem>>, vector<8x768xf32>,
    %c0_285 = arith.constant 0 : index
    %c147_286 = arith.constant 147 : index
    %179 = vector.load %arg14[%c0_285, %c147_286] : memref<8x1024xf32, #tpu.memory_space<vmem>>, vector<8x768xf32>
    %c64_287 = arith.constant 64 : index
    %c0_288 = arith.constant 0 : index
    %180 = vector.load %arg16[%c64_287, %c0_288] : memref<72x768xf32, #tpu.memory_space<vmem>>, vector<8x768xf32>
    tpu.vector_store %arg16[%c64_287, %c0_288], %179 {strides = array<i32>} : memref<72x768xf32, #tpu.memory_space<vmem>>, vector<8x768xf32>,
    %c0_289 = arith.constant 0 : index
    %c0_290 = arith.constant 0 : index
    %181 = vector.load %arg6[%c0_289, %c0_290] : memref<8x72xbf16, #tpu.memory_space<vmem>>, vector<8x72xbf16>
    %c0_291 = arith.constant 0 : index
    %c0_292 = arith.constant 0 : index
    %182 = vector.load %arg16[%c0_291, %c0_292] : memref<72x768xf32, #tpu.memory_space<vmem>>, vector<72x768xf32>
    %183 = arith.truncf %182 : vector<72x768xf32> to vector<72x768xbf16>
    %cst_293 = arith.constant dense<0.000000e+00> : vector<8x768xf32>
    %184 = tpu.matmul %181, %183, %cst_293 {dimension_numbers = #tpu.dot_dimension_numbers<[1], [0], [0], [1], [0, 0, 1, 1], [], []>} : vector<8x72xbf16>, vector<72x768xbf16>, vector<8x768xf32> -> vector<8x768xf32>
    %185 = vector.broadcast %6 : vector<8x1xf32> to vector<8x768xf32>
    %186 = arith.addf %184, %185 : vector<8x768xf32>
    %187 = math.tanh %186 : vector<8x768xf32>
    %188 = arith.mulf %4, %187 : vector<8x768xf32>
    %c0_294 = arith.constant 0 : index
    %c128_295 = arith.constant 128 : index
    %189 = vector.load %arg15[%c0_294, %c128_295] : memref<8x1024xf32, #tpu.memory_space<vmem>>, vector<8x768xf32>
    tpu.vector_store %arg15[%c0_294, %c128_295], %188 {strides = array<i32>} : memref<8x1024xf32, #tpu.memory_space<vmem>>, vector<8x768xf32>,
    %c2_i32 = arith.constant 2 : i32
    %c0_296 = arith.constant 0 : index
    %c109_297 = arith.constant 109 : index
    %190 = vector.load %arg14[%c0_296, %c109_297] : memref<8x1024xf32, #tpu.memory_space<vmem>>, vector<8x768xf32>
    %c0_298 = arith.constant 0 : index
    %c0_299 = arith.constant 0 : index
    %191 = vector.load %arg16[%c0_298, %c0_299] : memref<72x768xf32, #tpu.memory_space<vmem>>, vector<8x768xf32>
    tpu.vector_store %arg16[%c0_298, %c0_299], %190 {strides = array<i32>} : memref<72x768xf32, #tpu.memory_space<vmem>>, vector<8x768xf32>,
    %c0_300 = arith.constant 0 : index
    %c110_301 = arith.constant 110 : index
    %192 = vector.load %arg14[%c0_300, %c110_301] : memref<8x1024xf32, #tpu.memory_space<vmem>>, vector<8x768xf32>
    %c8_302 = arith.constant 8 : index
    %c0_303 = arith.constant 0 : index
    %193 = vector.load %arg16[%c8_302, %c0_303] : memref<72x768xf32, #tpu.memory_space<vmem>>, vector<8x768xf32>
    tpu.vector_store %arg16[%c8_302, %c0_303], %192 {strides = array<i32>} : memref<72x768xf32, #tpu.memory_space<vmem>>, vector<8x768xf32>,
    %c0_304 = arith.constant 0 : index
    %c111_305 = arith.constant 111 : index
    %194 = vector.load %arg14[%c0_304, %c111_305] : memref<8x1024xf32, #tpu.memory_space<vmem>>, vector<8x768xf32>
    %c16_306 = arith.constant 16 : index
    %c0_307 = arith.constant 0 : index
    %195 = vector.load %arg16[%c16_306, %c0_307] : memref<72x768xf32, #tpu.memory_space<vmem>>, vector<8x768xf32>
    tpu.vector_store %arg16[%c16_306, %c0_307], %194 {strides = array<i32>} : memref<72x768xf32, #tpu.memory_space<vmem>>, vector<8x768xf32>,
    %c0_308 = arith.constant 0 : index
    %c127_309 = arith.constant 127 : index
    %196 = vector.load %arg14[%c0_308, %c127_309] : memref<8x1024xf32, #tpu.memory_space<vmem>>, vector<8x768xf32>
    %c24_310 = arith.constant 24 : index
    %c0_311 = arith.constant 0 : index
    %197 = vector.load %arg16[%c24_310, %c0_311] : memref<72x768xf32, #tpu.memory_space<vmem>>, vector<8x768xf32>
    tpu.vector_store %arg16[%c24_310, %c0_311], %196 {strides = array<i32>} : memref<72x768xf32, #tpu.memory_space<vmem>>, vector<8x768xf32>,
    %c0_312 = arith.constant 0 : index
    %c128_313 = arith.constant 128 : index
    %198 = vector.load %arg14[%c0_312, %c128_313] : memref<8x1024xf32, #tpu.memory_space<vmem>>, vector<8x768xf32>
    %c32_314 = arith.constant 32 : index
    %c0_315 = arith.constant 0 : index
    %199 = vector.load %arg16[%c32_314, %c0_315] : memref<72x768xf32, #tpu.memory_space<vmem>>, vector<8x768xf32>
    tpu.vector_store %arg16[%c32_314, %c0_315], %198 {strides = array<i32>} : memref<72x768xf32, #tpu.memory_space<vmem>>, vector<8x768xf32>,
    %c0_316 = arith.constant 0 : index
    %c129_317 = arith.constant 129 : index
    %200 = vector.load %arg14[%c0_316, %c129_317] : memref<8x1024xf32, #tpu.memory_space<vmem>>, vector<8x768xf32>
    %c40_318 = arith.constant 40 : index
    %c0_319 = arith.constant 0 : index
    %201 = vector.load %arg16[%c40_318, %c0_319] : memref<72x768xf32, #tpu.memory_space<vmem>>, vector<8x768xf32>
    tpu.vector_store %arg16[%c40_318, %c0_319], %200 {strides = array<i32>} : memref<72x768xf32, #tpu.memory_space<vmem>>, vector<8x768xf32>,
    %c0_320 = arith.constant 0 : index
    %c145_321 = arith.constant 145 : index
    %202 = vector.load %arg14[%c0_320, %c145_321] : memref<8x1024xf32, #tpu.memory_space<vmem>>, vector<8x768xf32>
    %c48_322 = arith.constant 48 : index
    %c0_323 = arith.constant 0 : index
    %203 = vector.load %arg16[%c48_322, %c0_323] : memref<72x768xf32, #tpu.memory_space<vmem>>, vector<8x768xf32>
    tpu.vector_store %arg16[%c48_322, %c0_323], %202 {strides = array<i32>} : memref<72x768xf32, #tpu.memory_space<vmem>>, vector<8x768xf32>,
    %c0_324 = arith.constant 0 : index
    %c146_325 = arith.constant 146 : index
    %204 = vector.load %arg14[%c0_324, %c146_325] : memref<8x1024xf32, #tpu.memory_space<vmem>>, vector<8x768xf32>
    %c56_326 = arith.constant 56 : index
    %c0_327 = arith.constant 0 : index
    %205 = vector.load %arg16[%c56_326, %c0_327] : memref<72x768xf32, #tpu.memory_space<vmem>>, vector<8x768xf32>
    tpu.vector_store %arg16[%c56_326, %c0_327], %204 {strides = array<i32>} : memref<72x768xf32, #tpu.memory_space<vmem>>, vector<8x768xf32>,
    %c0_328 = arith.constant 0 : index
    %c147_329 = arith.constant 147 : index
    %206 = vector.load %arg14[%c0_328, %c147_329] : memref<8x1024xf32, #tpu.memory_space<vmem>>, vector<8x768xf32>
    %c64_330 = arith.constant 64 : index
    %c0_331 = arith.constant 0 : index
    %207 = vector.load %arg16[%c64_330, %c0_331] : memref<72x768xf32, #tpu.memory_space<vmem>>, vector<8x768xf32>
    tpu.vector_store %arg16[%c64_330, %c0_331], %206 {strides = array<i32>} : memref<72x768xf32, #tpu.memory_space<vmem>>, vector<8x768xf32>,
    %c0_332 = arith.constant 0 : index
    %c0_333 = arith.constant 0 : index
    %208 = vector.load %arg4[%c0_332, %c0_333] : memref<8x72xbf16, #tpu.memory_space<vmem>>, vector<8x72xbf16>
    %c0_334 = arith.constant 0 : index
    %c0_335 = arith.constant 0 : index
    %209 = vector.load %arg16[%c0_334, %c0_335] : memref<72x768xf32, #tpu.memory_space<vmem>>, vector<72x768xf32>
    %210 = arith.truncf %209 : vector<72x768xf32> to vector<72x768xbf16>
    %cst_336 = arith.constant dense<0.000000e+00> : vector<8x768xf32>
    %211 = tpu.matmul %208, %210, %cst_336 {dimension_numbers = #tpu.dot_dimension_numbers<[1], [0], [0], [1], [0, 0, 1, 1], [], []>} : vector<8x72xbf16>, vector<72x768xbf16>, vector<8x768xf32> -> vector<8x768xf32>
    %c0_337 = arith.constant 0 : index
    %c109_338 = arith.constant 109 : index
    %212 = vector.load %arg15[%c0_337, %c109_338] : memref<8x1024xf32, #tpu.memory_space<vmem>>, vector<8x768xf32>
    %c0_339 = arith.constant 0 : index
    %c0_340 = arith.constant 0 : index
    %213 = vector.load %arg16[%c0_339, %c0_340] : memref<72x768xf32, #tpu.memory_space<vmem>>, vector<8x768xf32>
    tpu.vector_store %arg16[%c0_339, %c0_340], %212 {strides = array<i32>} : memref<72x768xf32, #tpu.memory_space<vmem>>, vector<8x768xf32>,
    %c0_341 = arith.constant 0 : index
    %c110_342 = arith.constant 110 : index
    %214 = vector.load %arg15[%c0_341, %c110_342] : memref<8x1024xf32, #tpu.memory_space<vmem>>, vector<8x768xf32>
    %c8_343 = arith.constant 8 : index
    %c0_344 = arith.constant 0 : index
    %215 = vector.load %arg16[%c8_343, %c0_344] : memref<72x768xf32, #tpu.memory_space<vmem>>, vector<8x768xf32>
    tpu.vector_store %arg16[%c8_343, %c0_344], %214 {strides = array<i32>} : memref<72x768xf32, #tpu.memory_space<vmem>>, vector<8x768xf32>,
    %c0_345 = arith.constant 0 : index
    %c111_346 = arith.constant 111 : index
    %216 = vector.load %arg15[%c0_345, %c111_346] : memref<8x1024xf32, #tpu.memory_space<vmem>>, vector<8x768xf32>
    %c16_347 = arith.constant 16 : index
    %c0_348 = arith.constant 0 : index
    %217 = vector.load %arg16[%c16_347, %c0_348] : memref<72x768xf32, #tpu.memory_space<vmem>>, vector<8x768xf32>
    tpu.vector_store %arg16[%c16_347, %c0_348], %216 {strides = array<i32>} : memref<72x768xf32, #tpu.memory_space<vmem>>, vector<8x768xf32>,
    %c0_349 = arith.constant 0 : index
    %c127_350 = arith.constant 127 : index
    %218 = vector.load %arg15[%c0_349, %c127_350] : memref<8x1024xf32, #tpu.memory_space<vmem>>, vector<8x768xf32>
    %c24_351 = arith.constant 24 : index
    %c0_352 = arith.constant 0 : index
    %219 = vector.load %arg16[%c24_351, %c0_352] : memref<72x768xf32, #tpu.memory_space<vmem>>, vector<8x768xf32>
    tpu.vector_store %arg16[%c24_351, %c0_352], %218 {strides = array<i32>} : memref<72x768xf32, #tpu.memory_space<vmem>>, vector<8x768xf32>,
    %c0_353 = arith.constant 0 : index
    %c128_354 = arith.constant 128 : index
    %220 = vector.load %arg15[%c0_353, %c128_354] : memref<8x1024xf32, #tpu.memory_space<vmem>>, vector<8x768xf32>
    %c32_355 = arith.constant 32 : index
    %c0_356 = arith.constant 0 : index
    %221 = vector.load %arg16[%c32_355, %c0_356] : memref<72x768xf32, #tpu.memory_space<vmem>>, vector<8x768xf32>
    tpu.vector_store %arg16[%c32_355, %c0_356], %220 {strides = array<i32>} : memref<72x768xf32, #tpu.memory_space<vmem>>, vector<8x768xf32>,
    %c0_357 = arith.constant 0 : index
    %c129_358 = arith.constant 129 : index
    %222 = vector.load %arg15[%c0_357, %c129_358] : memref<8x1024xf32, #tpu.memory_space<vmem>>, vector<8x768xf32>
    %c40_359 = arith.constant 40 : index
    %c0_360 = arith.constant 0 : index
    %223 = vector.load %arg16[%c40_359, %c0_360] : memref<72x768xf32, #tpu.memory_space<vmem>>, vector<8x768xf32>
    tpu.vector_store %arg16[%c40_359, %c0_360], %222 {strides = array<i32>} : memref<72x768xf32, #tpu.memory_space<vmem>>, vector<8x768xf32>,
    %c0_361 = arith.constant 0 : index
    %c145_362 = arith.constant 145 : index
    %224 = vector.load %arg15[%c0_361, %c145_362] : memref<8x1024xf32, #tpu.memory_space<vmem>>, vector<8x768xf32>
    %c48_363 = arith.constant 48 : index
    %c0_364 = arith.constant 0 : index
    %225 = vector.load %arg16[%c48_363, %c0_364] : memref<72x768xf32, #tpu.memory_space<vmem>>, vector<8x768xf32>
    tpu.vector_store %arg16[%c48_363, %c0_364], %224 {strides = array<i32>} : memref<72x768xf32, #tpu.memory_space<vmem>>, vector<8x768xf32>,
    %c0_365 = arith.constant 0 : index
    %c146_366 = arith.constant 146 : index
    %226 = vector.load %arg15[%c0_365, %c146_366] : memref<8x1024xf32, #tpu.memory_space<vmem>>, vector<8x768xf32>
    %c56_367 = arith.constant 56 : index
    %c0_368 = arith.constant 0 : index
    %227 = vector.load %arg16[%c56_367, %c0_368] : memref<72x768xf32, #tpu.memory_space<vmem>>, vector<8x768xf32>
    tpu.vector_store %arg16[%c56_367, %c0_368], %226 {strides = array<i32>} : memref<72x768xf32, #tpu.memory_space<vmem>>, vector<8x768xf32>,
    %c0_369 = arith.constant 0 : index
    %c147_370 = arith.constant 147 : index
    %228 = vector.load %arg15[%c0_369, %c147_370] : memref<8x1024xf32, #tpu.memory_space<vmem>>, vector<8x768xf32>
    %c64_371 = arith.constant 64 : index
    %c0_372 = arith.constant 0 : index
    %229 = vector.load %arg16[%c64_371, %c0_372] : memref<72x768xf32, #tpu.memory_space<vmem>>, vector<8x768xf32>
    tpu.vector_store %arg16[%c64_371, %c0_372], %228 {strides = array<i32>} : memref<72x768xf32, #tpu.memory_space<vmem>>, vector<8x768xf32>,
    %c0_373 = arith.constant 0 : index
    %c0_374 = arith.constant 0 : index
    %230 = vector.load %arg5[%c0_373, %c0_374] : memref<8x72xbf16, #tpu.memory_space<vmem>>, vector<8x72xbf16>
    %c0_375 = arith.constant 0 : index
    %c0_376 = arith.constant 0 : index
    %231 = vector.load %arg16[%c0_375, %c0_376] : memref<72x768xf32, #tpu.memory_space<vmem>>, vector<72x768xf32>
    %232 = arith.truncf %231 : vector<72x768xf32> to vector<72x768xbf16>
    %cst_377 = arith.constant dense<0.000000e+00> : vector<8x768xf32>
    %233 = tpu.matmul %230, %232, %cst_377 {dimension_numbers = #tpu.dot_dimension_numbers<[1], [0], [0], [1], [0, 0, 1, 1], [], []>} : vector<8x72xbf16>, vector<72x768xbf16>, vector<8x768xf32> -> vector<8x768xf32>
    %c0_378 = arith.constant 0 : index
    %c0_379 = arith.constant 0 : index
    %234 = vector.load %arg17[%c0_378, %c0_379] : memref<8x768xf32, #tpu.memory_space<vmem>>, vector<8x768xf32>
    %235 = arith.addf %234, %211 : vector<8x768xf32>
    %cst_380 = arith.constant 0.000000e+00 : f32
    %236 = vector.broadcast %cst_380 : f32 to vector<8x768xf32>
    %237 = arith.maximumf %233, %236 : vector<8x768xf32>
    %238 = arith.subf %235, %237 : vector<8x768xf32>
    %239 = math.tanh %238 : vector<8x768xf32>
    %240 = arith.mulf %4, %239 : vector<8x768xf32>
    %c0_381 = arith.constant 0 : index
    %c128_382 = arith.constant 128 : index
    %241 = vector.load %arg14[%c0_381, %c128_382] : memref<8x1024xf32, #tpu.memory_space<vmem>>, vector<8x768xf32>
    tpu.vector_store %arg14[%c0_381, %c128_382], %240 {strides = array<i32>} : memref<8x1024xf32, #tpu.memory_space<vmem>>, vector<8x768xf32>,
    %c0_383 = arith.constant 0 : index
    %c109_384 = arith.constant 109 : index
    %242 = vector.load %arg14[%c0_383, %c109_384] : memref<8x1024xf32, #tpu.memory_space<vmem>>, vector<8x768xf32>
    %c0_385 = arith.constant 0 : index
    %c0_386 = arith.constant 0 : index
    %243 = vector.load %arg16[%c0_385, %c0_386] : memref<72x768xf32, #tpu.memory_space<vmem>>, vector<8x768xf32>
    tpu.vector_store %arg16[%c0_385, %c0_386], %242 {strides = array<i32>} : memref<72x768xf32, #tpu.memory_space<vmem>>, vector<8x768xf32>,
    %c0_387 = arith.constant 0 : index
    %c110_388 = arith.constant 110 : index
    %244 = vector.load %arg14[%c0_387, %c110_388] : memref<8x1024xf32, #tpu.memory_space<vmem>>, vector<8x768xf32>
    %c8_389 = arith.constant 8 : index
    %c0_390 = arith.constant 0 : index
    %245 = vector.load %arg16[%c8_389, %c0_390] : memref<72x768xf32, #tpu.memory_space<vmem>>, vector<8x768xf32>
    tpu.vector_store %arg16[%c8_389, %c0_390], %244 {strides = array<i32>} : memref<72x768xf32, #tpu.memory_space<vmem>>, vector<8x768xf32>,
    %c0_391 = arith.constant 0 : index
    %c111_392 = arith.constant 111 : index
    %246 = vector.load %arg14[%c0_391, %c111_392] : memref<8x1024xf32, #tpu.memory_space<vmem>>, vector<8x768xf32>
    %c16_393 = arith.constant 16 : index
    %c0_394 = arith.constant 0 : index
    %247 = vector.load %arg16[%c16_393, %c0_394] : memref<72x768xf32, #tpu.memory_space<vmem>>, vector<8x768xf32>
    tpu.vector_store %arg16[%c16_393, %c0_394], %246 {strides = array<i32>} : memref<72x768xf32, #tpu.memory_space<vmem>>, vector<8x768xf32>,
    %c0_395 = arith.constant 0 : index
    %c127_396 = arith.constant 127 : index
    %248 = vector.load %arg14[%c0_395, %c127_396] : memref<8x1024xf32, #tpu.memory_space<vmem>>, vector<8x768xf32>
    %c24_397 = arith.constant 24 : index
    %c0_398 = arith.constant 0 : index
    %249 = vector.load %arg16[%c24_397, %c0_398] : memref<72x768xf32, #tpu.memory_space<vmem>>, vector<8x768xf32>
    tpu.vector_store %arg16[%c24_397, %c0_398], %248 {strides = array<i32>} : memref<72x768xf32, #tpu.memory_space<vmem>>, vector<8x768xf32>,
    %c0_399 = arith.constant 0 : index
    %c128_400 = arith.constant 128 : index
    %250 = vector.load %arg14[%c0_399, %c128_400] : memref<8x1024xf32, #tpu.memory_space<vmem>>, vector<8x768xf32>
    %c32_401 = arith.constant 32 : index
    %c0_402 = arith.constant 0 : index
    %251 = vector.load %arg16[%c32_401, %c0_402] : memref<72x768xf32, #tpu.memory_space<vmem>>, vector<8x768xf32>
    tpu.vector_store %arg16[%c32_401, %c0_402], %250 {strides = array<i32>} : memref<72x768xf32, #tpu.memory_space<vmem>>, vector<8x768xf32>,
    %c0_403 = arith.constant 0 : index
    %c129_404 = arith.constant 129 : index
    %252 = vector.load %arg14[%c0_403, %c129_404] : memref<8x1024xf32, #tpu.memory_space<vmem>>, vector<8x768xf32>
    %c40_405 = arith.constant 40 : index
    %c0_406 = arith.constant 0 : index
    %253 = vector.load %arg16[%c40_405, %c0_406] : memref<72x768xf32, #tpu.memory_space<vmem>>, vector<8x768xf32>
    tpu.vector_store %arg16[%c40_405, %c0_406], %252 {strides = array<i32>} : memref<72x768xf32, #tpu.memory_space<vmem>>, vector<8x768xf32>,
    %c0_407 = arith.constant 0 : index
    %c145_408 = arith.constant 145 : index
    %254 = vector.load %arg14[%c0_407, %c145_408] : memref<8x1024xf32, #tpu.memory_space<vmem>>, vector<8x768xf32>
    %c48_409 = arith.constant 48 : index
    %c0_410 = arith.constant 0 : index
    %255 = vector.load %arg16[%c48_409, %c0_410] : memref<72x768xf32, #tpu.memory_space<vmem>>, vector<8x768xf32>
    tpu.vector_store %arg16[%c48_409, %c0_410], %254 {strides = array<i32>} : memref<72x768xf32, #tpu.memory_space<vmem>>, vector<8x768xf32>,
    %c0_411 = arith.constant 0 : index
    %c146_412 = arith.constant 146 : index
    %256 = vector.load %arg14[%c0_411, %c146_412] : memref<8x1024xf32, #tpu.memory_space<vmem>>, vector<8x768xf32>
    %c56_413 = arith.constant 56 : index
    %c0_414 = arith.constant 0 : index
    %257 = vector.load %arg16[%c56_413, %c0_414] : memref<72x768xf32, #tpu.memory_space<vmem>>, vector<8x768xf32>
    tpu.vector_store %arg16[%c56_413, %c0_414], %256 {strides = array<i32>} : memref<72x768xf32, #tpu.memory_space<vmem>>, vector<8x768xf32>,
    %c0_415 = arith.constant 0 : index
    %c147_416 = arith.constant 147 : index
    %258 = vector.load %arg14[%c0_415, %c147_416] : memref<8x1024xf32, #tpu.memory_space<vmem>>, vector<8x768xf32>
    %c64_417 = arith.constant 64 : index
    %c0_418 = arith.constant 0 : index
    %259 = vector.load %arg16[%c64_417, %c0_418] : memref<72x768xf32, #tpu.memory_space<vmem>>, vector<8x768xf32>
    tpu.vector_store %arg16[%c64_417, %c0_418], %258 {strides = array<i32>} : memref<72x768xf32, #tpu.memory_space<vmem>>, vector<8x768xf32>,
    %c0_419 = arith.constant 0 : index
    %c0_420 = arith.constant 0 : index
    %260 = vector.load %arg6[%c0_419, %c0_420] : memref<8x72xbf16, #tpu.memory_space<vmem>>, vector<8x72xbf16>
    %c0_421 = arith.constant 0 : index
    %c0_422 = arith.constant 0 : index
    %261 = vector.load %arg16[%c0_421, %c0_422] : memref<72x768xf32, #tpu.memory_space<vmem>>, vector<72x768xf32>
    %262 = arith.truncf %261 : vector<72x768xf32> to vector<72x768xbf16>
    %cst_423 = arith.constant dense<0.000000e+00> : vector<8x768xf32>
    %263 = tpu.matmul %260, %262, %cst_423 {dimension_numbers = #tpu.dot_dimension_numbers<[1], [0], [0], [1], [0, 0, 1, 1], [], []>} : vector<8x72xbf16>, vector<72x768xbf16>, vector<8x768xf32> -> vector<8x768xf32>
    %264 = vector.broadcast %6 : vector<8x1xf32> to vector<8x768xf32>
    %265 = arith.addf %263, %264 : vector<8x768xf32>
    %266 = math.tanh %265 : vector<8x768xf32>
    %267 = arith.mulf %4, %266 : vector<8x768xf32>
    %c0_424 = arith.constant 0 : index
    %c128_425 = arith.constant 128 : index
    %268 = vector.load %arg15[%c0_424, %c128_425] : memref<8x1024xf32, #tpu.memory_space<vmem>>, vector<8x768xf32>
    tpu.vector_store %arg15[%c0_424, %c128_425], %267 {strides = array<i32>} : memref<8x1024xf32, #tpu.memory_space<vmem>>, vector<8x768xf32>,
    %c0_426 = arith.constant 0 : index
    %c0_427 = arith.constant 0 : index
    %269 = vector.load %arg10[%c0_426, %c0_427] : memref<1x32xf32, #tpu.memory_space<vmem>>, vector<1x32xf32>
    %c0_428 = arith.constant 0 : index
    %c0_429 = arith.constant 0 : index
    %270 = vector.load %arg12[%c0_428, %c0_429] : memref<1x6xf32, #tpu.memory_space<vmem>>, vector<1x6xf32>
    %c0_430 = arith.constant 0 : index
    %c0_431 = arith.constant 0 : index
    %271 = vector.load %arg11[%c0_430, %c0_431] : memref<32x6xf32, #tpu.memory_space<vmem>>, vector<32x6xf32>
    %c0_432 = arith.constant 0 : index
    %c128_433 = arith.constant 128 : index
    %272 = vector.load %arg14[%c0_432, %c128_433] : memref<8x1024xf32, #tpu.memory_space<vmem>>, vector<1x384xf32>
    %c0_434 = arith.constant 0 : index
    %c0_435 = arith.constant 0 : index
    %273 = vector.load %arg9[%c0_434, %c0_435] : memref<3072x32xf32, #tpu.memory_space<vmem>>, vector<384x32xf32>
    %cst_436 = arith.constant dense<0.000000e+00> : vector<1x32xf32>
    %274 = tpu.matmul %272, %273, %cst_436 {dimension_numbers = #tpu.dot_dimension_numbers<[1], [0], [0], [1], [0, 0, 1, 1], [], []>} : vector<1x384xf32>, vector<384x32xf32>, vector<1x32xf32> -> vector<1x32xf32>
    %275 = arith.addf %269, %274 : vector<1x32xf32>
    %c1 = arith.constant 1 : index
    %c128_437 = arith.constant 128 : index
    %276 = vector.load %arg14[%c1, %c128_437] : memref<8x1024xf32, #tpu.memory_space<vmem>>, vector<1x384xf32>
    %c384 = arith.constant 384 : index
    %c0_438 = arith.constant 0 : index
    %277 = vector.load %arg9[%c384, %c0_438] : memref<3072x32xf32, #tpu.memory_space<vmem>>, vector<384x32xf32>
    %cst_439 = arith.constant dense<0.000000e+00> : vector<1x32xf32>
    %278 = tpu.matmul %276, %277, %cst_439 {dimension_numbers = #tpu.dot_dimension_numbers<[1], [0], [0], [1], [0, 0, 1, 1], [], []>} : vector<1x384xf32>, vector<384x32xf32>, vector<1x32xf32> -> vector<1x32xf32>
    %279 = arith.addf %275, %278 : vector<1x32xf32>
    %c2 = arith.constant 2 : index
    %c128_440 = arith.constant 128 : index
    %280 = vector.load %arg14[%c2, %c128_440] : memref<8x1024xf32, #tpu.memory_space<vmem>>, vector<1x384xf32>
    %c768 = arith.constant 768 : index
    %c0_441 = arith.constant 0 : index
    %281 = vector.load %arg9[%c768, %c0_441] : memref<3072x32xf32, #tpu.memory_space<vmem>>, vector<384x32xf32>
    %cst_442 = arith.constant dense<0.000000e+00> : vector<1x32xf32>
    %282 = tpu.matmul %280, %281, %cst_442 {dimension_numbers = #tpu.dot_dimension_numbers<[1], [0], [0], [1], [0, 0, 1, 1], [], []>} : vector<1x384xf32>, vector<384x32xf32>, vector<1x32xf32> -> vector<1x32xf32>
    %283 = arith.addf %279, %282 : vector<1x32xf32>
    %c3 = arith.constant 3 : index
    %c128_443 = arith.constant 128 : index
    %284 = vector.load %arg14[%c3, %c128_443] : memref<8x1024xf32, #tpu.memory_space<vmem>>, vector<1x384xf32>
    %c1152 = arith.constant 1152 : index
    %c0_444 = arith.constant 0 : index
    %285 = vector.load %arg9[%c1152, %c0_444] : memref<3072x32xf32, #tpu.memory_space<vmem>>, vector<384x32xf32>
    %cst_445 = arith.constant dense<0.000000e+00> : vector<1x32xf32>
    %286 = tpu.matmul %284, %285, %cst_445 {dimension_numbers = #tpu.dot_dimension_numbers<[1], [0], [0], [1], [0, 0, 1, 1], [], []>} : vector<1x384xf32>, vector<384x32xf32>, vector<1x32xf32> -> vector<1x32xf32>
    %287 = arith.addf %283, %286 : vector<1x32xf32>
    %c4 = arith.constant 4 : index
    %c128_446 = arith.constant 128 : index
    %288 = vector.load %arg14[%c4, %c128_446] : memref<8x1024xf32, #tpu.memory_space<vmem>>, vector<1x384xf32>
    %c1536 = arith.constant 1536 : index
    %c0_447 = arith.constant 0 : index
    %289 = vector.load %arg9[%c1536, %c0_447] : memref<3072x32xf32, #tpu.memory_space<vmem>>, vector<384x32xf32>
    %cst_448 = arith.constant dense<0.000000e+00> : vector<1x32xf32>
    %290 = tpu.matmul %288, %289, %cst_448 {dimension_numbers = #tpu.dot_dimension_numbers<[1], [0], [0], [1], [0, 0, 1, 1], [], []>} : vector<1x384xf32>, vector<384x32xf32>, vector<1x32xf32> -> vector<1x32xf32>
    %291 = arith.addf %287, %290 : vector<1x32xf32>
    %c5 = arith.constant 5 : index
    %c128_449 = arith.constant 128 : index
    %292 = vector.load %arg14[%c5, %c128_449] : memref<8x1024xf32, #tpu.memory_space<vmem>>, vector<1x384xf32>
    %c1920 = arith.constant 1920 : index
    %c0_450 = arith.constant 0 : index
    %293 = vector.load %arg9[%c1920, %c0_450] : memref<3072x32xf32, #tpu.memory_space<vmem>>, vector<384x32xf32>
    %cst_451 = arith.constant dense<0.000000e+00> : vector<1x32xf32>
    %294 = tpu.matmul %292, %293, %cst_451 {dimension_numbers = #tpu.dot_dimension_numbers<[1], [0], [0], [1], [0, 0, 1, 1], [], []>} : vector<1x384xf32>, vector<384x32xf32>, vector<1x32xf32> -> vector<1x32xf32>
    %295 = arith.addf %291, %294 : vector<1x32xf32>
    %c6 = arith.constant 6 : index
    %c128_452 = arith.constant 128 : index
    %296 = vector.load %arg14[%c6, %c128_452] : memref<8x1024xf32, #tpu.memory_space<vmem>>, vector<1x384xf32>
    %c2304 = arith.constant 2304 : index
    %c0_453 = arith.constant 0 : index
    %297 = vector.load %arg9[%c2304, %c0_453] : memref<3072x32xf32, #tpu.memory_space<vmem>>, vector<384x32xf32>
    %cst_454 = arith.constant dense<0.000000e+00> : vector<1x32xf32>
    %298 = tpu.matmul %296, %297, %cst_454 {dimension_numbers = #tpu.dot_dimension_numbers<[1], [0], [0], [1], [0, 0, 1, 1], [], []>} : vector<1x384xf32>, vector<384x32xf32>, vector<1x32xf32> -> vector<1x32xf32>
    %299 = arith.addf %295, %298 : vector<1x32xf32>
    %c7 = arith.constant 7 : index
    %c128_455 = arith.constant 128 : index
    %300 = vector.load %arg14[%c7, %c128_455] : memref<8x1024xf32, #tpu.memory_space<vmem>>, vector<1x384xf32>
    %c2688 = arith.constant 2688 : index
    %c0_456 = arith.constant 0 : index
    %301 = vector.load %arg9[%c2688, %c0_456] : memref<3072x32xf32, #tpu.memory_space<vmem>>, vector<384x32xf32>
    %cst_457 = arith.constant dense<0.000000e+00> : vector<1x32xf32>
    %302 = tpu.matmul %300, %301, %cst_457 {dimension_numbers = #tpu.dot_dimension_numbers<[1], [0], [0], [1], [0, 0, 1, 1], [], []>} : vector<1x384xf32>, vector<384x32xf32>, vector<1x32xf32> -> vector<1x32xf32>
    %303 = arith.addf %299, %302 : vector<1x32xf32>
    %cst_458 = arith.constant 0.000000e+00 : f32
    %304 = vector.broadcast %cst_458 : f32 to vector<1x32xf32>
    %305 = arith.maximumf %303, %304 : vector<1x32xf32>
    %cst_459 = arith.constant dense<0.000000e+00> : vector<1x6xf32>
    %306 = tpu.matmul %305, %271, %cst_459 {dimension_numbers = #tpu.dot_dimension_numbers<[1], [0], [0], [1], [0, 0, 1, 1], [], []>} : vector<1x32xf32>, vector<32x6xf32>, vector<1x6xf32> -> vector<1x6xf32>
    %307 = arith.addf %306, %270 : vector<1x6xf32>
    %c0_460 = arith.constant 0 : index
    %c0_461 = arith.constant 0 : index
    %308 = vector.load %arg13[%c0_460, %c0_461] : memref<2x6xf32, #tpu.memory_space<vmem>>, vector<1x6xf32>
    tpu.vector_store %arg13[%c0_460, %c0_461], %307 {strides = array<i32>} : memref<2x6xf32, #tpu.memory_space<vmem>>, vector<1x6xf32>,
    %c0_462 = arith.constant 0 : index
    %c512 = arith.constant 512 : index
    %309 = vector.load %arg14[%c0_462, %c512] : memref<8x1024xf32, #tpu.memory_space<vmem>>, vector<1x384xf32>
    %c0_463 = arith.constant 0 : index
    %c0_464 = arith.constant 0 : index
    %310 = vector.load %arg9[%c0_463, %c0_464] : memref<3072x32xf32, #tpu.memory_space<vmem>>, vector<384x32xf32>
    %cst_465 = arith.constant dense<0.000000e+00> : vector<1x32xf32>
    %311 = tpu.matmul %309, %310, %cst_465 {dimension_numbers = #tpu.dot_dimension_numbers<[1], [0], [0], [1], [0, 0, 1, 1], [], []>} : vector<1x384xf32>, vector<384x32xf32>, vector<1x32xf32> -> vector<1x32xf32>
    %312 = arith.addf %269, %311 : vector<1x32xf32>
    %c1_466 = arith.constant 1 : index
    %c512_467 = arith.constant 512 : index
    %313 = vector.load %arg14[%c1_466, %c512_467] : memref<8x1024xf32, #tpu.memory_space<vmem>>, vector<1x384xf32>
    %c384_468 = arith.constant 384 : index
    %c0_469 = arith.constant 0 : index
    %314 = vector.load %arg9[%c384_468, %c0_469] : memref<3072x32xf32, #tpu.memory_space<vmem>>, vector<384x32xf32>
    %cst_470 = arith.constant dense<0.000000e+00> : vector<1x32xf32>
    %315 = tpu.matmul %313, %314, %cst_470 {dimension_numbers = #tpu.dot_dimension_numbers<[1], [0], [0], [1], [0, 0, 1, 1], [], []>} : vector<1x384xf32>, vector<384x32xf32>, vector<1x32xf32> -> vector<1x32xf32>
    %316 = arith.addf %312, %315 : vector<1x32xf32>
    %c2_471 = arith.constant 2 : index
    %c512_472 = arith.constant 512 : index
    %317 = vector.load %arg14[%c2_471, %c512_472] : memref<8x1024xf32, #tpu.memory_space<vmem>>, vector<1x384xf32>
    %c768_473 = arith.constant 768 : index
    %c0_474 = arith.constant 0 : index
    %318 = vector.load %arg9[%c768_473, %c0_474] : memref<3072x32xf32, #tpu.memory_space<vmem>>, vector<384x32xf32>
    %cst_475 = arith.constant dense<0.000000e+00> : vector<1x32xf32>
    %319 = tpu.matmul %317, %318, %cst_475 {dimension_numbers = #tpu.dot_dimension_numbers<[1], [0], [0], [1], [0, 0, 1, 1], [], []>} : vector<1x384xf32>, vector<384x32xf32>, vector<1x32xf32> -> vector<1x32xf32>
    %320 = arith.addf %316, %319 : vector<1x32xf32>
    %c3_476 = arith.constant 3 : index
    %c512_477 = arith.constant 512 : index
    %321 = vector.load %arg14[%c3_476, %c512_477] : memref<8x1024xf32, #tpu.memory_space<vmem>>, vector<1x384xf32>
    %c1152_478 = arith.constant 1152 : index
    %c0_479 = arith.constant 0 : index
    %322 = vector.load %arg9[%c1152_478, %c0_479] : memref<3072x32xf32, #tpu.memory_space<vmem>>, vector<384x32xf32>
    %cst_480 = arith.constant dense<0.000000e+00> : vector<1x32xf32>
    %323 = tpu.matmul %321, %322, %cst_480 {dimension_numbers = #tpu.dot_dimension_numbers<[1], [0], [0], [1], [0, 0, 1, 1], [], []>} : vector<1x384xf32>, vector<384x32xf32>, vector<1x32xf32> -> vector<1x32xf32>
    %324 = arith.addf %320, %323 : vector<1x32xf32>
    %c4_481 = arith.constant 4 : index
    %c512_482 = arith.constant 512 : index
    %325 = vector.load %arg14[%c4_481, %c512_482] : memref<8x1024xf32, #tpu.memory_space<vmem>>, vector<1x384xf32>
    %c1536_483 = arith.constant 1536 : index
    %c0_484 = arith.constant 0 : index
    %326 = vector.load %arg9[%c1536_483, %c0_484] : memref<3072x32xf32, #tpu.memory_space<vmem>>, vector<384x32xf32>
    %cst_485 = arith.constant dense<0.000000e+00> : vector<1x32xf32>
    %327 = tpu.matmul %325, %326, %cst_485 {dimension_numbers = #tpu.dot_dimension_numbers<[1], [0], [0], [1], [0, 0, 1, 1], [], []>} : vector<1x384xf32>, vector<384x32xf32>, vector<1x32xf32> -> vector<1x32xf32>
    %328 = arith.addf %324, %327 : vector<1x32xf32>
    %c5_486 = arith.constant 5 : index
    %c512_487 = arith.constant 512 : index
    %329 = vector.load %arg14[%c5_486, %c512_487] : memref<8x1024xf32, #tpu.memory_space<vmem>>, vector<1x384xf32>
    %c1920_488 = arith.constant 1920 : index
    %c0_489 = arith.constant 0 : index
    %330 = vector.load %arg9[%c1920_488, %c0_489] : memref<3072x32xf32, #tpu.memory_space<vmem>>, vector<384x32xf32>
    %cst_490 = arith.constant dense<0.000000e+00> : vector<1x32xf32>
    %331 = tpu.matmul %329, %330, %cst_490 {dimension_numbers = #tpu.dot_dimension_numbers<[1], [0], [0], [1], [0, 0, 1, 1], [], []>} : vector<1x384xf32>, vector<384x32xf32>, vector<1x32xf32> -> vector<1x32xf32>
    %332 = arith.addf %328, %331 : vector<1x32xf32>
    %c6_491 = arith.constant 6 : index
    %c512_492 = arith.constant 512 : index
    %333 = vector.load %arg14[%c6_491, %c512_492] : memref<8x1024xf32, #tpu.memory_space<vmem>>, vector<1x384xf32>
    %c2304_493 = arith.constant 2304 : index
    %c0_494 = arith.constant 0 : index
    %334 = vector.load %arg9[%c2304_493, %c0_494] : memref<3072x32xf32, #tpu.memory_space<vmem>>, vector<384x32xf32>
    %cst_495 = arith.constant dense<0.000000e+00> : vector<1x32xf32>
    %335 = tpu.matmul %333, %334, %cst_495 {dimension_numbers = #tpu.dot_dimension_numbers<[1], [0], [0], [1], [0, 0, 1, 1], [], []>} : vector<1x384xf32>, vector<384x32xf32>, vector<1x32xf32> -> vector<1x32xf32>
    %336 = arith.addf %332, %335 : vector<1x32xf32>
    %c7_496 = arith.constant 7 : index
    %c512_497 = arith.constant 512 : index
    %337 = vector.load %arg14[%c7_496, %c512_497] : memref<8x1024xf32, #tpu.memory_space<vmem>>, vector<1x384xf32>
    %c2688_498 = arith.constant 2688 : index
    %c0_499 = arith.constant 0 : index
    %338 = vector.load %arg9[%c2688_498, %c0_499] : memref<3072x32xf32, #tpu.memory_space<vmem>>, vector<384x32xf32>
    %cst_500 = arith.constant dense<0.000000e+00> : vector<1x32xf32>
    %339 = tpu.matmul %337, %338, %cst_500 {dimension_numbers = #tpu.dot_dimension_numbers<[1], [0], [0], [1], [0, 0, 1, 1], [], []>} : vector<1x384xf32>, vector<384x32xf32>, vector<1x32xf32> -> vector<1x32xf32>
    %340 = arith.addf %336, %339 : vector<1x32xf32>
    %cst_501 = arith.constant 0.000000e+00 : f32
    %341 = vector.broadcast %cst_501 : f32 to vector<1x32xf32>
    %342 = arith.maximumf %340, %341 : vector<1x32xf32>
    %cst_502 = arith.constant dense<0.000000e+00> : vector<1x6xf32>
    %343 = tpu.matmul %342, %271, %cst_502 {dimension_numbers = #tpu.dot_dimension_numbers<[1], [0], [0], [1], [0, 0, 1, 1], [], []>} : vector<1x32xf32>, vector<32x6xf32>, vector<1x6xf32> -> vector<1x6xf32>
    %344 = arith.addf %343, %270 : vector<1x6xf32>
    %c1_503 = arith.constant 1 : index
    %c0_504 = arith.constant 0 : index
    %345 = vector.load %arg13[%c1_503, %c0_504] : memref<2x6xf32, #tpu.memory_space<vmem>>, vector<1x6xf32>
    tpu.vector_store %arg13[%c1_503, %c0_504], %344 {strides = array<i32>} : memref<2x6xf32, #tpu.memory_space<vmem>>, vector<1x6xf32>,
    return
  }
  func.func @transform_0(%arg0: i32) -> (i32, i32) {
    %c0_i32 = arith.constant 0 : i32
    %c0_i32_0 = arith.constant 0 : i32
    %c0_i32_1 = arith.constant 0 : i32
    return %c0_i32, %c0_i32_0 : i32, i32
  }
  func.func @transform_1(%arg0: i32) -> (i32, i32) {
    %c0_i32 = arith.constant 0 : i32
    %c0_i32_0 = arith.constant 0 : i32
    %c0_i32_1 = arith.constant 0 : i32
    return %c0_i32, %c0_i32_0 : i32, i32
  }
  func.func @transform_2(%arg0: i32) -> (i32, i32) {
    %c0_i32 = arith.constant 0 : i32
    %c0_i32_0 = arith.constant 0 : i32
    %c0_i32_1 = arith.constant 0 : i32
    return %c0_i32, %c0_i32_0 : i32, i32
  }
  func.func @transform_3(%arg0: i32) -> (i32, i32) {
    %c0_i32 = arith.constant 0 : i32
    %c0_i32_0 = arith.constant 0 : i32
    %c0_i32_1 = arith.constant 0 : i32
    return %c0_i32, %c0_i32_0 : i32, i32
  }
  func.func @transform_4(%arg0: i32) -> (i32, i32) {
    %c0_i32 = arith.constant 0 : i32
    %c0_i32_0 = arith.constant 0 : i32
    %c0_i32_1 = arith.constant 0 : i32
    return %c0_i32, %c0_i32_0 : i32, i32
  }
  func.func @transform_5(%arg0: i32) -> (i32, i32) {
    %c0_i32 = arith.constant 0 : i32
    %c0_i32_0 = arith.constant 0 : i32
    %c0_i32_1 = arith.constant 0 : i32
    return %c0_i32, %c0_i32_0 : i32, i32
  }
  func.func @transform_6(%arg0: i32) -> (i32, i32) {
    %c0_i32 = arith.constant 0 : i32
    %c0_i32_0 = arith.constant 0 : i32
    %c0_i32_1 = arith.constant 0 : i32
    return %c0_i32, %c0_i32_0 : i32, i32
  }
  func.func @transform_7(%arg0: i32) -> (i32, i32) {
    %c0_i32 = arith.constant 0 : i32
    %c0_i32_0 = arith.constant 0 : i32
    %c0_i32_1 = arith.constant 0 : i32
    return %c0_i32, %c0_i32_0 : i32, i32
  }
  func.func @transform_8(%arg0: i32) -> (i32, i32) {
    %c0_i32 = arith.constant 0 : i32
    %c0_i32_0 = arith.constant 0 : i32
    %c0_i32_1 = arith.constant 0 : i32
    return %c0_i32, %c0_i32_0 : i32, i32
  }
  func.func @transform_9(%arg0: i32) -> (i32, i32) {
    %c0_i32 = arith.constant 0 : i32
    %c0_i32_0 = arith.constant 0 : i32
    %c0_i32_1 = arith.constant 0 : i32
    return %c0_i32, %c0_i32_0 : i32, i32
  }
  func.func @transform_10(%arg0: i32) -> (i32, i32) {
    %c0_i32 = arith.constant 0 : i32
    %c0_i32_0 = arith.constant 0 : i32
    %c0_i32_1 = arith.constant 0 : i32
    return %c0_i32, %c0_i32_0 : i32, i32
  }
  func.func @transform_11(%arg0: i32) -> (i32, i32) {
    %c0_i32 = arith.constant 0 : i32
    %c0_i32_0 = arith.constant 0 : i32
    %c0_i32_1 = arith.constant 0 : i32
    return %c0_i32, %c0_i32_0 : i32, i32
  }
  func.func @transform_12(%arg0: i32) -> (i32, i32) {
    %c0_i32 = arith.constant 0 : i32
    %c0_i32_0 = arith.constant 0 : i32
    %c0_i32_1 = arith.constant 0 : i32
    return %c0_i32, %c0_i32_0 : i32, i32
  }
}

</mosaic_0001>

<llo_original>
// kernel: tile.8
$region0: #{tile.8}
  #allocation0 [shape = 's32[1]{0}', space=sflag, size = 0x4, scoped, tag = 'scoped memory for tile.8']
  %s0 = inlined_call_operand.vmem [shape: f32[384], index: 0, kind: input, shape index: {}]
  %s1 = inlined_call_operand.vmem [shape: f32[2,384], index: 1, kind: output, shape index: {}]
  // Predicated region
  $region2: #{tile.8} parent=0 // pred_check
    _
  $region3: #{tile.8} parent=0 // pred_check_branch
    %3 = sbr.rel (0) target = $region5
  $region4: #{tile.8} parent=0 // pred_region
    _
  $region5: #{tile.8} parent=0 // pred_fallthru
    _
  %v4 = vld [vmem:[%s0] ss:$0 sm:$0xff]
  %5 = vst [vmem:[%s1] sm:$0x3] %v4
  %s6 = scalar_lea.vmem %s0, 1
  %v7 = vld [vmem:[%s6] ss:$0 sm:$0xff]
  %s8 = scalar_lea.vmem %s1, 2
  %9 = vst [vmem:[%s8] sm:$0x3] %v7
  %s10 = scalar_lea.vmem %s0, 2
  %v11 = vld [vmem:[%s10] ss:$0 sm:$0xff]
  %s12 = scalar_lea.vmem %s1, 4
  %13 = vst [vmem:[%s12] sm:$0x3] %v11

// kernel: image_classifier_forward.1
$region0: #{image_classifier_forward.1}
  #allocation0 [shape = 'u32[]', space=smem, size = 0x4, offset = 0x4, fixed_abs, tag = 'smem constant byte address 0x4 - core index']
  #allocation1 [shape = 'u32[144,128]{1,0:T(1,128)}', space=vmem, size = 0x12000, scoped, tag = 'internal scratch']
  #allocation2 [shape = 'f32[8,1024]{1,0:T(8,128)}', space=vmem, size = 0x8000, scoped, tag = 'scratch operand']
  #allocation3 [shape = 'f32[8,1024]{1,0:T(8,128)}', space=vmem, size = 0x8000, scoped, tag = 'scratch operand']
  #allocation4 [shape = 'f32[72,768]{1,0:T(8,128)}', space=vmem, size = 0x36000, scoped, tag = 'scratch operand']
  #allocation5 [shape = 'f32[8,768]{1,0:T(8,128)}', space=vmem, size = 0x6000, scoped, tag = 'scratch operand']
  %s0 = inlined_call_operand.vmem [shape: f32[8,1024], index: 0, kind: input, shape index: {}]
  %s1 = inlined_call_operand.vmem [shape: f32[8,768], index: 1, kind: input, shape index: {}]
  %s2 = inlined_call_operand.vmem [shape: bf16[8,72], index: 2, kind: input, shape index: {}]
  %s3 = inlined_call_operand.vmem [shape: bf16[8,72], index: 3, kind: input, shape index: {}]
  %s4 = inlined_call_operand.vmem [shape: bf16[8,72], index: 4, kind: input, shape index: {}]
  %s5 = inlined_call_operand.vmem [shape: bf16[8,72], index: 5, kind: input, shape index: {}]
  %s6 = inlined_call_operand.vmem [shape: f32[8,1], index: 6, kind: input, shape index: {}]
  %s7 = inlined_call_operand.vmem [shape: f32[8,1], index: 7, kind: input, shape index: {}]
  %s8 = inlined_call_operand.vmem [shape: f32[3072,32], index: 8, kind: input, shape index: {}]
  %s9 = inlined_call_operand.vmem [shape: f32[1,32], index: 9, kind: input, shape index: {}]
  %s10 = inlined_call_operand.vmem [shape: f32[32,6], index: 10, kind: input, shape index: {}]
  %s11 = inlined_call_operand.vmem [shape: f32[1,6], index: 11, kind: input, shape index: {}]
  %s12 = inlined_call_operand.hbm [shape: f32[2,6], index: 12, kind: output, shape index: {}]
  %s13 = sld [smem:[#allocation0]]
  $region58: #{image_classifier_forward.1} parent=0
    _
  %s15 = ssub.s32 1, %s13
  %s16 = scalar_select 0, %s15, %s13
  $region1: #{image_classifier_forward.1} parent=0
    #allocation6 [shape = 'u8[1024]{0}', space=vmem, size = 0x400, scoped, tag = 'output window, operand 0, single buffered']
    #allocation7 [shape = 's32[1]{0}', space=sflag, size = 0x4, scoped, tag = 'scoped memory for image_classifier_forward.1']
    %17 = vsyncpa [#allocation7], 0
    // Predicated region
    $region2: #{image_classifier_forward.1} parent=1 // pred_check
      _
    $region3: #{image_classifier_forward.1} parent=1 // pred_check_branch
      %19 = sbr.rel (0) target = $region5
    $region4: #{image_classifier_forward.1} parent=1 // pred_region
      _
    $region5: #{image_classifier_forward.1} parent=1 // pred_fallthru
      _
    // Predicated region
    $region6: #{image_classifier_forward.1} parent=1 // pred_check
      _
    $region7: #{image_classifier_forward.1} parent=1 // pred_check_branch
      %21 = sbr.rel (0) target = $region9
    $region8: #{image_classifier_forward.1} parent=1 // pred_region
      _
    $region9: #{image_classifier_forward.1} parent=1 // pred_fallthru
      _
    // Predicated region
    $region10: #{image_classifier_forward.1} parent=1 // pred_check
      _
    $region11: #{image_classifier_forward.1} parent=1 // pred_check_branch
      %23 = sbr.rel (0) target = $region13
    $region12: #{image_classifier_forward.1} parent=1 // pred_region
      _
    $region13: #{image_classifier_forward.1} parent=1 // pred_fallthru
      _
    // Predicated region
    $region14: #{image_classifier_forward.1} parent=1 // pred_check
      _
    $region15: #{image_classifier_forward.1} parent=1 // pred_check_branch
      %25 = sbr.rel (0) target = $region17
    $region16: #{image_classifier_forward.1} parent=1 // pred_region
      _
    $region17: #{image_classifier_forward.1} parent=1 // pred_fallthru
      _
    // Predicated region
    $region18: #{image_classifier_forward.1} parent=1 // pred_check
      _
    $region19: #{image_classifier_forward.1} parent=1 // pred_check_branch
      %27 = sbr.rel (0) target = $region21
    $region20: #{image_classifier_forward.1} parent=1 // pred_region
      _
    $region21: #{image_classifier_forward.1} parent=1 // pred_fallthru
      _
    // Predicated region
    $region22: #{image_classifier_forward.1} parent=1 // pred_check
      _
    $region23: #{image_classifier_forward.1} parent=1 // pred_check_branch
      %29 = sbr.rel (0) target = $region25
    $region24: #{image_classifier_forward.1} parent=1 // pred_region
      _
    $region25: #{image_classifier_forward.1} parent=1 // pred_fallthru
      _
    // Predicated region
    $region26: #{image_classifier_forward.1} parent=1 // pred_check
      _
    $region27: #{image_classifier_forward.1} parent=1 // pred_check_branch
      %31 = sbr.rel (0) target = $region29
    $region28: #{image_classifier_forward.1} parent=1 // pred_region
      _
    $region29: #{image_classifier_forward.1} parent=1 // pred_fallthru
      _
    // Predicated region
    $region30: #{image_classifier_forward.1} parent=1 // pred_check
      _
    $region31: #{image_classifier_forward.1} parent=1 // pred_check_branch
      %33 = sbr.rel (0) target = $region33
    $region32: #{image_classifier_forward.1} parent=1 // pred_region
      _
    $region33: #{image_classifier_forward.1} parent=1 // pred_fallthru
      _
    // Predicated region
    $region34: #{image_classifier_forward.1} parent=1 // pred_check
      _
    $region35: #{image_classifier_forward.1} parent=1 // pred_check_branch
      %35 = sbr.rel (0) target = $region37
    $region36: #{image_classifier_forward.1} parent=1 // pred_region
      _
    $region37: #{image_classifier_forward.1} parent=1 // pred_fallthru
      _
    // Predicated region
    $region38: #{image_classifier_forward.1} parent=1 // pred_check
      _
    $region39: #{image_classifier_forward.1} parent=1 // pred_check_branch
      %37 = sbr.rel (0) target = $region41
    $region40: #{image_classifier_forward.1} parent=1 // pred_region
      _
    $region41: #{image_classifier_forward.1} parent=1 // pred_fallthru
      _
    // Predicated region
    $region42: #{image_classifier_forward.1} parent=1 // pred_check
      _
    $region43: #{image_classifier_forward.1} parent=1 // pred_check_branch
      %39 = sbr.rel (0) target = $region45
    $region44: #{image_classifier_forward.1} parent=1 // pred_region
      _
    $region45: #{image_classifier_forward.1} parent=1 // pred_fallthru
      _
    // Predicated region
    $region46: #{image_classifier_forward.1} parent=1 // pred_check
      _
    $region47: #{image_classifier_forward.1} parent=1 // pred_check_branch
      %41 = sbr.rel (0) target = $region49
    $region48: #{image_classifier_forward.1} parent=1 // pred_region
      _
    $region49: #{image_classifier_forward.1} parent=1 // pred_fallthru
      _
    %43 = vst [vmem:[#allocation2] sm:$0xff] 0.0
    %44 = vst [vmem:[#allocation2 + $0x8] sm:$0xff] 0.0
    %45 = vst [vmem:[#allocation2 + $0x10] sm:$0xff] 0.0
    %46 = vst [vmem:[#allocation2 + $0x18] sm:$0xff] 0.0
    %47 = vst [vmem:[#allocation2 + $0x20] sm:$0xff] 0.0
    %48 = vst [vmem:[#allocation2 + $0x28] sm:$0xff] 0.0
    %49 = vst [vmem:[#allocation2 + $0x30] sm:$0xff] 0.0
    %50 = vst [vmem:[#allocation2 + $0x38] sm:$0xff] 0.0
    %51 = vst [vmem:[#allocation3] sm:$0xff] 0.0
    %52 = vst [vmem:[#allocation3 + $0x8] sm:$0xff] 0.0
    %53 = vst [vmem:[#allocation3 + $0x10] sm:$0xff] 0.0
    %54 = vst [vmem:[#allocation3 + $0x18] sm:$0xff] 0.0
    %55 = vst [vmem:[#allocation3 + $0x20] sm:$0xff] 0.0
    %56 = vst [vmem:[#allocation3 + $0x28] sm:$0xff] 0.0
    %57 = vst [vmem:[#allocation3 + $0x30] sm:$0xff] 0.0
    %58 = vst [vmem:[#allocation3 + $0x38] sm:$0xff] 0.0
    %v59 = vld [vmem:[%s1] sm:$0xff]
    %v60 = vld [vmem:[%s1 + $0x8] sm:$0xff]
    %v61 = vld [vmem:[%s1 + $0x10] sm:$0xff]
    %v62 = vld [vmem:[%s1 + $0x18] sm:$0xff]
    %v63 = vld [vmem:[%s1 + $0x20] sm:$0xff]
    %v64 = vld [vmem:[%s1 + $0x28] sm:$0xff]
    %v65 = vld [vmem:[%s6] sm:$0xff]
    %v66 = vld [vmem:[%s7] sm:$0xff]
    %v67 = vld [vmem:[%s0] sm:$0xff]
    %v68 = vld [vmem:[%s0 + $0x8] sm:$0xff]
    %v69 = vld [vmem:[%s0 + $0x10] sm:$0xff]
    %v70 = vld [vmem:[%s0 + $0x18] sm:$0xff]
    %v71 = vld [vmem:[%s0 + $0x20] sm:$0xff]
    %v72 = vld [vmem:[%s0 + $0x28] sm:$0xff]
    %v73 = vld [vmem:[%s0 + $0x30] sm:$0xff]
    %81 = vrot.lane.b32.xlu0 %v67, 19
    %v82 = vpop.permute.xlu0 %81
    %83 = vrot.lane.b32.xlu0 %v68, 19
    %v84 = vpop.permute.xlu0 %83
    %85 = vrot.lane.b32.xlu0 %v69, 19
    %v86 = vpop.permute.xlu0 %85
    %87 = vrot.lane.b32.xlu0 %v70, 19
    %v88 = vpop.permute.xlu0 %87
    %89 = vrot.lane.b32.xlu0 %v71, 19
    %v90 = vpop.permute.xlu0 %89
    %91 = vrot.lane.b32.xlu0 %v72, 19
    %v92 = vpop.permute.xlu0 %91
    %93 = vrot.lane.b32.xlu0 %v73, 19
    %v94 = vpop.permute.xlu0 %93
    %vm95 = vcmask 154624
    %v96 = vsel %vm95, %v82, %v84
    %v97 = vsel %vm95, %v84, %v86
    %v98 = vsel %vm95, %v86, %v88
    %v99 = vsel %vm95, %v88, %v90
    %v100 = vsel %vm95, %v90, %v92
    %v101 = vsel %vm95, %v92, %v94
    %108 = vst [vmem:[#allocation4] sm:$0xff] %v96
    %109 = vst [vmem:[#allocation4 + $0x8] sm:$0xff] %v97
    %110 = vst [vmem:[#allocation4 + $0x10] sm:$0xff] %v98
    %111 = vst [vmem:[#allocation4 + $0x18] sm:$0xff] %v99
    %112 = vst [vmem:[#allocation4 + $0x20] sm:$0xff] %v100
    %113 = vst [vmem:[#allocation4 + $0x28] sm:$0xff] %v101
    %v114 = vld [vmem:[%s0] sm:$0xff]
    %v115 = vld [vmem:[%s0 + $0x8] sm:$0xff]
    %v116 = vld [vmem:[%s0 + $0x10] sm:$0xff]
    %v117 = vld [vmem:[%s0 + $0x18] sm:$0xff]
    %v118 = vld [vmem:[%s0 + $0x20] sm:$0xff]
    %v119 = vld [vmem:[%s0 + $0x28] sm:$0xff]
    %v120 = vld [vmem:[%s0 + $0x30] sm:$0xff]
    %128 = vrot.lane.b32.xlu0 %v114, 18
    %v129 = vpop.permute.xlu0 %128
    %130 = vrot.lane.b32.xlu0 %v115, 18
    %v131 = vpop.permute.xlu0 %130
    %132 = vrot.lane.b32.xlu0 %v116, 18
    %v133 = vpop.permute.xlu0 %132
    %134 = vrot.lane.b32.xlu0 %v117, 18
    %v135 = vpop.permute.xlu0 %134
    %136 = vrot.lane.b32.xlu0 %v118, 18
    %v137 = vpop.permute.xlu0 %136
    %138 = vrot.lane.b32.xlu0 %v119, 18
    %v139 = vpop.permute.xlu0 %138
    %140 = vrot.lane.b32.xlu0 %v120, 18
    %v141 = vpop.permute.xlu0 %140
    %vm142 = vcmask 146432
    %v143 = vsel %vm142, %v129, %v131
    %v144 = vsel %vm142, %v131, %v133
    %v145 = vsel %vm142, %v133, %v135
    %v146 = vsel %vm142, %v135, %v137
    %v147 = vsel %vm142, %v137, %v139
    %v148 = vsel %vm142, %v139, %v141
    %155 = vst [vmem:[#allocation4 + $0x30] sm:$0xff] %v143
    %156 = vst [vmem:[#allocation4 + $0x38] sm:$0xff] %v144
    %157 = vst [vmem:[#allocation4 + $0x40] sm:$0xff] %v145
    %158 = vst [vmem:[#allocation4 + $0x48] sm:$0xff] %v146
    %159 = vst [vmem:[#allocation4 + $0x50] sm:$0xff] %v147
    %160 = vst [vmem:[#allocation4 + $0x58] sm:$0xff] %v148
    %v161 = vld [vmem:[%s0] sm:$0xff]
    %v162 = vld [vmem:[%s0 + $0x8] sm:$0xff]
    %v163 = vld [vmem:[%s0 + $0x10] sm:$0xff]
    %v164 = vld [vmem:[%s0 + $0x18] sm:$0xff]
    %v165 = vld [vmem:[%s0 + $0x20] sm:$0xff]
    %v166 = vld [vmem:[%s0 + $0x28] sm:$0xff]
    %v167 = vld [vmem:[%s0 + $0x30] sm:$0xff]
    %175 = vrot.lane.b32.xlu0 %v161, 17
    %v176 = vpop.permute.xlu0 %175
    %177 = vrot.lane.b32.xlu0 %v162, 17
    %v178 = vpop.permute.xlu0 %177
    %179 = vrot.lane.b32.xlu0 %v163, 17
    %v180 = vpop.permute.xlu0 %179
    %181 = vrot.lane.b32.xlu0 %v164, 17
    %v182 = vpop.permute.xlu0 %181
    %183 = vrot.lane.b32.xlu0 %v165, 17
    %v184 = vpop.permute.xlu0 %183
    %185 = vrot.lane.b32.xlu0 %v166, 17
    %v186 = vpop.permute.xlu0 %185
    %187 = vrot.lane.b32.xlu0 %v167, 17
    %v188 = vpop.permute.xlu0 %187
    %vm189 = vcmask 138240
    %v190 = vsel %vm189, %v176, %v178
    %v191 = vsel %vm189, %v178, %v180
    %v192 = vsel %vm189, %v180, %v182
    %v193 = vsel %vm189, %v182, %v184
    %v194 = vsel %vm189, %v184, %v186
    %v195 = vsel %vm189, %v186, %v188
    %202 = vst [vmem:[#allocation4 + $0x60] sm:$0xff] %v190
    %203 = vst [vmem:[#allocation4 + $0x68] sm:$0xff] %v191
    %204 = vst [vmem:[#allocation4 + $0x70] sm:$0xff] %v192
    %205 = vst [vmem:[#allocation4 + $0x78] sm:$0xff] %v193
    %206 = vst [vmem:[#allocation4 + $0x80] sm:$0xff] %v194
    %207 = vst [vmem:[#allocation4 + $0x88] sm:$0xff] %v195
    %v208 = vld [vmem:[%s0] sm:$0xff]
    %v209 = vld [vmem:[%s0 + $0x8] sm:$0xff]
    %v210 = vld [vmem:[%s0 + $0x10] sm:$0xff]
    %v211 = vld [vmem:[%s0 + $0x18] sm:$0xff]
    %v212 = vld [vmem:[%s0 + $0x20] sm:$0xff]
    %v213 = vld [vmem:[%s0 + $0x28] sm:$0xff]
    %v214 = vld [vmem:[%s0 + $0x30] sm:$0xff]
    %222 = vrot.lane.b32.xlu0 %v208, 1
    %v223 = vpop.permute.xlu0 %222
    %224 = vrot.lane.b32.xlu0 %v209, 1
    %v225 = vpop.permute.xlu0 %224
    %226 = vrot.lane.b32.xlu0 %v210, 1
    %v227 = vpop.permute.xlu0 %226
    %228 = vrot.lane.b32.xlu0 %v211, 1
    %v229 = vpop.permute.xlu0 %228
    %230 = vrot.lane.b32.xlu0 %v212, 1
    %v231 = vpop.permute.xlu0 %230
    %232 = vrot.lane.b32.xlu0 %v213, 1
    %v233 = vpop.permute.xlu0 %232
    %234 = vrot.lane.b32.xlu0 %v214, 1
    %v235 = vpop.permute.xlu0 %234
    %vm236 = vcmask 7168
    %v237 = vsel %vm236, %v223, %v225
    %v238 = vsel %vm236, %v225, %v227
    %v239 = vsel %vm236, %v227, %v229
    %v240 = vsel %vm236, %v229, %v231
    %v241 = vsel %vm236, %v231, %v233
    %v242 = vsel %vm236, %v233, %v235
    %249 = vst [vmem:[#allocation4 + $0x90] sm:$0xff] %v237
    %250 = vst [vmem:[#allocation4 + $0x98] sm:$0xff] %v238
    %251 = vst [vmem:[#allocation4 + $0xa0] sm:$0xff] %v239
    %252 = vst [vmem:[#allocation4 + $0xa8] sm:$0xff] %v240
    %253 = vst [vmem:[#allocation4 + $0xb0] sm:$0xff] %v241
    %254 = vst [vmem:[#allocation4 + $0xb8] sm:$0xff] %v242
    %v255 = vld [vmem:[%s0 + $0x8] sm:$0xff]
    %v256 = vld [vmem:[%s0 + $0x10] sm:$0xff]
    %v257 = vld [vmem:[%s0 + $0x18] sm:$0xff]
    %v258 = vld [vmem:[%s0 + $0x20] sm:$0xff]
    %v259 = vld [vmem:[%s0 + $0x28] sm:$0xff]
    %v260 = vld [vmem:[%s0 + $0x30] sm:$0xff]
    %261 = vst [vmem:[#allocation4 + $0xc0] sm:$0xff] %v255
    %262 = vst [vmem:[#allocation4 + $0xc8] sm:$0xff] %v256
    %263 = vst [vmem:[#allocation4 + $0xd0] sm:$0xff] %v257
    %264 = vst [vmem:[#allocation4 + $0xd8] sm:$0xff] %v258
    %265 = vst [vmem:[#allocation4 + $0xe0] sm:$0xff] %v259
    %266 = vst [vmem:[#allocation4 + $0xe8] sm:$0xff] %v260
    %v267 = vld [vmem:[%s0 + $0x8] sm:$0xff]
    %v268 = vld [vmem:[%s0 + $0x10] sm:$0xff]
    %v269 = vld [vmem:[%s0 + $0x18] sm:$0xff]
    %v270 = vld [vmem:[%s0 + $0x20] sm:$0xff]
    %v271 = vld [vmem:[%s0 + $0x28] sm:$0xff]
    %v272 = vld [vmem:[%s0 + $0x30] sm:$0xff]
    %v273 = vld [vmem:[%s0 + $0x38] sm:$0xff]
    %281 = vrot.lane.b32.xlu0 %v267, 127
    %v282 = vpop.permute.xlu0 %281
    %283 = vrot.lane.b32.xlu0 %v268, 127
    %v284 = vpop.permute.xlu0 %283
    %285 = vrot.lane.b32.xlu0 %v269, 127
    %v286 = vpop.permute.xlu0 %285
    %287 = vrot.lane.b32.xlu0 %v270, 127
    %v288 = vpop.permute.xlu0 %287
    %289 = vrot.lane.b32.xlu0 %v271, 127
    %v290 = vpop.permute.xlu0 %289
    %291 = vrot.lane.b32.xlu0 %v272, 127
    %v292 = vpop.permute.xlu0 %291
    %293 = vrot.lane.b32.xlu0 %v273, 127
    %v294 = vpop.permute.xlu0 %293
    %vm295 = vcmask 1039360
    %v296 = vsel %vm295, %v282, %v284
    %v297 = vsel %vm295, %v284, %v286
    %v298 = vsel %vm295, %v286, %v288
    %v299 = vsel %vm295, %v288, %v290
    %v300 = vsel %vm295, %v290, %v292
    %v301 = vsel %vm295, %v292, %v294
    %308 = vst [vmem:[#allocation4 + $0xf0] sm:$0xff] %v296
    %309 = vst [vmem:[#allocation4 + $0xf8] sm:$0xff] %v297
    %310 = vst [vmem:[#allocation4 + $0x100] sm:$0xff] %v298
    %311 = vst [vmem:[#allocation4 + $0x108] sm:$0xff] %v299
    %312 = vst [vmem:[#allocation4 + $0x110] sm:$0xff] %v300
    %313 = vst [vmem:[#allocation4 + $0x118] sm:$0xff] %v301
    %v314 = vld [vmem:[%s0 + $0x8] sm:$0xff]
    %v315 = vld [vmem:[%s0 + $0x10] sm:$0xff]
    %v316 = vld [vmem:[%s0 + $0x18] sm:$0xff]
    %v317 = vld [vmem:[%s0 + $0x20] sm:$0xff]
    %v318 = vld [vmem:[%s0 + $0x28] sm:$0xff]
    %v319 = vld [vmem:[%s0 + $0x30] sm:$0xff]
    %v320 = vld [vmem:[%s0 + $0x38] sm:$0xff]
    %328 = vrot.lane.b32.xlu0 %v314, 111
    %v329 = vpop.permute.xlu0 %328
    %330 = vrot.lane.b32.xlu0 %v315, 111
    %v331 = vpop.permute.xlu0 %330
    %332 = vrot.lane.b32.xlu0 %v316, 111
    %v333 = vpop.permute.xlu0 %332
    %334 = vrot.lane.b32.xlu0 %v317, 111
    %v335 = vpop.permute.xlu0 %334
    %336 = vrot.lane.b32.xlu0 %v318, 111
    %v337 = vpop.permute.xlu0 %336
    %338 = vrot.lane.b32.xlu0 %v319, 111
    %v339 = vpop.permute.xlu0 %338
    %340 = vrot.lane.b32.xlu0 %v320, 111
    %v341 = vpop.permute.xlu0 %340
    %vm342 = vcmask 908288
    %v343 = vsel %vm342, %v329, %v331
    %v344 = vsel %vm342, %v331, %v333
    %v345 = vsel %vm342, %v333, %v335
    %v346 = vsel %vm342, %v335, %v337
    %v347 = vsel %vm342, %v337, %v339
    %v348 = vsel %vm342, %v339, %v341
    %355 = vst [vmem:[#allocation4 + $0x120] sm:$0xff] %v343
    %356 = vst [vmem:[#allocation4 + $0x128] sm:$0xff] %v344
    %357 = vst [vmem:[#allocation4 + $0x130] sm:$0xff] %v345
    %358 = vst [vmem:[#allocation4 + $0x138] sm:$0xff] %v346
    %359 = vst [vmem:[#allocation4 + $0x140] sm:$0xff] %v347
    %360 = vst [vmem:[#allocation4 + $0x148] sm:$0xff] %v348
    %v361 = vld [vmem:[%s0 + $0x8] sm:$0xff]
    %v362 = vld [vmem:[%s0 + $0x10] sm:$0xff]
    %v363 = vld [vmem:[%s0 + $0x18] sm:$0xff]
    %v364 = vld [vmem:[%s0 + $0x20] sm:$0xff]
    %v365 = vld [vmem:[%s0 + $0x28] sm:$0xff]
    %v366 = vld [vmem:[%s0 + $0x30] sm:$0xff]
    %v367 = vld [vmem:[%s0 + $0x38] sm:$0xff]
    %375 = vrot.lane.b32.xlu0 %v361, 110
    %v376 = vpop.permute.xlu0 %375
    %377 = vrot.lane.b32.xlu0 %v362, 110
    %v378 = vpop.permute.xlu0 %377
    %379 = vrot.lane.b32.xlu0 %v363, 110
    %v380 = vpop.permute.xlu0 %379
    %381 = vrot.lane.b32.xlu0 %v364, 110
    %v382 = vpop.permute.xlu0 %381
    %383 = vrot.lane.b32.xlu0 %v365, 110
    %v384 = vpop.permute.xlu0 %383
    %385 = vrot.lane.b32.xlu0 %v366, 110
    %v386 = vpop.permute.xlu0 %385
    %387 = vrot.lane.b32.xlu0 %v367, 110
    %v388 = vpop.permute.xlu0 %387
    %vm389 = vcmask 900096
    %v390 = vsel %vm389, %v376, %v378
    %v391 = vsel %vm389, %v378, %v380
    %v392 = vsel %vm389, %v380, %v382
    %v393 = vsel %vm389, %v382, %v384
    %v394 = vsel %vm389, %v384, %v386
    %v395 = vsel %vm389, %v386, %v388
    %402 = vst [vmem:[#allocation4 + $0x150] sm:$0xff] %v390
    %403 = vst [vmem:[#allocation4 + $0x158] sm:$0xff] %v391
    %404 = vst [vmem:[#allocation4 + $0x160] sm:$0xff] %v392
    %405 = vst [vmem:[#allocation4 + $0x168] sm:$0xff] %v393
    %406 = vst [vmem:[#allocation4 + $0x170] sm:$0xff] %v394
    %407 = vst [vmem:[#allocation4 + $0x178] sm:$0xff] %v395
    %v408 = vld [vmem:[%s0 + $0x8] sm:$0xff]
    %v409 = vld [vmem:[%s0 + $0x10] sm:$0xff]
    %v410 = vld [vmem:[%s0 + $0x18] sm:$0xff]
    %v411 = vld [vmem:[%s0 + $0x20] sm:$0xff]
    %v412 = vld [vmem:[%s0 + $0x28] sm:$0xff]
    %v413 = vld [vmem:[%s0 + $0x30] sm:$0xff]
    %v414 = vld [vmem:[%s0 + $0x38] sm:$0xff]
    %422 = vrot.lane.b32.xlu0 %v408, 109
    %v423 = vpop.permute.xlu0 %422
    %424 = vrot.lane.b32.xlu0 %v409, 109
    %v425 = vpop.permute.xlu0 %424
    %426 = vrot.lane.b32.xlu0 %v410, 109
    %v427 = vpop.permute.xlu0 %426
    %428 = vrot.lane.b32.xlu0 %v411, 109
    %v429 = vpop.permute.xlu0 %428
    %430 = vrot.lane.b32.xlu0 %v412, 109
    %v431 = vpop.permute.xlu0 %430
    %432 = vrot.lane.b32.xlu0 %v413, 109
    %v433 = vpop.permute.xlu0 %432
    %434 = vrot.lane.b32.xlu0 %v414, 109
    %v435 = vpop.permute.xlu0 %434
    %vm436 = vcmask 891904
    %v437 = vsel %vm436, %v423, %v425
    %v438 = vsel %vm436, %v425, %v427
    %v439 = vsel %vm436, %v427, %v429
    %v440 = vsel %vm436, %v429, %v431
    %v441 = vsel %vm436, %v431, %v433
    %v442 = vsel %vm436, %v433, %v435
    %449 = vst [vmem:[#allocation4 + $0x180] sm:$0xff] %v437
    %450 = vst [vmem:[#allocation4 + $0x188] sm:$0xff] %v438
    %451 = vst [vmem:[#allocation4 + $0x190] sm:$0xff] %v439
    %452 = vst [vmem:[#allocation4 + $0x198] sm:$0xff] %v440
    %453 = vst [vmem:[#allocation4 + $0x1a0] sm:$0xff] %v441
    %454 = vst [vmem:[#allocation4 + $0x1a8] sm:$0xff] %v442
    %v455 = vld [vmem:[%s2] sm:$0xf]
    %v456 = vld [vmem:[#allocation4] sm:$0xff]
    %v457 = vld [vmem:[#allocation4 + $0x8] sm:$0xff]
    %v458 = vld [vmem:[#allocation4 + $0x10] sm:$0xff]
    %v459 = vld [vmem:[#allocation4 + $0x18] sm:$0xff]
    %v460 = vld [vmem:[#allocation4 + $0x20] sm:$0xff]
    %v461 = vld [vmem:[#allocation4 + $0x28] sm:$0xff]
    %v462 = vld [vmem:[#allocation4 + $0x30] sm:$0xff]
    %v463 = vld [vmem:[#allocation4 + $0x38] sm:$0xff]
    %v464 = vld [vmem:[#allocation4 + $0x40] sm:$0xff]
    %v465 = vld [vmem:[#allocation4 + $0x48] sm:$0xff]
    %v466 = vld [vmem:[#allocation4 + $0x50] sm:$0xff]
    %v467 = vld [vmem:[#allocation4 + $0x58] sm:$0xff]
    %v468 = vld [vmem:[#allocation4 + $0x60] sm:$0xff]
    %v469 = vld [vmem:[#allocation4 + $0x68] sm:$0xff]
    %v470 = vld [vmem:[#allocation4 + $0x70] sm:$0xff]
    %v471 = vld [vmem:[#allocation4 + $0x78] sm:$0xff]
    %v472 = vld [vmem:[#allocation4 + $0x80] sm:$0xff]
    %v473 = vld [vmem:[#allocation4 + $0x88] sm:$0xff]
    %v474 = vld [vmem:[#allocation4 + $0x90] sm:$0xff]
    %v475 = vld [vmem:[#allocation4 + $0x98] sm:$0xff]
    %v476 = vld [vmem:[#allocation4 + $0xa0] sm:$0xff]
    %v477 = vld [vmem:[#allocation4 + $0xa8] sm:$0xff]
    %v478 = vld [vmem:[#allocation4 + $0xb0] sm:$0xff]
    %v479 = vld [vmem:[#allocation4 + $0xb8] sm:$0xff]
    %v480 = vld [vmem:[#allocation4 + $0xc0] sm:$0xff]
    %v481 = vld [vmem:[#allocation4 + $0xc8] sm:$0xff]
    %v482 = vld [vmem:[#allocation4 + $0xd0] sm:$0xff]
    %v483 = vld [vmem:[#allocation4 + $0xd8] sm:$0xff]
    %v484 = vld [vmem:[#allocation4 + $0xe0] sm:$0xff]
    %v485 = vld [vmem:[#allocation4 + $0xe8] sm:$0xff]
    %v486 = vld [vmem:[#allocation4 + $0xf0] sm:$0xff]
    %v487 = vld [vmem:[#allocation4 + $0xf8] sm:$0xff]
    %v488 = vld [vmem:[#allocation4 + $0x100] sm:$0xff]
    %v489 = vld [vmem:[#allocation4 + $0x108] sm:$0xff]
    %v490 = vld [vmem:[#allocation4 + $0x110] sm:$0xff]
    %v491 = vld [vmem:[#allocation4 + $0x118] sm:$0xff]
    %v492 = vld [vmem:[#allocation4 + $0x120] sm:$0xff]
    %v493 = vld [vmem:[#allocation4 + $0x128] sm:$0xff]
    %v494 = vld [vmem:[#allocation4 + $0x130] sm:$0xff]
    %v495 = vld [vmem:[#allocation4 + $0x138] sm:$0xff]
    %v496 = vld [vmem:[#allocation4 + $0x140] sm:$0xff]
    %v497 = vld [vmem:[#allocation4 + $0x148] sm:$0xff]
    %v498 = vld [vmem:[#allocation4 + $0x150] sm:$0xff]
    %v499 = vld [vmem:[#allocation4 + $0x158] sm:$0xff]
    %v500 = vld [vmem:[#allocation4 + $0x160] sm:$0xff]
    %v501 = vld [vmem:[#allocation4 + $0x168] sm:$0xff]
    %v502 = vld [vmem:[#allocation4 + $0x170] sm:$0xff]
    %v503 = vld [vmem:[#allocation4 + $0x178] sm:$0xff]
    %v504 = vld [vmem:[#allocation4 + $0x180] sm:$0xff]
    %v505 = vld [vmem:[#allocation4 + $0x188] sm:$0xff]
    %v506 = vld [vmem:[#allocation4 + $0x190] sm:$0xff]
    %v507 = vld [vmem:[#allocation4 + $0x198] sm:$0xff]
    %v508 = vld [vmem:[#allocation4 + $0x1a0] sm:$0xff]
    %v509 = vld [vmem:[#allocation4 + $0x1a8] sm:$0xff]
    %v510 = vpack.c.bf16 %v462, %v456
    %v511 = vpack.c.bf16 %v463, %v457
    %v512 = vpack.c.bf16 %v464, %v458
    %v513 = vpack.c.bf16 %v465, %v459
    %v514 = vpack.c.bf16 %v466, %v460
    %v515 = vpack.c.bf16 %v467, %v461
    %v516 = vpack.c.bf16 %v474, %v468
    %v517 = vpack.c.bf16 %v475, %v469
    %v518 = vpack.c.bf16 %v476, %v470
    %v519 = vpack.c.bf16 %v477, %v471
    %v520 = vpack.c.bf16 %v478, %v472
    %v521 = vpack.c.bf16 %v479, %v473
    %v522 = vpack.c.bf16 %v486, %v480
    %v523 = vpack.c.bf16 %v487, %v481
    %v524 = vpack.c.bf16 %v488, %v482
    %v525 = vpack.c.bf16 %v489, %v483
    %v526 = vpack.c.bf16 %v490, %v484
    %v527 = vpack.c.bf16 %v491, %v485
    %v528 = vpack.c.bf16 %v498, %v492
    %v529 = vpack.c.bf16 %v499, %v493
    %v530 = vpack.c.bf16 %v500, %v494
    %v531 = vpack.c.bf16 %v501, %v495
    %v532 = vpack.c.bf16 %v502, %v496
    %v533 = vpack.c.bf16 %v503, %v497
    %v534 = vpack.c.bf16 %v504, %v504
    %v535 = vpack.c.bf16 %v505, %v505
    %v536 = vpack.c.bf16 %v506, %v506
    %v537 = vpack.c.bf16 %v507, %v507
    %v538 = vpack.c.bf16 %v508, %v508
    %v539 = vpack.c.bf16 %v509, %v509
    %541 = vset.pattern.permute.xlu0 0
    %542 = vperm.xlu0 %541, %v65
    %v543 = vpop.permute.xlu0 %542
    %vm545 = vcmask 588800
    %v547 = vsel %vm545, %v455, 0
    %vm549 = vcmask 1043456
    %v551 = vsel %vm549, %v534, 0
    %v554 = vsel %vm549, %v535, 0
    %v557 = vsel %vm549, %v536, 0
    %v560 = vsel %vm549, %v537, 0
    %v563 = vsel %vm549, %v538, 0
    %v566 = vsel %vm549, %v539, 0
    %568 = vmatprep.subr.bf16.mxu0 %v511
    %569 = vmatpush1.bf16.msra.mxu0 %v510
    %570 = vmatprep.subr.bf16.mxu0 %v517
    %571 = vmatpush1.bf16.msra.mxu0 %v516
    %572 = vmatprep.subr.bf16.mxu0 %v523
    %573 = vmatpush1.bf16.msra.mxu0 %v522
    %574 = vmatprep.subr.bf16.mxu0 %v529
    %575 = vmatpush1.bf16.msra.mxu0 %v528
    %576 = vmatprep.subr.bf16.mxu0 %v554
    %577 = vmatpush1.bf16.msra.mxu0 %v551
    %578 = vmatprep.subr.bf16.mxu0 0
    %579 = vmatpush1.bf16.msra.mxu0 0
    %580 = vmatprep.subr.bf16.mxu0 0
    %581 = vmatpush1.bf16.msra.mxu0 0
    %582 = vmatprep.subr.bf16.mxu0 0
    %583 = vmatpush1.bf16.msra.mxu0 0
    %584 = vmatprep.subr.bf16.mxu0 0
    %585 = vmatpush1.bf16.msra.mxu0 0
    %586 = vmatprep.subr.bf16.mxu0 0
    %587 = vmatpush1.bf16.msra.mxu0 0
    %588 = vmatprep.subr.bf16.mxu0 0
    %589 = vmatpush1.bf16.msra.mxu0 0
    %590 = vmatprep.subr.bf16.mxu0 0
    %591 = vmatpush1.bf16.msra.mxu0 0
    %592 = vmatprep.subr.bf16.mxu0 0
    %593 = vmatpush1.bf16.msra.mxu0 0
    %594 = vmatprep.subr.bf16.mxu0 0
    %595 = vmatpush1.bf16.msra.mxu0 0
    %596 = vmatprep.subr.bf16.mxu0 0
    %597 = vmatpush1.bf16.msra.mxu0 0
    %598 = vmatprep.subr.bf16.mxu0 0
    %599 = vmatpush1.bf16.msra.mxu0 0
    %600 = vmatprep.mubr.bf16.mxu0 0
    %601 = vmatmul.mubr.bf16.gmra.mrb[0].mxu0 %v547
    %v602 = vpop.f32.mrb[0].mxu0
    %v603 = vadd.f32 %v543, %v602
    %v604 = vpop.f32.mrb[0].mxu0
    %v605 = vadd.f32 %v543, %v604
    %v606 = vpop.f32.mrb[0].mxu0
    %v607 = vpop.f32.mrb[0].mxu0
    %608 = vdwg.mxu0
    %609 = vmatprep.subr.bf16.mxu0 %v513
    %610 = vmatpush1.bf16.msra.mxu0 %v512
    %611 = vmatprep.subr.bf16.mxu0 %v519
    %612 = vmatpush1.bf16.msra.mxu0 %v518
    %613 = vmatprep.subr.bf16.mxu0 %v525
    %614 = vmatpush1.bf16.msra.mxu0 %v524
    %615 = vmatprep.subr.bf16.mxu0 %v531
    %616 = vmatpush1.bf16.msra.mxu0 %v530
    %617 = vmatprep.subr.bf16.mxu0 %v560
    %618 = vmatpush1.bf16.msra.mxu0 %v557
    %619 = vmatprep.subr.bf16.mxu0 0
    %620 = vmatpush1.bf16.msra.mxu0 0
    %621 = vmatprep.subr.bf16.mxu0 0
    %622 = vmatpush1.bf16.msra.mxu0 0
    %623 = vmatprep.subr.bf16.mxu0 0
    %624 = vmatpush1.bf16.msra.mxu0 0
    %625 = vmatprep.subr.bf16.mxu0 0
    %626 = vmatpush1.bf16.msra.mxu0 0
    %627 = vmatprep.subr.bf16.mxu0 0
    %628 = vmatpush1.bf16.msra.mxu0 0
    %629 = vmatprep.subr.bf16.mxu0 0
    %630 = vmatpush1.bf16.msra.mxu0 0
    %631 = vmatprep.subr.bf16.mxu0 0
    %632 = vmatpush1.bf16.msra.mxu0 0
    %633 = vmatprep.subr.bf16.mxu0 0
    %634 = vmatpush1.bf16.msra.mxu0 0
    %635 = vmatprep.subr.bf16.mxu0 0
    %636 = vmatpush1.bf16.msra.mxu0 0
    %637 = vmatprep.subr.bf16.mxu0 0
    %638 = vmatpush1.bf16.msra.mxu0 0
    %639 = vmatprep.subr.bf16.mxu0 0
    %640 = vmatpush1.bf16.msra.mxu0 0
    %641 = vmatprep.mubr.bf16.mxu0 0
    %642 = vmatmul.mubr.bf16.gmra.mrb[0].mxu0 %v547
    %v643 = vpop.f32.mrb[0].mxu0
    %v644 = vadd.f32 %v543, %v643
    %v645 = vpop.f32.mrb[0].mxu0
    %v646 = vadd.f32 %v543, %v645
    %v647 = vpop.f32.mrb[0].mxu0
    %v648 = vpop.f32.mrb[0].mxu0
    %649 = vdwg.mxu0
    %650 = vmatprep.subr.bf16.mxu0 %v515
    %651 = vmatpush1.bf16.msra.mxu0 %v514
    %652 = vmatprep.subr.bf16.mxu0 %v521
    %653 = vmatpush1.bf16.msra.mxu0 %v520
    %654 = vmatprep.subr.bf16.mxu0 %v527
    %655 = vmatpush1.bf16.msra.mxu0 %v526
    %656 = vmatprep.subr.bf16.mxu0 %v533
    %657 = vmatpush1.bf16.msra.mxu0 %v532
    %658 = vmatprep.subr.bf16.mxu0 %v566
    %659 = vmatpush1.bf16.msra.mxu0 %v563
    %660 = vmatprep.subr.bf16.mxu0 0
    %661 = vmatpush1.bf16.msra.mxu0 0
    %662 = vmatprep.subr.bf16.mxu0 0
    %663 = vmatpush1.bf16.msra.mxu0 0
    %664 = vmatprep.subr.bf16.mxu0 0
    %665 = vmatpush1.bf16.msra.mxu0 0
    %666 = vmatprep.subr.bf16.mxu0 0
    %667 = vmatpush1.bf16.msra.mxu0 0
    %668 = vmatprep.subr.bf16.mxu0 0
    %669 = vmatpush1.bf16.msra.mxu0 0
    %670 = vmatprep.subr.bf16.mxu0 0
    %671 = vmatpush1.bf16.msra.mxu0 0
    %672 = vmatprep.subr.bf16.mxu0 0
    %673 = vmatpush1.bf16.msra.mxu0 0
    %674 = vmatprep.subr.bf16.mxu0 0
    %675 = vmatpush1.bf16.msra.mxu0 0
    %676 = vmatprep.subr.bf16.mxu0 0
    %677 = vmatpush1.bf16.msra.mxu0 0
    %678 = vmatprep.subr.bf16.mxu0 0
    %679 = vmatpush1.bf16.msra.mxu0 0
    %680 = vmatprep.subr.bf16.mxu0 0
    %681 = vmatpush1.bf16.msra.mxu0 0
    %682 = vmatprep.mubr.bf16.mxu0 0
    %683 = vmatmul.mubr.bf16.gmra.mrb[0].mxu0 %v547
    %v684 = vpop.f32.mrb[0].mxu0
    %v685 = vadd.f32 %v543, %v684
    %v686 = vpop.f32.mrb[0].mxu0
    %v687 = vadd.f32 %v543, %v686
    %v688 = vpop.f32.mrb[0].mxu0
    %v689 = vpop.f32.mrb[0].mxu0
    %690 = vdwg.mxu0
    %691 = vst [vmem:[#allocation5] sm:$0xff] %v603
    %692 = vst [vmem:[#allocation5 + $0x8] sm:$0xff] %v605
    %693 = vst [vmem:[#allocation5 + $0x10] sm:$0xff] %v644
    %694 = vst [vmem:[#allocation5 + $0x18] sm:$0xff] %v646
    %695 = vst [vmem:[#allocation5 + $0x20] sm:$0xff] %v685
    %696 = vst [vmem:[#allocation5 + $0x28] sm:$0xff] %v687
    %v697 = vld [vmem:[#allocation2] sm:$0xff]
    %v698 = vld [vmem:[#allocation2 + $0x8] sm:$0xff]
    %v699 = vld [vmem:[#allocation2 + $0x10] sm:$0xff]
    %v700 = vld [vmem:[#allocation2 + $0x18] sm:$0xff]
    %v701 = vld [vmem:[#allocation2 + $0x20] sm:$0xff]
    %v702 = vld [vmem:[#allocation2 + $0x28] sm:$0xff]
    %v703 = vld [vmem:[#allocation2 + $0x30] sm:$0xff]
    %711 = vrot.lane.b32.xlu0 %v697, 19
    %v712 = vpop.permute.xlu0 %711
    %713 = vrot.lane.b32.xlu0 %v698, 19
    %v714 = vpop.permute.xlu0 %713
    %715 = vrot.lane.b32.xlu0 %v699, 19
    %v716 = vpop.permute.xlu0 %715
    %717 = vrot.lane.b32.xlu0 %v700, 19
    %v718 = vpop.permute.xlu0 %717
    %719 = vrot.lane.b32.xlu0 %v701, 19
    %v720 = vpop.permute.xlu0 %719
    %721 = vrot.lane.b32.xlu0 %v702, 19
    %v722 = vpop.permute.xlu0 %721
    %723 = vrot.lane.b32.xlu0 %v703, 19
    %v724 = vpop.permute.xlu0 %723
    %v725 = vsel %vm95, %v712, %v714
    %v726 = vsel %vm95, %v714, %v716
    %v727 = vsel %vm95, %v716, %v718
    %v728 = vsel %vm95, %v718, %v720
    %v729 = vsel %vm95, %v720, %v722
    %v730 = vsel %vm95, %v722, %v724
    %737 = vst [vmem:[#allocation4] sm:$0xff] %v725
    %738 = vst [vmem:[#allocation4 + $0x8] sm:$0xff] %v726
    %739 = vst [vmem:[#allocation4 + $0x10] sm:$0xff] %v727
    %740 = vst [vmem:[#allocation4 + $0x18] sm:$0xff] %v728
    %741 = vst [vmem:[#allocation4 + $0x20] sm:$0xff] %v729
    %742 = vst [vmem:[#allocation4 + $0x28] sm:$0xff] %v730
    %v743 = vld [vmem:[#allocation2] sm:$0xff]
    %v744 = vld [vmem:[#allocation2 + $0x8] sm:$0xff]
    %v745 = vld [vmem:[#allocation2 + $0x10] sm:$0xff]
    %v746 = vld [vmem:[#allocation2 + $0x18] sm:$0xff]
    %v747 = vld [vmem:[#allocation2 + $0x20] sm:$0xff]
    %v748 = vld [vmem:[#allocation2 + $0x28] sm:$0xff]
    %v749 = vld [vmem:[#allocation2 + $0x30] sm:$0xff]
    %757 = vrot.lane.b32.xlu0 %v743, 18
    %v758 = vpop.permute.xlu0 %757
    %759 = vrot.lane.b32.xlu0 %v744, 18
    %v760 = vpop.permute.xlu0 %759
    %761 = vrot.lane.b32.xlu0 %v745, 18
    %v762 = vpop.permute.xlu0 %761
    %763 = vrot.lane.b32.xlu0 %v746, 18
    %v764 = vpop.permute.xlu0 %763
    %765 = vrot.lane.b32.xlu0 %v747, 18
    %v766 = vpop.permute.xlu0 %765
    %767 = vrot.lane.b32.xlu0 %v748, 18
    %v768 = vpop.permute.xlu0 %767
    %769 = vrot.lane.b32.xlu0 %v749, 18
    %v770 = vpop.permute.xlu0 %769
    %v771 = vsel %vm142, %v758, %v760
    %v772 = vsel %vm142, %v760, %v762
    %v773 = vsel %vm142, %v762, %v764
    %v774 = vsel %vm142, %v764, %v766
    %v775 = vsel %vm142, %v766, %v768
    %v776 = vsel %vm142, %v768, %v770
    %783 = vst [vmem:[#allocation4 + $0x30] sm:$0xff] %v771
    %784 = vst [vmem:[#allocation4 + $0x38] sm:$0xff] %v772
    %785 = vst [vmem:[#allocation4 + $0x40] sm:$0xff] %v773
    %786 = vst [vmem:[#allocation4 + $0x48] sm:$0xff] %v774
    %787 = vst [vmem:[#allocation4 + $0x50] sm:$0xff] %v775
    %788 = vst [vmem:[#allocation4 + $0x58] sm:$0xff] %v776
    %v789 = vld [vmem:[#allocation2] sm:$0xff]
    %v790 = vld [vmem:[#allocation2 + $0x8] sm:$0xff]
    %v791 = vld [vmem:[#allocation2 + $0x10] sm:$0xff]
    %v792 = vld [vmem:[#allocation2 + $0x18] sm:$0xff]
    %v793 = vld [vmem:[#allocation2 + $0x20] sm:$0xff]
    %v794 = vld [vmem:[#allocation2 + $0x28] sm:$0xff]
    %v795 = vld [vmem:[#allocation2 + $0x30] sm:$0xff]
    %803 = vrot.lane.b32.xlu0 %v789, 17
    %v804 = vpop.permute.xlu0 %803
    %805 = vrot.lane.b32.xlu0 %v790, 17
    %v806 = vpop.permute.xlu0 %805
    %807 = vrot.lane.b32.xlu0 %v791, 17
    %v808 = vpop.permute.xlu0 %807
    %809 = vrot.lane.b32.xlu0 %v792, 17
    %v810 = vpop.permute.xlu0 %809
    %811 = vrot.lane.b32.xlu0 %v793, 17
    %v812 = vpop.permute.xlu0 %811
    %813 = vrot.lane.b32.xlu0 %v794, 17
    %v814 = vpop.permute.xlu0 %813
    %815 = vrot.lane.b32.xlu0 %v795, 17
    %v816 = vpop.permute.xlu0 %815
    %v817 = vsel %vm189, %v804, %v806
    %v818 = vsel %vm189, %v806, %v808
    %v819 = vsel %vm189, %v808, %v810
    %v820 = vsel %vm189, %v810, %v812
    %v821 = vsel %vm189, %v812, %v814
    %v822 = vsel %vm189, %v814, %v816
    %829 = vst [vmem:[#allocation4 + $0x60] sm:$0xff] %v817
    %830 = vst [vmem:[#allocation4 + $0x68] sm:$0xff] %v818
    %831 = vst [vmem:[#allocation4 + $0x70] sm:$0xff] %v819
    %832 = vst [vmem:[#allocation4 + $0x78] sm:$0xff] %v820
    %833 = vst [vmem:[#allocation4 + $0x80] sm:$0xff] %v821
    %834 = vst [vmem:[#allocation4 + $0x88] sm:$0xff] %v822
    %v835 = vld [vmem:[#allocation2] sm:$0xff]
    %v836 = vld [vmem:[#allocation2 + $0x8] sm:$0xff]
    %v837 = vld [vmem:[#allocation2 + $0x10] sm:$0xff]
    %v838 = vld [vmem:[#allocation2 + $0x18] sm:$0xff]
    %v839 = vld [vmem:[#allocation2 + $0x20] sm:$0xff]
    %v840 = vld [vmem:[#allocation2 + $0x28] sm:$0xff]
    %v841 = vld [vmem:[#allocation2 + $0x30] sm:$0xff]
    %849 = vrot.lane.b32.xlu0 %v835, 1
    %v850 = vpop.permute.xlu0 %849
    %851 = vrot.lane.b32.xlu0 %v836, 1
    %v852 = vpop.permute.xlu0 %851
    %853 = vrot.lane.b32.xlu0 %v837, 1
    %v854 = vpop.permute.xlu0 %853
    %855 = vrot.lane.b32.xlu0 %v838, 1
    %v856 = vpop.permute.xlu0 %855
    %857 = vrot.lane.b32.xlu0 %v839, 1
    %v858 = vpop.permute.xlu0 %857
    %859 = vrot.lane.b32.xlu0 %v840, 1
    %v860 = vpop.permute.xlu0 %859
    %861 = vrot.lane.b32.xlu0 %v841, 1
    %v862 = vpop.permute.xlu0 %861
    %v863 = vsel %vm236, %v850, %v852
    %v864 = vsel %vm236, %v852, %v854
    %v865 = vsel %vm236, %v854, %v856
    %v866 = vsel %vm236, %v856, %v858
    %v867 = vsel %vm236, %v858, %v860
    %v868 = vsel %vm236, %v860, %v862
    %875 = vst [vmem:[#allocation4 + $0x90] sm:$0xff] %v863
    %876 = vst [vmem:[#allocation4 + $0x98] sm:$0xff] %v864
    %877 = vst [vmem:[#allocation4 + $0xa0] sm:$0xff] %v865
    %878 = vst [vmem:[#allocation4 + $0xa8] sm:$0xff] %v866
    %879 = vst [vmem:[#allocation4 + $0xb0] sm:$0xff] %v867
    %880 = vst [vmem:[#allocation4 + $0xb8] sm:$0xff] %v868
    %v881 = vld [vmem:[#allocation2 + $0x8] sm:$0xff]
    %v882 = vld [vmem:[#allocation2 + $0x10] sm:$0xff]
    %v883 = vld [vmem:[#allocation2 + $0x18] sm:$0xff]
    %v884 = vld [vmem:[#allocation2 + $0x20] sm:$0xff]
    %v885 = vld [vmem:[#allocation2 + $0x28] sm:$0xff]
    %v886 = vld [vmem:[#allocation2 + $0x30] sm:$0xff]
    %887 = vst [vmem:[#allocation4 + $0xc0] sm:$0xff] %v881
    %888 = vst [vmem:[#allocation4 + $0xc8] sm:$0xff] %v882
    %889 = vst [vmem:[#allocation4 + $0xd0] sm:$0xff] %v883
    %890 = vst [vmem:[#allocation4 + $0xd8] sm:$0xff] %v884
    %891 = vst [vmem:[#allocation4 + $0xe0] sm:$0xff] %v885
    %892 = vst [vmem:[#allocation4 + $0xe8] sm:$0xff] %v886
    %v893 = vld [vmem:[#allocation2 + $0x8] sm:$0xff]
    %v894 = vld [vmem:[#allocation2 + $0x10] sm:$0xff]
    %v895 = vld [vmem:[#allocation2 + $0x18] sm:$0xff]
    %v896 = vld [vmem:[#allocation2 + $0x20] sm:$0xff]
    %v897 = vld [vmem:[#allocation2 + $0x28] sm:$0xff]
    %v898 = vld [vmem:[#allocation2 + $0x30] sm:$0xff]
    %v899 = vld [vmem:[#allocation2 + $0x38] sm:$0xff]
    %907 = vrot.lane.b32.xlu0 %v893, 127
    %v908 = vpop.permute.xlu0 %907
    %909 = vrot.lane.b32.xlu0 %v894, 127
    %v910 = vpop.permute.xlu0 %909
    %911 = vrot.lane.b32.xlu0 %v895, 127
    %v912 = vpop.permute.xlu0 %911
    %913 = vrot.lane.b32.xlu0 %v896, 127
    %v914 = vpop.permute.xlu0 %913
    %915 = vrot.lane.b32.xlu0 %v897, 127
    %v916 = vpop.permute.xlu0 %915
    %917 = vrot.lane.b32.xlu0 %v898, 127
    %v918 = vpop.permute.xlu0 %917
    %919 = vrot.lane.b32.xlu0 %v899, 127
    %v920 = vpop.permute.xlu0 %919
    %v921 = vsel %vm295, %v908, %v910
    %v922 = vsel %vm295, %v910, %v912
    %v923 = vsel %vm295, %v912, %v914
    %v924 = vsel %vm295, %v914, %v916
    %v925 = vsel %vm295, %v916, %v918
    %v926 = vsel %vm295, %v918, %v920
    %933 = vst [vmem:[#allocation4 + $0xf0] sm:$0xff] %v921
    %934 = vst [vmem:[#allocation4 + $0xf8] sm:$0xff] %v922
    %935 = vst [vmem:[#allocation4 + $0x100] sm:$0xff] %v923
    %936 = vst [vmem:[#allocation4 + $0x108] sm:$0xff] %v924
    %937 = vst [vmem:[#allocation4 + $0x110] sm:$0xff] %v925
    %938 = vst [vmem:[#allocation4 + $0x118] sm:$0xff] %v926
    %v939 = vld [vmem:[#allocation2 + $0x8] sm:$0xff]
    %v940 = vld [vmem:[#allocation2 + $0x10] sm:$0xff]
    %v941 = vld [vmem:[#allocation2 + $0x18] sm:$0xff]
    %v942 = vld [vmem:[#allocation2 + $0x20] sm:$0xff]
    %v943 = vld [vmem:[#allocation2 + $0x28] sm:$0xff]
    %v944 = vld [vmem:[#allocation2 + $0x30] sm:$0xff]
    %v945 = vld [vmem:[#allocation2 + $0x38] sm:$0xff]
    %953 = vrot.lane.b32.xlu0 %v939, 111
    %v954 = vpop.permute.xlu0 %953
    %955 = vrot.lane.b32.xlu0 %v940, 111
    %v956 = vpop.permute.xlu0 %955
    %957 = vrot.lane.b32.xlu0 %v941, 111
    %v958 = vpop.permute.xlu0 %957
    %959 = vrot.lane.b32.xlu0 %v942, 111
    %v960 = vpop.permute.xlu0 %959
    %961 = vrot.lane.b32.xlu0 %v943, 111
    %v962 = vpop.permute.xlu0 %961
    %963 = vrot.lane.b32.xlu0 %v944, 111
    %v964 = vpop.permute.xlu0 %963
    %965 = vrot.lane.b32.xlu0 %v945, 111
    %v966 = vpop.permute.xlu0 %965
    %v967 = vsel %vm342, %v954, %v956
    %v968 = vsel %vm342, %v956, %v958
    %v969 = vsel %vm342, %v958, %v960
    %v970 = vsel %vm342, %v960, %v962
    %v971 = vsel %vm342, %v962, %v964
    %v972 = vsel %vm342, %v964, %v966
    %979 = vst [vmem:[#allocation4 + $0x120] sm:$0xff] %v967
    %980 = vst [vmem:[#allocation4 + $0x128] sm:$0xff] %v968
    %981 = vst [vmem:[#allocation4 + $0x130] sm:$0xff] %v969
    %982 = vst [vmem:[#allocation4 + $0x138] sm:$0xff] %v970
    %983 = vst [vmem:[#allocation4 + $0x140] sm:$0xff] %v971
    %984 = vst [vmem:[#allocation4 + $0x148] sm:$0xff] %v972
    %v985 = vld [vmem:[#allocation2 + $0x8] sm:$0xff]
    %v986 = vld [vmem:[#allocation2 + $0x10] sm:$0xff]
    %v987 = vld [vmem:[#allocation2 + $0x18] sm:$0xff]
    %v988 = vld [vmem:[#allocation2 + $0x20] sm:$0xff]
    %v989 = vld [vmem:[#allocation2 + $0x28] sm:$0xff]
    %v990 = vld [vmem:[#allocation2 + $0x30] sm:$0xff]
    %v991 = vld [vmem:[#allocation2 + $0x38] sm:$0xff]
    %999 = vrot.lane.b32.xlu0 %v985, 110
    %v1000 = vpop.permute.xlu0 %999
    %1001 = vrot.lane.b32.xlu0 %v986, 110
    %v1002 = vpop.permute.xlu0 %1001
    %1003 = vrot.lane.b32.xlu0 %v987, 110
    %v1004 = vpop.permute.xlu0 %1003
    %1005 = vrot.lane.b32.xlu0 %v988, 110
    %v1006 = vpop.permute.xlu0 %1005
    %1007 = vrot.lane.b32.xlu0 %v989, 110
    %v1008 = vpop.permute.xlu0 %1007
    %1009 = vrot.lane.b32.xlu0 %v990, 110
    %v1010 = vpop.permute.xlu0 %1009
    %1011 = vrot.lane.b32.xlu0 %v991, 110
    %v1012 = vpop.permute.xlu0 %1011
    %v1013 = vsel %vm389, %v1000, %v1002
    %v1014 = vsel %vm389, %v1002, %v1004
    %v1015 = vsel %vm389, %v1004, %v1006
    %v1016 = vsel %vm389, %v1006, %v1008
    %v1017 = vsel %vm389, %v1008, %v1010
    %v1018 = vsel %vm389, %v1010, %v1012
    %1025 = vst [vmem:[#allocation4 + $0x150] sm:$0xff] %v1013
    %1026 = vst [vmem:[#allocation4 + $0x158] sm:$0xff] %v1014
    %1027 = vst [vmem:[#allocation4 + $0x160] sm:$0xff] %v1015
    %1028 = vst [vmem:[#allocation4 + $0x168] sm:$0xff] %v1016
    %1029 = vst [vmem:[#allocation4 + $0x170] sm:$0xff] %v1017
    %1030 = vst [vmem:[#allocation4 + $0x178] sm:$0xff] %v1018
    %v1031 = vld [vmem:[#allocation2 + $0x8] sm:$0xff]
    %v1032 = vld [vmem:[#allocation2 + $0x10] sm:$0xff]
    %v1033 = vld [vmem:[#allocation2 + $0x18] sm:$0xff]
    %v1034 = vld [vmem:[#allocation2 + $0x20] sm:$0xff]
    %v1035 = vld [vmem:[#allocation2 + $0x28] sm:$0xff]
    %v1036 = vld [vmem:[#allocation2 + $0x30] sm:$0xff]
    %v1037 = vld [vmem:[#allocation2 + $0x38] sm:$0xff]
    %1045 = vrot.lane.b32.xlu0 %v1031, 109
    %v1046 = vpop.permute.xlu0 %1045
    %1047 = vrot.lane.b32.xlu0 %v1032, 109
    %v1048 = vpop.permute.xlu0 %1047
    %1049 = vrot.lane.b32.xlu0 %v1033, 109
    %v1050 = vpop.permute.xlu0 %1049
    %1051 = vrot.lane.b32.xlu0 %v1034, 109
    %v1052 = vpop.permute.xlu0 %1051
    %1053 = vrot.lane.b32.xlu0 %v1035, 109
    %v1054 = vpop.permute.xlu0 %1053
    %1055 = vrot.lane.b32.xlu0 %v1036, 109
    %v1056 = vpop.permute.xlu0 %1055
    %1057 = vrot.lane.b32.xlu0 %v1037, 109
    %v1058 = vpop.permute.xlu0 %1057
    %v1059 = vsel %vm436, %v1046, %v1048
    %v1060 = vsel %vm436, %v1048, %v1050
    %v1061 = vsel %vm436, %v1050, %v1052
    %v1062 = vsel %vm436, %v1052, %v1054
    %v1063 = vsel %vm436, %v1054, %v1056
    %v1064 = vsel %vm436, %v1056, %v1058
    %1071 = vst [vmem:[#allocation4 + $0x180] sm:$0xff] %v1059
    %1072 = vst [vmem:[#allocation4 + $0x188] sm:$0xff] %v1060
    %1073 = vst [vmem:[#allocation4 + $0x190] sm:$0xff] %v1061
    %1074 = vst [vmem:[#allocation4 + $0x198] sm:$0xff] %v1062
    %1075 = vst [vmem:[#allocation4 + $0x1a0] sm:$0xff] %v1063
    %1076 = vst [vmem:[#allocation4 + $0x1a8] sm:$0xff] %v1064
    %v1077 = vld [vmem:[%s3] sm:$0xf]
    %v1078 = vld [vmem:[#allocation4] sm:$0xff]
    %v1079 = vld [vmem:[#allocation4 + $0x8] sm:$0xff]
    %v1080 = vld [vmem:[#allocation4 + $0x10] sm:$0xff]
    %v1081 = vld [vmem:[#allocation4 + $0x18] sm:$0xff]
    %v1082 = vld [vmem:[#allocation4 + $0x20] sm:$0xff]
    %v1083 = vld [vmem:[#allocation4 + $0x28] sm:$0xff]
    %v1084 = vld [vmem:[#allocation4 + $0x30] sm:$0xff]
    %v1085 = vld [vmem:[#allocation4 + $0x38] sm:$0xff]
    %v1086 = vld [vmem:[#allocation4 + $0x40] sm:$0xff]
    %v1087 = vld [vmem:[#allocation4 + $0x48] sm:$0xff]
    %v1088 = vld [vmem:[#allocation4 + $0x50] sm:$0xff]
    %v1089 = vld [vmem:[#allocation4 + $0x58] sm:$0xff]
    %v1090 = vld [vmem:[#allocation4 + $0x60] sm:$0xff]
    %v1091 = vld [vmem:[#allocation4 + $0x68] sm:$0xff]
    %v1092 = vld [vmem:[#allocation4 + $0x70] sm:$0xff]
    %v1093 = vld [vmem:[#allocation4 + $0x78] sm:$0xff]
    %v1094 = vld [vmem:[#allocation4 + $0x80] sm:$0xff]
    %v1095 = vld [vmem:[#allocation4 + $0x88] sm:$0xff]
    %v1096 = vld [vmem:[#allocation4 + $0x90] sm:$0xff]
    %v1097 = vld [vmem:[#allocation4 + $0x98] sm:$0xff]
    %v1098 = vld [vmem:[#allocation4 + $0xa0] sm:$0xff]
    %v1099 = vld [vmem:[#allocation4 + $0xa8] sm:$0xff]
    %v1100 = vld [vmem:[#allocation4 + $0xb0] sm:$0xff]
    %v1101 = vld [vmem:[#allocation4 + $0xb8] sm:$0xff]
    %v1102 = vld [vmem:[#allocation4 + $0xc0] sm:$0xff]
    %v1103 = vld [vmem:[#allocation4 + $0xc8] sm:$0xff]
    %v1104 = vld [vmem:[#allocation4 + $0xd0] sm:$0xff]
    %v1105 = vld [vmem:[#allocation4 + $0xd8] sm:$0xff]
    %v1106 = vld [vmem:[#allocation4 + $0xe0] sm:$0xff]
    %v1107 = vld [vmem:[#allocation4 + $0xe8] sm:$0xff]
    %v1108 = vld [vmem:[#allocation4 + $0xf0] sm:$0xff]
    %v1109 = vld [vmem:[#allocation4 + $0xf8] sm:$0xff]
    %v1110 = vld [vmem:[#allocation4 + $0x100] sm:$0xff]
    %v1111 = vld [vmem:[#allocation4 + $0x108] sm:$0xff]
    %v1112 = vld [vmem:[#allocation4 + $0x110] sm:$0xff]
    %v1113 = vld [vmem:[#allocation4 + $0x118] sm:$0xff]
    %v1114 = vld [vmem:[#allocation4 + $0x120] sm:$0xff]
    %v1115 = vld [vmem:[#allocation4 + $0x128] sm:$0xff]
    %v1116 = vld [vmem:[#allocation4 + $0x130] sm:$0xff]
    %v1117 = vld [vmem:[#allocation4 + $0x138] sm:$0xff]
    %v1118 = vld [vmem:[#allocation4 + $0x140] sm:$0xff]
    %v1119 = vld [vmem:[#allocation4 + $0x148] sm:$0xff]
    %v1120 = vld [vmem:[#allocation4 + $0x150] sm:$0xff]
    %v1121 = vld [vmem:[#allocation4 + $0x158] sm:$0xff]
    %v1122 = vld [vmem:[#allocation4 + $0x160] sm:$0xff]
    %v1123 = vld [vmem:[#allocation4 + $0x168] sm:$0xff]
    %v1124 = vld [vmem:[#allocation4 + $0x170] sm:$0xff]
    %v1125 = vld [vmem:[#allocation4 + $0x178] sm:$0xff]
    %v1126 = vld [vmem:[#allocation4 + $0x180] sm:$0xff]
    %v1127 = vld [vmem:[#allocation4 + $0x188] sm:$0xff]
    %v1128 = vld [vmem:[#allocation4 + $0x190] sm:$0xff]
    %v1129 = vld [vmem:[#allocation4 + $0x198] sm:$0xff]
    %v1130 = vld [vmem:[#allocation4 + $0x1a0] sm:$0xff]
    %v1131 = vld [vmem:[#allocation4 + $0x1a8] sm:$0xff]
    %v1132 = vpack.c.bf16 %v1084, %v1078
    %v1133 = vpack.c.bf16 %v1085, %v1079
    %v1134 = vpack.c.bf16 %v1086, %v1080
    %v1135 = vpack.c.bf16 %v1087, %v1081
    %v1136 = vpack.c.bf16 %v1088, %v1082
    %v1137 = vpack.c.bf16 %v1089, %v1083
    %v1138 = vpack.c.bf16 %v1096, %v1090
    %v1139 = vpack.c.bf16 %v1097, %v1091
    %v1140 = vpack.c.bf16 %v1098, %v1092
    %v1141 = vpack.c.bf16 %v1099, %v1093
    %v1142 = vpack.c.bf16 %v1100, %v1094
    %v1143 = vpack.c.bf16 %v1101, %v1095
    %v1144 = vpack.c.bf16 %v1108, %v1102
    %v1145 = vpack.c.bf16 %v1109, %v1103
    %v1146 = vpack.c.bf16 %v1110, %v1104
    %v1147 = vpack.c.bf16 %v1111, %v1105
    %v1148 = vpack.c.bf16 %v1112, %v1106
    %v1149 = vpack.c.bf16 %v1113, %v1107
    %v1150 = vpack.c.bf16 %v1120, %v1114
    %v1151 = vpack.c.bf16 %v1121, %v1115
    %v1152 = vpack.c.bf16 %v1122, %v1116
    %v1153 = vpack.c.bf16 %v1123, %v1117
    %v1154 = vpack.c.bf16 %v1124, %v1118
    %v1155 = vpack.c.bf16 %v1125, %v1119
    %v1156 = vpack.c.bf16 %v1126, %v1126
    %v1157 = vpack.c.bf16 %v1127, %v1127
    %v1158 = vpack.c.bf16 %v1128, %v1128
    %v1159 = vpack.c.bf16 %v1129, %v1129
    %v1160 = vpack.c.bf16 %v1130, %v1130
    %v1161 = vpack.c.bf16 %v1131, %v1131
    %v1163 = vsel %vm545, %v1077, 0
    %v1166 = vsel %vm549, %v1156, 0
    %v1169 = vsel %vm549, %v1157, 0
    %v1172 = vsel %vm549, %v1158, 0
    %v1175 = vsel %vm549, %v1159, 0
    %v1178 = vsel %vm549, %v1160, 0
    %v1181 = vsel %vm549, %v1161, 0
    %1183 = vmatprep.subr.bf16.mxu0 %v1133
    %1184 = vmatpush1.bf16.msra.mxu0 %v1132
    %1185 = vmatprep.subr.bf16.mxu0 %v1139
    %1186 = vmatpush1.bf16.msra.mxu0 %v1138
    %1187 = vmatprep.subr.bf16.mxu0 %v1145
    %1188 = vmatpush1.bf16.msra.mxu0 %v1144
    %1189 = vmatprep.subr.bf16.mxu0 %v1151
    %1190 = vmatpush1.bf16.msra.mxu0 %v1150
    %1191 = vmatprep.subr.bf16.mxu0 %v1169
    %1192 = vmatpush1.bf16.msra.mxu0 %v1166
    %1193 = vmatprep.subr.bf16.mxu0 0
    %1194 = vmatpush1.bf16.msra.mxu0 0
    %1195 = vmatprep.subr.bf16.mxu0 0
    %1196 = vmatpush1.bf16.msra.mxu0 0
    %1197 = vmatprep.subr.bf16.mxu0 0
    %1198 = vmatpush1.bf16.msra.mxu0 0
    %1199 = vmatprep.subr.bf16.mxu0 0
    %1200 = vmatpush1.bf16.msra.mxu0 0
    %1201 = vmatprep.subr.bf16.mxu0 0
    %1202 = vmatpush1.bf16.msra.mxu0 0
    %1203 = vmatprep.subr.bf16.mxu0 0
    %1204 = vmatpush1.bf16.msra.mxu0 0
    %1205 = vmatprep.subr.bf16.mxu0 0
    %1206 = vmatpush1.bf16.msra.mxu0 0
    %1207 = vmatprep.subr.bf16.mxu0 0
    %1208 = vmatpush1.bf16.msra.mxu0 0
    %1209 = vmatprep.subr.bf16.mxu0 0
    %1210 = vmatpush1.bf16.msra.mxu0 0
    %1211 = vmatprep.subr.bf16.mxu0 0
    %1212 = vmatpush1.bf16.msra.mxu0 0
    %1213 = vmatprep.subr.bf16.mxu0 0
    %1214 = vmatpush1.bf16.msra.mxu0 0
    %1215 = vmatprep.mubr.bf16.mxu0 0
    %1216 = vmatmul.mubr.bf16.gmra.mrb[0].mxu0 %v1163
    %v1217 = vpop.f32.mrb[0].mxu0
    %v1218 = vadd.f32 0.0, %v1217
    %v1219 = vpop.f32.mrb[0].mxu0
    %v1220 = vadd.f32 0.0, %v1219
    %v1221 = vpop.f32.mrb[0].mxu0
    %v1222 = vpop.f32.mrb[0].mxu0
    %1223 = vdwg.mxu0
    %1224 = vmatprep.subr.bf16.mxu0 %v1135
    %1225 = vmatpush1.bf16.msra.mxu0 %v1134
    %1226 = vmatprep.subr.bf16.mxu0 %v1141
    %1227 = vmatpush1.bf16.msra.mxu0 %v1140
    %1228 = vmatprep.subr.bf16.mxu0 %v1147
    %1229 = vmatpush1.bf16.msra.mxu0 %v1146
    %1230 = vmatprep.subr.bf16.mxu0 %v1153
    %1231 = vmatpush1.bf16.msra.mxu0 %v1152
    %1232 = vmatprep.subr.bf16.mxu0 %v1175
    %1233 = vmatpush1.bf16.msra.mxu0 %v1172
    %1234 = vmatprep.subr.bf16.mxu0 0
    %1235 = vmatpush1.bf16.msra.mxu0 0
    %1236 = vmatprep.subr.bf16.mxu0 0
    %1237 = vmatpush1.bf16.msra.mxu0 0
    %1238 = vmatprep.subr.bf16.mxu0 0
    %1239 = vmatpush1.bf16.msra.mxu0 0
    %1240 = vmatprep.subr.bf16.mxu0 0
    %1241 = vmatpush1.bf16.msra.mxu0 0
    %1242 = vmatprep.subr.bf16.mxu0 0
    %1243 = vmatpush1.bf16.msra.mxu0 0
    %1244 = vmatprep.subr.bf16.mxu0 0
    %1245 = vmatpush1.bf16.msra.mxu0 0
    %1246 = vmatprep.subr.bf16.mxu0 0
    %1247 = vmatpush1.bf16.msra.mxu0 0
    %1248 = vmatprep.subr.bf16.mxu0 0
    %1249 = vmatpush1.bf16.msra.mxu0 0
    %1250 = vmatprep.subr.bf16.mxu0 0
    %1251 = vmatpush1.bf16.msra.mxu0 0
    %1252 = vmatprep.subr.bf16.mxu0 0
    %1253 = vmatpush1.bf16.msra.mxu0 0
    %1254 = vmatprep.subr.bf16.mxu0 0
    %1255 = vmatpush1.bf16.msra.mxu0 0
    %1256 = vmatprep.mubr.bf16.mxu0 0
    %1257 = vmatmul.mubr.bf16.gmra.mrb[0].mxu0 %v1163
    %v1258 = vpop.f32.mrb[0].mxu0
    %v1259 = vadd.f32 0.0, %v1258
    %v1260 = vpop.f32.mrb[0].mxu0
    %v1261 = vadd.f32 0.0, %v1260
    %v1262 = vpop.f32.mrb[0].mxu0
    %v1263 = vpop.f32.mrb[0].mxu0
    %1264 = vdwg.mxu0
    %1265 = vmatprep.subr.bf16.mxu0 %v1137
    %1266 = vmatpush1.bf16.msra.mxu0 %v1136
    %1267 = vmatprep.subr.bf16.mxu0 %v1143
    %1268 = vmatpush1.bf16.msra.mxu0 %v1142
    %1269 = vmatprep.subr.bf16.mxu0 %v1149
    %1270 = vmatpush1.bf16.msra.mxu0 %v1148
    %1271 = vmatprep.subr.bf16.mxu0 %v1155
    %1272 = vmatpush1.bf16.msra.mxu0 %v1154
    %1273 = vmatprep.subr.bf16.mxu0 %v1181
    %1274 = vmatpush1.bf16.msra.mxu0 %v1178
    %1275 = vmatprep.subr.bf16.mxu0 0
    %1276 = vmatpush1.bf16.msra.mxu0 0
    %1277 = vmatprep.subr.bf16.mxu0 0
    %1278 = vmatpush1.bf16.msra.mxu0 0
    %1279 = vmatprep.subr.bf16.mxu0 0
    %1280 = vmatpush1.bf16.msra.mxu0 0
    %1281 = vmatprep.subr.bf16.mxu0 0
    %1282 = vmatpush1.bf16.msra.mxu0 0
    %1283 = vmatprep.subr.bf16.mxu0 0
    %1284 = vmatpush1.bf16.msra.mxu0 0
    %1285 = vmatprep.subr.bf16.mxu0 0
    %1286 = vmatpush1.bf16.msra.mxu0 0
    %1287 = vmatprep.subr.bf16.mxu0 0
    %1288 = vmatpush1.bf16.msra.mxu0 0
    %1289 = vmatprep.subr.bf16.mxu0 0
    %1290 = vmatpush1.bf16.msra.mxu0 0
    %1291 = vmatprep.subr.bf16.mxu0 0
    %1292 = vmatpush1.bf16.msra.mxu0 0
    %1293 = vmatprep.subr.bf16.mxu0 0
    %1294 = vmatpush1.bf16.msra.mxu0 0
    %1295 = vmatprep.subr.bf16.mxu0 0
    %1296 = vmatpush1.bf16.msra.mxu0 0
    %1297 = vmatprep.mubr.bf16.mxu0 0
    %1298 = vmatmul.mubr.bf16.gmra.mrb[0].mxu0 %v1163
    %v1299 = vpop.f32.mrb[0].mxu0
    %v1300 = vadd.f32 0.0, %v1299
    %v1301 = vpop.f32.mrb[0].mxu0
    %v1302 = vadd.f32 0.0, %v1301
    %v1303 = vpop.f32.mrb[0].mxu0
    %v1304 = vpop.f32.mrb[0].mxu0
    %1305 = vdwg.mxu0
    %v1306 = vld [vmem:[#allocation3] sm:$0xff]
    %v1307 = vld [vmem:[#allocation3 + $0x8] sm:$0xff]
    %v1308 = vld [vmem:[#allocation3 + $0x10] sm:$0xff]
    %v1309 = vld [vmem:[#allocation3 + $0x18] sm:$0xff]
    %v1310 = vld [vmem:[#allocation3 + $0x20] sm:$0xff]
    %v1311 = vld [vmem:[#allocation3 + $0x28] sm:$0xff]
    %v1312 = vld [vmem:[#allocation3 + $0x30] sm:$0xff]
    %1320 = vrot.lane.b32.xlu0 %v1306, 19
    %v1321 = vpop.permute.xlu0 %1320
    %1322 = vrot.lane.b32.xlu0 %v1307, 19
    %v1323 = vpop.permute.xlu0 %1322
    %1324 = vrot.lane.b32.xlu0 %v1308, 19
    %v1325 = vpop.permute.xlu0 %1324
    %1326 = vrot.lane.b32.xlu0 %v1309, 19
    %v1327 = vpop.permute.xlu0 %1326
    %1328 = vrot.lane.b32.xlu0 %v1310, 19
    %v1329 = vpop.permute.xlu0 %1328
    %1330 = vrot.lane.b32.xlu0 %v1311, 19
    %v1331 = vpop.permute.xlu0 %1330
    %1332 = vrot.lane.b32.xlu0 %v1312, 19
    %v1333 = vpop.permute.xlu0 %1332
    %v1334 = vsel %vm95, %v1321, %v1323
    %v1335 = vsel %vm95, %v1323, %v1325
    %v1336 = vsel %vm95, %v1325, %v1327
    %v1337 = vsel %vm95, %v1327, %v1329
    %v1338 = vsel %vm95, %v1329, %v1331
    %v1339 = vsel %vm95, %v1331, %v1333
    %1346 = vst [vmem:[#allocation4] sm:$0xff] %v1334
    %1347 = vst [vmem:[#allocation4 + $0x8] sm:$0xff] %v1335
    %1348 = vst [vmem:[#allocation4 + $0x10] sm:$0xff] %v1336
    %1349 = vst [vmem:[#allocation4 + $0x18] sm:$0xff] %v1337
    %1350 = vst [vmem:[#allocation4 + $0x20] sm:$0xff] %v1338
    %1351 = vst [vmem:[#allocation4 + $0x28] sm:$0xff] %v1339
    %v1352 = vld [vmem:[#allocation3] sm:$0xff]
    %v1353 = vld [vmem:[#allocation3 + $0x8] sm:$0xff]
    %v1354 = vld [vmem:[#allocation3 + $0x10] sm:$0xff]
    %v1355 = vld [vmem:[#allocation3 + $0x18] sm:$0xff]
    %v1356 = vld [vmem:[#allocation3 + $0x20] sm:$0xff]
    %v1357 = vld [vmem:[#allocation3 + $0x28] sm:$0xff]
    %v1358 = vld [vmem:[#allocation3 + $0x30] sm:$0xff]
    %1366 = vrot.lane.b32.xlu0 %v1352, 18
    %v1367 = vpop.permute.xlu0 %1366
    %1368 = vrot.lane.b32.xlu0 %v1353, 18
    %v1369 = vpop.permute.xlu0 %1368
    %1370 = vrot.lane.b32.xlu0 %v1354, 18
    %v1371 = vpop.permute.xlu0 %1370
    %1372 = vrot.lane.b32.xlu0 %v1355, 18
    %v1373 = vpop.permute.xlu0 %1372
    %1374 = vrot.lane.b32.xlu0 %v1356, 18
    %v1375 = vpop.permute.xlu0 %1374
    %1376 = vrot.lane.b32.xlu0 %v1357, 18
    %v1377 = vpop.permute.xlu0 %1376
    %1378 = vrot.lane.b32.xlu0 %v1358, 18
    %v1379 = vpop.permute.xlu0 %1378
    %v1380 = vsel %vm142, %v1367, %v1369
    %v1381 = vsel %vm142, %v1369, %v1371
    %v1382 = vsel %vm142, %v1371, %v1373
    %v1383 = vsel %vm142, %v1373, %v1375
    %v1384 = vsel %vm142, %v1375, %v1377
    %v1385 = vsel %vm142, %v1377, %v1379
    %1392 = vst [vmem:[#allocation4 + $0x30] sm:$0xff] %v1380
    %1393 = vst [vmem:[#allocation4 + $0x38] sm:$0xff] %v1381
    %1394 = vst [vmem:[#allocation4 + $0x40] sm:$0xff] %v1382
    %1395 = vst [vmem:[#allocation4 + $0x48] sm:$0xff] %v1383
    %1396 = vst [vmem:[#allocation4 + $0x50] sm:$0xff] %v1384
    %1397 = vst [vmem:[#allocation4 + $0x58] sm:$0xff] %v1385
    %v1398 = vld [vmem:[#allocation3] sm:$0xff]
    %v1399 = vld [vmem:[#allocation3 + $0x8] sm:$0xff]
    %v1400 = vld [vmem:[#allocation3 + $0x10] sm:$0xff]
    %v1401 = vld [vmem:[#allocation3 + $0x18] sm:$0xff]
    %v1402 = vld [vmem:[#allocation3 + $0x20] sm:$0xff]
    %v1403 = vld [vmem:[#allocation3 + $0x28] sm:$0xff]
    %v1404 = vld [vmem:[#allocation3 + $0x30] sm:$0xff]
    %1412 = vrot.lane.b32.xlu0 %v1398, 17
    %v1413 = vpop.permute.xlu0 %1412
    %1414 = vrot.lane.b32.xlu0 %v1399, 17
    %v1415 = vpop.permute.xlu0 %1414
    %1416 = vrot.lane.b32.xlu0 %v1400, 17
    %v1417 = vpop.permute.xlu0 %1416
    %1418 = vrot.lane.b32.xlu0 %v1401, 17
    %v1419 = vpop.permute.xlu0 %1418
    %1420 = vrot.lane.b32.xlu0 %v1402, 17
    %v1421 = vpop.permute.xlu0 %1420
    %1422 = vrot.lane.b32.xlu0 %v1403, 17
    %v1423 = vpop.permute.xlu0 %1422
    %1424 = vrot.lane.b32.xlu0 %v1404, 17
    %v1425 = vpop.permute.xlu0 %1424
    %v1426 = vsel %vm189, %v1413, %v1415
    %v1427 = vsel %vm189, %v1415, %v1417
    %v1428 = vsel %vm189, %v1417, %v1419
    %v1429 = vsel %vm189, %v1419, %v1421
    %v1430 = vsel %vm189, %v1421, %v1423
    %v1431 = vsel %vm189, %v1423, %v1425
    %1438 = vst [vmem:[#allocation4 + $0x60] sm:$0xff] %v1426
    %1439 = vst [vmem:[#allocation4 + $0x68] sm:$0xff] %v1427
    %1440 = vst [vmem:[#allocation4 + $0x70] sm:$0xff] %v1428
    %1441 = vst [vmem:[#allocation4 + $0x78] sm:$0xff] %v1429
    %1442 = vst [vmem:[#allocation4 + $0x80] sm:$0xff] %v1430
    %1443 = vst [vmem:[#allocation4 + $0x88] sm:$0xff] %v1431
    %v1444 = vld [vmem:[#allocation3] sm:$0xff]
    %v1445 = vld [vmem:[#allocation3 + $0x8] sm:$0xff]
    %v1446 = vld [vmem:[#allocation3 + $0x10] sm:$0xff]
    %v1447 = vld [vmem:[#allocation3 + $0x18] sm:$0xff]
    %v1448 = vld [vmem:[#allocation3 + $0x20] sm:$0xff]
    %v1449 = vld [vmem:[#allocation3 + $0x28] sm:$0xff]
    %v1450 = vld [vmem:[#allocation3 + $0x30] sm:$0xff]
    %1458 = vrot.lane.b32.xlu0 %v1444, 1
    %v1459 = vpop.permute.xlu0 %1458
    %1460 = vrot.lane.b32.xlu0 %v1445, 1
    %v1461 = vpop.permute.xlu0 %1460
    %1462 = vrot.lane.b32.xlu0 %v1446, 1
    %v1463 = vpop.permute.xlu0 %1462
    %1464 = vrot.lane.b32.xlu0 %v1447, 1
    %v1465 = vpop.permute.xlu0 %1464
    %1466 = vrot.lane.b32.xlu0 %v1448, 1
    %v1467 = vpop.permute.xlu0 %1466
    %1468 = vrot.lane.b32.xlu0 %v1449, 1
    %v1469 = vpop.permute.xlu0 %1468
    %1470 = vrot.lane.b32.xlu0 %v1450, 1
    %v1471 = vpop.permute.xlu0 %1470
    %v1472 = vsel %vm236, %v1459, %v1461
    %v1473 = vsel %vm236, %v1461, %v1463
    %v1474 = vsel %vm236, %v1463, %v1465
    %v1475 = vsel %vm236, %v1465, %v1467
    %v1476 = vsel %vm236, %v1467, %v1469
    %v1477 = vsel %vm236, %v1469, %v1471
    %1484 = vst [vmem:[#allocation4 + $0x90] sm:$0xff] %v1472
    %1485 = vst [vmem:[#allocation4 + $0x98] sm:$0xff] %v1473
    %1486 = vst [vmem:[#allocation4 + $0xa0] sm:$0xff] %v1474
    %1487 = vst [vmem:[#allocation4 + $0xa8] sm:$0xff] %v1475
    %1488 = vst [vmem:[#allocation4 + $0xb0] sm:$0xff] %v1476
    %1489 = vst [vmem:[#allocation4 + $0xb8] sm:$0xff] %v1477
    %v1490 = vld [vmem:[#allocation3 + $0x8] sm:$0xff]
    %v1491 = vld [vmem:[#allocation3 + $0x10] sm:$0xff]
    %v1492 = vld [vmem:[#allocation3 + $0x18] sm:$0xff]
    %v1493 = vld [vmem:[#allocation3 + $0x20] sm:$0xff]
    %v1494 = vld [vmem:[#allocation3 + $0x28] sm:$0xff]
    %v1495 = vld [vmem:[#allocation3 + $0x30] sm:$0xff]
    %1496 = vst [vmem:[#allocation4 + $0xc0] sm:$0xff] %v1490
    %1497 = vst [vmem:[#allocation4 + $0xc8] sm:$0xff] %v1491
    %1498 = vst [vmem:[#allocation4 + $0xd0] sm:$0xff] %v1492
    %1499 = vst [vmem:[#allocation4 + $0xd8] sm:$0xff] %v1493
    %1500 = vst [vmem:[#allocation4 + $0xe0] sm:$0xff] %v1494
    %1501 = vst [vmem:[#allocation4 + $0xe8] sm:$0xff] %v1495
    %v1502 = vld [vmem:[#allocation3 + $0x8] sm:$0xff]
    %v1503 = vld [vmem:[#allocation3 + $0x10] sm:$0xff]
    %v1504 = vld [vmem:[#allocation3 + $0x18] sm:$0xff]
    %v1505 = vld [vmem:[#allocation3 + $0x20] sm:$0xff]
    %v1506 = vld [vmem:[#allocation3 + $0x28] sm:$0xff]
    %v1507 = vld [vmem:[#allocation3 + $0x30] sm:$0xff]
    %v1508 = vld [vmem:[#allocation3 + $0x38] sm:$0xff]
    %1516 = vrot.lane.b32.xlu0 %v1502, 127
    %v1517 = vpop.permute.xlu0 %1516
    %1518 = vrot.lane.b32.xlu0 %v1503, 127
    %v1519 = vpop.permute.xlu0 %1518
    %1520 = vrot.lane.b32.xlu0 %v1504, 127
    %v1521 = vpop.permute.xlu0 %1520
    %1522 = vrot.lane.b32.xlu0 %v1505, 127
    %v1523 = vpop.permute.xlu0 %1522
    %1524 = vrot.lane.b32.xlu0 %v1506, 127
    %v1525 = vpop.permute.xlu0 %1524
    %1526 = vrot.lane.b32.xlu0 %v1507, 127
    %v1527 = vpop.permute.xlu0 %1526
    %1528 = vrot.lane.b32.xlu0 %v1508, 127
    %v1529 = vpop.permute.xlu0 %1528
    %v1530 = vsel %vm295, %v1517, %v1519
    %v1531 = vsel %vm295, %v1519, %v1521
    %v1532 = vsel %vm295, %v1521, %v1523
    %v1533 = vsel %vm295, %v1523, %v1525
    %v1534 = vsel %vm295, %v1525, %v1527
    %v1535 = vsel %vm295, %v1527, %v1529
    %1542 = vst [vmem:[#allocation4 + $0xf0] sm:$0xff] %v1530
    %1543 = vst [vmem:[#allocation4 + $0xf8] sm:$0xff] %v1531
    %1544 = vst [vmem:[#allocation4 + $0x100] sm:$0xff] %v1532
    %1545 = vst [vmem:[#allocation4 + $0x108] sm:$0xff] %v1533
    %1546 = vst [vmem:[#allocation4 + $0x110] sm:$0xff] %v1534
    %1547 = vst [vmem:[#allocation4 + $0x118] sm:$0xff] %v1535
    %v1548 = vld [vmem:[#allocation3 + $0x8] sm:$0xff]
    %v1549 = vld [vmem:[#allocation3 + $0x10] sm:$0xff]
    %v1550 = vld [vmem:[#allocation3 + $0x18] sm:$0xff]
    %v1551 = vld [vmem:[#allocation3 + $0x20] sm:$0xff]
    %v1552 = vld [vmem:[#allocation3 + $0x28] sm:$0xff]
    %v1553 = vld [vmem:[#allocation3 + $0x30] sm:$0xff]
    %v1554 = vld [vmem:[#allocation3 + $0x38] sm:$0xff]
    %1562 = vrot.lane.b32.xlu0 %v1548, 111
    %v1563 = vpop.permute.xlu0 %1562
    %1564 = vrot.lane.b32.xlu0 %v1549, 111
    %v1565 = vpop.permute.xlu0 %1564
    %1566 = vrot.lane.b32.xlu0 %v1550, 111
    %v1567 = vpop.permute.xlu0 %1566
    %1568 = vrot.lane.b32.xlu0 %v1551, 111
    %v1569 = vpop.permute.xlu0 %1568
    %1570 = vrot.lane.b32.xlu0 %v1552, 111
    %v1571 = vpop.permute.xlu0 %1570
    %1572 = vrot.lane.b32.xlu0 %v1553, 111
    %v1573 = vpop.permute.xlu0 %1572
    %1574 = vrot.lane.b32.xlu0 %v1554, 111
    %v1575 = vpop.permute.xlu0 %1574
    %v1576 = vsel %vm342, %v1563, %v1565
    %v1577 = vsel %vm342, %v1565, %v1567
    %v1578 = vsel %vm342, %v1567, %v1569
    %v1579 = vsel %vm342, %v1569, %v1571
    %v1580 = vsel %vm342, %v1571, %v1573
    %v1581 = vsel %vm342, %v1573, %v1575
    %1588 = vst [vmem:[#allocation4 + $0x120] sm:$0xff] %v1576
    %1589 = vst [vmem:[#allocation4 + $0x128] sm:$0xff] %v1577
    %1590 = vst [vmem:[#allocation4 + $0x130] sm:$0xff] %v1578
    %1591 = vst [vmem:[#allocation4 + $0x138] sm:$0xff] %v1579
    %1592 = vst [vmem:[#allocation4 + $0x140] sm:$0xff] %v1580
    %1593 = vst [vmem:[#allocation4 + $0x148] sm:$0xff] %v1581
    %v1594 = vld [vmem:[#allocation3 + $0x8] sm:$0xff]
    %v1595 = vld [vmem:[#allocation3 + $0x10] sm:$0xff]
    %v1596 = vld [vmem:[#allocation3 + $0x18] sm:$0xff]
    %v1597 = vld [vmem:[#allocation3 + $0x20] sm:$0xff]
    %v1598 = vld [vmem:[#allocation3 + $0x28] sm:$0xff]
    %v1599 = vld [vmem:[#allocation3 + $0x30] sm:$0xff]
    %v1600 = vld [vmem:[#allocation3 + $0x38] sm:$0xff]
    %1608 = vrot.lane.b32.xlu0 %v1594, 110
    %v1609 = vpop.permute.xlu0 %1608
    %1610 = vrot.lane.b32.xlu0 %v1595, 110
    %v1611 = vpop.permute.xlu0 %1610
    %1612 = vrot.lane.b32.xlu0 %v1596, 110
    %v1613 = vpop.permute.xlu0 %1612
    %1614 = vrot.lane.b32.xlu0 %v1597, 110
    %v1615 = vpop.permute.xlu0 %1614
    %1616 = vrot.lane.b32.xlu0 %v1598, 110
    %v1617 = vpop.permute.xlu0 %1616
    %1618 = vrot.lane.b32.xlu0 %v1599, 110
    %v1619 = vpop.permute.xlu0 %1618
    %1620 = vrot.lane.b32.xlu0 %v1600, 110
    %v1621 = vpop.permute.xlu0 %1620
    %v1622 = vsel %vm389, %v1609, %v1611
    %v1623 = vsel %vm389, %v1611, %v1613
    %v1624 = vsel %vm389, %v1613, %v1615
    %v1625 = vsel %vm389, %v1615, %v1617
    %v1626 = vsel %vm389, %v1617, %v1619
    %v1627 = vsel %vm389, %v1619, %v1621
    %1634 = vst [vmem:[#allocation4 + $0x150] sm:$0xff] %v1622
    %1635 = vst [vmem:[#allocation4 + $0x158] sm:$0xff] %v1623
    %1636 = vst [vmem:[#allocation4 + $0x160] sm:$0xff] %v1624
    %1637 = vst [vmem:[#allocation4 + $0x168] sm:$0xff] %v1625
    %1638 = vst [vmem:[#allocation4 + $0x170] sm:$0xff] %v1626
    %1639 = vst [vmem:[#allocation4 + $0x178] sm:$0xff] %v1627
    %v1640 = vld [vmem:[#allocation3 + $0x8] sm:$0xff]
    %v1641 = vld [vmem:[#allocation3 + $0x10] sm:$0xff]
    %v1642 = vld [vmem:[#allocation3 + $0x18] sm:$0xff]
    %v1643 = vld [vmem:[#allocation3 + $0x20] sm:$0xff]
    %v1644 = vld [vmem:[#allocation3 + $0x28] sm:$0xff]
    %v1645 = vld [vmem:[#allocation3 + $0x30] sm:$0xff]
    %v1646 = vld [vmem:[#allocation3 + $0x38] sm:$0xff]
    %1654 = vrot.lane.b32.xlu0 %v1640, 109
    %v1655 = vpop.permute.xlu0 %1654
    %1656 = vrot.lane.b32.xlu0 %v1641, 109
    %v1657 = vpop.permute.xlu0 %1656
    %1658 = vrot.lane.b32.xlu0 %v1642, 109
    %v1659 = vpop.permute.xlu0 %1658
    %1660 = vrot.lane.b32.xlu0 %v1643, 109
    %v1661 = vpop.permute.xlu0 %1660
    %1662 = vrot.lane.b32.xlu0 %v1644, 109
    %v1663 = vpop.permute.xlu0 %1662
    %1664 = vrot.lane.b32.xlu0 %v1645, 109
    %v1665 = vpop.permute.xlu0 %1664
    %1666 = vrot.lane.b32.xlu0 %v1646, 109
    %v1667 = vpop.permute.xlu0 %1666
    %v1668 = vsel %vm436, %v1655, %v1657
    %v1669 = vsel %vm436, %v1657, %v1659
    %v1670 = vsel %vm436, %v1659, %v1661
    %v1671 = vsel %vm436, %v1661, %v1663
    %v1672 = vsel %vm436, %v1663, %v1665
    %v1673 = vsel %vm436, %v1665, %v1667
    %1680 = vst [vmem:[#allocation4 + $0x180] sm:$0xff] %v1668
    %1681 = vst [vmem:[#allocation4 + $0x188] sm:$0xff] %v1669
    %1682 = vst [vmem:[#allocation4 + $0x190] sm:$0xff] %v1670
    %1683 = vst [vmem:[#allocation4 + $0x198] sm:$0xff] %v1671
    %1684 = vst [vmem:[#allocation4 + $0x1a0] sm:$0xff] %v1672
    %1685 = vst [vmem:[#allocation4 + $0x1a8] sm:$0xff] %v1673
    %v1686 = vld [vmem:[%s4] sm:$0xf]
    %v1687 = vld [vmem:[#allocation4] sm:$0xff]
    %v1688 = vld [vmem:[#allocation4 + $0x8] sm:$0xff]
    %v1689 = vld [vmem:[#allocation4 + $0x10] sm:$0xff]
    %v1690 = vld [vmem:[#allocation4 + $0x18] sm:$0xff]
    %v1691 = vld [vmem:[#allocation4 + $0x20] sm:$0xff]
    %v1692 = vld [vmem:[#allocation4 + $0x28] sm:$0xff]
    %v1693 = vld [vmem:[#allocation4 + $0x30] sm:$0xff]
    %v1694 = vld [vmem:[#allocation4 + $0x38] sm:$0xff]
    %v1695 = vld [vmem:[#allocation4 + $0x40] sm:$0xff]
    %v1696 = vld [vmem:[#allocation4 + $0x48] sm:$0xff]
    %v1697 = vld [vmem:[#allocation4 + $0x50] sm:$0xff]
    %v1698 = vld [vmem:[#allocation4 + $0x58] sm:$0xff]
    %v1699 = vld [vmem:[#allocation4 + $0x60] sm:$0xff]
    %v1700 = vld [vmem:[#allocation4 + $0x68] sm:$0xff]
    %v1701 = vld [vmem:[#allocation4 + $0x70] sm:$0xff]
    %v1702 = vld [vmem:[#allocation4 + $0x78] sm:$0xff]
    %v1703 = vld [vmem:[#allocation4 + $0x80] sm:$0xff]
    %v1704 = vld [vmem:[#allocation4 + $0x88] sm:$0xff]
    %v1705 = vld [vmem:[#allocation4 + $0x90] sm:$0xff]
    %v1706 = vld [vmem:[#allocation4 + $0x98] sm:$0xff]
    %v1707 = vld [vmem:[#allocation4 + $0xa0] sm:$0xff]
    %v1708 = vld [vmem:[#allocation4 + $0xa8] sm:$0xff]
    %v1709 = vld [vmem:[#allocation4 + $0xb0] sm:$0xff]
    %v1710 = vld [vmem:[#allocation4 + $0xb8] sm:$0xff]
    %v1711 = vld [vmem:[#allocation4 + $0xc0] sm:$0xff]
    %v1712 = vld [vmem:[#allocation4 + $0xc8] sm:$0xff]
    %v1713 = vld [vmem:[#allocation4 + $0xd0] sm:$0xff]
    %v1714 = vld [vmem:[#allocation4 + $0xd8] sm:$0xff]
    %v1715 = vld [vmem:[#allocation4 + $0xe0] sm:$0xff]
    %v1716 = vld [vmem:[#allocation4 + $0xe8] sm:$0xff]
    %v1717 = vld [vmem:[#allocation4 + $0xf0] sm:$0xff]
    %v1718 = vld [vmem:[#allocation4 + $0xf8] sm:$0xff]
    %v1719 = vld [vmem:[#allocation4 + $0x100] sm:$0xff]
    %v1720 = vld [vmem:[#allocation4 + $0x108] sm:$0xff]
    %v1721 = vld [vmem:[#allocation4 + $0x110] sm:$0xff]
    %v1722 = vld [vmem:[#allocation4 + $0x118] sm:$0xff]
    %v1723 = vld [vmem:[#allocation4 + $0x120] sm:$0xff]
    %v1724 = vld [vmem:[#allocation4 + $0x128] sm:$0xff]
    %v1725 = vld [vmem:[#allocation4 + $0x130] sm:$0xff]
    %v1726 = vld [vmem:[#allocation4 + $0x138] sm:$0xff]
    %v1727 = vld [vmem:[#allocation4 + $0x140] sm:$0xff]
    %v1728 = vld [vmem:[#allocation4 + $0x148] sm:$0xff]
    %v1729 = vld [vmem:[#allocation4 + $0x150] sm:$0xff]
    %v1730 = vld [vmem:[#allocation4 + $0x158] sm:$0xff]
    %v1731 = vld [vmem:[#allocation4 + $0x160] sm:$0xff]
    %v1732 = vld [vmem:[#allocation4 + $0x168] sm:$0xff]
    %v1733 = vld [vmem:[#allocation4 + $0x170] sm:$0xff]
    %v1734 = vld [vmem:[#allocation4 + $0x178] sm:$0xff]
    %v1735 = vld [vmem:[#allocation4 + $0x180] sm:$0xff]
    %v1736 = vld [vmem:[#allocation4 + $0x188] sm:$0xff]
    %v1737 = vld [vmem:[#allocation4 + $0x190] sm:$0xff]
    %v1738 = vld [vmem:[#allocation4 + $0x198] sm:$0xff]
    %v1739 = vld [vmem:[#allocation4 + $0x1a0] sm:$0xff]
    %v1740 = vld [vmem:[#allocation4 + $0x1a8] sm:$0xff]
    %v1741 = vpack.c.bf16 %v1693, %v1687
    %v1742 = vpack.c.bf16 %v1694, %v1688
    %v1743 = vpack.c.bf16 %v1695, %v1689
    %v1744 = vpack.c.bf16 %v1696, %v1690
    %v1745 = vpack.c.bf16 %v1697, %v1691
    %v1746 = vpack.c.bf16 %v1698, %v1692
    %v1747 = vpack.c.bf16 %v1705, %v1699
    %v1748 = vpack.c.bf16 %v1706, %v1700
    %v1749 = vpack.c.bf16 %v1707, %v1701
    %v1750 = vpack.c.bf16 %v1708, %v1702
    %v1751 = vpack.c.bf16 %v1709, %v1703
    %v1752 = vpack.c.bf16 %v1710, %v1704
    %v1753 = vpack.c.bf16 %v1717, %v1711
    %v1754 = vpack.c.bf16 %v1718, %v1712
    %v1755 = vpack.c.bf16 %v1719, %v1713
    %v1756 = vpack.c.bf16 %v1720, %v1714
    %v1757 = vpack.c.bf16 %v1721, %v1715
    %v1758 = vpack.c.bf16 %v1722, %v1716
    %v1759 = vpack.c.bf16 %v1729, %v1723
    %v1760 = vpack.c.bf16 %v1730, %v1724
    %v1761 = vpack.c.bf16 %v1731, %v1725
    %v1762 = vpack.c.bf16 %v1732, %v1726
    %v1763 = vpack.c.bf16 %v1733, %v1727
    %v1764 = vpack.c.bf16 %v1734, %v1728
    %v1765 = vpack.c.bf16 %v1735, %v1735
    %v1766 = vpack.c.bf16 %v1736, %v1736
    %v1767 = vpack.c.bf16 %v1737, %v1737
    %v1768 = vpack.c.bf16 %v1738, %v1738
    %v1769 = vpack.c.bf16 %v1739, %v1739
    %v1770 = vpack.c.bf16 %v1740, %v1740
    %v1772 = vsel %vm545, %v1686, 0
    %v1775 = vsel %vm549, %v1765, 0
    %v1778 = vsel %vm549, %v1766, 0
    %v1781 = vsel %vm549, %v1767, 0
    %v1784 = vsel %vm549, %v1768, 0
    %v1787 = vsel %vm549, %v1769, 0
    %v1790 = vsel %vm549, %v1770, 0
    %1792 = vmatprep.subr.bf16.mxu0 %v1742
    %1793 = vmatpush1.bf16.msra.mxu0 %v1741
    %1794 = vmatprep.subr.bf16.mxu0 %v1748
    %1795 = vmatpush1.bf16.msra.mxu0 %v1747
    %1796 = vmatprep.subr.bf16.mxu0 %v1754
    %1797 = vmatpush1.bf16.msra.mxu0 %v1753
    %1798 = vmatprep.subr.bf16.mxu0 %v1760
    %1799 = vmatpush1.bf16.msra.mxu0 %v1759
    %1800 = vmatprep.subr.bf16.mxu0 %v1778
    %1801 = vmatpush1.bf16.msra.mxu0 %v1775
    %1802 = vmatprep.subr.bf16.mxu0 0
    %1803 = vmatpush1.bf16.msra.mxu0 0
    %1804 = vmatprep.subr.bf16.mxu0 0
    %1805 = vmatpush1.bf16.msra.mxu0 0
    %1806 = vmatprep.subr.bf16.mxu0 0
    %1807 = vmatpush1.bf16.msra.mxu0 0
    %1808 = vmatprep.subr.bf16.mxu0 0
    %1809 = vmatpush1.bf16.msra.mxu0 0
    %1810 = vmatprep.subr.bf16.mxu0 0
    %1811 = vmatpush1.bf16.msra.mxu0 0
    %1812 = vmatprep.subr.bf16.mxu0 0
    %1813 = vmatpush1.bf16.msra.mxu0 0
    %1814 = vmatprep.subr.bf16.mxu0 0
    %1815 = vmatpush1.bf16.msra.mxu0 0
    %1816 = vmatprep.subr.bf16.mxu0 0
    %1817 = vmatpush1.bf16.msra.mxu0 0
    %1818 = vmatprep.subr.bf16.mxu0 0
    %1819 = vmatpush1.bf16.msra.mxu0 0
    %1820 = vmatprep.subr.bf16.mxu0 0
    %1821 = vmatpush1.bf16.msra.mxu0 0
    %1822 = vmatprep.subr.bf16.mxu0 0
    %1823 = vmatpush1.bf16.msra.mxu0 0
    %1824 = vmatprep.mubr.bf16.mxu0 0
    %1825 = vmatmul.mubr.bf16.gmra.mrb[0].mxu0 %v1772
    %v1826 = vpop.f32.mrb[0].mxu0
    %v1827 = vadd.f32 0.0, %v1826
    %v1828 = vpop.f32.mrb[0].mxu0
    %v1829 = vadd.f32 0.0, %v1828
    %v1830 = vpop.f32.mrb[0].mxu0
    %v1831 = vpop.f32.mrb[0].mxu0
    %1832 = vdwg.mxu0
    %1833 = vmatprep.subr.bf16.mxu0 %v1744
    %1834 = vmatpush1.bf16.msra.mxu0 %v1743
    %1835 = vmatprep.subr.bf16.mxu0 %v1750
    %1836 = vmatpush1.bf16.msra.mxu0 %v1749
    %1837 = vmatprep.subr.bf16.mxu0 %v1756
    %1838 = vmatpush1.bf16.msra.mxu0 %v1755
    %1839 = vmatprep.subr.bf16.mxu0 %v1762
    %1840 = vmatpush1.bf16.msra.mxu0 %v1761
    %1841 = vmatprep.subr.bf16.mxu0 %v1784
    %1842 = vmatpush1.bf16.msra.mxu0 %v1781
    %1843 = vmatprep.subr.bf16.mxu0 0
    %1844 = vmatpush1.bf16.msra.mxu0 0
    %1845 = vmatprep.subr.bf16.mxu0 0
    %1846 = vmatpush1.bf16.msra.mxu0 0
    %1847 = vmatprep.subr.bf16.mxu0 0
    %1848 = vmatpush1.bf16.msra.mxu0 0
    %1849 = vmatprep.subr.bf16.mxu0 0
    %1850 = vmatpush1.bf16.msra.mxu0 0
    %1851 = vmatprep.subr.bf16.mxu0 0
    %1852 = vmatpush1.bf16.msra.mxu0 0
    %1853 = vmatprep.subr.bf16.mxu0 0
    %1854 = vmatpush1.bf16.msra.mxu0 0
    %1855 = vmatprep.subr.bf16.mxu0 0
    %1856 = vmatpush1.bf16.msra.mxu0 0
    %1857 = vmatprep.subr.bf16.mxu0 0
    %1858 = vmatpush1.bf16.msra.mxu0 0
    %1859 = vmatprep.subr.bf16.mxu0 0
    %1860 = vmatpush1.bf16.msra.mxu0 0
    %1861 = vmatprep.subr.bf16.mxu0 0
    %1862 = vmatpush1.bf16.msra.mxu0 0
    %1863 = vmatprep.subr.bf16.mxu0 0
    %1864 = vmatpush1.bf16.msra.mxu0 0
    %1865 = vmatprep.mubr.bf16.mxu0 0
    %1866 = vmatmul.mubr.bf16.gmra.mrb[0].mxu0 %v1772
    %v1867 = vpop.f32.mrb[0].mxu0
    %v1868 = vadd.f32 0.0, %v1867
    %v1869 = vpop.f32.mrb[0].mxu0
    %v1870 = vadd.f32 0.0, %v1869
    %v1871 = vpop.f32.mrb[0].mxu0
    %v1872 = vpop.f32.mrb[0].mxu0
    %1873 = vdwg.mxu0
    %1874 = vmatprep.subr.bf16.mxu0 %v1746
    %1875 = vmatpush1.bf16.msra.mxu0 %v1745
    %1876 = vmatprep.subr.bf16.mxu0 %v1752
    %1877 = vmatpush1.bf16.msra.mxu0 %v1751
    %1878 = vmatprep.subr.bf16.mxu0 %v1758
    %1879 = vmatpush1.bf16.msra.mxu0 %v1757
    %1880 = vmatprep.subr.bf16.mxu0 %v1764
    %1881 = vmatpush1.bf16.msra.mxu0 %v1763
    %1882 = vmatprep.subr.bf16.mxu0 %v1790
    %1883 = vmatpush1.bf16.msra.mxu0 %v1787
    %1884 = vmatprep.subr.bf16.mxu0 0
    %1885 = vmatpush1.bf16.msra.mxu0 0
    %1886 = vmatprep.subr.bf16.mxu0 0
    %1887 = vmatpush1.bf16.msra.mxu0 0
    %1888 = vmatprep.subr.bf16.mxu0 0
    %1889 = vmatpush1.bf16.msra.mxu0 0
    %1890 = vmatprep.subr.bf16.mxu0 0
    %1891 = vmatpush1.bf16.msra.mxu0 0
    %1892 = vmatprep.subr.bf16.mxu0 0
    %1893 = vmatpush1.bf16.msra.mxu0 0
    %1894 = vmatprep.subr.bf16.mxu0 0
    %1895 = vmatpush1.bf16.msra.mxu0 0
    %1896 = vmatprep.subr.bf16.mxu0 0
    %1897 = vmatpush1.bf16.msra.mxu0 0
    %1898 = vmatprep.subr.bf16.mxu0 0
    %1899 = vmatpush1.bf16.msra.mxu0 0
    %1900 = vmatprep.subr.bf16.mxu0 0
    %1901 = vmatpush1.bf16.msra.mxu0 0
    %1902 = vmatprep.subr.bf16.mxu0 0
    %1903 = vmatpush1.bf16.msra.mxu0 0
    %1904 = vmatprep.subr.bf16.mxu0 0
    %1905 = vmatpush1.bf16.msra.mxu0 0
    %1906 = vmatprep.mubr.bf16.mxu0 0
    %1907 = vmatmul.mubr.bf16.gmra.mrb[0].mxu0 %v1772
    %v1908 = vpop.f32.mrb[0].mxu0
    %v1909 = vadd.f32 0.0, %v1908
    %v1910 = vpop.f32.mrb[0].mxu0
    %v1911 = vadd.f32 0.0, %v1910
    %v1912 = vpop.f32.mrb[0].mxu0
    %v1913 = vpop.f32.mrb[0].mxu0
    %1914 = vdwg.mxu0
    %v1915 = vld [vmem:[#allocation5] sm:$0xff]
    %v1916 = vld [vmem:[#allocation5 + $0x8] sm:$0xff]
    %v1917 = vld [vmem:[#allocation5 + $0x10] sm:$0xff]
    %v1918 = vld [vmem:[#allocation5 + $0x18] sm:$0xff]
    %v1919 = vld [vmem:[#allocation5 + $0x20] sm:$0xff]
    %v1920 = vld [vmem:[#allocation5 + $0x28] sm:$0xff]
    %v1921 = vadd.f32 %v1915, %v1218
    %v1922 = vadd.f32 %v1916, %v1220
    %v1923 = vadd.f32 %v1917, %v1259
    %v1924 = vadd.f32 %v1918, %v1261
    %v1925 = vadd.f32 %v1919, %v1300
    %v1926 = vadd.f32 %v1920, %v1302
    %v1927 = vmax.f32 %v1827, 0.0
    %v1928 = vmax.f32 %v1829, 0.0
    %v1929 = vmax.f32 %v1868, 0.0
    %v1930 = vmax.f32 %v1870, 0.0
    %v1931 = vmax.f32 %v1909, 0.0
    %v1932 = vmax.f32 %v1911, 0.0
    %v1933 = vsub.f32 %v1921, %v1927
    %v1934 = vsub.f32 %v1922, %v1928
    %v1935 = vsub.f32 %v1923, %v1929
    %v1936 = vsub.f32 %v1924, %v1930
    %v1937 = vsub.f32 %v1925, %v1931
    %v1938 = vsub.f32 %v1926, %v1932
    %v1939 = vtanh.pop %v1933
    %v1940 = vtanh.pop %v1934
    %v1941 = vtanh.pop %v1935
    %v1942 = vtanh.pop %v1936
    %v1943 = vtanh.pop %v1937
    %v1944 = vtanh.pop %v1938
    %v1945 = vmul.f32 %v59, %v1939
    %v1946 = vmul.f32 %v60, %v1940
    %v1947 = vmul.f32 %v61, %v1941
    %v1948 = vmul.f32 %v62, %v1942
    %v1949 = vmul.f32 %v63, %v1943
    %v1950 = vmul.f32 %v64, %v1944
    %1951 = vst [vmem:[#allocation2 + $0x8] sm:$0xff] %v1945
    %1952 = vst [vmem:[#allocation2 + $0x10] sm:$0xff] %v1946
    %1953 = vst [vmem:[#allocation2 + $0x18] sm:$0xff] %v1947
    %1954 = vst [vmem:[#allocation2 + $0x20] sm:$0xff] %v1948
    %1955 = vst [vmem:[#allocation2 + $0x28] sm:$0xff] %v1949
    %1956 = vst [vmem:[#allocation2 + $0x30] sm:$0xff] %v1950
    %v1957 = vld [vmem:[#allocation2] sm:$0xff]
    %v1958 = vld [vmem:[#allocation2 + $0x8] sm:$0xff]
    %v1959 = vld [vmem:[#allocation2 + $0x10] sm:$0xff]
    %v1960 = vld [vmem:[#allocation2 + $0x18] sm:$0xff]
    %v1961 = vld [vmem:[#allocation2 + $0x20] sm:$0xff]
    %v1962 = vld [vmem:[#allocation2 + $0x28] sm:$0xff]
    %v1963 = vld [vmem:[#allocation2 + $0x30] sm:$0xff]
    %1971 = vrot.lane.b32.xlu0 %v1957, 19
    %v1972 = vpop.permute.xlu0 %1971
    %1973 = vrot.lane.b32.xlu0 %v1958, 19
    %v1974 = vpop.permute.xlu0 %1973
    %1975 = vrot.lane.b32.xlu0 %v1959, 19
    %v1976 = vpop.permute.xlu0 %1975
    %1977 = vrot.lane.b32.xlu0 %v1960, 19
    %v1978 = vpop.permute.xlu0 %1977
    %1979 = vrot.lane.b32.xlu0 %v1961, 19
    %v1980 = vpop.permute.xlu0 %1979
    %1981 = vrot.lane.b32.xlu0 %v1962, 19
    %v1982 = vpop.permute.xlu0 %1981
    %1983 = vrot.lane.b32.xlu0 %v1963, 19
    %v1984 = vpop.permute.xlu0 %1983
    %v1985 = vsel %vm95, %v1972, %v1974
    %v1986 = vsel %vm95, %v1974, %v1976
    %v1987 = vsel %vm95, %v1976, %v1978
    %v1988 = vsel %vm95, %v1978, %v1980
    %v1989 = vsel %vm95, %v1980, %v1982
    %v1990 = vsel %vm95, %v1982, %v1984
    %1997 = vst [vmem:[#allocation4] sm:$0xff] %v1985
    %1998 = vst [vmem:[#allocation4 + $0x8] sm:$0xff] %v1986
    %1999 = vst [vmem:[#allocation4 + $0x10] sm:$0xff] %v1987
    %2000 = vst [vmem:[#allocation4 + $0x18] sm:$0xff] %v1988
    %2001 = vst [vmem:[#allocation4 + $0x20] sm:$0xff] %v1989
    %2002 = vst [vmem:[#allocation4 + $0x28] sm:$0xff] %v1990
    %v2003 = vld [vmem:[#allocation2] sm:$0xff]
    %v2004 = vld [vmem:[#allocation2 + $0x8] sm:$0xff]
    %v2005 = vld [vmem:[#allocation2 + $0x10] sm:$0xff]
    %v2006 = vld [vmem:[#allocation2 + $0x18] sm:$0xff]
    %v2007 = vld [vmem:[#allocation2 + $0x20] sm:$0xff]
    %v2008 = vld [vmem:[#allocation2 + $0x28] sm:$0xff]
    %v2009 = vld [vmem:[#allocation2 + $0x30] sm:$0xff]
    %2017 = vrot.lane.b32.xlu0 %v2003, 18
    %v2018 = vpop.permute.xlu0 %2017
    %2019 = vrot.lane.b32.xlu0 %v2004, 18
    %v2020 = vpop.permute.xlu0 %2019
    %2021 = vrot.lane.b32.xlu0 %v2005, 18
    %v2022 = vpop.permute.xlu0 %2021
    %2023 = vrot.lane.b32.xlu0 %v2006, 18
    %v2024 = vpop.permute.xlu0 %2023
    %2025 = vrot.lane.b32.xlu0 %v2007, 18
    %v2026 = vpop.permute.xlu0 %2025
    %2027 = vrot.lane.b32.xlu0 %v2008, 18
    %v2028 = vpop.permute.xlu0 %2027
    %2029 = vrot.lane.b32.xlu0 %v2009, 18
    %v2030 = vpop.permute.xlu0 %2029
    %v2031 = vsel %vm142, %v2018, %v2020
    %v2032 = vsel %vm142, %v2020, %v2022
    %v2033 = vsel %vm142, %v2022, %v2024
    %v2034 = vsel %vm142, %v2024, %v2026
    %v2035 = vsel %vm142, %v2026, %v2028
    %v2036 = vsel %vm142, %v2028, %v2030
    %2043 = vst [vmem:[#allocation4 + $0x30] sm:$0xff] %v2031
    %2044 = vst [vmem:[#allocation4 + $0x38] sm:$0xff] %v2032
    %2045 = vst [vmem:[#allocation4 + $0x40] sm:$0xff] %v2033
    %2046 = vst [vmem:[#allocation4 + $0x48] sm:$0xff] %v2034
    %2047 = vst [vmem:[#allocation4 + $0x50] sm:$0xff] %v2035
    %2048 = vst [vmem:[#allocation4 + $0x58] sm:$0xff] %v2036
    %v2049 = vld [vmem:[#allocation2] sm:$0xff]
    %v2050 = vld [vmem:[#allocation2 + $0x8] sm:$0xff]
    %v2051 = vld [vmem:[#allocation2 + $0x10] sm:$0xff]
    %v2052 = vld [vmem:[#allocation2 + $0x18] sm:$0xff]
    %v2053 = vld [vmem:[#allocation2 + $0x20] sm:$0xff]
    %v2054 = vld [vmem:[#allocation2 + $0x28] sm:$0xff]
    %v2055 = vld [vmem:[#allocation2 + $0x30] sm:$0xff]
    %2063 = vrot.lane.b32.xlu0 %v2049, 17
    %v2064 = vpop.permute.xlu0 %2063
    %2065 = vrot.lane.b32.xlu0 %v2050, 17
    %v2066 = vpop.permute.xlu0 %2065
    %2067 = vrot.lane.b32.xlu0 %v2051, 17
    %v2068 = vpop.permute.xlu0 %2067
    %2069 = vrot.lane.b32.xlu0 %v2052, 17
    %v2070 = vpop.permute.xlu0 %2069
    %2071 = vrot.lane.b32.xlu0 %v2053, 17
    %v2072 = vpop.permute.xlu0 %2071
    %2073 = vrot.lane.b32.xlu0 %v2054, 17
    %v2074 = vpop.permute.xlu0 %2073
    %2075 = vrot.lane.b32.xlu0 %v2055, 17
    %v2076 = vpop.permute.xlu0 %2075
    %v2077 = vsel %vm189, %v2064, %v2066
    %v2078 = vsel %vm189, %v2066, %v2068
    %v2079 = vsel %vm189, %v2068, %v2070
    %v2080 = vsel %vm189, %v2070, %v2072
    %v2081 = vsel %vm189, %v2072, %v2074
    %v2082 = vsel %vm189, %v2074, %v2076
    %2089 = vst [vmem:[#allocation4 + $0x60] sm:$0xff] %v2077
    %2090 = vst [vmem:[#allocation4 + $0x68] sm:$0xff] %v2078
    %2091 = vst [vmem:[#allocation4 + $0x70] sm:$0xff] %v2079
    %2092 = vst [vmem:[#allocation4 + $0x78] sm:$0xff] %v2080
    %2093 = vst [vmem:[#allocation4 + $0x80] sm:$0xff] %v2081
    %2094 = vst [vmem:[#allocation4 + $0x88] sm:$0xff] %v2082
    %v2095 = vld [vmem:[#allocation2] sm:$0xff]
    %v2096 = vld [vmem:[#allocation2 + $0x8] sm:$0xff]
    %v2097 = vld [vmem:[#allocation2 + $0x10] sm:$0xff]
    %v2098 = vld [vmem:[#allocation2 + $0x18] sm:$0xff]
    %v2099 = vld [vmem:[#allocation2 + $0x20] sm:$0xff]
    %v2100 = vld [vmem:[#allocation2 + $0x28] sm:$0xff]
    %v2101 = vld [vmem:[#allocation2 + $0x30] sm:$0xff]
    %2109 = vrot.lane.b32.xlu0 %v2095, 1
    %v2110 = vpop.permute.xlu0 %2109
    %2111 = vrot.lane.b32.xlu0 %v2096, 1
    %v2112 = vpop.permute.xlu0 %2111
    %2113 = vrot.lane.b32.xlu0 %v2097, 1
    %v2114 = vpop.permute.xlu0 %2113
    %2115 = vrot.lane.b32.xlu0 %v2098, 1
    %v2116 = vpop.permute.xlu0 %2115
    %2117 = vrot.lane.b32.xlu0 %v2099, 1
    %v2118 = vpop.permute.xlu0 %2117
    %2119 = vrot.lane.b32.xlu0 %v2100, 1
    %v2120 = vpop.permute.xlu0 %2119
    %2121 = vrot.lane.b32.xlu0 %v2101, 1
    %v2122 = vpop.permute.xlu0 %2121
    %v2123 = vsel %vm236, %v2110, %v2112
    %v2124 = vsel %vm236, %v2112, %v2114
    %v2125 = vsel %vm236, %v2114, %v2116
    %v2126 = vsel %vm236, %v2116, %v2118
    %v2127 = vsel %vm236, %v2118, %v2120
    %v2128 = vsel %vm236, %v2120, %v2122
    %2135 = vst [vmem:[#allocation4 + $0x90] sm:$0xff] %v2123
    %2136 = vst [vmem:[#allocation4 + $0x98] sm:$0xff] %v2124
    %2137 = vst [vmem:[#allocation4 + $0xa0] sm:$0xff] %v2125
    %2138 = vst [vmem:[#allocation4 + $0xa8] sm:$0xff] %v2126
    %2139 = vst [vmem:[#allocation4 + $0xb0] sm:$0xff] %v2127
    %2140 = vst [vmem:[#allocation4 + $0xb8] sm:$0xff] %v2128
    %v2141 = vld [vmem:[#allocation2 + $0x8] sm:$0xff]
    %v2142 = vld [vmem:[#allocation2 + $0x10] sm:$0xff]
    %v2143 = vld [vmem:[#allocation2 + $0x18] sm:$0xff]
    %v2144 = vld [vmem:[#allocation2 + $0x20] sm:$0xff]
    %v2145 = vld [vmem:[#allocation2 + $0x28] sm:$0xff]
    %v2146 = vld [vmem:[#allocation2 + $0x30] sm:$0xff]
    %2147 = vst [vmem:[#allocation4 + $0xc0] sm:$0xff] %v2141
    %2148 = vst [vmem:[#allocation4 + $0xc8] sm:$0xff] %v2142
    %2149 = vst [vmem:[#allocation4 + $0xd0] sm:$0xff] %v2143
    %2150 = vst [vmem:[#allocation4 + $0xd8] sm:$0xff] %v2144
    %2151 = vst [vmem:[#allocation4 + $0xe0] sm:$0xff] %v2145
    %2152 = vst [vmem:[#allocation4 + $0xe8] sm:$0xff] %v2146
    %v2153 = vld [vmem:[#allocation2 + $0x8] sm:$0xff]
    %v2154 = vld [vmem:[#allocation2 + $0x10] sm:$0xff]
    %v2155 = vld [vmem:[#allocation2 + $0x18] sm:$0xff]
    %v2156 = vld [vmem:[#allocation2 + $0x20] sm:$0xff]
    %v2157 = vld [vmem:[#allocation2 + $0x28] sm:$0xff]
    %v2158 = vld [vmem:[#allocation2 + $0x30] sm:$0xff]
    %v2159 = vld [vmem:[#allocation2 + $0x38] sm:$0xff]
    %2167 = vrot.lane.b32.xlu0 %v2153, 127
    %v2168 = vpop.permute.xlu0 %2167
    %2169 = vrot.lane.b32.xlu0 %v2154, 127
    %v2170 = vpop.permute.xlu0 %2169
    %2171 = vrot.lane.b32.xlu0 %v2155, 127
    %v2172 = vpop.permute.xlu0 %2171
    %2173 = vrot.lane.b32.xlu0 %v2156, 127
    %v2174 = vpop.permute.xlu0 %2173
    %2175 = vrot.lane.b32.xlu0 %v2157, 127
    %v2176 = vpop.permute.xlu0 %2175
    %2177 = vrot.lane.b32.xlu0 %v2158, 127
    %v2178 = vpop.permute.xlu0 %2177
    %2179 = vrot.lane.b32.xlu0 %v2159, 127
    %v2180 = vpop.permute.xlu0 %2179
    %v2181 = vsel %vm295, %v2168, %v2170
    %v2182 = vsel %vm295, %v2170, %v2172
    %v2183 = vsel %vm295, %v2172, %v2174
    %v2184 = vsel %vm295, %v2174, %v2176
    %v2185 = vsel %vm295, %v2176, %v2178
    %v2186 = vsel %vm295, %v2178, %v2180
    %2193 = vst [vmem:[#allocation4 + $0xf0] sm:$0xff] %v2181
    %2194 = vst [vmem:[#allocation4 + $0xf8] sm:$0xff] %v2182
    %2195 = vst [vmem:[#allocation4 + $0x100] sm:$0xff] %v2183
    %2196 = vst [vmem:[#allocation4 + $0x108] sm:$0xff] %v2184
    %2197 = vst [vmem:[#allocation4 + $0x110] sm:$0xff] %v2185
    %2198 = vst [vmem:[#allocation4 + $0x118] sm:$0xff] %v2186
    %v2199 = vld [vmem:[#allocation2 + $0x8] sm:$0xff]
    %v2200 = vld [vmem:[#allocation2 + $0x10] sm:$0xff]
    %v2201 = vld [vmem:[#allocation2 + $0x18] sm:$0xff]
    %v2202 = vld [vmem:[#allocation2 + $0x20] sm:$0xff]
    %v2203 = vld [vmem:[#allocation2 + $0x28] sm:$0xff]
    %v2204 = vld [vmem:[#allocation2 + $0x30] sm:$0xff]
    %v2205 = vld [vmem:[#allocation2 + $0x38] sm:$0xff]
    %2213 = vrot.lane.b32.xlu0 %v2199, 111
    %v2214 = vpop.permute.xlu0 %2213
    %2215 = vrot.lane.b32.xlu0 %v2200, 111
    %v2216 = vpop.permute.xlu0 %2215
    %2217 = vrot.lane.b32.xlu0 %v2201, 111
    %v2218 = vpop.permute.xlu0 %2217
    %2219 = vrot.lane.b32.xlu0 %v2202, 111
    %v2220 = vpop.permute.xlu0 %2219
    %2221 = vrot.lane.b32.xlu0 %v2203, 111
    %v2222 = vpop.permute.xlu0 %2221
    %2223 = vrot.lane.b32.xlu0 %v2204, 111
    %v2224 = vpop.permute.xlu0 %2223
    %2225 = vrot.lane.b32.xlu0 %v2205, 111
    %v2226 = vpop.permute.xlu0 %2225
    %v2227 = vsel %vm342, %v2214, %v2216
    %v2228 = vsel %vm342, %v2216, %v2218
    %v2229 = vsel %vm342, %v2218, %v2220
    %v2230 = vsel %vm342, %v2220, %v2222
    %v2231 = vsel %vm342, %v2222, %v2224
    %v2232 = vsel %vm342, %v2224, %v2226
    %2239 = vst [vmem:[#allocation4 + $0x120] sm:$0xff] %v2227
    %2240 = vst [vmem:[#allocation4 + $0x128] sm:$0xff] %v2228
    %2241 = vst [vmem:[#allocation4 + $0x130] sm:$0xff] %v2229
    %2242 = vst [vmem:[#allocation4 + $0x138] sm:$0xff] %v2230
    %2243 = vst [vmem:[#allocation4 + $0x140] sm:$0xff] %v2231
    %2244 = vst [vmem:[#allocation4 + $0x148] sm:$0xff] %v2232
    %v2245 = vld [vmem:[#allocation2 + $0x8] sm:$0xff]
    %v2246 = vld [vmem:[#allocation2 + $0x10] sm:$0xff]
    %v2247 = vld [vmem:[#allocation2 + $0x18] sm:$0xff]
    %v2248 = vld [vmem:[#allocation2 + $0x20] sm:$0xff]
    %v2249 = vld [vmem:[#allocation2 + $0x28] sm:$0xff]
    %v2250 = vld [vmem:[#allocation2 + $0x30] sm:$0xff]
    %v2251 = vld [vmem:[#allocation2 + $0x38] sm:$0xff]
    %2259 = vrot.lane.b32.xlu0 %v2245, 110
    %v2260 = vpop.permute.xlu0 %2259
    %2261 = vrot.lane.b32.xlu0 %v2246, 110
    %v2262 = vpop.permute.xlu0 %2261
    %2263 = vrot.lane.b32.xlu0 %v2247, 110
    %v2264 = vpop.permute.xlu0 %2263
    %2265 = vrot.lane.b32.xlu0 %v2248, 110
    %v2266 = vpop.permute.xlu0 %2265
    %2267 = vrot.lane.b32.xlu0 %v2249, 110
    %v2268 = vpop.permute.xlu0 %2267
    %2269 = vrot.lane.b32.xlu0 %v2250, 110
    %v2270 = vpop.permute.xlu0 %2269
    %2271 = vrot.lane.b32.xlu0 %v2251, 110
    %v2272 = vpop.permute.xlu0 %2271
    %v2273 = vsel %vm389, %v2260, %v2262
    %v2274 = vsel %vm389, %v2262, %v2264
    %v2275 = vsel %vm389, %v2264, %v2266
    %v2276 = vsel %vm389, %v2266, %v2268
    %v2277 = vsel %vm389, %v2268, %v2270
    %v2278 = vsel %vm389, %v2270, %v2272
    %2285 = vst [vmem:[#allocation4 + $0x150] sm:$0xff] %v2273
    %2286 = vst [vmem:[#allocation4 + $0x158] sm:$0xff] %v2274
    %2287 = vst [vmem:[#allocation4 + $0x160] sm:$0xff] %v2275
    %2288 = vst [vmem:[#allocation4 + $0x168] sm:$0xff] %v2276
    %2289 = vst [vmem:[#allocation4 + $0x170] sm:$0xff] %v2277
    %2290 = vst [vmem:[#allocation4 + $0x178] sm:$0xff] %v2278
    %v2291 = vld [vmem:[#allocation2 + $0x8] sm:$0xff]
    %v2292 = vld [vmem:[#allocation2 + $0x10] sm:$0xff]
    %v2293 = vld [vmem:[#allocation2 + $0x18] sm:$0xff]
    %v2294 = vld [vmem:[#allocation2 + $0x20] sm:$0xff]
    %v2295 = vld [vmem:[#allocation2 + $0x28] sm:$0xff]
    %v2296 = vld [vmem:[#allocation2 + $0x30] sm:$0xff]
    %v2297 = vld [vmem:[#allocation2 + $0x38] sm:$0xff]
    %2305 = vrot.lane.b32.xlu0 %v2291, 109
    %v2306 = vpop.permute.xlu0 %2305
    %2307 = vrot.lane.b32.xlu0 %v2292, 109
    %v2308 = vpop.permute.xlu0 %2307
    %2309 = vrot.lane.b32.xlu0 %v2293, 109
    %v2310 = vpop.permute.xlu0 %2309
    %2311 = vrot.lane.b32.xlu0 %v2294, 109
    %v2312 = vpop.permute.xlu0 %2311
    %2313 = vrot.lane.b32.xlu0 %v2295, 109
    %v2314 = vpop.permute.xlu0 %2313
    %2315 = vrot.lane.b32.xlu0 %v2296, 109
    %v2316 = vpop.permute.xlu0 %2315
    %2317 = vrot.lane.b32.xlu0 %v2297, 109
    %v2318 = vpop.permute.xlu0 %2317
    %v2319 = vsel %vm436, %v2306, %v2308
    %v2320 = vsel %vm436, %v2308, %v2310
    %v2321 = vsel %vm436, %v2310, %v2312
    %v2322 = vsel %vm436, %v2312, %v2314
    %v2323 = vsel %vm436, %v2314, %v2316
    %v2324 = vsel %vm436, %v2316, %v2318
    %2331 = vst [vmem:[#allocation4 + $0x180] sm:$0xff] %v2319
    %2332 = vst [vmem:[#allocation4 + $0x188] sm:$0xff] %v2320
    %2333 = vst [vmem:[#allocation4 + $0x190] sm:$0xff] %v2321
    %2334 = vst [vmem:[#allocation4 + $0x198] sm:$0xff] %v2322
    %2335 = vst [vmem:[#allocation4 + $0x1a0] sm:$0xff] %v2323
    %2336 = vst [vmem:[#allocation4 + $0x1a8] sm:$0xff] %v2324
    %v2337 = vld [vmem:[%s5] sm:$0xf]
    %v2338 = vld [vmem:[#allocation4] sm:$0xff]
    %v2339 = vld [vmem:[#allocation4 + $0x8] sm:$0xff]
    %v2340 = vld [vmem:[#allocation4 + $0x10] sm:$0xff]
    %v2341 = vld [vmem:[#allocation4 + $0x18] sm:$0xff]
    %v2342 = vld [vmem:[#allocation4 + $0x20] sm:$0xff]
    %v2343 = vld [vmem:[#allocation4 + $0x28] sm:$0xff]
    %v2344 = vld [vmem:[#allocation4 + $0x30] sm:$0xff]
    %v2345 = vld [vmem:[#allocation4 + $0x38] sm:$0xff]
    %v2346 = vld [vmem:[#allocation4 + $0x40] sm:$0xff]
    %v2347 = vld [vmem:[#allocation4 + $0x48] sm:$0xff]
    %v2348 = vld [vmem:[#allocation4 + $0x50] sm:$0xff]
    %v2349 = vld [vmem:[#allocation4 + $0x58] sm:$0xff]
    %v2350 = vld [vmem:[#allocation4 + $0x60] sm:$0xff]
    %v2351 = vld [vmem:[#allocation4 + $0x68] sm:$0xff]
    %v2352 = vld [vmem:[#allocation4 + $0x70] sm:$0xff]
    %v2353 = vld [vmem:[#allocation4 + $0x78] sm:$0xff]
    %v2354 = vld [vmem:[#allocation4 + $0x80] sm:$0xff]
    %v2355 = vld [vmem:[#allocation4 + $0x88] sm:$0xff]
    %v2356 = vld [vmem:[#allocation4 + $0x90] sm:$0xff]
    %v2357 = vld [vmem:[#allocation4 + $0x98] sm:$0xff]
    %v2358 = vld [vmem:[#allocation4 + $0xa0] sm:$0xff]
    %v2359 = vld [vmem:[#allocation4 + $0xa8] sm:$0xff]
    %v2360 = vld [vmem:[#allocation4 + $0xb0] sm:$0xff]
    %v2361 = vld [vmem:[#allocation4 + $0xb8] sm:$0xff]
    %v2362 = vld [vmem:[#allocation4 + $0xc0] sm:$0xff]
    %v2363 = vld [vmem:[#allocation4 + $0xc8] sm:$0xff]
    %v2364 = vld [vmem:[#allocation4 + $0xd0] sm:$0xff]
    %v2365 = vld [vmem:[#allocation4 + $0xd8] sm:$0xff]
    %v2366 = vld [vmem:[#allocation4 + $0xe0] sm:$0xff]
    %v2367 = vld [vmem:[#allocation4 + $0xe8] sm:$0xff]
    %v2368 = vld [vmem:[#allocation4 + $0xf0] sm:$0xff]
    %v2369 = vld [vmem:[#allocation4 + $0xf8] sm:$0xff]
    %v2370 = vld [vmem:[#allocation4 + $0x100] sm:$0xff]
    %v2371 = vld [vmem:[#allocation4 + $0x108] sm:$0xff]
    %v2372 = vld [vmem:[#allocation4 + $0x110] sm:$0xff]
    %v2373 = vld [vmem:[#allocation4 + $0x118] sm:$0xff]
    %v2374 = vld [vmem:[#allocation4 + $0x120] sm:$0xff]
    %v2375 = vld [vmem:[#allocation4 + $0x128] sm:$0xff]
    %v2376 = vld [vmem:[#allocation4 + $0x130] sm:$0xff]
    %v2377 = vld [vmem:[#allocation4 + $0x138] sm:$0xff]
    %v2378 = vld [vmem:[#allocation4 + $0x140] sm:$0xff]
    %v2379 = vld [vmem:[#allocation4 + $0x148] sm:$0xff]
    %v2380 = vld [vmem:[#allocation4 + $0x150] sm:$0xff]
    %v2381 = vld [vmem:[#allocation4 + $0x158] sm:$0xff]
    %v2382 = vld [vmem:[#allocation4 + $0x160] sm:$0xff]
    %v2383 = vld [vmem:[#allocation4 + $0x168] sm:$0xff]
    %v2384 = vld [vmem:[#allocation4 + $0x170] sm:$0xff]
    %v2385 = vld [vmem:[#allocation4 + $0x178] sm:$0xff]
    %v2386 = vld [vmem:[#allocation4 + $0x180] sm:$0xff]
    %v2387 = vld [vmem:[#allocation4 + $0x188] sm:$0xff]
    %v2388 = vld [vmem:[#allocation4 + $0x190] sm:$0xff]
    %v2389 = vld [vmem:[#allocation4 + $0x198] sm:$0xff]
    %v2390 = vld [vmem:[#allocation4 + $0x1a0] sm:$0xff]
    %v2391 = vld [vmem:[#allocation4 + $0x1a8] sm:$0xff]
    %v2392 = vpack.c.bf16 %v2344, %v2338
    %v2393 = vpack.c.bf16 %v2345, %v2339
    %v2394 = vpack.c.bf16 %v2346, %v2340
    %v2395 = vpack.c.bf16 %v2347, %v2341
    %v2396 = vpack.c.bf16 %v2348, %v2342
    %v2397 = vpack.c.bf16 %v2349, %v2343
    %v2398 = vpack.c.bf16 %v2356, %v2350
    %v2399 = vpack.c.bf16 %v2357, %v2351
    %v2400 = vpack.c.bf16 %v2358, %v2352
    %v2401 = vpack.c.bf16 %v2359, %v2353
    %v2402 = vpack.c.bf16 %v2360, %v2354
    %v2403 = vpack.c.bf16 %v2361, %v2355
    %v2404 = vpack.c.bf16 %v2368, %v2362
    %v2405 = vpack.c.bf16 %v2369, %v2363
    %v2406 = vpack.c.bf16 %v2370, %v2364
    %v2407 = vpack.c.bf16 %v2371, %v2365
    %v2408 = vpack.c.bf16 %v2372, %v2366
    %v2409 = vpack.c.bf16 %v2373, %v2367
    %v2410 = vpack.c.bf16 %v2380, %v2374
    %v2411 = vpack.c.bf16 %v2381, %v2375
    %v2412 = vpack.c.bf16 %v2382, %v2376
    %v2413 = vpack.c.bf16 %v2383, %v2377
    %v2414 = vpack.c.bf16 %v2384, %v2378
    %v2415 = vpack.c.bf16 %v2385, %v2379
    %v2416 = vpack.c.bf16 %v2386, %v2386
    %v2417 = vpack.c.bf16 %v2387, %v2387
    %v2418 = vpack.c.bf16 %v2388, %v2388
    %v2419 = vpack.c.bf16 %v2389, %v2389
    %v2420 = vpack.c.bf16 %v2390, %v2390
    %v2421 = vpack.c.bf16 %v2391, %v2391
    %2423 = vset.pattern.permute.xlu0 0
    %2424 = vperm.xlu0 %2423, %v66
    %v2425 = vpop.permute.xlu0 %2424
    %v2428 = vsel %vm545, %v2337, 0
    %v2431 = vsel %vm549, %v2416, 0
    %v2434 = vsel %vm549, %v2417, 0
    %v2437 = vsel %vm549, %v2418, 0
    %v2440 = vsel %vm549, %v2419, 0
    %v2443 = vsel %vm549, %v2420, 0
    %v2446 = vsel %vm549, %v2421, 0
    %2448 = vmatprep.subr.bf16.mxu0 %v2393
    %2449 = vmatpush1.bf16.msra.mxu0 %v2392
    %2450 = vmatprep.subr.bf16.mxu0 %v2399
    %2451 = vmatpush1.bf16.msra.mxu0 %v2398
    %2452 = vmatprep.subr.bf16.mxu0 %v2405
    %2453 = vmatpush1.bf16.msra.mxu0 %v2404
    %2454 = vmatprep.subr.bf16.mxu0 %v2411
    %2455 = vmatpush1.bf16.msra.mxu0 %v2410
    %2456 = vmatprep.subr.bf16.mxu0 %v2434
    %2457 = vmatpush1.bf16.msra.mxu0 %v2431
    %2458 = vmatprep.subr.bf16.mxu0 0
    %2459 = vmatpush1.bf16.msra.mxu0 0
    %2460 = vmatprep.subr.bf16.mxu0 0
    %2461 = vmatpush1.bf16.msra.mxu0 0
    %2462 = vmatprep.subr.bf16.mxu0 0
    %2463 = vmatpush1.bf16.msra.mxu0 0
    %2464 = vmatprep.subr.bf16.mxu0 0
    %2465 = vmatpush1.bf16.msra.mxu0 0
    %2466 = vmatprep.subr.bf16.mxu0 0
    %2467 = vmatpush1.bf16.msra.mxu0 0
    %2468 = vmatprep.subr.bf16.mxu0 0
    %2469 = vmatpush1.bf16.msra.mxu0 0
    %2470 = vmatprep.subr.bf16.mxu0 0
    %2471 = vmatpush1.bf16.msra.mxu0 0
    %2472 = vmatprep.subr.bf16.mxu0 0
    %2473 = vmatpush1.bf16.msra.mxu0 0
    %2474 = vmatprep.subr.bf16.mxu0 0
    %2475 = vmatpush1.bf16.msra.mxu0 0
    %2476 = vmatprep.subr.bf16.mxu0 0
    %2477 = vmatpush1.bf16.msra.mxu0 0
    %2478 = vmatprep.subr.bf16.mxu0 0
    %2479 = vmatpush1.bf16.msra.mxu0 0
    %2480 = vmatprep.mubr.bf16.mxu0 0
    %2481 = vmatmul.mubr.bf16.gmra.mrb[0].mxu0 %v2428
    %v2482 = vpop.f32.mrb[0].mxu0
    %v2483 = vadd.f32 %v2425, %v2482
    %v2484 = vpop.f32.mrb[0].mxu0
    %v2485 = vadd.f32 %v2425, %v2484
    %v2486 = vpop.f32.mrb[0].mxu0
    %v2487 = vpop.f32.mrb[0].mxu0
    %2488 = vdwg.mxu0
    %2489 = vmatprep.subr.bf16.mxu0 %v2395
    %2490 = vmatpush1.bf16.msra.mxu0 %v2394
    %2491 = vmatprep.subr.bf16.mxu0 %v2401
    %2492 = vmatpush1.bf16.msra.mxu0 %v2400
    %2493 = vmatprep.subr.bf16.mxu0 %v2407
    %2494 = vmatpush1.bf16.msra.mxu0 %v2406
    %2495 = vmatprep.subr.bf16.mxu0 %v2413
    %2496 = vmatpush1.bf16.msra.mxu0 %v2412
    %2497 = vmatprep.subr.bf16.mxu0 %v2440
    %2498 = vmatpush1.bf16.msra.mxu0 %v2437
    %2499 = vmatprep.subr.bf16.mxu0 0
    %2500 = vmatpush1.bf16.msra.mxu0 0
    %2501 = vmatprep.subr.bf16.mxu0 0
    %2502 = vmatpush1.bf16.msra.mxu0 0
    %2503 = vmatprep.subr.bf16.mxu0 0
    %2504 = vmatpush1.bf16.msra.mxu0 0
    %2505 = vmatprep.subr.bf16.mxu0 0
    %2506 = vmatpush1.bf16.msra.mxu0 0
    %2507 = vmatprep.subr.bf16.mxu0 0
    %2508 = vmatpush1.bf16.msra.mxu0 0
    %2509 = vmatprep.subr.bf16.mxu0 0
    %2510 = vmatpush1.bf16.msra.mxu0 0
    %2511 = vmatprep.subr.bf16.mxu0 0
    %2512 = vmatpush1.bf16.msra.mxu0 0
    %2513 = vmatprep.subr.bf16.mxu0 0
    %2514 = vmatpush1.bf16.msra.mxu0 0
    %2515 = vmatprep.subr.bf16.mxu0 0
    %2516 = vmatpush1.bf16.msra.mxu0 0
    %2517 = vmatprep.subr.bf16.mxu0 0
    %2518 = vmatpush1.bf16.msra.mxu0 0
    %2519 = vmatprep.subr.bf16.mxu0 0
    %2520 = vmatpush1.bf16.msra.mxu0 0
    %2521 = vmatprep.mubr.bf16.mxu0 0
    %2522 = vmatmul.mubr.bf16.gmra.mrb[0].mxu0 %v2428
    %v2523 = vpop.f32.mrb[0].mxu0
    %v2524 = vadd.f32 %v2425, %v2523
    %v2525 = vpop.f32.mrb[0].mxu0
    %v2526 = vadd.f32 %v2425, %v2525
    %v2527 = vpop.f32.mrb[0].mxu0
    %v2528 = vpop.f32.mrb[0].mxu0
    %2529 = vdwg.mxu0
    %2530 = vmatprep.subr.bf16.mxu0 %v2397
    %2531 = vmatpush1.bf16.msra.mxu0 %v2396
    %2532 = vmatprep.subr.bf16.mxu0 %v2403
    %2533 = vmatpush1.bf16.msra.mxu0 %v2402
    %2534 = vmatprep.subr.bf16.mxu0 %v2409
    %2535 = vmatpush1.bf16.msra.mxu0 %v2408
    %2536 = vmatprep.subr.bf16.mxu0 %v2415
    %2537 = vmatpush1.bf16.msra.mxu0 %v2414
    %2538 = vmatprep.subr.bf16.mxu0 %v2446
    %2539 = vmatpush1.bf16.msra.mxu0 %v2443
    %2540 = vmatprep.subr.bf16.mxu0 0
    %2541 = vmatpush1.bf16.msra.mxu0 0
    %2542 = vmatprep.subr.bf16.mxu0 0
    %2543 = vmatpush1.bf16.msra.mxu0 0
    %2544 = vmatprep.subr.bf16.mxu0 0
    %2545 = vmatpush1.bf16.msra.mxu0 0
    %2546 = vmatprep.subr.bf16.mxu0 0
    %2547 = vmatpush1.bf16.msra.mxu0 0
    %2548 = vmatprep.subr.bf16.mxu0 0
    %2549 = vmatpush1.bf16.msra.mxu0 0
    %2550 = vmatprep.subr.bf16.mxu0 0
    %2551 = vmatpush1.bf16.msra.mxu0 0
    %2552 = vmatprep.subr.bf16.mxu0 0
    %2553 = vmatpush1.bf16.msra.mxu0 0
    %2554 = vmatprep.subr.bf16.mxu0 0
    %2555 = vmatpush1.bf16.msra.mxu0 0
    %2556 = vmatprep.subr.bf16.mxu0 0
    %2557 = vmatpush1.bf16.msra.mxu0 0
    %2558 = vmatprep.subr.bf16.mxu0 0
    %2559 = vmatpush1.bf16.msra.mxu0 0
    %2560 = vmatprep.subr.bf16.mxu0 0
    %2561 = vmatpush1.bf16.msra.mxu0 0
    %2562 = vmatprep.mubr.bf16.mxu0 0
    %2563 = vmatmul.mubr.bf16.gmra.mrb[0].mxu0 %v2428
    %v2564 = vpop.f32.mrb[0].mxu0
    %v2565 = vadd.f32 %v2425, %v2564
    %v2566 = vpop.f32.mrb[0].mxu0
    %v2567 = vadd.f32 %v2425, %v2566
    %v2568 = vpop.f32.mrb[0].mxu0
    %v2569 = vpop.f32.mrb[0].mxu0
    %2570 = vdwg.mxu0
    %v2571 = vtanh.pop %v2483
    %v2572 = vtanh.pop %v2485
    %v2573 = vtanh.pop %v2524
    %v2574 = vtanh.pop %v2526
    %v2575 = vtanh.pop %v2565
    %v2576 = vtanh.pop %v2567
    %v2577 = vmul.f32 %v59, %v2571
    %v2578 = vmul.f32 %v60, %v2572
    %v2579 = vmul.f32 %v61, %v2573
    %v2580 = vmul.f32 %v62, %v2574
    %v2581 = vmul.f32 %v63, %v2575
    %v2582 = vmul.f32 %v64, %v2576
    %2583 = vst [vmem:[#allocation3 + $0x8] sm:$0xff] %v2577
    %2584 = vst [vmem:[#allocation3 + $0x10] sm:$0xff] %v2578
    %2585 = vst [vmem:[#allocation3 + $0x18] sm:$0xff] %v2579
    %2586 = vst [vmem:[#allocation3 + $0x20] sm:$0xff] %v2580
    %2587 = vst [vmem:[#allocation3 + $0x28] sm:$0xff] %v2581
    %2588 = vst [vmem:[#allocation3 + $0x30] sm:$0xff] %v2582
    %v2589 = vld [vmem:[#allocation2] sm:$0xff]
    %v2590 = vld [vmem:[#allocation2 + $0x8] sm:$0xff]
    %v2591 = vld [vmem:[#allocation2 + $0x10] sm:$0xff]
    %v2592 = vld [vmem:[#allocation2 + $0x18] sm:$0xff]
    %v2593 = vld [vmem:[#allocation2 + $0x20] sm:$0xff]
    %v2594 = vld [vmem:[#allocation2 + $0x28] sm:$0xff]
    %v2595 = vld [vmem:[#allocation2 + $0x30] sm:$0xff]
    %2603 = vrot.lane.b32.xlu0 %v2589, 19
    %v2604 = vpop.permute.xlu0 %2603
    %2605 = vrot.lane.b32.xlu0 %v2590, 19
    %v2606 = vpop.permute.xlu0 %2605
    %2607 = vrot.lane.b32.xlu0 %v2591, 19
    %v2608 = vpop.permute.xlu0 %2607
    %2609 = vrot.lane.b32.xlu0 %v2592, 19
    %v2610 = vpop.permute.xlu0 %2609
    %2611 = vrot.lane.b32.xlu0 %v2593, 19
    %v2612 = vpop.permute.xlu0 %2611
    %2613 = vrot.lane.b32.xlu0 %v2594, 19
    %v2614 = vpop.permute.xlu0 %2613
    %2615 = vrot.lane.b32.xlu0 %v2595, 19
    %v2616 = vpop.permute.xlu0 %2615
    %v2617 = vsel %vm95, %v2604, %v2606
    %v2618 = vsel %vm95, %v2606, %v2608
    %v2619 = vsel %vm95, %v2608, %v2610
    %v2620 = vsel %vm95, %v2610, %v2612
    %v2621 = vsel %vm95, %v2612, %v2614
    %v2622 = vsel %vm95, %v2614, %v2616
    %2629 = vst [vmem:[#allocation4] sm:$0xff] %v2617
    %2630 = vst [vmem:[#allocation4 + $0x8] sm:$0xff] %v2618
    %2631 = vst [vmem:[#allocation4 + $0x10] sm:$0xff] %v2619
    %2632 = vst [vmem:[#allocation4 + $0x18] sm:$0xff] %v2620
    %2633 = vst [vmem:[#allocation4 + $0x20] sm:$0xff] %v2621
    %2634 = vst [vmem:[#allocation4 + $0x28] sm:$0xff] %v2622
    %v2635 = vld [vmem:[#allocation2] sm:$0xff]
    %v2636 = vld [vmem:[#allocation2 + $0x8] sm:$0xff]
    %v2637 = vld [vmem:[#allocation2 + $0x10] sm:$0xff]
    %v2638 = vld [vmem:[#allocation2 + $0x18] sm:$0xff]
    %v2639 = vld [vmem:[#allocation2 + $0x20] sm:$0xff]
    %v2640 = vld [vmem:[#allocation2 + $0x28] sm:$0xff]
    %v2641 = vld [vmem:[#allocation2 + $0x30] sm:$0xff]
    %2649 = vrot.lane.b32.xlu0 %v2635, 18
    %v2650 = vpop.permute.xlu0 %2649
    %2651 = vrot.lane.b32.xlu0 %v2636, 18
    %v2652 = vpop.permute.xlu0 %2651
    %2653 = vrot.lane.b32.xlu0 %v2637, 18
    %v2654 = vpop.permute.xlu0 %2653
    %2655 = vrot.lane.b32.xlu0 %v2638, 18
    %v2656 = vpop.permute.xlu0 %2655
    %2657 = vrot.lane.b32.xlu0 %v2639, 18
    %v2658 = vpop.permute.xlu0 %2657
    %2659 = vrot.lane.b32.xlu0 %v2640, 18
    %v2660 = vpop.permute.xlu0 %2659
    %2661 = vrot.lane.b32.xlu0 %v2641, 18
    %v2662 = vpop.permute.xlu0 %2661
    %v2663 = vsel %vm142, %v2650, %v2652
    %v2664 = vsel %vm142, %v2652, %v2654
    %v2665 = vsel %vm142, %v2654, %v2656
    %v2666 = vsel %vm142, %v2656, %v2658
    %v2667 = vsel %vm142, %v2658, %v2660
    %v2668 = vsel %vm142, %v2660, %v2662
    %2675 = vst [vmem:[#allocation4 + $0x30] sm:$0xff] %v2663
    %2676 = vst [vmem:[#allocation4 + $0x38] sm:$0xff] %v2664
    %2677 = vst [vmem:[#allocation4 + $0x40] sm:$0xff] %v2665
    %2678 = vst [vmem:[#allocation4 + $0x48] sm:$0xff] %v2666
    %2679 = vst [vmem:[#allocation4 + $0x50] sm:$0xff] %v2667
    %2680 = vst [vmem:[#allocation4 + $0x58] sm:$0xff] %v2668
    %v2681 = vld [vmem:[#allocation2] sm:$0xff]
    %v2682 = vld [vmem:[#allocation2 + $0x8] sm:$0xff]
    %v2683 = vld [vmem:[#allocation2 + $0x10] sm:$0xff]
    %v2684 = vld [vmem:[#allocation2 + $0x18] sm:$0xff]
    %v2685 = vld [vmem:[#allocation2 + $0x20] sm:$0xff]
    %v2686 = vld [vmem:[#allocation2 + $0x28] sm:$0xff]
    %v2687 = vld [vmem:[#allocation2 + $0x30] sm:$0xff]
    %2695 = vrot.lane.b32.xlu0 %v2681, 17
    %v2696 = vpop.permute.xlu0 %2695
    %2697 = vrot.lane.b32.xlu0 %v2682, 17
    %v2698 = vpop.permute.xlu0 %2697
    %2699 = vrot.lane.b32.xlu0 %v2683, 17
    %v2700 = vpop.permute.xlu0 %2699
    %2701 = vrot.lane.b32.xlu0 %v2684, 17
    %v2702 = vpop.permute.xlu0 %2701
    %2703 = vrot.lane.b32.xlu0 %v2685, 17
    %v2704 = vpop.permute.xlu0 %2703
    %2705 = vrot.lane.b32.xlu0 %v2686, 17
    %v2706 = vpop.permute.xlu0 %2705
    %2707 = vrot.lane.b32.xlu0 %v2687, 17
    %v2708 = vpop.permute.xlu0 %2707
    %v2709 = vsel %vm189, %v2696, %v2698
    %v2710 = vsel %vm189, %v2698, %v2700
    %v2711 = vsel %vm189, %v2700, %v2702
    %v2712 = vsel %vm189, %v2702, %v2704
    %v2713 = vsel %vm189, %v2704, %v2706
    %v2714 = vsel %vm189, %v2706, %v2708
    %2721 = vst [vmem:[#allocation4 + $0x60] sm:$0xff] %v2709
    %2722 = vst [vmem:[#allocation4 + $0x68] sm:$0xff] %v2710
    %2723 = vst [vmem:[#allocation4 + $0x70] sm:$0xff] %v2711
    %2724 = vst [vmem:[#allocation4 + $0x78] sm:$0xff] %v2712
    %2725 = vst [vmem:[#allocation4 + $0x80] sm:$0xff] %v2713
    %2726 = vst [vmem:[#allocation4 + $0x88] sm:$0xff] %v2714
    %v2727 = vld [vmem:[#allocation2] sm:$0xff]
    %v2728 = vld [vmem:[#allocation2 + $0x8] sm:$0xff]
    %v2729 = vld [vmem:[#allocation2 + $0x10] sm:$0xff]
    %v2730 = vld [vmem:[#allocation2 + $0x18] sm:$0xff]
    %v2731 = vld [vmem:[#allocation2 + $0x20] sm:$0xff]
    %v2732 = vld [vmem:[#allocation2 + $0x28] sm:$0xff]
    %v2733 = vld [vmem:[#allocation2 + $0x30] sm:$0xff]
    %2741 = vrot.lane.b32.xlu0 %v2727, 1
    %v2742 = vpop.permute.xlu0 %2741
    %2743 = vrot.lane.b32.xlu0 %v2728, 1
    %v2744 = vpop.permute.xlu0 %2743
    %2745 = vrot.lane.b32.xlu0 %v2729, 1
    %v2746 = vpop.permute.xlu0 %2745
    %2747 = vrot.lane.b32.xlu0 %v2730, 1
    %v2748 = vpop.permute.xlu0 %2747
    %2749 = vrot.lane.b32.xlu0 %v2731, 1
    %v2750 = vpop.permute.xlu0 %2749
    %2751 = vrot.lane.b32.xlu0 %v2732, 1
    %v2752 = vpop.permute.xlu0 %2751
    %2753 = vrot.lane.b32.xlu0 %v2733, 1
    %v2754 = vpop.permute.xlu0 %2753
    %v2755 = vsel %vm236, %v2742, %v2744
    %v2756 = vsel %vm236, %v2744, %v2746
    %v2757 = vsel %vm236, %v2746, %v2748
    %v2758 = vsel %vm236, %v2748, %v2750
    %v2759 = vsel %vm236, %v2750, %v2752
    %v2760 = vsel %vm236, %v2752, %v2754
    %2767 = vst [vmem:[#allocation4 + $0x90] sm:$0xff] %v2755
    %2768 = vst [vmem:[#allocation4 + $0x98] sm:$0xff] %v2756
    %2769 = vst [vmem:[#allocation4 + $0xa0] sm:$0xff] %v2757
    %2770 = vst [vmem:[#allocation4 + $0xa8] sm:$0xff] %v2758
    %2771 = vst [vmem:[#allocation4 + $0xb0] sm:$0xff] %v2759
    %2772 = vst [vmem:[#allocation4 + $0xb8] sm:$0xff] %v2760
    %v2773 = vld [vmem:[#allocation2 + $0x8] sm:$0xff]
    %v2774 = vld [vmem:[#allocation2 + $0x10] sm:$0xff]
    %v2775 = vld [vmem:[#allocation2 + $0x18] sm:$0xff]
    %v2776 = vld [vmem:[#allocation2 + $0x20] sm:$0xff]
    %v2777 = vld [vmem:[#allocation2 + $0x28] sm:$0xff]
    %v2778 = vld [vmem:[#allocation2 + $0x30] sm:$0xff]
    %2779 = vst [vmem:[#allocation4 + $0xc0] sm:$0xff] %v2773
    %2780 = vst [vmem:[#allocation4 + $0xc8] sm:$0xff] %v2774
    %2781 = vst [vmem:[#allocation4 + $0xd0] sm:$0xff] %v2775
    %2782 = vst [vmem:[#allocation4 + $0xd8] sm:$0xff] %v2776
    %2783 = vst [vmem:[#allocation4 + $0xe0] sm:$0xff] %v2777
    %2784 = vst [vmem:[#allocation4 + $0xe8] sm:$0xff] %v2778
    %v2785 = vld [vmem:[#allocation2 + $0x8] sm:$0xff]
    %v2786 = vld [vmem:[#allocation2 + $0x10] sm:$0xff]
    %v2787 = vld [vmem:[#allocation2 + $0x18] sm:$0xff]
    %v2788 = vld [vmem:[#allocation2 + $0x20] sm:$0xff]
    %v2789 = vld [vmem:[#allocation2 + $0x28] sm:$0xff]
    %v2790 = vld [vmem:[#allocation2 + $0x30] sm:$0xff]
    %v2791 = vld [vmem:[#allocation2 + $0x38] sm:$0xff]
    %2799 = vrot.lane.b32.xlu0 %v2785, 127
    %v2800 = vpop.permute.xlu0 %2799
    %2801 = vrot.lane.b32.xlu0 %v2786, 127
    %v2802 = vpop.permute.xlu0 %2801
    %2803 = vrot.lane.b32.xlu0 %v2787, 127
    %v2804 = vpop.permute.xlu0 %2803
    %2805 = vrot.lane.b32.xlu0 %v2788, 127
    %v2806 = vpop.permute.xlu0 %2805
    %2807 = vrot.lane.b32.xlu0 %v2789, 127
    %v2808 = vpop.permute.xlu0 %2807
    %2809 = vrot.lane.b32.xlu0 %v2790, 127
    %v2810 = vpop.permute.xlu0 %2809
    %2811 = vrot.lane.b32.xlu0 %v2791, 127
    %v2812 = vpop.permute.xlu0 %2811
    %v2813 = vsel %vm295, %v2800, %v2802
    %v2814 = vsel %vm295, %v2802, %v2804
    %v2815 = vsel %vm295, %v2804, %v2806
    %v2816 = vsel %vm295, %v2806, %v2808
    %v2817 = vsel %vm295, %v2808, %v2810
    %v2818 = vsel %vm295, %v2810, %v2812
    %2825 = vst [vmem:[#allocation4 + $0xf0] sm:$0xff] %v2813
    %2826 = vst [vmem:[#allocation4 + $0xf8] sm:$0xff] %v2814
    %2827 = vst [vmem:[#allocation4 + $0x100] sm:$0xff] %v2815
    %2828 = vst [vmem:[#allocation4 + $0x108] sm:$0xff] %v2816
    %2829 = vst [vmem:[#allocation4 + $0x110] sm:$0xff] %v2817
    %2830 = vst [vmem:[#allocation4 + $0x118] sm:$0xff] %v2818
    %v2831 = vld [vmem:[#allocation2 + $0x8] sm:$0xff]
    %v2832 = vld [vmem:[#allocation2 + $0x10] sm:$0xff]
    %v2833 = vld [vmem:[#allocation2 + $0x18] sm:$0xff]
    %v2834 = vld [vmem:[#allocation2 + $0x20] sm:$0xff]
    %v2835 = vld [vmem:[#allocation2 + $0x28] sm:$0xff]
    %v2836 = vld [vmem:[#allocation2 + $0x30] sm:$0xff]
    %v2837 = vld [vmem:[#allocation2 + $0x38] sm:$0xff]
    %2845 = vrot.lane.b32.xlu0 %v2831, 111
    %v2846 = vpop.permute.xlu0 %2845
    %2847 = vrot.lane.b32.xlu0 %v2832, 111
    %v2848 = vpop.permute.xlu0 %2847
    %2849 = vrot.lane.b32.xlu0 %v2833, 111
    %v2850 = vpop.permute.xlu0 %2849
    %2851 = vrot.lane.b32.xlu0 %v2834, 111
    %v2852 = vpop.permute.xlu0 %2851
    %2853 = vrot.lane.b32.xlu0 %v2835, 111
    %v2854 = vpop.permute.xlu0 %2853
    %2855 = vrot.lane.b32.xlu0 %v2836, 111
    %v2856 = vpop.permute.xlu0 %2855
    %2857 = vrot.lane.b32.xlu0 %v2837, 111
    %v2858 = vpop.permute.xlu0 %2857
    %v2859 = vsel %vm342, %v2846, %v2848
    %v2860 = vsel %vm342, %v2848, %v2850
    %v2861 = vsel %vm342, %v2850, %v2852
    %v2862 = vsel %vm342, %v2852, %v2854
    %v2863 = vsel %vm342, %v2854, %v2856
    %v2864 = vsel %vm342, %v2856, %v2858
    %2871 = vst [vmem:[#allocation4 + $0x120] sm:$0xff] %v2859
    %2872 = vst [vmem:[#allocation4 + $0x128] sm:$0xff] %v2860
    %2873 = vst [vmem:[#allocation4 + $0x130] sm:$0xff] %v2861
    %2874 = vst [vmem:[#allocation4 + $0x138] sm:$0xff] %v2862
    %2875 = vst [vmem:[#allocation4 + $0x140] sm:$0xff] %v2863
    %2876 = vst [vmem:[#allocation4 + $0x148] sm:$0xff] %v2864
    %v2877 = vld [vmem:[#allocation2 + $0x8] sm:$0xff]
    %v2878 = vld [vmem:[#allocation2 + $0x10] sm:$0xff]
    %v2879 = vld [vmem:[#allocation2 + $0x18] sm:$0xff]
    %v2880 = vld [vmem:[#allocation2 + $0x20] sm:$0xff]
    %v2881 = vld [vmem:[#allocation2 + $0x28] sm:$0xff]
    %v2882 = vld [vmem:[#allocation2 + $0x30] sm:$0xff]
    %v2883 = vld [vmem:[#allocation2 + $0x38] sm:$0xff]
    %2891 = vrot.lane.b32.xlu0 %v2877, 110
    %v2892 = vpop.permute.xlu0 %2891
    %2893 = vrot.lane.b32.xlu0 %v2878, 110
    %v2894 = vpop.permute.xlu0 %2893
    %2895 = vrot.lane.b32.xlu0 %v2879, 110
    %v2896 = vpop.permute.xlu0 %2895
    %2897 = vrot.lane.b32.xlu0 %v2880, 110
    %v2898 = vpop.permute.xlu0 %2897
    %2899 = vrot.lane.b32.xlu0 %v2881, 110
    %v2900 = vpop.permute.xlu0 %2899
    %2901 = vrot.lane.b32.xlu0 %v2882, 110
    %v2902 = vpop.permute.xlu0 %2901
    %2903 = vrot.lane.b32.xlu0 %v2883, 110
    %v2904 = vpop.permute.xlu0 %2903
    %v2905 = vsel %vm389, %v2892, %v2894
    %v2906 = vsel %vm389, %v2894, %v2896
    %v2907 = vsel %vm389, %v2896, %v2898
    %v2908 = vsel %vm389, %v2898, %v2900
    %v2909 = vsel %vm389, %v2900, %v2902
    %v2910 = vsel %vm389, %v2902, %v2904
    %2917 = vst [vmem:[#allocation4 + $0x150] sm:$0xff] %v2905
    %2918 = vst [vmem:[#allocation4 + $0x158] sm:$0xff] %v2906
    %2919 = vst [vmem:[#allocation4 + $0x160] sm:$0xff] %v2907
    %2920 = vst [vmem:[#allocation4 + $0x168] sm:$0xff] %v2908
    %2921 = vst [vmem:[#allocation4 + $0x170] sm:$0xff] %v2909
    %2922 = vst [vmem:[#allocation4 + $0x178] sm:$0xff] %v2910
    %v2923 = vld [vmem:[#allocation2 + $0x8] sm:$0xff]
    %v2924 = vld [vmem:[#allocation2 + $0x10] sm:$0xff]
    %v2925 = vld [vmem:[#allocation2 + $0x18] sm:$0xff]
    %v2926 = vld [vmem:[#allocation2 + $0x20] sm:$0xff]
    %v2927 = vld [vmem:[#allocation2 + $0x28] sm:$0xff]
    %v2928 = vld [vmem:[#allocation2 + $0x30] sm:$0xff]
    %v2929 = vld [vmem:[#allocation2 + $0x38] sm:$0xff]
    %2937 = vrot.lane.b32.xlu0 %v2923, 109
    %v2938 = vpop.permute.xlu0 %2937
    %2939 = vrot.lane.b32.xlu0 %v2924, 109
    %v2940 = vpop.permute.xlu0 %2939
    %2941 = vrot.lane.b32.xlu0 %v2925, 109
    %v2942 = vpop.permute.xlu0 %2941
    %2943 = vrot.lane.b32.xlu0 %v2926, 109
    %v2944 = vpop.permute.xlu0 %2943
    %2945 = vrot.lane.b32.xlu0 %v2927, 109
    %v2946 = vpop.permute.xlu0 %2945
    %2947 = vrot.lane.b32.xlu0 %v2928, 109
    %v2948 = vpop.permute.xlu0 %2947
    %2949 = vrot.lane.b32.xlu0 %v2929, 109
    %v2950 = vpop.permute.xlu0 %2949
    %v2951 = vsel %vm436, %v2938, %v2940
    %v2952 = vsel %vm436, %v2940, %v2942
    %v2953 = vsel %vm436, %v2942, %v2944
    %v2954 = vsel %vm436, %v2944, %v2946
    %v2955 = vsel %vm436, %v2946, %v2948
    %v2956 = vsel %vm436, %v2948, %v2950
    %2963 = vst [vmem:[#allocation4 + $0x180] sm:$0xff] %v2951
    %2964 = vst [vmem:[#allocation4 + $0x188] sm:$0xff] %v2952
    %2965 = vst [vmem:[#allocation4 + $0x190] sm:$0xff] %v2953
    %2966 = vst [vmem:[#allocation4 + $0x198] sm:$0xff] %v2954
    %2967 = vst [vmem:[#allocation4 + $0x1a0] sm:$0xff] %v2955
    %2968 = vst [vmem:[#allocation4 + $0x1a8] sm:$0xff] %v2956
    %v2969 = vld [vmem:[%s3] sm:$0xf]
    %v2970 = vld [vmem:[#allocation4] sm:$0xff]
    %v2971 = vld [vmem:[#allocation4 + $0x8] sm:$0xff]
    %v2972 = vld [vmem:[#allocation4 + $0x10] sm:$0xff]
    %v2973 = vld [vmem:[#allocation4 + $0x18] sm:$0xff]
    %v2974 = vld [vmem:[#allocation4 + $0x20] sm:$0xff]
    %v2975 = vld [vmem:[#allocation4 + $0x28] sm:$0xff]
    %v2976 = vld [vmem:[#allocation4 + $0x30] sm:$0xff]
    %v2977 = vld [vmem:[#allocation4 + $0x38] sm:$0xff]
    %v2978 = vld [vmem:[#allocation4 + $0x40] sm:$0xff]
    %v2979 = vld [vmem:[#allocation4 + $0x48] sm:$0xff]
    %v2980 = vld [vmem:[#allocation4 + $0x50] sm:$0xff]
    %v2981 = vld [vmem:[#allocation4 + $0x58] sm:$0xff]
    %v2982 = vld [vmem:[#allocation4 + $0x60] sm:$0xff]
    %v2983 = vld [vmem:[#allocation4 + $0x68] sm:$0xff]
    %v2984 = vld [vmem:[#allocation4 + $0x70] sm:$0xff]
    %v2985 = vld [vmem:[#allocation4 + $0x78] sm:$0xff]
    %v2986 = vld [vmem:[#allocation4 + $0x80] sm:$0xff]
    %v2987 = vld [vmem:[#allocation4 + $0x88] sm:$0xff]
    %v2988 = vld [vmem:[#allocation4 + $0x90] sm:$0xff]
    %v2989 = vld [vmem:[#allocation4 + $0x98] sm:$0xff]
    %v2990 = vld [vmem:[#allocation4 + $0xa0] sm:$0xff]
    %v2991 = vld [vmem:[#allocation4 + $0xa8] sm:$0xff]
    %v2992 = vld [vmem:[#allocation4 + $0xb0] sm:$0xff]
    %v2993 = vld [vmem:[#allocation4 + $0xb8] sm:$0xff]
    %v2994 = vld [vmem:[#allocation4 + $0xc0] sm:$0xff]
    %v2995 = vld [vmem:[#allocation4 + $0xc8] sm:$0xff]
    %v2996 = vld [vmem:[#allocation4 + $0xd0] sm:$0xff]
    %v2997 = vld [vmem:[#allocation4 + $0xd8] sm:$0xff]
    %v2998 = vld [vmem:[#allocation4 + $0xe0] sm:$0xff]
    %v2999 = vld [vmem:[#allocation4 + $0xe8] sm:$0xff]
    %v3000 = vld [vmem:[#allocation4 + $0xf0] sm:$0xff]
    %v3001 = vld [vmem:[#allocation4 + $0xf8] sm:$0xff]
    %v3002 = vld [vmem:[#allocation4 + $0x100] sm:$0xff]
    %v3003 = vld [vmem:[#allocation4 + $0x108] sm:$0xff]
    %v3004 = vld [vmem:[#allocation4 + $0x110] sm:$0xff]
    %v3005 = vld [vmem:[#allocation4 + $0x118] sm:$0xff]
    %v3006 = vld [vmem:[#allocation4 + $0x120] sm:$0xff]
    %v3007 = vld [vmem:[#allocation4 + $0x128] sm:$0xff]
    %v3008 = vld [vmem:[#allocation4 + $0x130] sm:$0xff]
    %v3009 = vld [vmem:[#allocation4 + $0x138] sm:$0xff]
    %v3010 = vld [vmem:[#allocation4 + $0x140] sm:$0xff]
    %v3011 = vld [vmem:[#allocation4 + $0x148] sm:$0xff]
    %v3012 = vld [vmem:[#allocation4 + $0x150] sm:$0xff]
    %v3013 = vld [vmem:[#allocation4 + $0x158] sm:$0xff]
    %v3014 = vld [vmem:[#allocation4 + $0x160] sm:$0xff]
    %v3015 = vld [vmem:[#allocation4 + $0x168] sm:$0xff]
    %v3016 = vld [vmem:[#allocation4 + $0x170] sm:$0xff]
    %v3017 = vld [vmem:[#allocation4 + $0x178] sm:$0xff]
    %v3018 = vld [vmem:[#allocation4 + $0x180] sm:$0xff]
    %v3019 = vld [vmem:[#allocation4 + $0x188] sm:$0xff]
    %v3020 = vld [vmem:[#allocation4 + $0x190] sm:$0xff]
    %v3021 = vld [vmem:[#allocation4 + $0x198] sm:$0xff]
    %v3022 = vld [vmem:[#allocation4 + $0x1a0] sm:$0xff]
    %v3023 = vld [vmem:[#allocation4 + $0x1a8] sm:$0xff]
    %v3024 = vpack.c.bf16 %v2976, %v2970
    %v3025 = vpack.c.bf16 %v2977, %v2971
    %v3026 = vpack.c.bf16 %v2978, %v2972
    %v3027 = vpack.c.bf16 %v2979, %v2973
    %v3028 = vpack.c.bf16 %v2980, %v2974
    %v3029 = vpack.c.bf16 %v2981, %v2975
    %v3030 = vpack.c.bf16 %v2988, %v2982
    %v3031 = vpack.c.bf16 %v2989, %v2983
    %v3032 = vpack.c.bf16 %v2990, %v2984
    %v3033 = vpack.c.bf16 %v2991, %v2985
    %v3034 = vpack.c.bf16 %v2992, %v2986
    %v3035 = vpack.c.bf16 %v2993, %v2987
    %v3036 = vpack.c.bf16 %v3000, %v2994
    %v3037 = vpack.c.bf16 %v3001, %v2995
    %v3038 = vpack.c.bf16 %v3002, %v2996
    %v3039 = vpack.c.bf16 %v3003, %v2997
    %v3040 = vpack.c.bf16 %v3004, %v2998
    %v3041 = vpack.c.bf16 %v3005, %v2999
    %v3042 = vpack.c.bf16 %v3012, %v3006
    %v3043 = vpack.c.bf16 %v3013, %v3007
    %v3044 = vpack.c.bf16 %v3014, %v3008
    %v3045 = vpack.c.bf16 %v3015, %v3009
    %v3046 = vpack.c.bf16 %v3016, %v3010
    %v3047 = vpack.c.bf16 %v3017, %v3011
    %v3048 = vpack.c.bf16 %v3018, %v3018
    %v3049 = vpack.c.bf16 %v3019, %v3019
    %v3050 = vpack.c.bf16 %v3020, %v3020
    %v3051 = vpack.c.bf16 %v3021, %v3021
    %v3052 = vpack.c.bf16 %v3022, %v3022
    %v3053 = vpack.c.bf16 %v3023, %v3023
    %v3055 = vsel %vm545, %v2969, 0
    %v3058 = vsel %vm549, %v3048, 0
    %v3061 = vsel %vm549, %v3049, 0
    %v3064 = vsel %vm549, %v3050, 0
    %v3067 = vsel %vm549, %v3051, 0
    %v3070 = vsel %vm549, %v3052, 0
    %v3073 = vsel %vm549, %v3053, 0
    %3075 = vmatprep.subr.bf16.mxu0 %v3025
    %3076 = vmatpush1.bf16.msra.mxu0 %v3024
    %3077 = vmatprep.subr.bf16.mxu0 %v3031
    %3078 = vmatpush1.bf16.msra.mxu0 %v3030
    %3079 = vmatprep.subr.bf16.mxu0 %v3037
    %3080 = vmatpush1.bf16.msra.mxu0 %v3036
    %3081 = vmatprep.subr.bf16.mxu0 %v3043
    %3082 = vmatpush1.bf16.msra.mxu0 %v3042
    %3083 = vmatprep.subr.bf16.mxu0 %v3061
    %3084 = vmatpush1.bf16.msra.mxu0 %v3058
    %3085 = vmatprep.subr.bf16.mxu0 0
    %3086 = vmatpush1.bf16.msra.mxu0 0
    %3087 = vmatprep.subr.bf16.mxu0 0
    %3088 = vmatpush1.bf16.msra.mxu0 0
    %3089 = vmatprep.subr.bf16.mxu0 0
    %3090 = vmatpush1.bf16.msra.mxu0 0
    %3091 = vmatprep.subr.bf16.mxu0 0
    %3092 = vmatpush1.bf16.msra.mxu0 0
    %3093 = vmatprep.subr.bf16.mxu0 0
    %3094 = vmatpush1.bf16.msra.mxu0 0
    %3095 = vmatprep.subr.bf16.mxu0 0
    %3096 = vmatpush1.bf16.msra.mxu0 0
    %3097 = vmatprep.subr.bf16.mxu0 0
    %3098 = vmatpush1.bf16.msra.mxu0 0
    %3099 = vmatprep.subr.bf16.mxu0 0
    %3100 = vmatpush1.bf16.msra.mxu0 0
    %3101 = vmatprep.subr.bf16.mxu0 0
    %3102 = vmatpush1.bf16.msra.mxu0 0
    %3103 = vmatprep.subr.bf16.mxu0 0
    %3104 = vmatpush1.bf16.msra.mxu0 0
    %3105 = vmatprep.subr.bf16.mxu0 0
    %3106 = vmatpush1.bf16.msra.mxu0 0
    %3107 = vmatprep.mubr.bf16.mxu0 0
    %3108 = vmatmul.mubr.bf16.gmra.mrb[0].mxu0 %v3055
    %v3109 = vpop.f32.mrb[0].mxu0
    %v3110 = vadd.f32 0.0, %v3109
    %v3111 = vpop.f32.mrb[0].mxu0
    %v3112 = vadd.f32 0.0, %v3111
    %v3113 = vpop.f32.mrb[0].mxu0
    %v3114 = vpop.f32.mrb[0].mxu0
    %3115 = vdwg.mxu0
    %3116 = vmatprep.subr.bf16.mxu0 %v3027
    %3117 = vmatpush1.bf16.msra.mxu0 %v3026
    %3118 = vmatprep.subr.bf16.mxu0 %v3033
    %3119 = vmatpush1.bf16.msra.mxu0 %v3032
    %3120 = vmatprep.subr.bf16.mxu0 %v3039
    %3121 = vmatpush1.bf16.msra.mxu0 %v3038
    %3122 = vmatprep.subr.bf16.mxu0 %v3045
    %3123 = vmatpush1.bf16.msra.mxu0 %v3044
    %3124 = vmatprep.subr.bf16.mxu0 %v3067
    %3125 = vmatpush1.bf16.msra.mxu0 %v3064
    %3126 = vmatprep.subr.bf16.mxu0 0
    %3127 = vmatpush1.bf16.msra.mxu0 0
    %3128 = vmatprep.subr.bf16.mxu0 0
    %3129 = vmatpush1.bf16.msra.mxu0 0
    %3130 = vmatprep.subr.bf16.mxu0 0
    %3131 = vmatpush1.bf16.msra.mxu0 0
    %3132 = vmatprep.subr.bf16.mxu0 0
    %3133 = vmatpush1.bf16.msra.mxu0 0
    %3134 = vmatprep.subr.bf16.mxu0 0
    %3135 = vmatpush1.bf16.msra.mxu0 0
    %3136 = vmatprep.subr.bf16.mxu0 0
    %3137 = vmatpush1.bf16.msra.mxu0 0
    %3138 = vmatprep.subr.bf16.mxu0 0
    %3139 = vmatpush1.bf16.msra.mxu0 0
    %3140 = vmatprep.subr.bf16.mxu0 0
    %3141 = vmatpush1.bf16.msra.mxu0 0
    %3142 = vmatprep.subr.bf16.mxu0 0
    %3143 = vmatpush1.bf16.msra.mxu0 0
    %3144 = vmatprep.subr.bf16.mxu0 0
    %3145 = vmatpush1.bf16.msra.mxu0 0
    %3146 = vmatprep.subr.bf16.mxu0 0
    %3147 = vmatpush1.bf16.msra.mxu0 0
    %3148 = vmatprep.mubr.bf16.mxu0 0
    %3149 = vmatmul.mubr.bf16.gmra.mrb[0].mxu0 %v3055
    %v3150 = vpop.f32.mrb[0].mxu0
    %v3151 = vadd.f32 0.0, %v3150
    %v3152 = vpop.f32.mrb[0].mxu0
    %v3153 = vadd.f32 0.0, %v3152
    %v3154 = vpop.f32.mrb[0].mxu0
    %v3155 = vpop.f32.mrb[0].mxu0
    %3156 = vdwg.mxu0
    %3157 = vmatprep.subr.bf16.mxu0 %v3029
    %3158 = vmatpush1.bf16.msra.mxu0 %v3028
    %3159 = vmatprep.subr.bf16.mxu0 %v3035
    %3160 = vmatpush1.bf16.msra.mxu0 %v3034
    %3161 = vmatprep.subr.bf16.mxu0 %v3041
    %3162 = vmatpush1.bf16.msra.mxu0 %v3040
    %3163 = vmatprep.subr.bf16.mxu0 %v3047
    %3164 = vmatpush1.bf16.msra.mxu0 %v3046
    %3165 = vmatprep.subr.bf16.mxu0 %v3073
    %3166 = vmatpush1.bf16.msra.mxu0 %v3070
    %3167 = vmatprep.subr.bf16.mxu0 0
    %3168 = vmatpush1.bf16.msra.mxu0 0
    %3169 = vmatprep.subr.bf16.mxu0 0
    %3170 = vmatpush1.bf16.msra.mxu0 0
    %3171 = vmatprep.subr.bf16.mxu0 0
    %3172 = vmatpush1.bf16.msra.mxu0 0
    %3173 = vmatprep.subr.bf16.mxu0 0
    %3174 = vmatpush1.bf16.msra.mxu0 0
    %3175 = vmatprep.subr.bf16.mxu0 0
    %3176 = vmatpush1.bf16.msra.mxu0 0
    %3177 = vmatprep.subr.bf16.mxu0 0
    %3178 = vmatpush1.bf16.msra.mxu0 0
    %3179 = vmatprep.subr.bf16.mxu0 0
    %3180 = vmatpush1.bf16.msra.mxu0 0
    %3181 = vmatprep.subr.bf16.mxu0 0
    %3182 = vmatpush1.bf16.msra.mxu0 0
    %3183 = vmatprep.subr.bf16.mxu0 0
    %3184 = vmatpush1.bf16.msra.mxu0 0
    %3185 = vmatprep.subr.bf16.mxu0 0
    %3186 = vmatpush1.bf16.msra.mxu0 0
    %3187 = vmatprep.subr.bf16.mxu0 0
    %3188 = vmatpush1.bf16.msra.mxu0 0
    %3189 = vmatprep.mubr.bf16.mxu0 0
    %3190 = vmatmul.mubr.bf16.gmra.mrb[0].mxu0 %v3055
    %v3191 = vpop.f32.mrb[0].mxu0
    %v3192 = vadd.f32 0.0, %v3191
    %v3193 = vpop.f32.mrb[0].mxu0
    %v3194 = vadd.f32 0.0, %v3193
    %v3195 = vpop.f32.mrb[0].mxu0
    %v3196 = vpop.f32.mrb[0].mxu0
    %3197 = vdwg.mxu0
    %v3198 = vld [vmem:[#allocation3] sm:$0xff]
    %v3199 = vld [vmem:[#allocation3 + $0x8] sm:$0xff]
    %v3200 = vld [vmem:[#allocation3 + $0x10] sm:$0xff]
    %v3201 = vld [vmem:[#allocation3 + $0x18] sm:$0xff]
    %v3202 = vld [vmem:[#allocation3 + $0x20] sm:$0xff]
    %v3203 = vld [vmem:[#allocation3 + $0x28] sm:$0xff]
    %v3204 = vld [vmem:[#allocation3 + $0x30] sm:$0xff]
    %3212 = vrot.lane.b32.xlu0 %v3198, 19
    %v3213 = vpop.permute.xlu0 %3212
    %3214 = vrot.lane.b32.xlu0 %v3199, 19
    %v3215 = vpop.permute.xlu0 %3214
    %3216 = vrot.lane.b32.xlu0 %v3200, 19
    %v3217 = vpop.permute.xlu0 %3216
    %3218 = vrot.lane.b32.xlu0 %v3201, 19
    %v3219 = vpop.permute.xlu0 %3218
    %3220 = vrot.lane.b32.xlu0 %v3202, 19
    %v3221 = vpop.permute.xlu0 %3220
    %3222 = vrot.lane.b32.xlu0 %v3203, 19
    %v3223 = vpop.permute.xlu0 %3222
    %3224 = vrot.lane.b32.xlu0 %v3204, 19
    %v3225 = vpop.permute.xlu0 %3224
    %v3226 = vsel %vm95, %v3213, %v3215
    %v3227 = vsel %vm95, %v3215, %v3217
    %v3228 = vsel %vm95, %v3217, %v3219
    %v3229 = vsel %vm95, %v3219, %v3221
    %v3230 = vsel %vm95, %v3221, %v3223
    %v3231 = vsel %vm95, %v3223, %v3225
    %3238 = vst [vmem:[#allocation4] sm:$0xff] %v3226
    %3239 = vst [vmem:[#allocation4 + $0x8] sm:$0xff] %v3227
    %3240 = vst [vmem:[#allocation4 + $0x10] sm:$0xff] %v3228
    %3241 = vst [vmem:[#allocation4 + $0x18] sm:$0xff] %v3229
    %3242 = vst [vmem:[#allocation4 + $0x20] sm:$0xff] %v3230
    %3243 = vst [vmem:[#allocation4 + $0x28] sm:$0xff] %v3231
    %v3244 = vld [vmem:[#allocation3] sm:$0xff]
    %v3245 = vld [vmem:[#allocation3 + $0x8] sm:$0xff]
    %v3246 = vld [vmem:[#allocation3 + $0x10] sm:$0xff]
    %v3247 = vld [vmem:[#allocation3 + $0x18] sm:$0xff]
    %v3248 = vld [vmem:[#allocation3 + $0x20] sm:$0xff]
    %v3249 = vld [vmem:[#allocation3 + $0x28] sm:$0xff]
    %v3250 = vld [vmem:[#allocation3 + $0x30] sm:$0xff]
    %3258 = vrot.lane.b32.xlu0 %v3244, 18
    %v3259 = vpop.permute.xlu0 %3258
    %3260 = vrot.lane.b32.xlu0 %v3245, 18
    %v3261 = vpop.permute.xlu0 %3260
    %3262 = vrot.lane.b32.xlu0 %v3246, 18
    %v3263 = vpop.permute.xlu0 %3262
    %3264 = vrot.lane.b32.xlu0 %v3247, 18
    %v3265 = vpop.permute.xlu0 %3264
    %3266 = vrot.lane.b32.xlu0 %v3248, 18
    %v3267 = vpop.permute.xlu0 %3266
    %3268 = vrot.lane.b32.xlu0 %v3249, 18
    %v3269 = vpop.permute.xlu0 %3268
    %3270 = vrot.lane.b32.xlu0 %v3250, 18
    %v3271 = vpop.permute.xlu0 %3270
    %v3272 = vsel %vm142, %v3259, %v3261
    %v3273 = vsel %vm142, %v3261, %v3263
    %v3274 = vsel %vm142, %v3263, %v3265
    %v3275 = vsel %vm142, %v3265, %v3267
    %v3276 = vsel %vm142, %v3267, %v3269
    %v3277 = vsel %vm142, %v3269, %v3271
    %3284 = vst [vmem:[#allocation4 + $0x30] sm:$0xff] %v3272
    %3285 = vst [vmem:[#allocation4 + $0x38] sm:$0xff] %v3273
    %3286 = vst [vmem:[#allocation4 + $0x40] sm:$0xff] %v3274
    %3287 = vst [vmem:[#allocation4 + $0x48] sm:$0xff] %v3275
    %3288 = vst [vmem:[#allocation4 + $0x50] sm:$0xff] %v3276
    %3289 = vst [vmem:[#allocation4 + $0x58] sm:$0xff] %v3277
    %v3290 = vld [vmem:[#allocation3] sm:$0xff]
    %v3291 = vld [vmem:[#allocation3 + $0x8] sm:$0xff]
    %v3292 = vld [vmem:[#allocation3 + $0x10] sm:$0xff]
    %v3293 = vld [vmem:[#allocation3 + $0x18] sm:$0xff]
    %v3294 = vld [vmem:[#allocation3 + $0x20] sm:$0xff]
    %v3295 = vld [vmem:[#allocation3 + $0x28] sm:$0xff]
    %v3296 = vld [vmem:[#allocation3 + $0x30] sm:$0xff]
    %3304 = vrot.lane.b32.xlu0 %v3290, 17
    %v3305 = vpop.permute.xlu0 %3304
    %3306 = vrot.lane.b32.xlu0 %v3291, 17
    %v3307 = vpop.permute.xlu0 %3306
    %3308 = vrot.lane.b32.xlu0 %v3292, 17
    %v3309 = vpop.permute.xlu0 %3308
    %3310 = vrot.lane.b32.xlu0 %v3293, 17
    %v3311 = vpop.permute.xlu0 %3310
    %3312 = vrot.lane.b32.xlu0 %v3294, 17
    %v3313 = vpop.permute.xlu0 %3312
    %3314 = vrot.lane.b32.xlu0 %v3295, 17
    %v3315 = vpop.permute.xlu0 %3314
    %3316 = vrot.lane.b32.xlu0 %v3296, 17
    %v3317 = vpop.permute.xlu0 %3316
    %v3318 = vsel %vm189, %v3305, %v3307
    %v3319 = vsel %vm189, %v3307, %v3309
    %v3320 = vsel %vm189, %v3309, %v3311
    %v3321 = vsel %vm189, %v3311, %v3313
    %v3322 = vsel %vm189, %v3313, %v3315
    %v3323 = vsel %vm189, %v3315, %v3317
    %3330 = vst [vmem:[#allocation4 + $0x60] sm:$0xff] %v3318
    %3331 = vst [vmem:[#allocation4 + $0x68] sm:$0xff] %v3319
    %3332 = vst [vmem:[#allocation4 + $0x70] sm:$0xff] %v3320
    %3333 = vst [vmem:[#allocation4 + $0x78] sm:$0xff] %v3321
    %3334 = vst [vmem:[#allocation4 + $0x80] sm:$0xff] %v3322
    %3335 = vst [vmem:[#allocation4 + $0x88] sm:$0xff] %v3323
    %v3336 = vld [vmem:[#allocation3] sm:$0xff]
    %v3337 = vld [vmem:[#allocation3 + $0x8] sm:$0xff]
    %v3338 = vld [vmem:[#allocation3 + $0x10] sm:$0xff]
    %v3339 = vld [vmem:[#allocation3 + $0x18] sm:$0xff]
    %v3340 = vld [vmem:[#allocation3 + $0x20] sm:$0xff]
    %v3341 = vld [vmem:[#allocation3 + $0x28] sm:$0xff]
    %v3342 = vld [vmem:[#allocation3 + $0x30] sm:$0xff]
    %3350 = vrot.lane.b32.xlu0 %v3336, 1
    %v3351 = vpop.permute.xlu0 %3350
    %3352 = vrot.lane.b32.xlu0 %v3337, 1
    %v3353 = vpop.permute.xlu0 %3352
    %3354 = vrot.lane.b32.xlu0 %v3338, 1
    %v3355 = vpop.permute.xlu0 %3354
    %3356 = vrot.lane.b32.xlu0 %v3339, 1
    %v3357 = vpop.permute.xlu0 %3356
    %3358 = vrot.lane.b32.xlu0 %v3340, 1
    %v3359 = vpop.permute.xlu0 %3358
    %3360 = vrot.lane.b32.xlu0 %v3341, 1
    %v3361 = vpop.permute.xlu0 %3360
    %3362 = vrot.lane.b32.xlu0 %v3342, 1
    %v3363 = vpop.permute.xlu0 %3362
    %v3364 = vsel %vm236, %v3351, %v3353
    %v3365 = vsel %vm236, %v3353, %v3355
    %v3366 = vsel %vm236, %v3355, %v3357
    %v3367 = vsel %vm236, %v3357, %v3359
    %v3368 = vsel %vm236, %v3359, %v3361
    %v3369 = vsel %vm236, %v3361, %v3363
    %3376 = vst [vmem:[#allocation4 + $0x90] sm:$0xff] %v3364
    %3377 = vst [vmem:[#allocation4 + $0x98] sm:$0xff] %v3365
    %3378 = vst [vmem:[#allocation4 + $0xa0] sm:$0xff] %v3366
    %3379 = vst [vmem:[#allocation4 + $0xa8] sm:$0xff] %v3367
    %3380 = vst [vmem:[#allocation4 + $0xb0] sm:$0xff] %v3368
    %3381 = vst [vmem:[#allocation4 + $0xb8] sm:$0xff] %v3369
    %v3382 = vld [vmem:[#allocation3 + $0x8] sm:$0xff]
    %v3383 = vld [vmem:[#allocation3 + $0x10] sm:$0xff]
    %v3384 = vld [vmem:[#allocation3 + $0x18] sm:$0xff]
    %v3385 = vld [vmem:[#allocation3 + $0x20] sm:$0xff]
    %v3386 = vld [vmem:[#allocation3 + $0x28] sm:$0xff]
    %v3387 = vld [vmem:[#allocation3 + $0x30] sm:$0xff]
    %3388 = vst [vmem:[#allocation4 + $0xc0] sm:$0xff] %v3382
    %3389 = vst [vmem:[#allocation4 + $0xc8] sm:$0xff] %v3383
    %3390 = vst [vmem:[#allocation4 + $0xd0] sm:$0xff] %v3384
    %3391 = vst [vmem:[#allocation4 + $0xd8] sm:$0xff] %v3385
    %3392 = vst [vmem:[#allocation4 + $0xe0] sm:$0xff] %v3386
    %3393 = vst [vmem:[#allocation4 + $0xe8] sm:$0xff] %v3387
    %v3394 = vld [vmem:[#allocation3 + $0x8] sm:$0xff]
    %v3395 = vld [vmem:[#allocation3 + $0x10] sm:$0xff]
    %v3396 = vld [vmem:[#allocation3 + $0x18] sm:$0xff]
    %v3397 = vld [vmem:[#allocation3 + $0x20] sm:$0xff]
    %v3398 = vld [vmem:[#allocation3 + $0x28] sm:$0xff]
    %v3399 = vld [vmem:[#allocation3 + $0x30] sm:$0xff]
    %v3400 = vld [vmem:[#allocation3 + $0x38] sm:$0xff]
    %3408 = vrot.lane.b32.xlu0 %v3394, 127
    %v3409 = vpop.permute.xlu0 %3408
    %3410 = vrot.lane.b32.xlu0 %v3395, 127
    %v3411 = vpop.permute.xlu0 %3410
    %3412 = vrot.lane.b32.xlu0 %v3396, 127
    %v3413 = vpop.permute.xlu0 %3412
    %3414 = vrot.lane.b32.xlu0 %v3397, 127
    %v3415 = vpop.permute.xlu0 %3414
    %3416 = vrot.lane.b32.xlu0 %v3398, 127
    %v3417 = vpop.permute.xlu0 %3416
    %3418 = vrot.lane.b32.xlu0 %v3399, 127
    %v3419 = vpop.permute.xlu0 %3418
    %3420 = vrot.lane.b32.xlu0 %v3400, 127
    %v3421 = vpop.permute.xlu0 %3420
    %v3422 = vsel %vm295, %v3409, %v3411
    %v3423 = vsel %vm295, %v3411, %v3413
    %v3424 = vsel %vm295, %v3413, %v3415
    %v3425 = vsel %vm295, %v3415, %v3417
    %v3426 = vsel %vm295, %v3417, %v3419
    %v3427 = vsel %vm295, %v3419, %v3421
    %3434 = vst [vmem:[#allocation4 + $0xf0] sm:$0xff] %v3422
    %3435 = vst [vmem:[#allocation4 + $0xf8] sm:$0xff] %v3423
    %3436 = vst [vmem:[#allocation4 + $0x100] sm:$0xff] %v3424
    %3437 = vst [vmem:[#allocation4 + $0x108] sm:$0xff] %v3425
    %3438 = vst [vmem:[#allocation4 + $0x110] sm:$0xff] %v3426
    %3439 = vst [vmem:[#allocation4 + $0x118] sm:$0xff] %v3427
    %v3440 = vld [vmem:[#allocation3 + $0x8] sm:$0xff]
    %v3441 = vld [vmem:[#allocation3 + $0x10] sm:$0xff]
    %v3442 = vld [vmem:[#allocation3 + $0x18] sm:$0xff]
    %v3443 = vld [vmem:[#allocation3 + $0x20] sm:$0xff]
    %v3444 = vld [vmem:[#allocation3 + $0x28] sm:$0xff]
    %v3445 = vld [vmem:[#allocation3 + $0x30] sm:$0xff]
    %v3446 = vld [vmem:[#allocation3 + $0x38] sm:$0xff]
    %3454 = vrot.lane.b32.xlu0 %v3440, 111
    %v3455 = vpop.permute.xlu0 %3454
    %3456 = vrot.lane.b32.xlu0 %v3441, 111
    %v3457 = vpop.permute.xlu0 %3456
    %3458 = vrot.lane.b32.xlu0 %v3442, 111
    %v3459 = vpop.permute.xlu0 %3458
    %3460 = vrot.lane.b32.xlu0 %v3443, 111
    %v3461 = vpop.permute.xlu0 %3460
    %3462 = vrot.lane.b32.xlu0 %v3444, 111
    %v3463 = vpop.permute.xlu0 %3462
    %3464 = vrot.lane.b32.xlu0 %v3445, 111
    %v3465 = vpop.permute.xlu0 %3464
    %3466 = vrot.lane.b32.xlu0 %v3446, 111
    %v3467 = vpop.permute.xlu0 %3466
    %v3468 = vsel %vm342, %v3455, %v3457
    %v3469 = vsel %vm342, %v3457, %v3459
    %v3470 = vsel %vm342, %v3459, %v3461
    %v3471 = vsel %vm342, %v3461, %v3463
    %v3472 = vsel %vm342, %v3463, %v3465
    %v3473 = vsel %vm342, %v3465, %v3467
    %3480 = vst [vmem:[#allocation4 + $0x120] sm:$0xff] %v3468
    %3481 = vst [vmem:[#allocation4 + $0x128] sm:$0xff] %v3469
    %3482 = vst [vmem:[#allocation4 + $0x130] sm:$0xff] %v3470
    %3483 = vst [vmem:[#allocation4 + $0x138] sm:$0xff] %v3471
    %3484 = vst [vmem:[#allocation4 + $0x140] sm:$0xff] %v3472
    %3485 = vst [vmem:[#allocation4 + $0x148] sm:$0xff] %v3473
    %v3486 = vld [vmem:[#allocation3 + $0x8] sm:$0xff]
    %v3487 = vld [vmem:[#allocation3 + $0x10] sm:$0xff]
    %v3488 = vld [vmem:[#allocation3 + $0x18] sm:$0xff]
    %v3489 = vld [vmem:[#allocation3 + $0x20] sm:$0xff]
    %v3490 = vld [vmem:[#allocation3 + $0x28] sm:$0xff]
    %v3491 = vld [vmem:[#allocation3 + $0x30] sm:$0xff]
    %v3492 = vld [vmem:[#allocation3 + $0x38] sm:$0xff]
    %3500 = vrot.lane.b32.xlu0 %v3486, 110
    %v3501 = vpop.permute.xlu0 %3500
    %3502 = vrot.lane.b32.xlu0 %v3487, 110
    %v3503 = vpop.permute.xlu0 %3502
    %3504 = vrot.lane.b32.xlu0 %v3488, 110
    %v3505 = vpop.permute.xlu0 %3504
    %3506 = vrot.lane.b32.xlu0 %v3489, 110
    %v3507 = vpop.permute.xlu0 %3506
    %3508 = vrot.lane.b32.xlu0 %v3490, 110
    %v3509 = vpop.permute.xlu0 %3508
    %3510 = vrot.lane.b32.xlu0 %v3491, 110
    %v3511 = vpop.permute.xlu0 %3510
    %3512 = vrot.lane.b32.xlu0 %v3492, 110
    %v3513 = vpop.permute.xlu0 %3512
    %v3514 = vsel %vm389, %v3501, %v3503
    %v3515 = vsel %vm389, %v3503, %v3505
    %v3516 = vsel %vm389, %v3505, %v3507
    %v3517 = vsel %vm389, %v3507, %v3509
    %v3518 = vsel %vm389, %v3509, %v3511
    %v3519 = vsel %vm389, %v3511, %v3513
    %3526 = vst [vmem:[#allocation4 + $0x150] sm:$0xff] %v3514
    %3527 = vst [vmem:[#allocation4 + $0x158] sm:$0xff] %v3515
    %3528 = vst [vmem:[#allocation4 + $0x160] sm:$0xff] %v3516
    %3529 = vst [vmem:[#allocation4 + $0x168] sm:$0xff] %v3517
    %3530 = vst [vmem:[#allocation4 + $0x170] sm:$0xff] %v3518
    %3531 = vst [vmem:[#allocation4 + $0x178] sm:$0xff] %v3519
    %v3532 = vld [vmem:[#allocation3 + $0x8] sm:$0xff]
    %v3533 = vld [vmem:[#allocation3 + $0x10] sm:$0xff]
    %v3534 = vld [vmem:[#allocation3 + $0x18] sm:$0xff]
    %v3535 = vld [vmem:[#allocation3 + $0x20] sm:$0xff]
    %v3536 = vld [vmem:[#allocation3 + $0x28] sm:$0xff]
    %v3537 = vld [vmem:[#allocation3 + $0x30] sm:$0xff]
    %v3538 = vld [vmem:[#allocation3 + $0x38] sm:$0xff]
    %3546 = vrot.lane.b32.xlu0 %v3532, 109
    %v3547 = vpop.permute.xlu0 %3546
    %3548 = vrot.lane.b32.xlu0 %v3533, 109
    %v3549 = vpop.permute.xlu0 %3548
    %3550 = vrot.lane.b32.xlu0 %v3534, 109
    %v3551 = vpop.permute.xlu0 %3550
    %3552 = vrot.lane.b32.xlu0 %v3535, 109
    %v3553 = vpop.permute.xlu0 %3552
    %3554 = vrot.lane.b32.xlu0 %v3536, 109
    %v3555 = vpop.permute.xlu0 %3554
    %3556 = vrot.lane.b32.xlu0 %v3537, 109
    %v3557 = vpop.permute.xlu0 %3556
    %3558 = vrot.lane.b32.xlu0 %v3538, 109
    %v3559 = vpop.permute.xlu0 %3558
    %v3560 = vsel %vm436, %v3547, %v3549
    %v3561 = vsel %vm436, %v3549, %v3551
    %v3562 = vsel %vm436, %v3551, %v3553
    %v3563 = vsel %vm436, %v3553, %v3555
    %v3564 = vsel %vm436, %v3555, %v3557
    %v3565 = vsel %vm436, %v3557, %v3559
    %3572 = vst [vmem:[#allocation4 + $0x180] sm:$0xff] %v3560
    %3573 = vst [vmem:[#allocation4 + $0x188] sm:$0xff] %v3561
    %3574 = vst [vmem:[#allocation4 + $0x190] sm:$0xff] %v3562
    %3575 = vst [vmem:[#allocation4 + $0x198] sm:$0xff] %v3563
    %3576 = vst [vmem:[#allocation4 + $0x1a0] sm:$0xff] %v3564
    %3577 = vst [vmem:[#allocation4 + $0x1a8] sm:$0xff] %v3565
    %v3578 = vld [vmem:[%s4] sm:$0xf]
    %v3579 = vld [vmem:[#allocation4] sm:$0xff]
    %v3580 = vld [vmem:[#allocation4 + $0x8] sm:$0xff]
    %v3581 = vld [vmem:[#allocation4 + $0x10] sm:$0xff]
    %v3582 = vld [vmem:[#allocation4 + $0x18] sm:$0xff]
    %v3583 = vld [vmem:[#allocation4 + $0x20] sm:$0xff]
    %v3584 = vld [vmem:[#allocation4 + $0x28] sm:$0xff]
    %v3585 = vld [vmem:[#allocation4 + $0x30] sm:$0xff]
    %v3586 = vld [vmem:[#allocation4 + $0x38] sm:$0xff]
    %v3587 = vld [vmem:[#allocation4 + $0x40] sm:$0xff]
    %v3588 = vld [vmem:[#allocation4 + $0x48] sm:$0xff]
    %v3589 = vld [vmem:[#allocation4 + $0x50] sm:$0xff]
    %v3590 = vld [vmem:[#allocation4 + $0x58] sm:$0xff]
    %v3591 = vld [vmem:[#allocation4 + $0x60] sm:$0xff]
    %v3592 = vld [vmem:[#allocation4 + $0x68] sm:$0xff]
    %v3593 = vld [vmem:[#allocation4 + $0x70] sm:$0xff]
    %v3594 = vld [vmem:[#allocation4 + $0x78] sm:$0xff]
    %v3595 = vld [vmem:[#allocation4 + $0x80] sm:$0xff]
    %v3596 = vld [vmem:[#allocation4 + $0x88] sm:$0xff]
    %v3597 = vld [vmem:[#allocation4 + $0x90] sm:$0xff]
    %v3598 = vld [vmem:[#allocation4 + $0x98] sm:$0xff]
    %v3599 = vld [vmem:[#allocation4 + $0xa0] sm:$0xff]
    %v3600 = vld [vmem:[#allocation4 + $0xa8] sm:$0xff]
    %v3601 = vld [vmem:[#allocation4 + $0xb0] sm:$0xff]
    %v3602 = vld [vmem:[#allocation4 + $0xb8] sm:$0xff]
    %v3603 = vld [vmem:[#allocation4 + $0xc0] sm:$0xff]
    %v3604 = vld [vmem:[#allocation4 + $0xc8] sm:$0xff]
    %v3605 = vld [vmem:[#allocation4 + $0xd0] sm:$0xff]
    %v3606 = vld [vmem:[#allocation4 + $0xd8] sm:$0xff]
    %v3607 = vld [vmem:[#allocation4 + $0xe0] sm:$0xff]
    %v3608 = vld [vmem:[#allocation4 + $0xe8] sm:$0xff]
    %v3609 = vld [vmem:[#allocation4 + $0xf0] sm:$0xff]
    %v3610 = vld [vmem:[#allocation4 + $0xf8] sm:$0xff]
    %v3611 = vld [vmem:[#allocation4 + $0x100] sm:$0xff]
    %v3612 = vld [vmem:[#allocation4 + $0x108] sm:$0xff]
    %v3613 = vld [vmem:[#allocation4 + $0x110] sm:$0xff]
    %v3614 = vld [vmem:[#allocation4 + $0x118] sm:$0xff]
    %v3615 = vld [vmem:[#allocation4 + $0x120] sm:$0xff]
    %v3616 = vld [vmem:[#allocation4 + $0x128] sm:$0xff]
    %v3617 = vld [vmem:[#allocation4 + $0x130] sm:$0xff]
    %v3618 = vld [vmem:[#allocation4 + $0x138] sm:$0xff]
    %v3619 = vld [vmem:[#allocation4 + $0x140] sm:$0xff]
    %v3620 = vld [vmem:[#allocation4 + $0x148] sm:$0xff]
    %v3621 = vld [vmem:[#allocation4 + $0x150] sm:$0xff]
    %v3622 = vld [vmem:[#allocation4 + $0x158] sm:$0xff]
    %v3623 = vld [vmem:[#allocation4 + $0x160] sm:$0xff]
    %v3624 = vld [vmem:[#allocation4 + $0x168] sm:$0xff]
    %v3625 = vld [vmem:[#allocation4 + $0x170] sm:$0xff]
    %v3626 = vld [vmem:[#allocation4 + $0x178] sm:$0xff]
    %v3627 = vld [vmem:[#allocation4 + $0x180] sm:$0xff]
    %v3628 = vld [vmem:[#allocation4 + $0x188] sm:$0xff]
    %v3629 = vld [vmem:[#allocation4 + $0x190] sm:$0xff]
    %v3630 = vld [vmem:[#allocation4 + $0x198] sm:$0xff]
    %v3631 = vld [vmem:[#allocation4 + $0x1a0] sm:$0xff]
    %v3632 = vld [vmem:[#allocation4 + $0x1a8] sm:$0xff]
    %v3633 = vpack.c.bf16 %v3585, %v3579
    %v3634 = vpack.c.bf16 %v3586, %v3580
    %v3635 = vpack.c.bf16 %v3587, %v3581
    %v3636 = vpack.c.bf16 %v3588, %v3582
    %v3637 = vpack.c.bf16 %v3589, %v3583
    %v3638 = vpack.c.bf16 %v3590, %v3584
    %v3639 = vpack.c.bf16 %v3597, %v3591
    %v3640 = vpack.c.bf16 %v3598, %v3592
    %v3641 = vpack.c.bf16 %v3599, %v3593
    %v3642 = vpack.c.bf16 %v3600, %v3594
    %v3643 = vpack.c.bf16 %v3601, %v3595
    %v3644 = vpack.c.bf16 %v3602, %v3596
    %v3645 = vpack.c.bf16 %v3609, %v3603
    %v3646 = vpack.c.bf16 %v3610, %v3604
    %v3647 = vpack.c.bf16 %v3611, %v3605
    %v3648 = vpack.c.bf16 %v3612, %v3606
    %v3649 = vpack.c.bf16 %v3613, %v3607
    %v3650 = vpack.c.bf16 %v3614, %v3608
    %v3651 = vpack.c.bf16 %v3621, %v3615
    %v3652 = vpack.c.bf16 %v3622, %v3616
    %v3653 = vpack.c.bf16 %v3623, %v3617
    %v3654 = vpack.c.bf16 %v3624, %v3618
    %v3655 = vpack.c.bf16 %v3625, %v3619
    %v3656 = vpack.c.bf16 %v3626, %v3620
    %v3657 = vpack.c.bf16 %v3627, %v3627
    %v3658 = vpack.c.bf16 %v3628, %v3628
    %v3659 = vpack.c.bf16 %v3629, %v3629
    %v3660 = vpack.c.bf16 %v3630, %v3630
    %v3661 = vpack.c.bf16 %v3631, %v3631
    %v3662 = vpack.c.bf16 %v3632, %v3632
    %v3664 = vsel %vm545, %v3578, 0
    %v3667 = vsel %vm549, %v3657, 0
    %v3670 = vsel %vm549, %v3658, 0
    %v3673 = vsel %vm549, %v3659, 0
    %v3676 = vsel %vm549, %v3660, 0
    %v3679 = vsel %vm549, %v3661, 0
    %v3682 = vsel %vm549, %v3662, 0
    %3684 = vmatprep.subr.bf16.mxu0 %v3634
    %3685 = vmatpush1.bf16.msra.mxu0 %v3633
    %3686 = vmatprep.subr.bf16.mxu0 %v3640
    %3687 = vmatpush1.bf16.msra.mxu0 %v3639
    %3688 = vmatprep.subr.bf16.mxu0 %v3646
    %3689 = vmatpush1.bf16.msra.mxu0 %v3645
    %3690 = vmatprep.subr.bf16.mxu0 %v3652
    %3691 = vmatpush1.bf16.msra.mxu0 %v3651
    %3692 = vmatprep.subr.bf16.mxu0 %v3670
    %3693 = vmatpush1.bf16.msra.mxu0 %v3667
    %3694 = vmatprep.subr.bf16.mxu0 0
    %3695 = vmatpush1.bf16.msra.mxu0 0
    %3696 = vmatprep.subr.bf16.mxu0 0
    %3697 = vmatpush1.bf16.msra.mxu0 0
    %3698 = vmatprep.subr.bf16.mxu0 0
    %3699 = vmatpush1.bf16.msra.mxu0 0
    %3700 = vmatprep.subr.bf16.mxu0 0
    %3701 = vmatpush1.bf16.msra.mxu0 0
    %3702 = vmatprep.subr.bf16.mxu0 0
    %3703 = vmatpush1.bf16.msra.mxu0 0
    %3704 = vmatprep.subr.bf16.mxu0 0
    %3705 = vmatpush1.bf16.msra.mxu0 0
    %3706 = vmatprep.subr.bf16.mxu0 0
    %3707 = vmatpush1.bf16.msra.mxu0 0
    %3708 = vmatprep.subr.bf16.mxu0 0
    %3709 = vmatpush1.bf16.msra.mxu0 0
    %3710 = vmatprep.subr.bf16.mxu0 0
    %3711 = vmatpush1.bf16.msra.mxu0 0
    %3712 = vmatprep.subr.bf16.mxu0 0
    %3713 = vmatpush1.bf16.msra.mxu0 0
    %3714 = vmatprep.subr.bf16.mxu0 0
    %3715 = vmatpush1.bf16.msra.mxu0 0
    %3716 = vmatprep.mubr.bf16.mxu0 0
    %3717 = vmatmul.mubr.bf16.gmra.mrb[0].mxu0 %v3664
    %v3718 = vpop.f32.mrb[0].mxu0
    %v3719 = vadd.f32 0.0, %v3718
    %v3720 = vpop.f32.mrb[0].mxu0
    %v3721 = vadd.f32 0.0, %v3720
    %v3722 = vpop.f32.mrb[0].mxu0
    %v3723 = vpop.f32.mrb[0].mxu0
    %3724 = vdwg.mxu0
    %3725 = vmatprep.subr.bf16.mxu0 %v3636
    %3726 = vmatpush1.bf16.msra.mxu0 %v3635
    %3727 = vmatprep.subr.bf16.mxu0 %v3642
    %3728 = vmatpush1.bf16.msra.mxu0 %v3641
    %3729 = vmatprep.subr.bf16.mxu0 %v3648
    %3730 = vmatpush1.bf16.msra.mxu0 %v3647
    %3731 = vmatprep.subr.bf16.mxu0 %v3654
    %3732 = vmatpush1.bf16.msra.mxu0 %v3653
    %3733 = vmatprep.subr.bf16.mxu0 %v3676
    %3734 = vmatpush1.bf16.msra.mxu0 %v3673
    %3735 = vmatprep.subr.bf16.mxu0 0
    %3736 = vmatpush1.bf16.msra.mxu0 0
    %3737 = vmatprep.subr.bf16.mxu0 0
    %3738 = vmatpush1.bf16.msra.mxu0 0
    %3739 = vmatprep.subr.bf16.mxu0 0
    %3740 = vmatpush1.bf16.msra.mxu0 0
    %3741 = vmatprep.subr.bf16.mxu0 0
    %3742 = vmatpush1.bf16.msra.mxu0 0
    %3743 = vmatprep.subr.bf16.mxu0 0
    %3744 = vmatpush1.bf16.msra.mxu0 0
    %3745 = vmatprep.subr.bf16.mxu0 0
    %3746 = vmatpush1.bf16.msra.mxu0 0
    %3747 = vmatprep.subr.bf16.mxu0 0
    %3748 = vmatpush1.bf16.msra.mxu0 0
    %3749 = vmatprep.subr.bf16.mxu0 0
    %3750 = vmatpush1.bf16.msra.mxu0 0
    %3751 = vmatprep.subr.bf16.mxu0 0
    %3752 = vmatpush1.bf16.msra.mxu0 0
    %3753 = vmatprep.subr.bf16.mxu0 0
    %3754 = vmatpush1.bf16.msra.mxu0 0
    %3755 = vmatprep.subr.bf16.mxu0 0
    %3756 = vmatpush1.bf16.msra.mxu0 0
    %3757 = vmatprep.mubr.bf16.mxu0 0
    %3758 = vmatmul.mubr.bf16.gmra.mrb[0].mxu0 %v3664
    %v3759 = vpop.f32.mrb[0].mxu0
    %v3760 = vadd.f32 0.0, %v3759
    %v3761 = vpop.f32.mrb[0].mxu0
    %v3762 = vadd.f32 0.0, %v3761
    %v3763 = vpop.f32.mrb[0].mxu0
    %v3764 = vpop.f32.mrb[0].mxu0
    %3765 = vdwg.mxu0
    %3766 = vmatprep.subr.bf16.mxu0 %v3638
    %3767 = vmatpush1.bf16.msra.mxu0 %v3637
    %3768 = vmatprep.subr.bf16.mxu0 %v3644
    %3769 = vmatpush1.bf16.msra.mxu0 %v3643
    %3770 = vmatprep.subr.bf16.mxu0 %v3650
    %3771 = vmatpush1.bf16.msra.mxu0 %v3649
    %3772 = vmatprep.subr.bf16.mxu0 %v3656
    %3773 = vmatpush1.bf16.msra.mxu0 %v3655
    %3774 = vmatprep.subr.bf16.mxu0 %v3682
    %3775 = vmatpush1.bf16.msra.mxu0 %v3679
    %3776 = vmatprep.subr.bf16.mxu0 0
    %3777 = vmatpush1.bf16.msra.mxu0 0
    %3778 = vmatprep.subr.bf16.mxu0 0
    %3779 = vmatpush1.bf16.msra.mxu0 0
    %3780 = vmatprep.subr.bf16.mxu0 0
    %3781 = vmatpush1.bf16.msra.mxu0 0
    %3782 = vmatprep.subr.bf16.mxu0 0
    %3783 = vmatpush1.bf16.msra.mxu0 0
    %3784 = vmatprep.subr.bf16.mxu0 0
    %3785 = vmatpush1.bf16.msra.mxu0 0
    %3786 = vmatprep.subr.bf16.mxu0 0
    %3787 = vmatpush1.bf16.msra.mxu0 0
    %3788 = vmatprep.subr.bf16.mxu0 0
    %3789 = vmatpush1.bf16.msra.mxu0 0
    %3790 = vmatprep.subr.bf16.mxu0 0
    %3791 = vmatpush1.bf16.msra.mxu0 0
    %3792 = vmatprep.subr.bf16.mxu0 0
    %3793 = vmatpush1.bf16.msra.mxu0 0
    %3794 = vmatprep.subr.bf16.mxu0 0
    %3795 = vmatpush1.bf16.msra.mxu0 0
    %3796 = vmatprep.subr.bf16.mxu0 0
    %3797 = vmatpush1.bf16.msra.mxu0 0
    %3798 = vmatprep.mubr.bf16.mxu0 0
    %3799 = vmatmul.mubr.bf16.gmra.mrb[0].mxu0 %v3664
    %v3800 = vpop.f32.mrb[0].mxu0
    %v3801 = vadd.f32 0.0, %v3800
    %v3802 = vpop.f32.mrb[0].mxu0
    %v3803 = vadd.f32 0.0, %v3802
    %v3804 = vpop.f32.mrb[0].mxu0
    %v3805 = vpop.f32.mrb[0].mxu0
    %3806 = vdwg.mxu0
    %v3807 = vld [vmem:[#allocation5] sm:$0xff]
    %v3808 = vld [vmem:[#allocation5 + $0x8] sm:$0xff]
    %v3809 = vld [vmem:[#allocation5 + $0x10] sm:$0xff]
    %v3810 = vld [vmem:[#allocation5 + $0x18] sm:$0xff]
    %v3811 = vld [vmem:[#allocation5 + $0x20] sm:$0xff]
    %v3812 = vld [vmem:[#allocation5 + $0x28] sm:$0xff]
    %v3813 = vadd.f32 %v3807, %v3110
    %v3814 = vadd.f32 %v3808, %v3112
    %v3815 = vadd.f32 %v3809, %v3151
    %v3816 = vadd.f32 %v3810, %v3153
    %v3817 = vadd.f32 %v3811, %v3192
    %v3818 = vadd.f32 %v3812, %v3194
    %v3819 = vmax.f32 %v3719, 0.0
    %v3820 = vmax.f32 %v3721, 0.0
    %v3821 = vmax.f32 %v3760, 0.0
    %v3822 = vmax.f32 %v3762, 0.0
    %v3823 = vmax.f32 %v3801, 0.0
    %v3824 = vmax.f32 %v3803, 0.0
    %v3825 = vsub.f32 %v3813, %v3819
    %v3826 = vsub.f32 %v3814, %v3820
    %v3827 = vsub.f32 %v3815, %v3821
    %v3828 = vsub.f32 %v3816, %v3822
    %v3829 = vsub.f32 %v3817, %v3823
    %v3830 = vsub.f32 %v3818, %v3824
    %v3831 = vtanh.pop %v3825
    %v3832 = vtanh.pop %v3826
    %v3833 = vtanh.pop %v3827
    %v3834 = vtanh.pop %v3828
    %v3835 = vtanh.pop %v3829
    %v3836 = vtanh.pop %v3830
    %v3837 = vmul.f32 %v59, %v3831
    %v3838 = vmul.f32 %v60, %v3832
    %v3839 = vmul.f32 %v61, %v3833
    %v3840 = vmul.f32 %v62, %v3834
    %v3841 = vmul.f32 %v63, %v3835
    %v3842 = vmul.f32 %v64, %v3836
    %3843 = vst [vmem:[#allocation2 + $0x8] sm:$0xff] %v3837
    %3844 = vst [vmem:[#allocation2 + $0x10] sm:$0xff] %v3838
    %3845 = vst [vmem:[#allocation2 + $0x18] sm:$0xff] %v3839
    %3846 = vst [vmem:[#allocation2 + $0x20] sm:$0xff] %v3840
    %3847 = vst [vmem:[#allocation2 + $0x28] sm:$0xff] %v3841
    %3848 = vst [vmem:[#allocation2 + $0x30] sm:$0xff] %v3842
    %v3849 = vld [vmem:[#allocation2] sm:$0xff]
    %v3850 = vld [vmem:[#allocation2 + $0x8] sm:$0xff]
    %v3851 = vld [vmem:[#allocation2 + $0x10] sm:$0xff]
    %v3852 = vld [vmem:[#allocation2 + $0x18] sm:$0xff]
    %v3853 = vld [vmem:[#allocation2 + $0x20] sm:$0xff]
    %v3854 = vld [vmem:[#allocation2 + $0x28] sm:$0xff]
    %v3855 = vld [vmem:[#allocation2 + $0x30] sm:$0xff]
    %3863 = vrot.lane.b32.xlu0 %v3849, 19
    %v3864 = vpop.permute.xlu0 %3863
    %3865 = vrot.lane.b32.xlu0 %v3850, 19
    %v3866 = vpop.permute.xlu0 %3865
    %3867 = vrot.lane.b32.xlu0 %v3851, 19
    %v3868 = vpop.permute.xlu0 %3867
    %3869 = vrot.lane.b32.xlu0 %v3852, 19
    %v3870 = vpop.permute.xlu0 %3869
    %3871 = vrot.lane.b32.xlu0 %v3853, 19
    %v3872 = vpop.permute.xlu0 %3871
    %3873 = vrot.lane.b32.xlu0 %v3854, 19
    %v3874 = vpop.permute.xlu0 %3873
    %3875 = vrot.lane.b32.xlu0 %v3855, 19
    %v3876 = vpop.permute.xlu0 %3875
    %v3877 = vsel %vm95, %v3864, %v3866
    %v3878 = vsel %vm95, %v3866, %v3868
    %v3879 = vsel %vm95, %v3868, %v3870
    %v3880 = vsel %vm95, %v3870, %v3872
    %v3881 = vsel %vm95, %v3872, %v3874
    %v3882 = vsel %vm95, %v3874, %v3876
    %3889 = vst [vmem:[#allocation4] sm:$0xff] %v3877
    %3890 = vst [vmem:[#allocation4 + $0x8] sm:$0xff] %v3878
    %3891 = vst [vmem:[#allocation4 + $0x10] sm:$0xff] %v3879
    %3892 = vst [vmem:[#allocation4 + $0x18] sm:$0xff] %v3880
    %3893 = vst [vmem:[#allocation4 + $0x20] sm:$0xff] %v3881
    %3894 = vst [vmem:[#allocation4 + $0x28] sm:$0xff] %v3882
    %v3895 = vld [vmem:[#allocation2] sm:$0xff]
    %v3896 = vld [vmem:[#allocation2 + $0x8] sm:$0xff]
    %v3897 = vld [vmem:[#allocation2 + $0x10] sm:$0xff]
    %v3898 = vld [vmem:[#allocation2 + $0x18] sm:$0xff]
    %v3899 = vld [vmem:[#allocation2 + $0x20] sm:$0xff]
    %v3900 = vld [vmem:[#allocation2 + $0x28] sm:$0xff]
    %v3901 = vld [vmem:[#allocation2 + $0x30] sm:$0xff]
    %3909 = vrot.lane.b32.xlu0 %v3895, 18
    %v3910 = vpop.permute.xlu0 %3909
    %3911 = vrot.lane.b32.xlu0 %v3896, 18
    %v3912 = vpop.permute.xlu0 %3911
    %3913 = vrot.lane.b32.xlu0 %v3897, 18
    %v3914 = vpop.permute.xlu0 %3913
    %3915 = vrot.lane.b32.xlu0 %v3898, 18
    %v3916 = vpop.permute.xlu0 %3915
    %3917 = vrot.lane.b32.xlu0 %v3899, 18
    %v3918 = vpop.permute.xlu0 %3917
    %3919 = vrot.lane.b32.xlu0 %v3900, 18
    %v3920 = vpop.permute.xlu0 %3919
    %3921 = vrot.lane.b32.xlu0 %v3901, 18
    %v3922 = vpop.permute.xlu0 %3921
    %v3923 = vsel %vm142, %v3910, %v3912
    %v3924 = vsel %vm142, %v3912, %v3914
    %v3925 = vsel %vm142, %v3914, %v3916
    %v3926 = vsel %vm142, %v3916, %v3918
    %v3927 = vsel %vm142, %v3918, %v3920
    %v3928 = vsel %vm142, %v3920, %v3922
    %3935 = vst [vmem:[#allocation4 + $0x30] sm:$0xff] %v3923
    %3936 = vst [vmem:[#allocation4 + $0x38] sm:$0xff] %v3924
    %3937 = vst [vmem:[#allocation4 + $0x40] sm:$0xff] %v3925
    %3938 = vst [vmem:[#allocation4 + $0x48] sm:$0xff] %v3926
    %3939 = vst [vmem:[#allocation4 + $0x50] sm:$0xff] %v3927
    %3940 = vst [vmem:[#allocation4 + $0x58] sm:$0xff] %v3928
    %v3941 = vld [vmem:[#allocation2] sm:$0xff]
    %v3942 = vld [vmem:[#allocation2 + $0x8] sm:$0xff]
    %v3943 = vld [vmem:[#allocation2 + $0x10] sm:$0xff]
    %v3944 = vld [vmem:[#allocation2 + $0x18] sm:$0xff]
    %v3945 = vld [vmem:[#allocation2 + $0x20] sm:$0xff]
    %v3946 = vld [vmem:[#allocation2 + $0x28] sm:$0xff]
    %v3947 = vld [vmem:[#allocation2 + $0x30] sm:$0xff]
    %3955 = vrot.lane.b32.xlu0 %v3941, 17
    %v3956 = vpop.permute.xlu0 %3955
    %3957 = vrot.lane.b32.xlu0 %v3942, 17
    %v3958 = vpop.permute.xlu0 %3957
    %3959 = vrot.lane.b32.xlu0 %v3943, 17
    %v3960 = vpop.permute.xlu0 %3959
    %3961 = vrot.lane.b32.xlu0 %v3944, 17
    %v3962 = vpop.permute.xlu0 %3961
    %3963 = vrot.lane.b32.xlu0 %v3945, 17
    %v3964 = vpop.permute.xlu0 %3963
    %3965 = vrot.lane.b32.xlu0 %v3946, 17
    %v3966 = vpop.permute.xlu0 %3965
    %3967 = vrot.lane.b32.xlu0 %v3947, 17
    %v3968 = vpop.permute.xlu0 %3967
    %v3969 = vsel %vm189, %v3956, %v3958
    %v3970 = vsel %vm189, %v3958, %v3960
    %v3971 = vsel %vm189, %v3960, %v3962
    %v3972 = vsel %vm189, %v3962, %v3964
    %v3973 = vsel %vm189, %v3964, %v3966
    %v3974 = vsel %vm189, %v3966, %v3968
    %3981 = vst [vmem:[#allocation4 + $0x60] sm:$0xff] %v3969
    %3982 = vst [vmem:[#allocation4 + $0x68] sm:$0xff] %v3970
    %3983 = vst [vmem:[#allocation4 + $0x70] sm:$0xff] %v3971
    %3984 = vst [vmem:[#allocation4 + $0x78] sm:$0xff] %v3972
    %3985 = vst [vmem:[#allocation4 + $0x80] sm:$0xff] %v3973
    %3986 = vst [vmem:[#allocation4 + $0x88] sm:$0xff] %v3974
    %v3987 = vld [vmem:[#allocation2] sm:$0xff]
    %v3988 = vld [vmem:[#allocation2 + $0x8] sm:$0xff]
    %v3989 = vld [vmem:[#allocation2 + $0x10] sm:$0xff]
    %v3990 = vld [vmem:[#allocation2 + $0x18] sm:$0xff]
    %v3991 = vld [vmem:[#allocation2 + $0x20] sm:$0xff]
    %v3992 = vld [vmem:[#allocation2 + $0x28] sm:$0xff]
    %v3993 = vld [vmem:[#allocation2 + $0x30] sm:$0xff]
    %4001 = vrot.lane.b32.xlu0 %v3987, 1
    %v4002 = vpop.permute.xlu0 %4001
    %4003 = vrot.lane.b32.xlu0 %v3988, 1
    %v4004 = vpop.permute.xlu0 %4003
    %4005 = vrot.lane.b32.xlu0 %v3989, 1
    %v4006 = vpop.permute.xlu0 %4005
    %4007 = vrot.lane.b32.xlu0 %v3990, 1
    %v4008 = vpop.permute.xlu0 %4007
    %4009 = vrot.lane.b32.xlu0 %v3991, 1
    %v4010 = vpop.permute.xlu0 %4009
    %4011 = vrot.lane.b32.xlu0 %v3992, 1
    %v4012 = vpop.permute.xlu0 %4011
    %4013 = vrot.lane.b32.xlu0 %v3993, 1
    %v4014 = vpop.permute.xlu0 %4013
    %v4015 = vsel %vm236, %v4002, %v4004
    %v4016 = vsel %vm236, %v4004, %v4006
    %v4017 = vsel %vm236, %v4006, %v4008
    %v4018 = vsel %vm236, %v4008, %v4010
    %v4019 = vsel %vm236, %v4010, %v4012
    %v4020 = vsel %vm236, %v4012, %v4014
    %4027 = vst [vmem:[#allocation4 + $0x90] sm:$0xff] %v4015
    %4028 = vst [vmem:[#allocation4 + $0x98] sm:$0xff] %v4016
    %4029 = vst [vmem:[#allocation4 + $0xa0] sm:$0xff] %v4017
    %4030 = vst [vmem:[#allocation4 + $0xa8] sm:$0xff] %v4018
    %4031 = vst [vmem:[#allocation4 + $0xb0] sm:$0xff] %v4019
    %4032 = vst [vmem:[#allocation4 + $0xb8] sm:$0xff] %v4020
    %v4033 = vld [vmem:[#allocation2 + $0x8] sm:$0xff]
    %v4034 = vld [vmem:[#allocation2 + $0x10] sm:$0xff]
    %v4035 = vld [vmem:[#allocation2 + $0x18] sm:$0xff]
    %v4036 = vld [vmem:[#allocation2 + $0x20] sm:$0xff]
    %v4037 = vld [vmem:[#allocation2 + $0x28] sm:$0xff]
    %v4038 = vld [vmem:[#allocation2 + $0x30] sm:$0xff]
    %4039 = vst [vmem:[#allocation4 + $0xc0] sm:$0xff] %v4033
    %4040 = vst [vmem:[#allocation4 + $0xc8] sm:$0xff] %v4034
    %4041 = vst [vmem:[#allocation4 + $0xd0] sm:$0xff] %v4035
    %4042 = vst [vmem:[#allocation4 + $0xd8] sm:$0xff] %v4036
    %4043 = vst [vmem:[#allocation4 + $0xe0] sm:$0xff] %v4037
    %4044 = vst [vmem:[#allocation4 + $0xe8] sm:$0xff] %v4038
    %v4045 = vld [vmem:[#allocation2 + $0x8] sm:$0xff]
    %v4046 = vld [vmem:[#allocation2 + $0x10] sm:$0xff]
    %v4047 = vld [vmem:[#allocation2 + $0x18] sm:$0xff]
    %v4048 = vld [vmem:[#allocation2 + $0x20] sm:$0xff]
    %v4049 = vld [vmem:[#allocation2 + $0x28] sm:$0xff]
    %v4050 = vld [vmem:[#allocation2 + $0x30] sm:$0xff]
    %v4051 = vld [vmem:[#allocation2 + $0x38] sm:$0xff]
    %4059 = vrot.lane.b32.xlu0 %v4045, 127
    %v4060 = vpop.permute.xlu0 %4059
    %4061 = vrot.lane.b32.xlu0 %v4046, 127
    %v4062 = vpop.permute.xlu0 %4061
    %4063 = vrot.lane.b32.xlu0 %v4047, 127
    %v4064 = vpop.permute.xlu0 %4063
    %4065 = vrot.lane.b32.xlu0 %v4048, 127
    %v4066 = vpop.permute.xlu0 %4065
    %4067 = vrot.lane.b32.xlu0 %v4049, 127
    %v4068 = vpop.permute.xlu0 %4067
    %4069 = vrot.lane.b32.xlu0 %v4050, 127
    %v4070 = vpop.permute.xlu0 %4069
    %4071 = vrot.lane.b32.xlu0 %v4051, 127
    %v4072 = vpop.permute.xlu0 %4071
    %v4073 = vsel %vm295, %v4060, %v4062
    %v4074 = vsel %vm295, %v4062, %v4064
    %v4075 = vsel %vm295, %v4064, %v4066
    %v4076 = vsel %vm295, %v4066, %v4068
    %v4077 = vsel %vm295, %v4068, %v4070
    %v4078 = vsel %vm295, %v4070, %v4072
    %4085 = vst [vmem:[#allocation4 + $0xf0] sm:$0xff] %v4073
    %4086 = vst [vmem:[#allocation4 + $0xf8] sm:$0xff] %v4074
    %4087 = vst [vmem:[#allocation4 + $0x100] sm:$0xff] %v4075
    %4088 = vst [vmem:[#allocation4 + $0x108] sm:$0xff] %v4076
    %4089 = vst [vmem:[#allocation4 + $0x110] sm:$0xff] %v4077
    %4090 = vst [vmem:[#allocation4 + $0x118] sm:$0xff] %v4078
    %v4091 = vld [vmem:[#allocation2 + $0x8] sm:$0xff]
    %v4092 = vld [vmem:[#allocation2 + $0x10] sm:$0xff]
    %v4093 = vld [vmem:[#allocation2 + $0x18] sm:$0xff]
    %v4094 = vld [vmem:[#allocation2 + $0x20] sm:$0xff]
    %v4095 = vld [vmem:[#allocation2 + $0x28] sm:$0xff]
    %v4096 = vld [vmem:[#allocation2 + $0x30] sm:$0xff]
    %v4097 = vld [vmem:[#allocation2 + $0x38] sm:$0xff]
    %4105 = vrot.lane.b32.xlu0 %v4091, 111
    %v4106 = vpop.permute.xlu0 %4105
    %4107 = vrot.lane.b32.xlu0 %v4092, 111
    %v4108 = vpop.permute.xlu0 %4107
    %4109 = vrot.lane.b32.xlu0 %v4093, 111
    %v4110 = vpop.permute.xlu0 %4109
    %4111 = vrot.lane.b32.xlu0 %v4094, 111
    %v4112 = vpop.permute.xlu0 %4111
    %4113 = vrot.lane.b32.xlu0 %v4095, 111
    %v4114 = vpop.permute.xlu0 %4113
    %4115 = vrot.lane.b32.xlu0 %v4096, 111
    %v4116 = vpop.permute.xlu0 %4115
    %4117 = vrot.lane.b32.xlu0 %v4097, 111
    %v4118 = vpop.permute.xlu0 %4117
    %v4119 = vsel %vm342, %v4106, %v4108
    %v4120 = vsel %vm342, %v4108, %v4110
    %v4121 = vsel %vm342, %v4110, %v4112
    %v4122 = vsel %vm342, %v4112, %v4114
    %v4123 = vsel %vm342, %v4114, %v4116
    %v4124 = vsel %vm342, %v4116, %v4118
    %4131 = vst [vmem:[#allocation4 + $0x120] sm:$0xff] %v4119
    %4132 = vst [vmem:[#allocation4 + $0x128] sm:$0xff] %v4120
    %4133 = vst [vmem:[#allocation4 + $0x130] sm:$0xff] %v4121
    %4134 = vst [vmem:[#allocation4 + $0x138] sm:$0xff] %v4122
    %4135 = vst [vmem:[#allocation4 + $0x140] sm:$0xff] %v4123
    %4136 = vst [vmem:[#allocation4 + $0x148] sm:$0xff] %v4124
    %v4137 = vld [vmem:[#allocation2 + $0x8] sm:$0xff]
    %v4138 = vld [vmem:[#allocation2 + $0x10] sm:$0xff]
    %v4139 = vld [vmem:[#allocation2 + $0x18] sm:$0xff]
    %v4140 = vld [vmem:[#allocation2 + $0x20] sm:$0xff]
    %v4141 = vld [vmem:[#allocation2 + $0x28] sm:$0xff]
    %v4142 = vld [vmem:[#allocation2 + $0x30] sm:$0xff]
    %v4143 = vld [vmem:[#allocation2 + $0x38] sm:$0xff]
    %4151 = vrot.lane.b32.xlu0 %v4137, 110
    %v4152 = vpop.permute.xlu0 %4151
    %4153 = vrot.lane.b32.xlu0 %v4138, 110
    %v4154 = vpop.permute.xlu0 %4153
    %4155 = vrot.lane.b32.xlu0 %v4139, 110
    %v4156 = vpop.permute.xlu0 %4155
    %4157 = vrot.lane.b32.xlu0 %v4140, 110
    %v4158 = vpop.permute.xlu0 %4157
    %4159 = vrot.lane.b32.xlu0 %v4141, 110
    %v4160 = vpop.permute.xlu0 %4159
    %4161 = vrot.lane.b32.xlu0 %v4142, 110
    %v4162 = vpop.permute.xlu0 %4161
    %4163 = vrot.lane.b32.xlu0 %v4143, 110
    %v4164 = vpop.permute.xlu0 %4163
    %v4165 = vsel %vm389, %v4152, %v4154
    %v4166 = vsel %vm389, %v4154, %v4156
    %v4167 = vsel %vm389, %v4156, %v4158
    %v4168 = vsel %vm389, %v4158, %v4160
    %v4169 = vsel %vm389, %v4160, %v4162
    %v4170 = vsel %vm389, %v4162, %v4164
    %4177 = vst [vmem:[#allocation4 + $0x150] sm:$0xff] %v4165
    %4178 = vst [vmem:[#allocation4 + $0x158] sm:$0xff] %v4166
    %4179 = vst [vmem:[#allocation4 + $0x160] sm:$0xff] %v4167
    %4180 = vst [vmem:[#allocation4 + $0x168] sm:$0xff] %v4168
    %4181 = vst [vmem:[#allocation4 + $0x170] sm:$0xff] %v4169
    %4182 = vst [vmem:[#allocation4 + $0x178] sm:$0xff] %v4170
    %v4183 = vld [vmem:[#allocation2 + $0x8] sm:$0xff]
    %v4184 = vld [vmem:[#allocation2 + $0x10] sm:$0xff]
    %v4185 = vld [vmem:[#allocation2 + $0x18] sm:$0xff]
    %v4186 = vld [vmem:[#allocation2 + $0x20] sm:$0xff]
    %v4187 = vld [vmem:[#allocation2 + $0x28] sm:$0xff]
    %v4188 = vld [vmem:[#allocation2 + $0x30] sm:$0xff]
    %v4189 = vld [vmem:[#allocation2 + $0x38] sm:$0xff]
    %4197 = vrot.lane.b32.xlu0 %v4183, 109
    %v4198 = vpop.permute.xlu0 %4197
    %4199 = vrot.lane.b32.xlu0 %v4184, 109
    %v4200 = vpop.permute.xlu0 %4199
    %4201 = vrot.lane.b32.xlu0 %v4185, 109
    %v4202 = vpop.permute.xlu0 %4201
    %4203 = vrot.lane.b32.xlu0 %v4186, 109
    %v4204 = vpop.permute.xlu0 %4203
    %4205 = vrot.lane.b32.xlu0 %v4187, 109
    %v4206 = vpop.permute.xlu0 %4205
    %4207 = vrot.lane.b32.xlu0 %v4188, 109
    %v4208 = vpop.permute.xlu0 %4207
    %4209 = vrot.lane.b32.xlu0 %v4189, 109
    %v4210 = vpop.permute.xlu0 %4209
    %v4211 = vsel %vm436, %v4198, %v4200
    %v4212 = vsel %vm436, %v4200, %v4202
    %v4213 = vsel %vm436, %v4202, %v4204
    %v4214 = vsel %vm436, %v4204, %v4206
    %v4215 = vsel %vm436, %v4206, %v4208
    %v4216 = vsel %vm436, %v4208, %v4210
    %4223 = vst [vmem:[#allocation4 + $0x180] sm:$0xff] %v4211
    %4224 = vst [vmem:[#allocation4 + $0x188] sm:$0xff] %v4212
    %4225 = vst [vmem:[#allocation4 + $0x190] sm:$0xff] %v4213
    %4226 = vst [vmem:[#allocation4 + $0x198] sm:$0xff] %v4214
    %4227 = vst [vmem:[#allocation4 + $0x1a0] sm:$0xff] %v4215
    %4228 = vst [vmem:[#allocation4 + $0x1a8] sm:$0xff] %v4216
    %v4229 = vld [vmem:[%s5] sm:$0xf]
    %v4230 = vld [vmem:[#allocation4] sm:$0xff]
    %v4231 = vld [vmem:[#allocation4 + $0x8] sm:$0xff]
    %v4232 = vld [vmem:[#allocation4 + $0x10] sm:$0xff]
    %v4233 = vld [vmem:[#allocation4 + $0x18] sm:$0xff]
    %v4234 = vld [vmem:[#allocation4 + $0x20] sm:$0xff]
    %v4235 = vld [vmem:[#allocation4 + $0x28] sm:$0xff]
    %v4236 = vld [vmem:[#allocation4 + $0x30] sm:$0xff]
    %v4237 = vld [vmem:[#allocation4 + $0x38] sm:$0xff]
    %v4238 = vld [vmem:[#allocation4 + $0x40] sm:$0xff]
    %v4239 = vld [vmem:[#allocation4 + $0x48] sm:$0xff]
    %v4240 = vld [vmem:[#allocation4 + $0x50] sm:$0xff]
    %v4241 = vld [vmem:[#allocation4 + $0x58] sm:$0xff]
    %v4242 = vld [vmem:[#allocation4 + $0x60] sm:$0xff]
    %v4243 = vld [vmem:[#allocation4 + $0x68] sm:$0xff]
    %v4244 = vld [vmem:[#allocation4 + $0x70] sm:$0xff]
    %v4245 = vld [vmem:[#allocation4 + $0x78] sm:$0xff]
    %v4246 = vld [vmem:[#allocation4 + $0x80] sm:$0xff]
    %v4247 = vld [vmem:[#allocation4 + $0x88] sm:$0xff]
    %v4248 = vld [vmem:[#allocation4 + $0x90] sm:$0xff]
    %v4249 = vld [vmem:[#allocation4 + $0x98] sm:$0xff]
    %v4250 = vld [vmem:[#allocation4 + $0xa0] sm:$0xff]
    %v4251 = vld [vmem:[#allocation4 + $0xa8] sm:$0xff]
    %v4252 = vld [vmem:[#allocation4 + $0xb0] sm:$0xff]
    %v4253 = vld [vmem:[#allocation4 + $0xb8] sm:$0xff]
    %v4254 = vld [vmem:[#allocation4 + $0xc0] sm:$0xff]
    %v4255 = vld [vmem:[#allocation4 + $0xc8] sm:$0xff]
    %v4256 = vld [vmem:[#allocation4 + $0xd0] sm:$0xff]
    %v4257 = vld [vmem:[#allocation4 + $0xd8] sm:$0xff]
    %v4258 = vld [vmem:[#allocation4 + $0xe0] sm:$0xff]
    %v4259 = vld [vmem:[#allocation4 + $0xe8] sm:$0xff]
    %v4260 = vld [vmem:[#allocation4 + $0xf0] sm:$0xff]
    %v4261 = vld [vmem:[#allocation4 + $0xf8] sm:$0xff]
    %v4262 = vld [vmem:[#allocation4 + $0x100] sm:$0xff]
    %v4263 = vld [vmem:[#allocation4 + $0x108] sm:$0xff]
    %v4264 = vld [vmem:[#allocation4 + $0x110] sm:$0xff]
    %v4265 = vld [vmem:[#allocation4 + $0x118] sm:$0xff]
    %v4266 = vld [vmem:[#allocation4 + $0x120] sm:$0xff]
    %v4267 = vld [vmem:[#allocation4 + $0x128] sm:$0xff]
    %v4268 = vld [vmem:[#allocation4 + $0x130] sm:$0xff]
    %v4269 = vld [vmem:[#allocation4 + $0x138] sm:$0xff]
    %v4270 = vld [vmem:[#allocation4 + $0x140] sm:$0xff]
    %v4271 = vld [vmem:[#allocation4 + $0x148] sm:$0xff]
    %v4272 = vld [vmem:[#allocation4 + $0x150] sm:$0xff]
    %v4273 = vld [vmem:[#allocation4 + $0x158] sm:$0xff]
    %v4274 = vld [vmem:[#allocation4 + $0x160] sm:$0xff]
    %v4275 = vld [vmem:[#allocation4 + $0x168] sm:$0xff]
    %v4276 = vld [vmem:[#allocation4 + $0x170] sm:$0xff]
    %v4277 = vld [vmem:[#allocation4 + $0x178] sm:$0xff]
    %v4278 = vld [vmem:[#allocation4 + $0x180] sm:$0xff]
    %v4279 = vld [vmem:[#allocation4 + $0x188] sm:$0xff]
    %v4280 = vld [vmem:[#allocation4 + $0x190] sm:$0xff]
    %v4281 = vld [vmem:[#allocation4 + $0x198] sm:$0xff]
    %v4282 = vld [vmem:[#allocation4 + $0x1a0] sm:$0xff]
    %v4283 = vld [vmem:[#allocation4 + $0x1a8] sm:$0xff]
    %v4284 = vpack.c.bf16 %v4236, %v4230
    %v4285 = vpack.c.bf16 %v4237, %v4231
    %v4286 = vpack.c.bf16 %v4238, %v4232
    %v4287 = vpack.c.bf16 %v4239, %v4233
    %v4288 = vpack.c.bf16 %v4240, %v4234
    %v4289 = vpack.c.bf16 %v4241, %v4235
    %v4290 = vpack.c.bf16 %v4248, %v4242
    %v4291 = vpack.c.bf16 %v4249, %v4243
    %v4292 = vpack.c.bf16 %v4250, %v4244
    %v4293 = vpack.c.bf16 %v4251, %v4245
    %v4294 = vpack.c.bf16 %v4252, %v4246
    %v4295 = vpack.c.bf16 %v4253, %v4247
    %v4296 = vpack.c.bf16 %v4260, %v4254
    %v4297 = vpack.c.bf16 %v4261, %v4255
    %v4298 = vpack.c.bf16 %v4262, %v4256
    %v4299 = vpack.c.bf16 %v4263, %v4257
    %v4300 = vpack.c.bf16 %v4264, %v4258
    %v4301 = vpack.c.bf16 %v4265, %v4259
    %v4302 = vpack.c.bf16 %v4272, %v4266
    %v4303 = vpack.c.bf16 %v4273, %v4267
    %v4304 = vpack.c.bf16 %v4274, %v4268
    %v4305 = vpack.c.bf16 %v4275, %v4269
    %v4306 = vpack.c.bf16 %v4276, %v4270
    %v4307 = vpack.c.bf16 %v4277, %v4271
    %v4308 = vpack.c.bf16 %v4278, %v4278
    %v4309 = vpack.c.bf16 %v4279, %v4279
    %v4310 = vpack.c.bf16 %v4280, %v4280
    %v4311 = vpack.c.bf16 %v4281, %v4281
    %v4312 = vpack.c.bf16 %v4282, %v4282
    %v4313 = vpack.c.bf16 %v4283, %v4283
    %v4315 = vsel %vm545, %v4229, 0
    %v4318 = vsel %vm549, %v4308, 0
    %v4321 = vsel %vm549, %v4309, 0
    %v4324 = vsel %vm549, %v4310, 0
    %v4327 = vsel %vm549, %v4311, 0
    %v4330 = vsel %vm549, %v4312, 0
    %v4333 = vsel %vm549, %v4313, 0
    %4335 = vmatprep.subr.bf16.mxu0 %v4285
    %4336 = vmatpush1.bf16.msra.mxu0 %v4284
    %4337 = vmatprep.subr.bf16.mxu0 %v4291
    %4338 = vmatpush1.bf16.msra.mxu0 %v4290
    %4339 = vmatprep.subr.bf16.mxu0 %v4297
    %4340 = vmatpush1.bf16.msra.mxu0 %v4296
    %4341 = vmatprep.subr.bf16.mxu0 %v4303
    %4342 = vmatpush1.bf16.msra.mxu0 %v4302
    %4343 = vmatprep.subr.bf16.mxu0 %v4321
    %4344 = vmatpush1.bf16.msra.mxu0 %v4318
    %4345 = vmatprep.subr.bf16.mxu0 0
    %4346 = vmatpush1.bf16.msra.mxu0 0
    %4347 = vmatprep.subr.bf16.mxu0 0
    %4348 = vmatpush1.bf16.msra.mxu0 0
    %4349 = vmatprep.subr.bf16.mxu0 0
    %4350 = vmatpush1.bf16.msra.mxu0 0
    %4351 = vmatprep.subr.bf16.mxu0 0
    %4352 = vmatpush1.bf16.msra.mxu0 0
    %4353 = vmatprep.subr.bf16.mxu0 0
    %4354 = vmatpush1.bf16.msra.mxu0 0
    %4355 = vmatprep.subr.bf16.mxu0 0
    %4356 = vmatpush1.bf16.msra.mxu0 0
    %4357 = vmatprep.subr.bf16.mxu0 0
    %4358 = vmatpush1.bf16.msra.mxu0 0
    %4359 = vmatprep.subr.bf16.mxu0 0
    %4360 = vmatpush1.bf16.msra.mxu0 0
    %4361 = vmatprep.subr.bf16.mxu0 0
    %4362 = vmatpush1.bf16.msra.mxu0 0
    %4363 = vmatprep.subr.bf16.mxu0 0
    %4364 = vmatpush1.bf16.msra.mxu0 0
    %4365 = vmatprep.subr.bf16.mxu0 0
    %4366 = vmatpush1.bf16.msra.mxu0 0
    %4367 = vmatprep.mubr.bf16.mxu0 0
    %4368 = vmatmul.mubr.bf16.gmra.mrb[0].mxu0 %v4315
    %v4369 = vpop.f32.mrb[0].mxu0
    %v4370 = vadd.f32 %v2425, %v4369
    %v4371 = vpop.f32.mrb[0].mxu0
    %v4372 = vadd.f32 %v2425, %v4371
    %v4373 = vpop.f32.mrb[0].mxu0
    %v4374 = vpop.f32.mrb[0].mxu0
    %4375 = vdwg.mxu0
    %4376 = vmatprep.subr.bf16.mxu0 %v4287
    %4377 = vmatpush1.bf16.msra.mxu0 %v4286
    %4378 = vmatprep.subr.bf16.mxu0 %v4293
    %4379 = vmatpush1.bf16.msra.mxu0 %v4292
    %4380 = vmatprep.subr.bf16.mxu0 %v4299
    %4381 = vmatpush1.bf16.msra.mxu0 %v4298
    %4382 = vmatprep.subr.bf16.mxu0 %v4305
    %4383 = vmatpush1.bf16.msra.mxu0 %v4304
    %4384 = vmatprep.subr.bf16.mxu0 %v4327
    %4385 = vmatpush1.bf16.msra.mxu0 %v4324
    %4386 = vmatprep.subr.bf16.mxu0 0
    %4387 = vmatpush1.bf16.msra.mxu0 0
    %4388 = vmatprep.subr.bf16.mxu0 0
    %4389 = vmatpush1.bf16.msra.mxu0 0
    %4390 = vmatprep.subr.bf16.mxu0 0
    %4391 = vmatpush1.bf16.msra.mxu0 0
    %4392 = vmatprep.subr.bf16.mxu0 0
    %4393 = vmatpush1.bf16.msra.mxu0 0
    %4394 = vmatprep.subr.bf16.mxu0 0
    %4395 = vmatpush1.bf16.msra.mxu0 0
    %4396 = vmatprep.subr.bf16.mxu0 0
    %4397 = vmatpush1.bf16.msra.mxu0 0
    %4398 = vmatprep.subr.bf16.mxu0 0
    %4399 = vmatpush1.bf16.msra.mxu0 0
    %4400 = vmatprep.subr.bf16.mxu0 0
    %4401 = vmatpush1.bf16.msra.mxu0 0
    %4402 = vmatprep.subr.bf16.mxu0 0
    %4403 = vmatpush1.bf16.msra.mxu0 0
    %4404 = vmatprep.subr.bf16.mxu0 0
    %4405 = vmatpush1.bf16.msra.mxu0 0
    %4406 = vmatprep.subr.bf16.mxu0 0
    %4407 = vmatpush1.bf16.msra.mxu0 0
    %4408 = vmatprep.mubr.bf16.mxu0 0
    %4409 = vmatmul.mubr.bf16.gmra.mrb[0].mxu0 %v4315
    %v4410 = vpop.f32.mrb[0].mxu0
    %v4411 = vadd.f32 %v2425, %v4410
    %v4412 = vpop.f32.mrb[0].mxu0
    %v4413 = vadd.f32 %v2425, %v4412
    %v4414 = vpop.f32.mrb[0].mxu0
    %v4415 = vpop.f32.mrb[0].mxu0
    %4416 = vdwg.mxu0
    %4417 = vmatprep.subr.bf16.mxu0 %v4289
    %4418 = vmatpush1.bf16.msra.mxu0 %v4288
    %4419 = vmatprep.subr.bf16.mxu0 %v4295
    %4420 = vmatpush1.bf16.msra.mxu0 %v4294
    %4421 = vmatprep.subr.bf16.mxu0 %v4301
    %4422 = vmatpush1.bf16.msra.mxu0 %v4300
    %4423 = vmatprep.subr.bf16.mxu0 %v4307
    %4424 = vmatpush1.bf16.msra.mxu0 %v4306
    %4425 = vmatprep.subr.bf16.mxu0 %v4333
    %4426 = vmatpush1.bf16.msra.mxu0 %v4330
    %4427 = vmatprep.subr.bf16.mxu0 0
    %4428 = vmatpush1.bf16.msra.mxu0 0
    %4429 = vmatprep.subr.bf16.mxu0 0
    %4430 = vmatpush1.bf16.msra.mxu0 0
    %4431 = vmatprep.subr.bf16.mxu0 0
    %4432 = vmatpush1.bf16.msra.mxu0 0
    %4433 = vmatprep.subr.bf16.mxu0 0
    %4434 = vmatpush1.bf16.msra.mxu0 0
    %4435 = vmatprep.subr.bf16.mxu0 0
    %4436 = vmatpush1.bf16.msra.mxu0 0
    %4437 = vmatprep.subr.bf16.mxu0 0
    %4438 = vmatpush1.bf16.msra.mxu0 0
    %4439 = vmatprep.subr.bf16.mxu0 0
    %4440 = vmatpush1.bf16.msra.mxu0 0
    %4441 = vmatprep.subr.bf16.mxu0 0
    %4442 = vmatpush1.bf16.msra.mxu0 0
    %4443 = vmatprep.subr.bf16.mxu0 0
    %4444 = vmatpush1.bf16.msra.mxu0 0
    %4445 = vmatprep.subr.bf16.mxu0 0
    %4446 = vmatpush1.bf16.msra.mxu0 0
    %4447 = vmatprep.subr.bf16.mxu0 0
    %4448 = vmatpush1.bf16.msra.mxu0 0
    %4449 = vmatprep.mubr.bf16.mxu0 0
    %4450 = vmatmul.mubr.bf16.gmra.mrb[0].mxu0 %v4315
    %v4451 = vpop.f32.mrb[0].mxu0
    %v4452 = vadd.f32 %v2425, %v4451
    %v4453 = vpop.f32.mrb[0].mxu0
    %v4454 = vadd.f32 %v2425, %v4453
    %v4455 = vpop.f32.mrb[0].mxu0
    %v4456 = vpop.f32.mrb[0].mxu0
    %4457 = vdwg.mxu0
    %v4458 = vtanh.pop %v4370
    %v4459 = vtanh.pop %v4372
    %v4460 = vtanh.pop %v4411
    %v4461 = vtanh.pop %v4413
    %v4462 = vtanh.pop %v4452
    %v4463 = vtanh.pop %v4454
    %v4464 = vmul.f32 %v59, %v4458
    %v4465 = vmul.f32 %v60, %v4459
    %v4466 = vmul.f32 %v61, %v4460
    %v4467 = vmul.f32 %v62, %v4461
    %v4468 = vmul.f32 %v63, %v4462
    %v4469 = vmul.f32 %v64, %v4463
    %4470 = vst [vmem:[#allocation3 + $0x8] sm:$0xff] %v4464
    %4471 = vst [vmem:[#allocation3 + $0x10] sm:$0xff] %v4465
    %4472 = vst [vmem:[#allocation3 + $0x18] sm:$0xff] %v4466
    %4473 = vst [vmem:[#allocation3 + $0x20] sm:$0xff] %v4467
    %4474 = vst [vmem:[#allocation3 + $0x28] sm:$0xff] %v4468
    %4475 = vst [vmem:[#allocation3 + $0x30] sm:$0xff] %v4469
    %v4476 = vld [vmem:[#allocation2] sm:$0xff]
    %v4477 = vld [vmem:[#allocation2 + $0x8] sm:$0xff]
    %v4478 = vld [vmem:[#allocation2 + $0x10] sm:$0xff]
    %v4479 = vld [vmem:[#allocation2 + $0x18] sm:$0xff]
    %v4480 = vld [vmem:[#allocation2 + $0x20] sm:$0xff]
    %v4481 = vld [vmem:[#allocation2 + $0x28] sm:$0xff]
    %v4482 = vld [vmem:[#allocation2 + $0x30] sm:$0xff]
    %4490 = vrot.lane.b32.xlu0 %v4476, 19
    %v4491 = vpop.permute.xlu0 %4490
    %4492 = vrot.lane.b32.xlu0 %v4477, 19
    %v4493 = vpop.permute.xlu0 %4492
    %4494 = vrot.lane.b32.xlu0 %v4478, 19
    %v4495 = vpop.permute.xlu0 %4494
    %4496 = vrot.lane.b32.xlu0 %v4479, 19
    %v4497 = vpop.permute.xlu0 %4496
    %4498 = vrot.lane.b32.xlu0 %v4480, 19
    %v4499 = vpop.permute.xlu0 %4498
    %4500 = vrot.lane.b32.xlu0 %v4481, 19
    %v4501 = vpop.permute.xlu0 %4500
    %4502 = vrot.lane.b32.xlu0 %v4482, 19
    %v4503 = vpop.permute.xlu0 %4502
    %v4504 = vsel %vm95, %v4491, %v4493
    %v4505 = vsel %vm95, %v4493, %v4495
    %v4506 = vsel %vm95, %v4495, %v4497
    %v4507 = vsel %vm95, %v4497, %v4499
    %v4508 = vsel %vm95, %v4499, %v4501
    %v4509 = vsel %vm95, %v4501, %v4503
    %4516 = vst [vmem:[#allocation4] sm:$0xff] %v4504
    %4517 = vst [vmem:[#allocation4 + $0x8] sm:$0xff] %v4505
    %4518 = vst [vmem:[#allocation4 + $0x10] sm:$0xff] %v4506
    %4519 = vst [vmem:[#allocation4 + $0x18] sm:$0xff] %v4507
    %4520 = vst [vmem:[#allocation4 + $0x20] sm:$0xff] %v4508
    %4521 = vst [vmem:[#allocation4 + $0x28] sm:$0xff] %v4509
    %v4522 = vld [vmem:[#allocation2] sm:$0xff]
    %v4523 = vld [vmem:[#allocation2 + $0x8] sm:$0xff]
    %v4524 = vld [vmem:[#allocation2 + $0x10] sm:$0xff]
    %v4525 = vld [vmem:[#allocation2 + $0x18] sm:$0xff]
    %v4526 = vld [vmem:[#allocation2 + $0x20] sm:$0xff]
    %v4527 = vld [vmem:[#allocation2 + $0x28] sm:$0xff]
    %v4528 = vld [vmem:[#allocation2 + $0x30] sm:$0xff]
    %4536 = vrot.lane.b32.xlu0 %v4522, 18
    %v4537 = vpop.permute.xlu0 %4536
    %4538 = vrot.lane.b32.xlu0 %v4523, 18
    %v4539 = vpop.permute.xlu0 %4538
    %4540 = vrot.lane.b32.xlu0 %v4524, 18
    %v4541 = vpop.permute.xlu0 %4540
    %4542 = vrot.lane.b32.xlu0 %v4525, 18
    %v4543 = vpop.permute.xlu0 %4542
    %4544 = vrot.lane.b32.xlu0 %v4526, 18
    %v4545 = vpop.permute.xlu0 %4544
    %4546 = vrot.lane.b32.xlu0 %v4527, 18
    %v4547 = vpop.permute.xlu0 %4546
    %4548 = vrot.lane.b32.xlu0 %v4528, 18
    %v4549 = vpop.permute.xlu0 %4548
    %v4550 = vsel %vm142, %v4537, %v4539
    %v4551 = vsel %vm142, %v4539, %v4541
    %v4552 = vsel %vm142, %v4541, %v4543
    %v4553 = vsel %vm142, %v4543, %v4545
    %v4554 = vsel %vm142, %v4545, %v4547
    %v4555 = vsel %vm142, %v4547, %v4549
    %4562 = vst [vmem:[#allocation4 + $0x30] sm:$0xff] %v4550
    %4563 = vst [vmem:[#allocation4 + $0x38] sm:$0xff] %v4551
    %4564 = vst [vmem:[#allocation4 + $0x40] sm:$0xff] %v4552
    %4565 = vst [vmem:[#allocation4 + $0x48] sm:$0xff] %v4553
    %4566 = vst [vmem:[#allocation4 + $0x50] sm:$0xff] %v4554
    %4567 = vst [vmem:[#allocation4 + $0x58] sm:$0xff] %v4555
    %v4568 = vld [vmem:[#allocation2] sm:$0xff]
    %v4569 = vld [vmem:[#allocation2 + $0x8] sm:$0xff]
    %v4570 = vld [vmem:[#allocation2 + $0x10] sm:$0xff]
    %v4571 = vld [vmem:[#allocation2 + $0x18] sm:$0xff]
    %v4572 = vld [vmem:[#allocation2 + $0x20] sm:$0xff]
    %v4573 = vld [vmem:[#allocation2 + $0x28] sm:$0xff]
    %v4574 = vld [vmem:[#allocation2 + $0x30] sm:$0xff]
    %4582 = vrot.lane.b32.xlu0 %v4568, 17
    %v4583 = vpop.permute.xlu0 %4582
    %4584 = vrot.lane.b32.xlu0 %v4569, 17
    %v4585 = vpop.permute.xlu0 %4584
    %4586 = vrot.lane.b32.xlu0 %v4570, 17
    %v4587 = vpop.permute.xlu0 %4586
    %4588 = vrot.lane.b32.xlu0 %v4571, 17
    %v4589 = vpop.permute.xlu0 %4588
    %4590 = vrot.lane.b32.xlu0 %v4572, 17
    %v4591 = vpop.permute.xlu0 %4590
    %4592 = vrot.lane.b32.xlu0 %v4573, 17
    %v4593 = vpop.permute.xlu0 %4592
    %4594 = vrot.lane.b32.xlu0 %v4574, 17
    %v4595 = vpop.permute.xlu0 %4594
    %v4596 = vsel %vm189, %v4583, %v4585
    %v4597 = vsel %vm189, %v4585, %v4587
    %v4598 = vsel %vm189, %v4587, %v4589
    %v4599 = vsel %vm189, %v4589, %v4591
    %v4600 = vsel %vm189, %v4591, %v4593
    %v4601 = vsel %vm189, %v4593, %v4595
    %4608 = vst [vmem:[#allocation4 + $0x60] sm:$0xff] %v4596
    %4609 = vst [vmem:[#allocation4 + $0x68] sm:$0xff] %v4597
    %4610 = vst [vmem:[#allocation4 + $0x70] sm:$0xff] %v4598
    %4611 = vst [vmem:[#allocation4 + $0x78] sm:$0xff] %v4599
    %4612 = vst [vmem:[#allocation4 + $0x80] sm:$0xff] %v4600
    %4613 = vst [vmem:[#allocation4 + $0x88] sm:$0xff] %v4601
    %v4614 = vld [vmem:[#allocation2] sm:$0xff]
    %v4615 = vld [vmem:[#allocation2 + $0x8] sm:$0xff]
    %v4616 = vld [vmem:[#allocation2 + $0x10] sm:$0xff]
    %v4617 = vld [vmem:[#allocation2 + $0x18] sm:$0xff]
    %v4618 = vld [vmem:[#allocation2 + $0x20] sm:$0xff]
    %v4619 = vld [vmem:[#allocation2 + $0x28] sm:$0xff]
    %v4620 = vld [vmem:[#allocation2 + $0x30] sm:$0xff]
    %4628 = vrot.lane.b32.xlu0 %v4614, 1
    %v4629 = vpop.permute.xlu0 %4628
    %4630 = vrot.lane.b32.xlu0 %v4615, 1
    %v4631 = vpop.permute.xlu0 %4630
    %4632 = vrot.lane.b32.xlu0 %v4616, 1
    %v4633 = vpop.permute.xlu0 %4632
    %4634 = vrot.lane.b32.xlu0 %v4617, 1
    %v4635 = vpop.permute.xlu0 %4634
    %4636 = vrot.lane.b32.xlu0 %v4618, 1
    %v4637 = vpop.permute.xlu0 %4636
    %4638 = vrot.lane.b32.xlu0 %v4619, 1
    %v4639 = vpop.permute.xlu0 %4638
    %4640 = vrot.lane.b32.xlu0 %v4620, 1
    %v4641 = vpop.permute.xlu0 %4640
    %v4642 = vsel %vm236, %v4629, %v4631
    %v4643 = vsel %vm236, %v4631, %v4633
    %v4644 = vsel %vm236, %v4633, %v4635
    %v4645 = vsel %vm236, %v4635, %v4637
    %v4646 = vsel %vm236, %v4637, %v4639
    %v4647 = vsel %vm236, %v4639, %v4641
    %4654 = vst [vmem:[#allocation4 + $0x90] sm:$0xff] %v4642
    %4655 = vst [vmem:[#allocation4 + $0x98] sm:$0xff] %v4643
    %4656 = vst [vmem:[#allocation4 + $0xa0] sm:$0xff] %v4644
    %4657 = vst [vmem:[#allocation4 + $0xa8] sm:$0xff] %v4645
    %4658 = vst [vmem:[#allocation4 + $0xb0] sm:$0xff] %v4646
    %4659 = vst [vmem:[#allocation4 + $0xb8] sm:$0xff] %v4647
    %v4660 = vld [vmem:[#allocation2 + $0x8] sm:$0xff]
    %v4661 = vld [vmem:[#allocation2 + $0x10] sm:$0xff]
    %v4662 = vld [vmem:[#allocation2 + $0x18] sm:$0xff]
    %v4663 = vld [vmem:[#allocation2 + $0x20] sm:$0xff]
    %v4664 = vld [vmem:[#allocation2 + $0x28] sm:$0xff]
    %v4665 = vld [vmem:[#allocation2 + $0x30] sm:$0xff]
    %4666 = vst [vmem:[#allocation4 + $0xc0] sm:$0xff] %v4660
    %4667 = vst [vmem:[#allocation4 + $0xc8] sm:$0xff] %v4661
    %4668 = vst [vmem:[#allocation4 + $0xd0] sm:$0xff] %v4662
    %4669 = vst [vmem:[#allocation4 + $0xd8] sm:$0xff] %v4663
    %4670 = vst [vmem:[#allocation4 + $0xe0] sm:$0xff] %v4664
    %4671 = vst [vmem:[#allocation4 + $0xe8] sm:$0xff] %v4665
    %v4672 = vld [vmem:[#allocation2 + $0x8] sm:$0xff]
    %v4673 = vld [vmem:[#allocation2 + $0x10] sm:$0xff]
    %v4674 = vld [vmem:[#allocation2 + $0x18] sm:$0xff]
    %v4675 = vld [vmem:[#allocation2 + $0x20] sm:$0xff]
    %v4676 = vld [vmem:[#allocation2 + $0x28] sm:$0xff]
    %v4677 = vld [vmem:[#allocation2 + $0x30] sm:$0xff]
    %v4678 = vld [vmem:[#allocation2 + $0x38] sm:$0xff]
    %4686 = vrot.lane.b32.xlu0 %v4672, 127
    %v4687 = vpop.permute.xlu0 %4686
    %4688 = vrot.lane.b32.xlu0 %v4673, 127
    %v4689 = vpop.permute.xlu0 %4688
    %4690 = vrot.lane.b32.xlu0 %v4674, 127
    %v4691 = vpop.permute.xlu0 %4690
    %4692 = vrot.lane.b32.xlu0 %v4675, 127
    %v4693 = vpop.permute.xlu0 %4692
    %4694 = vrot.lane.b32.xlu0 %v4676, 127
    %v4695 = vpop.permute.xlu0 %4694
    %4696 = vrot.lane.b32.xlu0 %v4677, 127
    %v4697 = vpop.permute.xlu0 %4696
    %4698 = vrot.lane.b32.xlu0 %v4678, 127
    %v4699 = vpop.permute.xlu0 %4698
    %v4700 = vsel %vm295, %v4687, %v4689
    %v4701 = vsel %vm295, %v4689, %v4691
    %v4702 = vsel %vm295, %v4691, %v4693
    %v4703 = vsel %vm295, %v4693, %v4695
    %v4704 = vsel %vm295, %v4695, %v4697
    %v4705 = vsel %vm295, %v4697, %v4699
    %4712 = vst [vmem:[#allocation4 + $0xf0] sm:$0xff] %v4700
    %4713 = vst [vmem:[#allocation4 + $0xf8] sm:$0xff] %v4701
    %4714 = vst [vmem:[#allocation4 + $0x100] sm:$0xff] %v4702
    %4715 = vst [vmem:[#allocation4 + $0x108] sm:$0xff] %v4703
    %4716 = vst [vmem:[#allocation4 + $0x110] sm:$0xff] %v4704
    %4717 = vst [vmem:[#allocation4 + $0x118] sm:$0xff] %v4705
    %v4718 = vld [vmem:[#allocation2 + $0x8] sm:$0xff]
    %v4719 = vld [vmem:[#allocation2 + $0x10] sm:$0xff]
    %v4720 = vld [vmem:[#allocation2 + $0x18] sm:$0xff]
    %v4721 = vld [vmem:[#allocation2 + $0x20] sm:$0xff]
    %v4722 = vld [vmem:[#allocation2 + $0x28] sm:$0xff]
    %v4723 = vld [vmem:[#allocation2 + $0x30] sm:$0xff]
    %v4724 = vld [vmem:[#allocation2 + $0x38] sm:$0xff]
    %4732 = vrot.lane.b32.xlu0 %v4718, 111
    %v4733 = vpop.permute.xlu0 %4732
    %4734 = vrot.lane.b32.xlu0 %v4719, 111
    %v4735 = vpop.permute.xlu0 %4734
    %4736 = vrot.lane.b32.xlu0 %v4720, 111
    %v4737 = vpop.permute.xlu0 %4736
    %4738 = vrot.lane.b32.xlu0 %v4721, 111
    %v4739 = vpop.permute.xlu0 %4738
    %4740 = vrot.lane.b32.xlu0 %v4722, 111
    %v4741 = vpop.permute.xlu0 %4740
    %4742 = vrot.lane.b32.xlu0 %v4723, 111
    %v4743 = vpop.permute.xlu0 %4742
    %4744 = vrot.lane.b32.xlu0 %v4724, 111
    %v4745 = vpop.permute.xlu0 %4744
    %v4746 = vsel %vm342, %v4733, %v4735
    %v4747 = vsel %vm342, %v4735, %v4737
    %v4748 = vsel %vm342, %v4737, %v4739
    %v4749 = vsel %vm342, %v4739, %v4741
    %v4750 = vsel %vm342, %v4741, %v4743
    %v4751 = vsel %vm342, %v4743, %v4745
    %4758 = vst [vmem:[#allocation4 + $0x120] sm:$0xff] %v4746
    %4759 = vst [vmem:[#allocation4 + $0x128] sm:$0xff] %v4747
    %4760 = vst [vmem:[#allocation4 + $0x130] sm:$0xff] %v4748
    %4761 = vst [vmem:[#allocation4 + $0x138] sm:$0xff] %v4749
    %4762 = vst [vmem:[#allocation4 + $0x140] sm:$0xff] %v4750
    %4763 = vst [vmem:[#allocation4 + $0x148] sm:$0xff] %v4751
    %v4764 = vld [vmem:[#allocation2 + $0x8] sm:$0xff]
    %v4765 = vld [vmem:[#allocation2 + $0x10] sm:$0xff]
    %v4766 = vld [vmem:[#allocation2 + $0x18] sm:$0xff]
    %v4767 = vld [vmem:[#allocation2 + $0x20] sm:$0xff]
    %v4768 = vld [vmem:[#allocation2 + $0x28] sm:$0xff]
    %v4769 = vld [vmem:[#allocation2 + $0x30] sm:$0xff]
    %v4770 = vld [vmem:[#allocation2 + $0x38] sm:$0xff]
    %4778 = vrot.lane.b32.xlu0 %v4764, 110
    %v4779 = vpop.permute.xlu0 %4778
    %4780 = vrot.lane.b32.xlu0 %v4765, 110
    %v4781 = vpop.permute.xlu0 %4780
    %4782 = vrot.lane.b32.xlu0 %v4766, 110
    %v4783 = vpop.permute.xlu0 %4782
    %4784 = vrot.lane.b32.xlu0 %v4767, 110
    %v4785 = vpop.permute.xlu0 %4784
    %4786 = vrot.lane.b32.xlu0 %v4768, 110
    %v4787 = vpop.permute.xlu0 %4786
    %4788 = vrot.lane.b32.xlu0 %v4769, 110
    %v4789 = vpop.permute.xlu0 %4788
    %4790 = vrot.lane.b32.xlu0 %v4770, 110
    %v4791 = vpop.permute.xlu0 %4790
    %v4792 = vsel %vm389, %v4779, %v4781
    %v4793 = vsel %vm389, %v4781, %v4783
    %v4794 = vsel %vm389, %v4783, %v4785
    %v4795 = vsel %vm389, %v4785, %v4787
    %v4796 = vsel %vm389, %v4787, %v4789
    %v4797 = vsel %vm389, %v4789, %v4791
    %4804 = vst [vmem:[#allocation4 + $0x150] sm:$0xff] %v4792
    %4805 = vst [vmem:[#allocation4 + $0x158] sm:$0xff] %v4793
    %4806 = vst [vmem:[#allocation4 + $0x160] sm:$0xff] %v4794
    %4807 = vst [vmem:[#allocation4 + $0x168] sm:$0xff] %v4795
    %4808 = vst [vmem:[#allocation4 + $0x170] sm:$0xff] %v4796
    %4809 = vst [vmem:[#allocation4 + $0x178] sm:$0xff] %v4797
    %v4810 = vld [vmem:[#allocation2 + $0x8] sm:$0xff]
    %v4811 = vld [vmem:[#allocation2 + $0x10] sm:$0xff]
    %v4812 = vld [vmem:[#allocation2 + $0x18] sm:$0xff]
    %v4813 = vld [vmem:[#allocation2 + $0x20] sm:$0xff]
    %v4814 = vld [vmem:[#allocation2 + $0x28] sm:$0xff]
    %v4815 = vld [vmem:[#allocation2 + $0x30] sm:$0xff]
    %v4816 = vld [vmem:[#allocation2 + $0x38] sm:$0xff]
    %4824 = vrot.lane.b32.xlu0 %v4810, 109
    %v4825 = vpop.permute.xlu0 %4824
    %4826 = vrot.lane.b32.xlu0 %v4811, 109
    %v4827 = vpop.permute.xlu0 %4826
    %4828 = vrot.lane.b32.xlu0 %v4812, 109
    %v4829 = vpop.permute.xlu0 %4828
    %4830 = vrot.lane.b32.xlu0 %v4813, 109
    %v4831 = vpop.permute.xlu0 %4830
    %4832 = vrot.lane.b32.xlu0 %v4814, 109
    %v4833 = vpop.permute.xlu0 %4832
    %4834 = vrot.lane.b32.xlu0 %v4815, 109
    %v4835 = vpop.permute.xlu0 %4834
    %4836 = vrot.lane.b32.xlu0 %v4816, 109
    %v4837 = vpop.permute.xlu0 %4836
    %v4838 = vsel %vm436, %v4825, %v4827
    %v4839 = vsel %vm436, %v4827, %v4829
    %v4840 = vsel %vm436, %v4829, %v4831
    %v4841 = vsel %vm436, %v4831, %v4833
    %v4842 = vsel %vm436, %v4833, %v4835
    %v4843 = vsel %vm436, %v4835, %v4837
    %4850 = vst [vmem:[#allocation4 + $0x180] sm:$0xff] %v4838
    %4851 = vst [vmem:[#allocation4 + $0x188] sm:$0xff] %v4839
    %4852 = vst [vmem:[#allocation4 + $0x190] sm:$0xff] %v4840
    %4853 = vst [vmem:[#allocation4 + $0x198] sm:$0xff] %v4841
    %4854 = vst [vmem:[#allocation4 + $0x1a0] sm:$0xff] %v4842
    %4855 = vst [vmem:[#allocation4 + $0x1a8] sm:$0xff] %v4843
    %v4856 = vld [vmem:[%s3] sm:$0xf]
    %v4857 = vld [vmem:[#allocation4] sm:$0xff]
    %v4858 = vld [vmem:[#allocation4 + $0x8] sm:$0xff]
    %v4859 = vld [vmem:[#allocation4 + $0x10] sm:$0xff]
    %v4860 = vld [vmem:[#allocation4 + $0x18] sm:$0xff]
    %v4861 = vld [vmem:[#allocation4 + $0x20] sm:$0xff]
    %v4862 = vld [vmem:[#allocation4 + $0x28] sm:$0xff]
    %v4863 = vld [vmem:[#allocation4 + $0x30] sm:$0xff]
    %v4864 = vld [vmem:[#allocation4 + $0x38] sm:$0xff]
    %v4865 = vld [vmem:[#allocation4 + $0x40] sm:$0xff]
    %v4866 = vld [vmem:[#allocation4 + $0x48] sm:$0xff]
    %v4867 = vld [vmem:[#allocation4 + $0x50] sm:$0xff]
    %v4868 = vld [vmem:[#allocation4 + $0x58] sm:$0xff]
    %v4869 = vld [vmem:[#allocation4 + $0x60] sm:$0xff]
    %v4870 = vld [vmem:[#allocation4 + $0x68] sm:$0xff]
    %v4871 = vld [vmem:[#allocation4 + $0x70] sm:$0xff]
    %v4872 = vld [vmem:[#allocation4 + $0x78] sm:$0xff]
    %v4873 = vld [vmem:[#allocation4 + $0x80] sm:$0xff]
    %v4874 = vld [vmem:[#allocation4 + $0x88] sm:$0xff]
    %v4875 = vld [vmem:[#allocation4 + $0x90] sm:$0xff]
    %v4876 = vld [vmem:[#allocation4 + $0x98] sm:$0xff]
    %v4877 = vld [vmem:[#allocation4 + $0xa0] sm:$0xff]
    %v4878 = vld [vmem:[#allocation4 + $0xa8] sm:$0xff]
    %v4879 = vld [vmem:[#allocation4 + $0xb0] sm:$0xff]
    %v4880 = vld [vmem:[#allocation4 + $0xb8] sm:$0xff]
    %v4881 = vld [vmem:[#allocation4 + $0xc0] sm:$0xff]
    %v4882 = vld [vmem:[#allocation4 + $0xc8] sm:$0xff]
    %v4883 = vld [vmem:[#allocation4 + $0xd0] sm:$0xff]
    %v4884 = vld [vmem:[#allocation4 + $0xd8] sm:$0xff]
    %v4885 = vld [vmem:[#allocation4 + $0xe0] sm:$0xff]
    %v4886 = vld [vmem:[#allocation4 + $0xe8] sm:$0xff]
    %v4887 = vld [vmem:[#allocation4 + $0xf0] sm:$0xff]
    %v4888 = vld [vmem:[#allocation4 + $0xf8] sm:$0xff]
    %v4889 = vld [vmem:[#allocation4 + $0x100] sm:$0xff]
    %v4890 = vld [vmem:[#allocation4 + $0x108] sm:$0xff]
    %v4891 = vld [vmem:[#allocation4 + $0x110] sm:$0xff]
    %v4892 = vld [vmem:[#allocation4 + $0x118] sm:$0xff]
    %v4893 = vld [vmem:[#allocation4 + $0x120] sm:$0xff]
    %v4894 = vld [vmem:[#allocation4 + $0x128] sm:$0xff]
    %v4895 = vld [vmem:[#allocation4 + $0x130] sm:$0xff]
    %v4896 = vld [vmem:[#allocation4 + $0x138] sm:$0xff]
    %v4897 = vld [vmem:[#allocation4 + $0x140] sm:$0xff]
    %v4898 = vld [vmem:[#allocation4 + $0x148] sm:$0xff]
    %v4899 = vld [vmem:[#allocation4 + $0x150] sm:$0xff]
    %v4900 = vld [vmem:[#allocation4 + $0x158] sm:$0xff]
    %v4901 = vld [vmem:[#allocation4 + $0x160] sm:$0xff]
    %v4902 = vld [vmem:[#allocation4 + $0x168] sm:$0xff]
    %v4903 = vld [vmem:[#allocation4 + $0x170] sm:$0xff]
    %v4904 = vld [vmem:[#allocation4 + $0x178] sm:$0xff]
    %v4905 = vld [vmem:[#allocation4 + $0x180] sm:$0xff]
    %v4906 = vld [vmem:[#allocation4 + $0x188] sm:$0xff]
    %v4907 = vld [vmem:[#allocation4 + $0x190] sm:$0xff]
    %v4908 = vld [vmem:[#allocation4 + $0x198] sm:$0xff]
    %v4909 = vld [vmem:[#allocation4 + $0x1a0] sm:$0xff]
    %v4910 = vld [vmem:[#allocation4 + $0x1a8] sm:$0xff]
    %v4911 = vpack.c.bf16 %v4863, %v4857
    %v4912 = vpack.c.bf16 %v4864, %v4858
    %v4913 = vpack.c.bf16 %v4865, %v4859
    %v4914 = vpack.c.bf16 %v4866, %v4860
    %v4915 = vpack.c.bf16 %v4867, %v4861
    %v4916 = vpack.c.bf16 %v4868, %v4862
    %v4917 = vpack.c.bf16 %v4875, %v4869
    %v4918 = vpack.c.bf16 %v4876, %v4870
    %v4919 = vpack.c.bf16 %v4877, %v4871
    %v4920 = vpack.c.bf16 %v4878, %v4872
    %v4921 = vpack.c.bf16 %v4879, %v4873
    %v4922 = vpack.c.bf16 %v4880, %v4874
    %v4923 = vpack.c.bf16 %v4887, %v4881
    %v4924 = vpack.c.bf16 %v4888, %v4882
    %v4925 = vpack.c.bf16 %v4889, %v4883
    %v4926 = vpack.c.bf16 %v4890, %v4884
    %v4927 = vpack.c.bf16 %v4891, %v4885
    %v4928 = vpack.c.bf16 %v4892, %v4886
    %v4929 = vpack.c.bf16 %v4899, %v4893
    %v4930 = vpack.c.bf16 %v4900, %v4894
    %v4931 = vpack.c.bf16 %v4901, %v4895
    %v4932 = vpack.c.bf16 %v4902, %v4896
    %v4933 = vpack.c.bf16 %v4903, %v4897
    %v4934 = vpack.c.bf16 %v4904, %v4898
    %v4935 = vpack.c.bf16 %v4905, %v4905
    %v4936 = vpack.c.bf16 %v4906, %v4906
    %v4937 = vpack.c.bf16 %v4907, %v4907
    %v4938 = vpack.c.bf16 %v4908, %v4908
    %v4939 = vpack.c.bf16 %v4909, %v4909
    %v4940 = vpack.c.bf16 %v4910, %v4910
    %v4942 = vsel %vm545, %v4856, 0
    %v4945 = vsel %vm549, %v4935, 0
    %v4948 = vsel %vm549, %v4936, 0
    %v4951 = vsel %vm549, %v4937, 0
    %v4954 = vsel %vm549, %v4938, 0
    %v4957 = vsel %vm549, %v4939, 0
    %v4960 = vsel %vm549, %v4940, 0
    %4962 = vmatprep.subr.bf16.mxu0 %v4912
    %4963 = vmatpush1.bf16.msra.mxu0 %v4911
    %4964 = vmatprep.subr.bf16.mxu0 %v4918
    %4965 = vmatpush1.bf16.msra.mxu0 %v4917
    %4966 = vmatprep.subr.bf16.mxu0 %v4924
    %4967 = vmatpush1.bf16.msra.mxu0 %v4923
    %4968 = vmatprep.subr.bf16.mxu0 %v4930
    %4969 = vmatpush1.bf16.msra.mxu0 %v4929
    %4970 = vmatprep.subr.bf16.mxu0 %v4948
    %4971 = vmatpush1.bf16.msra.mxu0 %v4945
    %4972 = vmatprep.subr.bf16.mxu0 0
    %4973 = vmatpush1.bf16.msra.mxu0 0
    %4974 = vmatprep.subr.bf16.mxu0 0
    %4975 = vmatpush1.bf16.msra.mxu0 0
    %4976 = vmatprep.subr.bf16.mxu0 0
    %4977 = vmatpush1.bf16.msra.mxu0 0
    %4978 = vmatprep.subr.bf16.mxu0 0
    %4979 = vmatpush1.bf16.msra.mxu0 0
    %4980 = vmatprep.subr.bf16.mxu0 0
    %4981 = vmatpush1.bf16.msra.mxu0 0
    %4982 = vmatprep.subr.bf16.mxu0 0
    %4983 = vmatpush1.bf16.msra.mxu0 0
    %4984 = vmatprep.subr.bf16.mxu0 0
    %4985 = vmatpush1.bf16.msra.mxu0 0
    %4986 = vmatprep.subr.bf16.mxu0 0
    %4987 = vmatpush1.bf16.msra.mxu0 0
    %4988 = vmatprep.subr.bf16.mxu0 0
    %4989 = vmatpush1.bf16.msra.mxu0 0
    %4990 = vmatprep.subr.bf16.mxu0 0
    %4991 = vmatpush1.bf16.msra.mxu0 0
    %4992 = vmatprep.subr.bf16.mxu0 0
    %4993 = vmatpush1.bf16.msra.mxu0 0
    %4994 = vmatprep.mubr.bf16.mxu0 0
    %4995 = vmatmul.mubr.bf16.gmra.mrb[0].mxu0 %v4942
    %v4996 = vpop.f32.mrb[0].mxu0
    %v4997 = vadd.f32 0.0, %v4996
    %v4998 = vpop.f32.mrb[0].mxu0
    %v4999 = vadd.f32 0.0, %v4998
    %v5000 = vpop.f32.mrb[0].mxu0
    %v5001 = vpop.f32.mrb[0].mxu0
    %5002 = vdwg.mxu0
    %5003 = vmatprep.subr.bf16.mxu0 %v4914
    %5004 = vmatpush1.bf16.msra.mxu0 %v4913
    %5005 = vmatprep.subr.bf16.mxu0 %v4920
    %5006 = vmatpush1.bf16.msra.mxu0 %v4919
    %5007 = vmatprep.subr.bf16.mxu0 %v4926
    %5008 = vmatpush1.bf16.msra.mxu0 %v4925
    %5009 = vmatprep.subr.bf16.mxu0 %v4932
    %5010 = vmatpush1.bf16.msra.mxu0 %v4931
    %5011 = vmatprep.subr.bf16.mxu0 %v4954
    %5012 = vmatpush1.bf16.msra.mxu0 %v4951
    %5013 = vmatprep.subr.bf16.mxu0 0
    %5014 = vmatpush1.bf16.msra.mxu0 0
    %5015 = vmatprep.subr.bf16.mxu0 0
    %5016 = vmatpush1.bf16.msra.mxu0 0
    %5017 = vmatprep.subr.bf16.mxu0 0
    %5018 = vmatpush1.bf16.msra.mxu0 0
    %5019 = vmatprep.subr.bf16.mxu0 0
    %5020 = vmatpush1.bf16.msra.mxu0 0
    %5021 = vmatprep.subr.bf16.mxu0 0
    %5022 = vmatpush1.bf16.msra.mxu0 0
    %5023 = vmatprep.subr.bf16.mxu0 0
    %5024 = vmatpush1.bf16.msra.mxu0 0
    %5025 = vmatprep.subr.bf16.mxu0 0
    %5026 = vmatpush1.bf16.msra.mxu0 0
    %5027 = vmatprep.subr.bf16.mxu0 0
    %5028 = vmatpush1.bf16.msra.mxu0 0
    %5029 = vmatprep.subr.bf16.mxu0 0
    %5030 = vmatpush1.bf16.msra.mxu0 0
    %5031 = vmatprep.subr.bf16.mxu0 0
    %5032 = vmatpush1.bf16.msra.mxu0 0
    %5033 = vmatprep.subr.bf16.mxu0 0
    %5034 = vmatpush1.bf16.msra.mxu0 0
    %5035 = vmatprep.mubr.bf16.mxu0 0
    %5036 = vmatmul.mubr.bf16.gmra.mrb[0].mxu0 %v4942
    %v5037 = vpop.f32.mrb[0].mxu0
    %v5038 = vadd.f32 0.0, %v5037
    %v5039 = vpop.f32.mrb[0].mxu0
    %v5040 = vadd.f32 0.0, %v5039
    %v5041 = vpop.f32.mrb[0].mxu0
    %v5042 = vpop.f32.mrb[0].mxu0
    %5043 = vdwg.mxu0
    %5044 = vmatprep.subr.bf16.mxu0 %v4916
    %5045 = vmatpush1.bf16.msra.mxu0 %v4915
    %5046 = vmatprep.subr.bf16.mxu0 %v4922
    %5047 = vmatpush1.bf16.msra.mxu0 %v4921
    %5048 = vmatprep.subr.bf16.mxu0 %v4928
    %5049 = vmatpush1.bf16.msra.mxu0 %v4927
    %5050 = vmatprep.subr.bf16.mxu0 %v4934
    %5051 = vmatpush1.bf16.msra.mxu0 %v4933
    %5052 = vmatprep.subr.bf16.mxu0 %v4960
    %5053 = vmatpush1.bf16.msra.mxu0 %v4957
    %5054 = vmatprep.subr.bf16.mxu0 0
    %5055 = vmatpush1.bf16.msra.mxu0 0
    %5056 = vmatprep.subr.bf16.mxu0 0
    %5057 = vmatpush1.bf16.msra.mxu0 0
    %5058 = vmatprep.subr.bf16.mxu0 0
    %5059 = vmatpush1.bf16.msra.mxu0 0
    %5060 = vmatprep.subr.bf16.mxu0 0
    %5061 = vmatpush1.bf16.msra.mxu0 0
    %5062 = vmatprep.subr.bf16.mxu0 0
    %5063 = vmatpush1.bf16.msra.mxu0 0
    %5064 = vmatprep.subr.bf16.mxu0 0
    %5065 = vmatpush1.bf16.msra.mxu0 0
    %5066 = vmatprep.subr.bf16.mxu0 0
    %5067 = vmatpush1.bf16.msra.mxu0 0
    %5068 = vmatprep.subr.bf16.mxu0 0
    %5069 = vmatpush1.bf16.msra.mxu0 0
    %5070 = vmatprep.subr.bf16.mxu0 0
    %5071 = vmatpush1.bf16.msra.mxu0 0
    %5072 = vmatprep.subr.bf16.mxu0 0
    %5073 = vmatpush1.bf16.msra.mxu0 0
    %5074 = vmatprep.subr.bf16.mxu0 0
    %5075 = vmatpush1.bf16.msra.mxu0 0
    %5076 = vmatprep.mubr.bf16.mxu0 0
    %5077 = vmatmul.mubr.bf16.gmra.mrb[0].mxu0 %v4942
    %v5078 = vpop.f32.mrb[0].mxu0
    %v5079 = vadd.f32 0.0, %v5078
    %v5080 = vpop.f32.mrb[0].mxu0
    %v5081 = vadd.f32 0.0, %v5080
    %v5082 = vpop.f32.mrb[0].mxu0
    %v5083 = vpop.f32.mrb[0].mxu0
    %5084 = vdwg.mxu0
    %v5085 = vld [vmem:[#allocation3] sm:$0xff]
    %v5086 = vld [vmem:[#allocation3 + $0x8] sm:$0xff]
    %v5087 = vld [vmem:[#allocation3 + $0x10] sm:$0xff]
    %v5088 = vld [vmem:[#allocation3 + $0x18] sm:$0xff]
    %v5089 = vld [vmem:[#allocation3 + $0x20] sm:$0xff]
    %v5090 = vld [vmem:[#allocation3 + $0x28] sm:$0xff]
    %v5091 = vld [vmem:[#allocation3 + $0x30] sm:$0xff]
    %5099 = vrot.lane.b32.xlu0 %v5085, 19
    %v5100 = vpop.permute.xlu0 %5099
    %5101 = vrot.lane.b32.xlu0 %v5086, 19
    %v5102 = vpop.permute.xlu0 %5101
    %5103 = vrot.lane.b32.xlu0 %v5087, 19
    %v5104 = vpop.permute.xlu0 %5103
    %5105 = vrot.lane.b32.xlu0 %v5088, 19
    %v5106 = vpop.permute.xlu0 %5105
    %5107 = vrot.lane.b32.xlu0 %v5089, 19
    %v5108 = vpop.permute.xlu0 %5107
    %5109 = vrot.lane.b32.xlu0 %v5090, 19
    %v5110 = vpop.permute.xlu0 %5109
    %5111 = vrot.lane.b32.xlu0 %v5091, 19
    %v5112 = vpop.permute.xlu0 %5111
    %v5113 = vsel %vm95, %v5100, %v5102
    %v5114 = vsel %vm95, %v5102, %v5104
    %v5115 = vsel %vm95, %v5104, %v5106
    %v5116 = vsel %vm95, %v5106, %v5108
    %v5117 = vsel %vm95, %v5108, %v5110
    %v5118 = vsel %vm95, %v5110, %v5112
    %5125 = vst [vmem:[#allocation4] sm:$0xff] %v5113
    %5126 = vst [vmem:[#allocation4 + $0x8] sm:$0xff] %v5114
    %5127 = vst [vmem:[#allocation4 + $0x10] sm:$0xff] %v5115
    %5128 = vst [vmem:[#allocation4 + $0x18] sm:$0xff] %v5116
    %5129 = vst [vmem:[#allocation4 + $0x20] sm:$0xff] %v5117
    %5130 = vst [vmem:[#allocation4 + $0x28] sm:$0xff] %v5118
    %v5131 = vld [vmem:[#allocation3] sm:$0xff]
    %v5132 = vld [vmem:[#allocation3 + $0x8] sm:$0xff]
    %v5133 = vld [vmem:[#allocation3 + $0x10] sm:$0xff]
    %v5134 = vld [vmem:[#allocation3 + $0x18] sm:$0xff]
    %v5135 = vld [vmem:[#allocation3 + $0x20] sm:$0xff]
    %v5136 = vld [vmem:[#allocation3 + $0x28] sm:$0xff]
    %v5137 = vld [vmem:[#allocation3 + $0x30] sm:$0xff]
    %5145 = vrot.lane.b32.xlu0 %v5131, 18
    %v5146 = vpop.permute.xlu0 %5145
    %5147 = vrot.lane.b32.xlu0 %v5132, 18
    %v5148 = vpop.permute.xlu0 %5147
    %5149 = vrot.lane.b32.xlu0 %v5133, 18
    %v5150 = vpop.permute.xlu0 %5149
    %5151 = vrot.lane.b32.xlu0 %v5134, 18
    %v5152 = vpop.permute.xlu0 %5151
    %5153 = vrot.lane.b32.xlu0 %v5135, 18
    %v5154 = vpop.permute.xlu0 %5153
    %5155 = vrot.lane.b32.xlu0 %v5136, 18
    %v5156 = vpop.permute.xlu0 %5155
    %5157 = vrot.lane.b32.xlu0 %v5137, 18
    %v5158 = vpop.permute.xlu0 %5157
    %v5159 = vsel %vm142, %v5146, %v5148
    %v5160 = vsel %vm142, %v5148, %v5150
    %v5161 = vsel %vm142, %v5150, %v5152
    %v5162 = vsel %vm142, %v5152, %v5154
    %v5163 = vsel %vm142, %v5154, %v5156
    %v5164 = vsel %vm142, %v5156, %v5158
    %5171 = vst [vmem:[#allocation4 + $0x30] sm:$0xff] %v5159
    %5172 = vst [vmem:[#allocation4 + $0x38] sm:$0xff] %v5160
    %5173 = vst [vmem:[#allocation4 + $0x40] sm:$0xff] %v5161
    %5174 = vst [vmem:[#allocation4 + $0x48] sm:$0xff] %v5162
    %5175 = vst [vmem:[#allocation4 + $0x50] sm:$0xff] %v5163
    %5176 = vst [vmem:[#allocation4 + $0x58] sm:$0xff] %v5164
    %v5177 = vld [vmem:[#allocation3] sm:$0xff]
    %v5178 = vld [vmem:[#allocation3 + $0x8] sm:$0xff]
    %v5179 = vld [vmem:[#allocation3 + $0x10] sm:$0xff]
    %v5180 = vld [vmem:[#allocation3 + $0x18] sm:$0xff]
    %v5181 = vld [vmem:[#allocation3 + $0x20] sm:$0xff]
    %v5182 = vld [vmem:[#allocation3 + $0x28] sm:$0xff]
    %v5183 = vld [vmem:[#allocation3 + $0x30] sm:$0xff]
    %5191 = vrot.lane.b32.xlu0 %v5177, 17
    %v5192 = vpop.permute.xlu0 %5191
    %5193 = vrot.lane.b32.xlu0 %v5178, 17
    %v5194 = vpop.permute.xlu0 %5193
    %5195 = vrot.lane.b32.xlu0 %v5179, 17
    %v5196 = vpop.permute.xlu0 %5195
    %5197 = vrot.lane.b32.xlu0 %v5180, 17
    %v5198 = vpop.permute.xlu0 %5197
    %5199 = vrot.lane.b32.xlu0 %v5181, 17
    %v5200 = vpop.permute.xlu0 %5199
    %5201 = vrot.lane.b32.xlu0 %v5182, 17
    %v5202 = vpop.permute.xlu0 %5201
    %5203 = vrot.lane.b32.xlu0 %v5183, 17
    %v5204 = vpop.permute.xlu0 %5203
    %v5205 = vsel %vm189, %v5192, %v5194
    %v5206 = vsel %vm189, %v5194, %v5196
    %v5207 = vsel %vm189, %v5196, %v5198
    %v5208 = vsel %vm189, %v5198, %v5200
    %v5209 = vsel %vm189, %v5200, %v5202
    %v5210 = vsel %vm189, %v5202, %v5204
    %5217 = vst [vmem:[#allocation4 + $0x60] sm:$0xff] %v5205
    %5218 = vst [vmem:[#allocation4 + $0x68] sm:$0xff] %v5206
    %5219 = vst [vmem:[#allocation4 + $0x70] sm:$0xff] %v5207
    %5220 = vst [vmem:[#allocation4 + $0x78] sm:$0xff] %v5208
    %5221 = vst [vmem:[#allocation4 + $0x80] sm:$0xff] %v5209
    %5222 = vst [vmem:[#allocation4 + $0x88] sm:$0xff] %v5210
    %v5223 = vld [vmem:[#allocation3] sm:$0xff]
    %v5224 = vld [vmem:[#allocation3 + $0x8] sm:$0xff]
    %v5225 = vld [vmem:[#allocation3 + $0x10] sm:$0xff]
    %v5226 = vld [vmem:[#allocation3 + $0x18] sm:$0xff]
    %v5227 = vld [vmem:[#allocation3 + $0x20] sm:$0xff]
    %v5228 = vld [vmem:[#allocation3 + $0x28] sm:$0xff]
    %v5229 = vld [vmem:[#allocation3 + $0x30] sm:$0xff]
    %5237 = vrot.lane.b32.xlu0 %v5223, 1
    %v5238 = vpop.permute.xlu0 %5237
    %5239 = vrot.lane.b32.xlu0 %v5224, 1
    %v5240 = vpop.permute.xlu0 %5239
    %5241 = vrot.lane.b32.xlu0 %v5225, 1
    %v5242 = vpop.permute.xlu0 %5241
    %5243 = vrot.lane.b32.xlu0 %v5226, 1
    %v5244 = vpop.permute.xlu0 %5243
    %5245 = vrot.lane.b32.xlu0 %v5227, 1
    %v5246 = vpop.permute.xlu0 %5245
    %5247 = vrot.lane.b32.xlu0 %v5228, 1
    %v5248 = vpop.permute.xlu0 %5247
    %5249 = vrot.lane.b32.xlu0 %v5229, 1
    %v5250 = vpop.permute.xlu0 %5249
    %v5251 = vsel %vm236, %v5238, %v5240
    %v5252 = vsel %vm236, %v5240, %v5242
    %v5253 = vsel %vm236, %v5242, %v5244
    %v5254 = vsel %vm236, %v5244, %v5246
    %v5255 = vsel %vm236, %v5246, %v5248
    %v5256 = vsel %vm236, %v5248, %v5250
    %5263 = vst [vmem:[#allocation4 + $0x90] sm:$0xff] %v5251
    %5264 = vst [vmem:[#allocation4 + $0x98] sm:$0xff] %v5252
    %5265 = vst [vmem:[#allocation4 + $0xa0] sm:$0xff] %v5253
    %5266 = vst [vmem:[#allocation4 + $0xa8] sm:$0xff] %v5254
    %5267 = vst [vmem:[#allocation4 + $0xb0] sm:$0xff] %v5255
    %5268 = vst [vmem:[#allocation4 + $0xb8] sm:$0xff] %v5256
    %v5269 = vld [vmem:[#allocation3 + $0x8] sm:$0xff]
    %v5270 = vld [vmem:[#allocation3 + $0x10] sm:$0xff]
    %v5271 = vld [vmem:[#allocation3 + $0x18] sm:$0xff]
    %v5272 = vld [vmem:[#allocation3 + $0x20] sm:$0xff]
    %v5273 = vld [vmem:[#allocation3 + $0x28] sm:$0xff]
    %v5274 = vld [vmem:[#allocation3 + $0x30] sm:$0xff]
    %5275 = vst [vmem:[#allocation4 + $0xc0] sm:$0xff] %v5269
    %5276 = vst [vmem:[#allocation4 + $0xc8] sm:$0xff] %v5270
    %5277 = vst [vmem:[#allocation4 + $0xd0] sm:$0xff] %v5271
    %5278 = vst [vmem:[#allocation4 + $0xd8] sm:$0xff] %v5272
    %5279 = vst [vmem:[#allocation4 + $0xe0] sm:$0xff] %v5273
    %5280 = vst [vmem:[#allocation4 + $0xe8] sm:$0xff] %v5274
    %v5281 = vld [vmem:[#allocation3 + $0x8] sm:$0xff]
    %v5282 = vld [vmem:[#allocation3 + $0x10] sm:$0xff]
    %v5283 = vld [vmem:[#allocation3 + $0x18] sm:$0xff]
    %v5284 = vld [vmem:[#allocation3 + $0x20] sm:$0xff]
    %v5285 = vld [vmem:[#allocation3 + $0x28] sm:$0xff]
    %v5286 = vld [vmem:[#allocation3 + $0x30] sm:$0xff]
    %v5287 = vld [vmem:[#allocation3 + $0x38] sm:$0xff]
    %5295 = vrot.lane.b32.xlu0 %v5281, 127
    %v5296 = vpop.permute.xlu0 %5295
    %5297 = vrot.lane.b32.xlu0 %v5282, 127
    %v5298 = vpop.permute.xlu0 %5297
    %5299 = vrot.lane.b32.xlu0 %v5283, 127
    %v5300 = vpop.permute.xlu0 %5299
    %5301 = vrot.lane.b32.xlu0 %v5284, 127
    %v5302 = vpop.permute.xlu0 %5301
    %5303 = vrot.lane.b32.xlu0 %v5285, 127
    %v5304 = vpop.permute.xlu0 %5303
    %5305 = vrot.lane.b32.xlu0 %v5286, 127
    %v5306 = vpop.permute.xlu0 %5305
    %5307 = vrot.lane.b32.xlu0 %v5287, 127
    %v5308 = vpop.permute.xlu0 %5307
    %v5309 = vsel %vm295, %v5296, %v5298
    %v5310 = vsel %vm295, %v5298, %v5300
    %v5311 = vsel %vm295, %v5300, %v5302
    %v5312 = vsel %vm295, %v5302, %v5304
    %v5313 = vsel %vm295, %v5304, %v5306
    %v5314 = vsel %vm295, %v5306, %v5308
    %5321 = vst [vmem:[#allocation4 + $0xf0] sm:$0xff] %v5309
    %5322 = vst [vmem:[#allocation4 + $0xf8] sm:$0xff] %v5310
    %5323 = vst [vmem:[#allocation4 + $0x100] sm:$0xff] %v5311
    %5324 = vst [vmem:[#allocation4 + $0x108] sm:$0xff] %v5312
    %5325 = vst [vmem:[#allocation4 + $0x110] sm:$0xff] %v5313
    %5326 = vst [vmem:[#allocation4 + $0x118] sm:$0xff] %v5314
    %v5327 = vld [vmem:[#allocation3 + $0x8] sm:$0xff]
    %v5328 = vld [vmem:[#allocation3 + $0x10] sm:$0xff]
    %v5329 = vld [vmem:[#allocation3 + $0x18] sm:$0xff]
    %v5330 = vld [vmem:[#allocation3 + $0x20] sm:$0xff]
    %v5331 = vld [vmem:[#allocation3 + $0x28] sm:$0xff]
    %v5332 = vld [vmem:[#allocation3 + $0x30] sm:$0xff]
    %v5333 = vld [vmem:[#allocation3 + $0x38] sm:$0xff]
    %5341 = vrot.lane.b32.xlu0 %v5327, 111
    %v5342 = vpop.permute.xlu0 %5341
    %5343 = vrot.lane.b32.xlu0 %v5328, 111
    %v5344 = vpop.permute.xlu0 %5343
    %5345 = vrot.lane.b32.xlu0 %v5329, 111
    %v5346 = vpop.permute.xlu0 %5345
    %5347 = vrot.lane.b32.xlu0 %v5330, 111
    %v5348 = vpop.permute.xlu0 %5347
    %5349 = vrot.lane.b32.xlu0 %v5331, 111
    %v5350 = vpop.permute.xlu0 %5349
    %5351 = vrot.lane.b32.xlu0 %v5332, 111
    %v5352 = vpop.permute.xlu0 %5351
    %5353 = vrot.lane.b32.xlu0 %v5333, 111
    %v5354 = vpop.permute.xlu0 %5353
    %v5355 = vsel %vm342, %v5342, %v5344
    %v5356 = vsel %vm342, %v5344, %v5346
    %v5357 = vsel %vm342, %v5346, %v5348
    %v5358 = vsel %vm342, %v5348, %v5350
    %v5359 = vsel %vm342, %v5350, %v5352
    %v5360 = vsel %vm342, %v5352, %v5354
    %5367 = vst [vmem:[#allocation4 + $0x120] sm:$0xff] %v5355
    %5368 = vst [vmem:[#allocation4 + $0x128] sm:$0xff] %v5356
    %5369 = vst [vmem:[#allocation4 + $0x130] sm:$0xff] %v5357
    %5370 = vst [vmem:[#allocation4 + $0x138] sm:$0xff] %v5358
    %5371 = vst [vmem:[#allocation4 + $0x140] sm:$0xff] %v5359
    %5372 = vst [vmem:[#allocation4 + $0x148] sm:$0xff] %v5360
    %v5373 = vld [vmem:[#allocation3 + $0x8] sm:$0xff]
    %v5374 = vld [vmem:[#allocation3 + $0x10] sm:$0xff]
    %v5375 = vld [vmem:[#allocation3 + $0x18] sm:$0xff]
    %v5376 = vld [vmem:[#allocation3 + $0x20] sm:$0xff]
    %v5377 = vld [vmem:[#allocation3 + $0x28] sm:$0xff]
    %v5378 = vld [vmem:[#allocation3 + $0x30] sm:$0xff]
    %v5379 = vld [vmem:[#allocation3 + $0x38] sm:$0xff]
    %5387 = vrot.lane.b32.xlu0 %v5373, 110
    %v5388 = vpop.permute.xlu0 %5387
    %5389 = vrot.lane.b32.xlu0 %v5374, 110
    %v5390 = vpop.permute.xlu0 %5389
    %5391 = vrot.lane.b32.xlu0 %v5375, 110
    %v5392 = vpop.permute.xlu0 %5391
    %5393 = vrot.lane.b32.xlu0 %v5376, 110
    %v5394 = vpop.permute.xlu0 %5393
    %5395 = vrot.lane.b32.xlu0 %v5377, 110
    %v5396 = vpop.permute.xlu0 %5395
    %5397 = vrot.lane.b32.xlu0 %v5378, 110
    %v5398 = vpop.permute.xlu0 %5397
    %5399 = vrot.lane.b32.xlu0 %v5379, 110
    %v5400 = vpop.permute.xlu0 %5399
    %v5401 = vsel %vm389, %v5388, %v5390
    %v5402 = vsel %vm389, %v5390, %v5392
    %v5403 = vsel %vm389, %v5392, %v5394
    %v5404 = vsel %vm389, %v5394, %v5396
    %v5405 = vsel %vm389, %v5396, %v5398
    %v5406 = vsel %vm389, %v5398, %v5400
    %5413 = vst [vmem:[#allocation4 + $0x150] sm:$0xff] %v5401
    %5414 = vst [vmem:[#allocation4 + $0x158] sm:$0xff] %v5402
    %5415 = vst [vmem:[#allocation4 + $0x160] sm:$0xff] %v5403
    %5416 = vst [vmem:[#allocation4 + $0x168] sm:$0xff] %v5404
    %5417 = vst [vmem:[#allocation4 + $0x170] sm:$0xff] %v5405
    %5418 = vst [vmem:[#allocation4 + $0x178] sm:$0xff] %v5406
    %v5419 = vld [vmem:[#allocation3 + $0x8] sm:$0xff]
    %v5420 = vld [vmem:[#allocation3 + $0x10] sm:$0xff]
    %v5421 = vld [vmem:[#allocation3 + $0x18] sm:$0xff]
    %v5422 = vld [vmem:[#allocation3 + $0x20] sm:$0xff]
    %v5423 = vld [vmem:[#allocation3 + $0x28] sm:$0xff]
    %v5424 = vld [vmem:[#allocation3 + $0x30] sm:$0xff]
    %v5425 = vld [vmem:[#allocation3 + $0x38] sm:$0xff]
    %5433 = vrot.lane.b32.xlu0 %v5419, 109
    %v5434 = vpop.permute.xlu0 %5433
    %5435 = vrot.lane.b32.xlu0 %v5420, 109
    %v5436 = vpop.permute.xlu0 %5435
    %5437 = vrot.lane.b32.xlu0 %v5421, 109
    %v5438 = vpop.permute.xlu0 %5437
    %5439 = vrot.lane.b32.xlu0 %v5422, 109
    %v5440 = vpop.permute.xlu0 %5439
    %5441 = vrot.lane.b32.xlu0 %v5423, 109
    %v5442 = vpop.permute.xlu0 %5441
    %5443 = vrot.lane.b32.xlu0 %v5424, 109
    %v5444 = vpop.permute.xlu0 %5443
    %5445 = vrot.lane.b32.xlu0 %v5425, 109
    %v5446 = vpop.permute.xlu0 %5445
    %v5447 = vsel %vm436, %v5434, %v5436
    %v5448 = vsel %vm436, %v5436, %v5438
    %v5449 = vsel %vm436, %v5438, %v5440
    %v5450 = vsel %vm436, %v5440, %v5442
    %v5451 = vsel %vm436, %v5442, %v5444
    %v5452 = vsel %vm436, %v5444, %v5446
    %5459 = vst [vmem:[#allocation4 + $0x180] sm:$0xff] %v5447
    %5460 = vst [vmem:[#allocation4 + $0x188] sm:$0xff] %v5448
    %5461 = vst [vmem:[#allocation4 + $0x190] sm:$0xff] %v5449
    %5462 = vst [vmem:[#allocation4 + $0x198] sm:$0xff] %v5450
    %5463 = vst [vmem:[#allocation4 + $0x1a0] sm:$0xff] %v5451
    %5464 = vst [vmem:[#allocation4 + $0x1a8] sm:$0xff] %v5452
    %v5465 = vld [vmem:[%s4] sm:$0xf]
    %v5466 = vld [vmem:[#allocation4] sm:$0xff]
    %v5467 = vld [vmem:[#allocation4 + $0x8] sm:$0xff]
    %v5468 = vld [vmem:[#allocation4 + $0x10] sm:$0xff]
    %v5469 = vld [vmem:[#allocation4 + $0x18] sm:$0xff]
    %v5470 = vld [vmem:[#allocation4 + $0x20] sm:$0xff]
    %v5471 = vld [vmem:[#allocation4 + $0x28] sm:$0xff]
    %v5472 = vld [vmem:[#allocation4 + $0x30] sm:$0xff]
    %v5473 = vld [vmem:[#allocation4 + $0x38] sm:$0xff]
    %v5474 = vld [vmem:[#allocation4 + $0x40] sm:$0xff]
    %v5475 = vld [vmem:[#allocation4 + $0x48] sm:$0xff]
    %v5476 = vld [vmem:[#allocation4 + $0x50] sm:$0xff]
    %v5477 = vld [vmem:[#allocation4 + $0x58] sm:$0xff]
    %v5478 = vld [vmem:[#allocation4 + $0x60] sm:$0xff]
    %v5479 = vld [vmem:[#allocation4 + $0x68] sm:$0xff]
    %v5480 = vld [vmem:[#allocation4 + $0x70] sm:$0xff]
    %v5481 = vld [vmem:[#allocation4 + $0x78] sm:$0xff]
    %v5482 = vld [vmem:[#allocation4 + $0x80] sm:$0xff]
    %v5483 = vld [vmem:[#allocation4 + $0x88] sm:$0xff]
    %v5484 = vld [vmem:[#allocation4 + $0x90] sm:$0xff]
    %v5485 = vld [vmem:[#allocation4 + $0x98] sm:$0xff]
    %v5486 = vld [vmem:[#allocation4 + $0xa0] sm:$0xff]
    %v5487 = vld [vmem:[#allocation4 + $0xa8] sm:$0xff]
    %v5488 = vld [vmem:[#allocation4 + $0xb0] sm:$0xff]
    %v5489 = vld [vmem:[#allocation4 + $0xb8] sm:$0xff]
    %v5490 = vld [vmem:[#allocation4 + $0xc0] sm:$0xff]
    %v5491 = vld [vmem:[#allocation4 + $0xc8] sm:$0xff]
    %v5492 = vld [vmem:[#allocation4 + $0xd0] sm:$0xff]
    %v5493 = vld [vmem:[#allocation4 + $0xd8] sm:$0xff]
    %v5494 = vld [vmem:[#allocation4 + $0xe0] sm:$0xff]
    %v5495 = vld [vmem:[#allocation4 + $0xe8] sm:$0xff]
    %v5496 = vld [vmem:[#allocation4 + $0xf0] sm:$0xff]
    %v5497 = vld [vmem:[#allocation4 + $0xf8] sm:$0xff]
    %v5498 = vld [vmem:[#allocation4 + $0x100] sm:$0xff]
    %v5499 = vld [vmem:[#allocation4 + $0x108] sm:$0xff]
    %v5500 = vld [vmem:[#allocation4 + $0x110] sm:$0xff]
    %v5501 = vld [vmem:[#allocation4 + $0x118] sm:$0xff]
    %v5502 = vld [vmem:[#allocation4 + $0x120] sm:$0xff]
    %v5503 = vld [vmem:[#allocation4 + $0x128] sm:$0xff]
    %v5504 = vld [vmem:[#allocation4 + $0x130] sm:$0xff]
    %v5505 = vld [vmem:[#allocation4 + $0x138] sm:$0xff]
    %v5506 = vld [vmem:[#allocation4 + $0x140] sm:$0xff]
    %v5507 = vld [vmem:[#allocation4 + $0x148] sm:$0xff]
    %v5508 = vld [vmem:[#allocation4 + $0x150] sm:$0xff]
    %v5509 = vld [vmem:[#allocation4 + $0x158] sm:$0xff]
    %v5510 = vld [vmem:[#allocation4 + $0x160] sm:$0xff]
    %v5511 = vld [vmem:[#allocation4 + $0x168] sm:$0xff]
    %v5512 = vld [vmem:[#allocation4 + $0x170] sm:$0xff]
    %v5513 = vld [vmem:[#allocation4 + $0x178] sm:$0xff]
    %v5514 = vld [vmem:[#allocation4 + $0x180] sm:$0xff]
    %v5515 = vld [vmem:[#allocation4 + $0x188] sm:$0xff]
    %v5516 = vld [vmem:[#allocation4 + $0x190] sm:$0xff]
    %v5517 = vld [vmem:[#allocation4 + $0x198] sm:$0xff]
    %v5518 = vld [vmem:[#allocation4 + $0x1a0] sm:$0xff]
    %v5519 = vld [vmem:[#allocation4 + $0x1a8] sm:$0xff]
    %v5520 = vpack.c.bf16 %v5472, %v5466
    %v5521 = vpack.c.bf16 %v5473, %v5467
    %v5522 = vpack.c.bf16 %v5474, %v5468
    %v5523 = vpack.c.bf16 %v5475, %v5469
    %v5524 = vpack.c.bf16 %v5476, %v5470
    %v5525 = vpack.c.bf16 %v5477, %v5471
    %v5526 = vpack.c.bf16 %v5484, %v5478
    %v5527 = vpack.c.bf16 %v5485, %v5479
    %v5528 = vpack.c.bf16 %v5486, %v5480
    %v5529 = vpack.c.bf16 %v5487, %v5481
    %v5530 = vpack.c.bf16 %v5488, %v5482
    %v5531 = vpack.c.bf16 %v5489, %v5483
    %v5532 = vpack.c.bf16 %v5496, %v5490
    %v5533 = vpack.c.bf16 %v5497, %v5491
    %v5534 = vpack.c.bf16 %v5498, %v5492
    %v5535 = vpack.c.bf16 %v5499, %v5493
    %v5536 = vpack.c.bf16 %v5500, %v5494
    %v5537 = vpack.c.bf16 %v5501, %v5495
    %v5538 = vpack.c.bf16 %v5508, %v5502
    %v5539 = vpack.c.bf16 %v5509, %v5503
    %v5540 = vpack.c.bf16 %v5510, %v5504
    %v5541 = vpack.c.bf16 %v5511, %v5505
    %v5542 = vpack.c.bf16 %v5512, %v5506
    %v5543 = vpack.c.bf16 %v5513, %v5507
    %v5544 = vpack.c.bf16 %v5514, %v5514
    %v5545 = vpack.c.bf16 %v5515, %v5515
    %v5546 = vpack.c.bf16 %v5516, %v5516
    %v5547 = vpack.c.bf16 %v5517, %v5517
    %v5548 = vpack.c.bf16 %v5518, %v5518
    %v5549 = vpack.c.bf16 %v5519, %v5519
    %v5551 = vsel %vm545, %v5465, 0
    %v5554 = vsel %vm549, %v5544, 0
    %v5557 = vsel %vm549, %v5545, 0
    %v5560 = vsel %vm549, %v5546, 0
    %v5563 = vsel %vm549, %v5547, 0
    %v5566 = vsel %vm549, %v5548, 0
    %v5569 = vsel %vm549, %v5549, 0
    %5571 = vmatprep.subr.bf16.mxu0 %v5521
    %5572 = vmatpush1.bf16.msra.mxu0 %v5520
    %5573 = vmatprep.subr.bf16.mxu0 %v5527
    %5574 = vmatpush1.bf16.msra.mxu0 %v5526
    %5575 = vmatprep.subr.bf16.mxu0 %v5533
    %5576 = vmatpush1.bf16.msra.mxu0 %v5532
    %5577 = vmatprep.subr.bf16.mxu0 %v5539
    %5578 = vmatpush1.bf16.msra.mxu0 %v5538
    %5579 = vmatprep.subr.bf16.mxu0 %v5557
    %5580 = vmatpush1.bf16.msra.mxu0 %v5554
    %5581 = vmatprep.subr.bf16.mxu0 0
    %5582 = vmatpush1.bf16.msra.mxu0 0
    %5583 = vmatprep.subr.bf16.mxu0 0
    %5584 = vmatpush1.bf16.msra.mxu0 0
    %5585 = vmatprep.subr.bf16.mxu0 0
    %5586 = vmatpush1.bf16.msra.mxu0 0
    %5587 = vmatprep.subr.bf16.mxu0 0
    %5588 = vmatpush1.bf16.msra.mxu0 0
    %5589 = vmatprep.subr.bf16.mxu0 0
    %5590 = vmatpush1.bf16.msra.mxu0 0
    %5591 = vmatprep.subr.bf16.mxu0 0
    %5592 = vmatpush1.bf16.msra.mxu0 0
    %5593 = vmatprep.subr.bf16.mxu0 0
    %5594 = vmatpush1.bf16.msra.mxu0 0
    %5595 = vmatprep.subr.bf16.mxu0 0
    %5596 = vmatpush1.bf16.msra.mxu0 0
    %5597 = vmatprep.subr.bf16.mxu0 0
    %5598 = vmatpush1.bf16.msra.mxu0 0
    %5599 = vmatprep.subr.bf16.mxu0 0
    %5600 = vmatpush1.bf16.msra.mxu0 0
    %5601 = vmatprep.subr.bf16.mxu0 0
    %5602 = vmatpush1.bf16.msra.mxu0 0
    %5603 = vmatprep.mubr.bf16.mxu0 0
    %5604 = vmatmul.mubr.bf16.gmra.mrb[0].mxu0 %v5551
    %v5605 = vpop.f32.mrb[0].mxu0
    %v5606 = vadd.f32 0.0, %v5605
    %v5607 = vpop.f32.mrb[0].mxu0
    %v5608 = vadd.f32 0.0, %v5607
    %v5609 = vpop.f32.mrb[0].mxu0
    %v5610 = vpop.f32.mrb[0].mxu0
    %5611 = vdwg.mxu0
    %5612 = vmatprep.subr.bf16.mxu0 %v5523
    %5613 = vmatpush1.bf16.msra.mxu0 %v5522
    %5614 = vmatprep.subr.bf16.mxu0 %v5529
    %5615 = vmatpush1.bf16.msra.mxu0 %v5528
    %5616 = vmatprep.subr.bf16.mxu0 %v5535
    %5617 = vmatpush1.bf16.msra.mxu0 %v5534
    %5618 = vmatprep.subr.bf16.mxu0 %v5541
    %5619 = vmatpush1.bf16.msra.mxu0 %v5540
    %5620 = vmatprep.subr.bf16.mxu0 %v5563
    %5621 = vmatpush1.bf16.msra.mxu0 %v5560
    %5622 = vmatprep.subr.bf16.mxu0 0
    %5623 = vmatpush1.bf16.msra.mxu0 0
    %5624 = vmatprep.subr.bf16.mxu0 0
    %5625 = vmatpush1.bf16.msra.mxu0 0
    %5626 = vmatprep.subr.bf16.mxu0 0
    %5627 = vmatpush1.bf16.msra.mxu0 0
    %5628 = vmatprep.subr.bf16.mxu0 0
    %5629 = vmatpush1.bf16.msra.mxu0 0
    %5630 = vmatprep.subr.bf16.mxu0 0
    %5631 = vmatpush1.bf16.msra.mxu0 0
    %5632 = vmatprep.subr.bf16.mxu0 0
    %5633 = vmatpush1.bf16.msra.mxu0 0
    %5634 = vmatprep.subr.bf16.mxu0 0
    %5635 = vmatpush1.bf16.msra.mxu0 0
    %5636 = vmatprep.subr.bf16.mxu0 0
    %5637 = vmatpush1.bf16.msra.mxu0 0
    %5638 = vmatprep.subr.bf16.mxu0 0
    %5639 = vmatpush1.bf16.msra.mxu0 0
    %5640 = vmatprep.subr.bf16.mxu0 0
    %5641 = vmatpush1.bf16.msra.mxu0 0
    %5642 = vmatprep.subr.bf16.mxu0 0
    %5643 = vmatpush1.bf16.msra.mxu0 0
    %5644 = vmatprep.mubr.bf16.mxu0 0
    %5645 = vmatmul.mubr.bf16.gmra.mrb[0].mxu0 %v5551
    %v5646 = vpop.f32.mrb[0].mxu0
    %v5647 = vadd.f32 0.0, %v5646
    %v5648 = vpop.f32.mrb[0].mxu0
    %v5649 = vadd.f32 0.0, %v5648
    %v5650 = vpop.f32.mrb[0].mxu0
    %v5651 = vpop.f32.mrb[0].mxu0
    %5652 = vdwg.mxu0
    %5653 = vmatprep.subr.bf16.mxu0 %v5525
    %5654 = vmatpush1.bf16.msra.mxu0 %v5524
    %5655 = vmatprep.subr.bf16.mxu0 %v5531
    %5656 = vmatpush1.bf16.msra.mxu0 %v5530
    %5657 = vmatprep.subr.bf16.mxu0 %v5537
    %5658 = vmatpush1.bf16.msra.mxu0 %v5536
    %5659 = vmatprep.subr.bf16.mxu0 %v5543
    %5660 = vmatpush1.bf16.msra.mxu0 %v5542
    %5661 = vmatprep.subr.bf16.mxu0 %v5569
    %5662 = vmatpush1.bf16.msra.mxu0 %v5566
    %5663 = vmatprep.subr.bf16.mxu0 0
    %5664 = vmatpush1.bf16.msra.mxu0 0
    %5665 = vmatprep.subr.bf16.mxu0 0
    %5666 = vmatpush1.bf16.msra.mxu0 0
    %5667 = vmatprep.subr.bf16.mxu0 0
    %5668 = vmatpush1.bf16.msra.mxu0 0
    %5669 = vmatprep.subr.bf16.mxu0 0
    %5670 = vmatpush1.bf16.msra.mxu0 0
    %5671 = vmatprep.subr.bf16.mxu0 0
    %5672 = vmatpush1.bf16.msra.mxu0 0
    %5673 = vmatprep.subr.bf16.mxu0 0
    %5674 = vmatpush1.bf16.msra.mxu0 0
    %5675 = vmatprep.subr.bf16.mxu0 0
    %5676 = vmatpush1.bf16.msra.mxu0 0
    %5677 = vmatprep.subr.bf16.mxu0 0
    %5678 = vmatpush1.bf16.msra.mxu0 0
    %5679 = vmatprep.subr.bf16.mxu0 0
    %5680 = vmatpush1.bf16.msra.mxu0 0
    %5681 = vmatprep.subr.bf16.mxu0 0
    %5682 = vmatpush1.bf16.msra.mxu0 0
    %5683 = vmatprep.subr.bf16.mxu0 0
    %5684 = vmatpush1.bf16.msra.mxu0 0
    %5685 = vmatprep.mubr.bf16.mxu0 0
    %5686 = vmatmul.mubr.bf16.gmra.mrb[0].mxu0 %v5551
    %v5687 = vpop.f32.mrb[0].mxu0
    %v5688 = vadd.f32 0.0, %v5687
    %v5689 = vpop.f32.mrb[0].mxu0
    %v5690 = vadd.f32 0.0, %v5689
    %v5691 = vpop.f32.mrb[0].mxu0
    %v5692 = vpop.f32.mrb[0].mxu0
    %5693 = vdwg.mxu0
    %v5694 = vld [vmem:[#allocation5] sm:$0xff]
    %v5695 = vld [vmem:[#allocation5 + $0x8] sm:$0xff]
    %v5696 = vld [vmem:[#allocation5 + $0x10] sm:$0xff]
    %v5697 = vld [vmem:[#allocation5 + $0x18] sm:$0xff]
    %v5698 = vld [vmem:[#allocation5 + $0x20] sm:$0xff]
    %v5699 = vld [vmem:[#allocation5 + $0x28] sm:$0xff]
    %v5700 = vadd.f32 %v5694, %v4997
    %v5701 = vadd.f32 %v5695, %v4999
    %v5702 = vadd.f32 %v5696, %v5038
    %v5703 = vadd.f32 %v5697, %v5040
    %v5704 = vadd.f32 %v5698, %v5079
    %v5705 = vadd.f32 %v5699, %v5081
    %v5706 = vmax.f32 %v5606, 0.0
    %v5707 = vmax.f32 %v5608, 0.0
    %v5708 = vmax.f32 %v5647, 0.0
    %v5709 = vmax.f32 %v5649, 0.0
    %v5710 = vmax.f32 %v5688, 0.0
    %v5711 = vmax.f32 %v5690, 0.0
    %v5712 = vsub.f32 %v5700, %v5706
    %v5713 = vsub.f32 %v5701, %v5707
    %v5714 = vsub.f32 %v5702, %v5708
    %v5715 = vsub.f32 %v5703, %v5709
    %v5716 = vsub.f32 %v5704, %v5710
    %v5717 = vsub.f32 %v5705, %v5711
    %v5718 = vtanh.pop %v5712
    %v5719 = vtanh.pop %v5713
    %v5720 = vtanh.pop %v5714
    %v5721 = vtanh.pop %v5715
    %v5722 = vtanh.pop %v5716
    %v5723 = vtanh.pop %v5717
    %v5724 = vmul.f32 %v59, %v5718
    %v5725 = vmul.f32 %v60, %v5719
    %v5726 = vmul.f32 %v61, %v5720
    %v5727 = vmul.f32 %v62, %v5721
    %v5728 = vmul.f32 %v63, %v5722
    %v5729 = vmul.f32 %v64, %v5723
    %5730 = vst [vmem:[#allocation2 + $0x8] sm:$0xff] %v5724
    %5731 = vst [vmem:[#allocation2 + $0x10] sm:$0xff] %v5725
    %5732 = vst [vmem:[#allocation2 + $0x18] sm:$0xff] %v5726
    %5733 = vst [vmem:[#allocation2 + $0x20] sm:$0xff] %v5727
    %5734 = vst [vmem:[#allocation2 + $0x28] sm:$0xff] %v5728
    %5735 = vst [vmem:[#allocation2 + $0x30] sm:$0xff] %v5729
    %v5736 = vld [vmem:[#allocation2] sm:$0xff]
    %v5737 = vld [vmem:[#allocation2 + $0x8] sm:$0xff]
    %v5738 = vld [vmem:[#allocation2 + $0x10] sm:$0xff]
    %v5739 = vld [vmem:[#allocation2 + $0x18] sm:$0xff]
    %v5740 = vld [vmem:[#allocation2 + $0x20] sm:$0xff]
    %v5741 = vld [vmem:[#allocation2 + $0x28] sm:$0xff]
    %v5742 = vld [vmem:[#allocation2 + $0x30] sm:$0xff]
    %5750 = vrot.lane.b32.xlu0 %v5736, 19
    %v5751 = vpop.permute.xlu0 %5750
    %5752 = vrot.lane.b32.xlu0 %v5737, 19
    %v5753 = vpop.permute.xlu0 %5752
    %5754 = vrot.lane.b32.xlu0 %v5738, 19
    %v5755 = vpop.permute.xlu0 %5754
    %5756 = vrot.lane.b32.xlu0 %v5739, 19
    %v5757 = vpop.permute.xlu0 %5756
    %5758 = vrot.lane.b32.xlu0 %v5740, 19
    %v5759 = vpop.permute.xlu0 %5758
    %5760 = vrot.lane.b32.xlu0 %v5741, 19
    %v5761 = vpop.permute.xlu0 %5760
    %5762 = vrot.lane.b32.xlu0 %v5742, 19
    %v5763 = vpop.permute.xlu0 %5762
    %v5764 = vsel %vm95, %v5751, %v5753
    %v5765 = vsel %vm95, %v5753, %v5755
    %v5766 = vsel %vm95, %v5755, %v5757
    %v5767 = vsel %vm95, %v5757, %v5759
    %v5768 = vsel %vm95, %v5759, %v5761
    %v5769 = vsel %vm95, %v5761, %v5763
    %5776 = vst [vmem:[#allocation4] sm:$0xff] %v5764
    %5777 = vst [vmem:[#allocation4 + $0x8] sm:$0xff] %v5765
    %5778 = vst [vmem:[#allocation4 + $0x10] sm:$0xff] %v5766
    %5779 = vst [vmem:[#allocation4 + $0x18] sm:$0xff] %v5767
    %5780 = vst [vmem:[#allocation4 + $0x20] sm:$0xff] %v5768
    %5781 = vst [vmem:[#allocation4 + $0x28] sm:$0xff] %v5769
    %v5782 = vld [vmem:[#allocation2] sm:$0xff]
    %v5783 = vld [vmem:[#allocation2 + $0x8] sm:$0xff]
    %v5784 = vld [vmem:[#allocation2 + $0x10] sm:$0xff]
    %v5785 = vld [vmem:[#allocation2 + $0x18] sm:$0xff]
    %v5786 = vld [vmem:[#allocation2 + $0x20] sm:$0xff]
    %v5787 = vld [vmem:[#allocation2 + $0x28] sm:$0xff]
    %v5788 = vld [vmem:[#allocation2 + $0x30] sm:$0xff]
    %5796 = vrot.lane.b32.xlu0 %v5782, 18
    %v5797 = vpop.permute.xlu0 %5796
    %5798 = vrot.lane.b32.xlu0 %v5783, 18
    %v5799 = vpop.permute.xlu0 %5798
    %5800 = vrot.lane.b32.xlu0 %v5784, 18
    %v5801 = vpop.permute.xlu0 %5800
    %5802 = vrot.lane.b32.xlu0 %v5785, 18
    %v5803 = vpop.permute.xlu0 %5802
    %5804 = vrot.lane.b32.xlu0 %v5786, 18
    %v5805 = vpop.permute.xlu0 %5804
    %5806 = vrot.lane.b32.xlu0 %v5787, 18
    %v5807 = vpop.permute.xlu0 %5806
    %5808 = vrot.lane.b32.xlu0 %v5788, 18
    %v5809 = vpop.permute.xlu0 %5808
    %v5810 = vsel %vm142, %v5797, %v5799
    %v5811 = vsel %vm142, %v5799, %v5801
    %v5812 = vsel %vm142, %v5801, %v5803
    %v5813 = vsel %vm142, %v5803, %v5805
    %v5814 = vsel %vm142, %v5805, %v5807
    %v5815 = vsel %vm142, %v5807, %v5809
    %5822 = vst [vmem:[#allocation4 + $0x30] sm:$0xff] %v5810
    %5823 = vst [vmem:[#allocation4 + $0x38] sm:$0xff] %v5811
    %5824 = vst [vmem:[#allocation4 + $0x40] sm:$0xff] %v5812
    %5825 = vst [vmem:[#allocation4 + $0x48] sm:$0xff] %v5813
    %5826 = vst [vmem:[#allocation4 + $0x50] sm:$0xff] %v5814
    %5827 = vst [vmem:[#allocation4 + $0x58] sm:$0xff] %v5815
    %v5828 = vld [vmem:[#allocation2] sm:$0xff]
    %v5829 = vld [vmem:[#allocation2 + $0x8] sm:$0xff]
    %v5830 = vld [vmem:[#allocation2 + $0x10] sm:$0xff]
    %v5831 = vld [vmem:[#allocation2 + $0x18] sm:$0xff]
    %v5832 = vld [vmem:[#allocation2 + $0x20] sm:$0xff]
    %v5833 = vld [vmem:[#allocation2 + $0x28] sm:$0xff]
    %v5834 = vld [vmem:[#allocation2 + $0x30] sm:$0xff]
    %5842 = vrot.lane.b32.xlu0 %v5828, 17
    %v5843 = vpop.permute.xlu0 %5842
    %5844 = vrot.lane.b32.xlu0 %v5829, 17
    %v5845 = vpop.permute.xlu0 %5844
    %5846 = vrot.lane.b32.xlu0 %v5830, 17
    %v5847 = vpop.permute.xlu0 %5846
    %5848 = vrot.lane.b32.xlu0 %v5831, 17
    %v5849 = vpop.permute.xlu0 %5848
    %5850 = vrot.lane.b32.xlu0 %v5832, 17
    %v5851 = vpop.permute.xlu0 %5850
    %5852 = vrot.lane.b32.xlu0 %v5833, 17
    %v5853 = vpop.permute.xlu0 %5852
    %5854 = vrot.lane.b32.xlu0 %v5834, 17
    %v5855 = vpop.permute.xlu0 %5854
    %v5856 = vsel %vm189, %v5843, %v5845
    %v5857 = vsel %vm189, %v5845, %v5847
    %v5858 = vsel %vm189, %v5847, %v5849
    %v5859 = vsel %vm189, %v5849, %v5851
    %v5860 = vsel %vm189, %v5851, %v5853
    %v5861 = vsel %vm189, %v5853, %v5855
    %5868 = vst [vmem:[#allocation4 + $0x60] sm:$0xff] %v5856
    %5869 = vst [vmem:[#allocation4 + $0x68] sm:$0xff] %v5857
    %5870 = vst [vmem:[#allocation4 + $0x70] sm:$0xff] %v5858
    %5871 = vst [vmem:[#allocation4 + $0x78] sm:$0xff] %v5859
    %5872 = vst [vmem:[#allocation4 + $0x80] sm:$0xff] %v5860
    %5873 = vst [vmem:[#allocation4 + $0x88] sm:$0xff] %v5861
    %v5874 = vld [vmem:[#allocation2] sm:$0xff]
    %v5875 = vld [vmem:[#allocation2 + $0x8] sm:$0xff]
    %v5876 = vld [vmem:[#allocation2 + $0x10] sm:$0xff]
    %v5877 = vld [vmem:[#allocation2 + $0x18] sm:$0xff]
    %v5878 = vld [vmem:[#allocation2 + $0x20] sm:$0xff]
    %v5879 = vld [vmem:[#allocation2 + $0x28] sm:$0xff]
    %v5880 = vld [vmem:[#allocation2 + $0x30] sm:$0xff]
    %5888 = vrot.lane.b32.xlu0 %v5874, 1
    %v5889 = vpop.permute.xlu0 %5888
    %5890 = vrot.lane.b32.xlu0 %v5875, 1
    %v5891 = vpop.permute.xlu0 %5890
    %5892 = vrot.lane.b32.xlu0 %v5876, 1
    %v5893 = vpop.permute.xlu0 %5892
    %5894 = vrot.lane.b32.xlu0 %v5877, 1
    %v5895 = vpop.permute.xlu0 %5894
    %5896 = vrot.lane.b32.xlu0 %v5878, 1
    %v5897 = vpop.permute.xlu0 %5896
    %5898 = vrot.lane.b32.xlu0 %v5879, 1
    %v5899 = vpop.permute.xlu0 %5898
    %5900 = vrot.lane.b32.xlu0 %v5880, 1
    %v5901 = vpop.permute.xlu0 %5900
    %v5902 = vsel %vm236, %v5889, %v5891
    %v5903 = vsel %vm236, %v5891, %v5893
    %v5904 = vsel %vm236, %v5893, %v5895
    %v5905 = vsel %vm236, %v5895, %v5897
    %v5906 = vsel %vm236, %v5897, %v5899
    %v5907 = vsel %vm236, %v5899, %v5901
    %5914 = vst [vmem:[#allocation4 + $0x90] sm:$0xff] %v5902
    %5915 = vst [vmem:[#allocation4 + $0x98] sm:$0xff] %v5903
    %5916 = vst [vmem:[#allocation4 + $0xa0] sm:$0xff] %v5904
    %5917 = vst [vmem:[#allocation4 + $0xa8] sm:$0xff] %v5905
    %5918 = vst [vmem:[#allocation4 + $0xb0] sm:$0xff] %v5906
    %5919 = vst [vmem:[#allocation4 + $0xb8] sm:$0xff] %v5907
    %v5920 = vld [vmem:[#allocation2 + $0x8] sm:$0xff]
    %v5921 = vld [vmem:[#allocation2 + $0x10] sm:$0xff]
    %v5922 = vld [vmem:[#allocation2 + $0x18] sm:$0xff]
    %v5923 = vld [vmem:[#allocation2 + $0x20] sm:$0xff]
    %v5924 = vld [vmem:[#allocation2 + $0x28] sm:$0xff]
    %v5925 = vld [vmem:[#allocation2 + $0x30] sm:$0xff]
    %5926 = vst [vmem:[#allocation4 + $0xc0] sm:$0xff] %v5920
    %5927 = vst [vmem:[#allocation4 + $0xc8] sm:$0xff] %v5921
    %5928 = vst [vmem:[#allocation4 + $0xd0] sm:$0xff] %v5922
    %5929 = vst [vmem:[#allocation4 + $0xd8] sm:$0xff] %v5923
    %5930 = vst [vmem:[#allocation4 + $0xe0] sm:$0xff] %v5924
    %5931 = vst [vmem:[#allocation4 + $0xe8] sm:$0xff] %v5925
    %v5932 = vld [vmem:[#allocation2 + $0x8] sm:$0xff]
    %v5933 = vld [vmem:[#allocation2 + $0x10] sm:$0xff]
    %v5934 = vld [vmem:[#allocation2 + $0x18] sm:$0xff]
    %v5935 = vld [vmem:[#allocation2 + $0x20] sm:$0xff]
    %v5936 = vld [vmem:[#allocation2 + $0x28] sm:$0xff]
    %v5937 = vld [vmem:[#allocation2 + $0x30] sm:$0xff]
    %v5938 = vld [vmem:[#allocation2 + $0x38] sm:$0xff]
    %5946 = vrot.lane.b32.xlu0 %v5932, 127
    %v5947 = vpop.permute.xlu0 %5946
    %5948 = vrot.lane.b32.xlu0 %v5933, 127
    %v5949 = vpop.permute.xlu0 %5948
    %5950 = vrot.lane.b32.xlu0 %v5934, 127
    %v5951 = vpop.permute.xlu0 %5950
    %5952 = vrot.lane.b32.xlu0 %v5935, 127
    %v5953 = vpop.permute.xlu0 %5952
    %5954 = vrot.lane.b32.xlu0 %v5936, 127
    %v5955 = vpop.permute.xlu0 %5954
    %5956 = vrot.lane.b32.xlu0 %v5937, 127
    %v5957 = vpop.permute.xlu0 %5956
    %5958 = vrot.lane.b32.xlu0 %v5938, 127
    %v5959 = vpop.permute.xlu0 %5958
    %v5960 = vsel %vm295, %v5947, %v5949
    %v5961 = vsel %vm295, %v5949, %v5951
    %v5962 = vsel %vm295, %v5951, %v5953
    %v5963 = vsel %vm295, %v5953, %v5955
    %v5964 = vsel %vm295, %v5955, %v5957
    %v5965 = vsel %vm295, %v5957, %v5959
    %5972 = vst [vmem:[#allocation4 + $0xf0] sm:$0xff] %v5960
    %5973 = vst [vmem:[#allocation4 + $0xf8] sm:$0xff] %v5961
    %5974 = vst [vmem:[#allocation4 + $0x100] sm:$0xff] %v5962
    %5975 = vst [vmem:[#allocation4 + $0x108] sm:$0xff] %v5963
    %5976 = vst [vmem:[#allocation4 + $0x110] sm:$0xff] %v5964
    %5977 = vst [vmem:[#allocation4 + $0x118] sm:$0xff] %v5965
    %v5978 = vld [vmem:[#allocation2 + $0x8] sm:$0xff]
    %v5979 = vld [vmem:[#allocation2 + $0x10] sm:$0xff]
    %v5980 = vld [vmem:[#allocation2 + $0x18] sm:$0xff]
    %v5981 = vld [vmem:[#allocation2 + $0x20] sm:$0xff]
    %v5982 = vld [vmem:[#allocation2 + $0x28] sm:$0xff]
    %v5983 = vld [vmem:[#allocation2 + $0x30] sm:$0xff]
    %v5984 = vld [vmem:[#allocation2 + $0x38] sm:$0xff]
    %5992 = vrot.lane.b32.xlu0 %v5978, 111
    %v5993 = vpop.permute.xlu0 %5992
    %5994 = vrot.lane.b32.xlu0 %v5979, 111
    %v5995 = vpop.permute.xlu0 %5994
    %5996 = vrot.lane.b32.xlu0 %v5980, 111
    %v5997 = vpop.permute.xlu0 %5996
    %5998 = vrot.lane.b32.xlu0 %v5981, 111
    %v5999 = vpop.permute.xlu0 %5998
    %6000 = vrot.lane.b32.xlu0 %v5982, 111
    %v6001 = vpop.permute.xlu0 %6000
    %6002 = vrot.lane.b32.xlu0 %v5983, 111
    %v6003 = vpop.permute.xlu0 %6002
    %6004 = vrot.lane.b32.xlu0 %v5984, 111
    %v6005 = vpop.permute.xlu0 %6004
    %v6006 = vsel %vm342, %v5993, %v5995
    %v6007 = vsel %vm342, %v5995, %v5997
    %v6008 = vsel %vm342, %v5997, %v5999
    %v6009 = vsel %vm342, %v5999, %v6001
    %v6010 = vsel %vm342, %v6001, %v6003
    %v6011 = vsel %vm342, %v6003, %v6005
    %6018 = vst [vmem:[#allocation4 + $0x120] sm:$0xff] %v6006
    %6019 = vst [vmem:[#allocation4 + $0x128] sm:$0xff] %v6007
    %6020 = vst [vmem:[#allocation4 + $0x130] sm:$0xff] %v6008
    %6021 = vst [vmem:[#allocation4 + $0x138] sm:$0xff] %v6009
    %6022 = vst [vmem:[#allocation4 + $0x140] sm:$0xff] %v6010
    %6023 = vst [vmem:[#allocation4 + $0x148] sm:$0xff] %v6011
    %v6024 = vld [vmem:[#allocation2 + $0x8] sm:$0xff]
    %v6025 = vld [vmem:[#allocation2 + $0x10] sm:$0xff]
    %v6026 = vld [vmem:[#allocation2 + $0x18] sm:$0xff]
    %v6027 = vld [vmem:[#allocation2 + $0x20] sm:$0xff]
    %v6028 = vld [vmem:[#allocation2 + $0x28] sm:$0xff]
    %v6029 = vld [vmem:[#allocation2 + $0x30] sm:$0xff]
    %v6030 = vld [vmem:[#allocation2 + $0x38] sm:$0xff]
    %6038 = vrot.lane.b32.xlu0 %v6024, 110
    %v6039 = vpop.permute.xlu0 %6038
    %6040 = vrot.lane.b32.xlu0 %v6025, 110
    %v6041 = vpop.permute.xlu0 %6040
    %6042 = vrot.lane.b32.xlu0 %v6026, 110
    %v6043 = vpop.permute.xlu0 %6042
    %6044 = vrot.lane.b32.xlu0 %v6027, 110
    %v6045 = vpop.permute.xlu0 %6044
    %6046 = vrot.lane.b32.xlu0 %v6028, 110
    %v6047 = vpop.permute.xlu0 %6046
    %6048 = vrot.lane.b32.xlu0 %v6029, 110
    %v6049 = vpop.permute.xlu0 %6048
    %6050 = vrot.lane.b32.xlu0 %v6030, 110
    %v6051 = vpop.permute.xlu0 %6050
    %v6052 = vsel %vm389, %v6039, %v6041
    %v6053 = vsel %vm389, %v6041, %v6043
    %v6054 = vsel %vm389, %v6043, %v6045
    %v6055 = vsel %vm389, %v6045, %v6047
    %v6056 = vsel %vm389, %v6047, %v6049
    %v6057 = vsel %vm389, %v6049, %v6051
    %6064 = vst [vmem:[#allocation4 + $0x150] sm:$0xff] %v6052
    %6065 = vst [vmem:[#allocation4 + $0x158] sm:$0xff] %v6053
    %6066 = vst [vmem:[#allocation4 + $0x160] sm:$0xff] %v6054
    %6067 = vst [vmem:[#allocation4 + $0x168] sm:$0xff] %v6055
    %6068 = vst [vmem:[#allocation4 + $0x170] sm:$0xff] %v6056
    %6069 = vst [vmem:[#allocation4 + $0x178] sm:$0xff] %v6057
    %v6070 = vld [vmem:[#allocation2 + $0x8] sm:$0xff]
    %v6071 = vld [vmem:[#allocation2 + $0x10] sm:$0xff]
    %v6072 = vld [vmem:[#allocation2 + $0x18] sm:$0xff]
    %v6073 = vld [vmem:[#allocation2 + $0x20] sm:$0xff]
    %v6074 = vld [vmem:[#allocation2 + $0x28] sm:$0xff]
    %v6075 = vld [vmem:[#allocation2 + $0x30] sm:$0xff]
    %v6076 = vld [vmem:[#allocation2 + $0x38] sm:$0xff]
    %6084 = vrot.lane.b32.xlu0 %v6070, 109
    %v6085 = vpop.permute.xlu0 %6084
    %6086 = vrot.lane.b32.xlu0 %v6071, 109
    %v6087 = vpop.permute.xlu0 %6086
    %6088 = vrot.lane.b32.xlu0 %v6072, 109
    %v6089 = vpop.permute.xlu0 %6088
    %6090 = vrot.lane.b32.xlu0 %v6073, 109
    %v6091 = vpop.permute.xlu0 %6090
    %6092 = vrot.lane.b32.xlu0 %v6074, 109
    %v6093 = vpop.permute.xlu0 %6092
    %6094 = vrot.lane.b32.xlu0 %v6075, 109
    %v6095 = vpop.permute.xlu0 %6094
    %6096 = vrot.lane.b32.xlu0 %v6076, 109
    %v6097 = vpop.permute.xlu0 %6096
    %v6098 = vsel %vm436, %v6085, %v6087
    %v6099 = vsel %vm436, %v6087, %v6089
    %v6100 = vsel %vm436, %v6089, %v6091
    %v6101 = vsel %vm436, %v6091, %v6093
    %v6102 = vsel %vm436, %v6093, %v6095
    %v6103 = vsel %vm436, %v6095, %v6097
    %6110 = vst [vmem:[#allocation4 + $0x180] sm:$0xff] %v6098
    %6111 = vst [vmem:[#allocation4 + $0x188] sm:$0xff] %v6099
    %6112 = vst [vmem:[#allocation4 + $0x190] sm:$0xff] %v6100
    %6113 = vst [vmem:[#allocation4 + $0x198] sm:$0xff] %v6101
    %6114 = vst [vmem:[#allocation4 + $0x1a0] sm:$0xff] %v6102
    %6115 = vst [vmem:[#allocation4 + $0x1a8] sm:$0xff] %v6103
    %v6116 = vld [vmem:[%s5] sm:$0xf]
    %v6117 = vld [vmem:[#allocation4] sm:$0xff]
    %v6118 = vld [vmem:[#allocation4 + $0x8] sm:$0xff]
    %v6119 = vld [vmem:[#allocation4 + $0x10] sm:$0xff]
    %v6120 = vld [vmem:[#allocation4 + $0x18] sm:$0xff]
    %v6121 = vld [vmem:[#allocation4 + $0x20] sm:$0xff]
    %v6122 = vld [vmem:[#allocation4 + $0x28] sm:$0xff]
    %v6123 = vld [vmem:[#allocation4 + $0x30] sm:$0xff]
    %v6124 = vld [vmem:[#allocation4 + $0x38] sm:$0xff]
    %v6125 = vld [vmem:[#allocation4 + $0x40] sm:$0xff]
    %v6126 = vld [vmem:[#allocation4 + $0x48] sm:$0xff]
    %v6127 = vld [vmem:[#allocation4 + $0x50] sm:$0xff]
    %v6128 = vld [vmem:[#allocation4 + $0x58] sm:$0xff]
    %v6129 = vld [vmem:[#allocation4 + $0x60] sm:$0xff]
    %v6130 = vld [vmem:[#allocation4 + $0x68] sm:$0xff]
    %v6131 = vld [vmem:[#allocation4 + $0x70] sm:$0xff]
    %v6132 = vld [vmem:[#allocation4 + $0x78] sm:$0xff]
    %v6133 = vld [vmem:[#allocation4 + $0x80] sm:$0xff]
    %v6134 = vld [vmem:[#allocation4 + $0x88] sm:$0xff]
    %v6135 = vld [vmem:[#allocation4 + $0x90] sm:$0xff]
    %v6136 = vld [vmem:[#allocation4 + $0x98] sm:$0xff]
    %v6137 = vld [vmem:[#allocation4 + $0xa0] sm:$0xff]
    %v6138 = vld [vmem:[#allocation4 + $0xa8] sm:$0xff]
    %v6139 = vld [vmem:[#allocation4 + $0xb0] sm:$0xff]
    %v6140 = vld [vmem:[#allocation4 + $0xb8] sm:$0xff]
    %v6141 = vld [vmem:[#allocation4 + $0xc0] sm:$0xff]
    %v6142 = vld [vmem:[#allocation4 + $0xc8] sm:$0xff]
    %v6143 = vld [vmem:[#allocation4 + $0xd0] sm:$0xff]
    %v6144 = vld [vmem:[#allocation4 + $0xd8] sm:$0xff]
    %v6145 = vld [vmem:[#allocation4 + $0xe0] sm:$0xff]
    %v6146 = vld [vmem:[#allocation4 + $0xe8] sm:$0xff]
    %v6147 = vld [vmem:[#allocation4 + $0xf0] sm:$0xff]
    %v6148 = vld [vmem:[#allocation4 + $0xf8] sm:$0xff]
    %v6149 = vld [vmem:[#allocation4 + $0x100] sm:$0xff]
    %v6150 = vld [vmem:[#allocation4 + $0x108] sm:$0xff]
    %v6151 = vld [vmem:[#allocation4 + $0x110] sm:$0xff]
    %v6152 = vld [vmem:[#allocation4 + $0x118] sm:$0xff]
    %v6153 = vld [vmem:[#allocation4 + $0x120] sm:$0xff]
    %v6154 = vld [vmem:[#allocation4 + $0x128] sm:$0xff]
    %v6155 = vld [vmem:[#allocation4 + $0x130] sm:$0xff]
    %v6156 = vld [vmem:[#allocation4 + $0x138] sm:$0xff]
    %v6157 = vld [vmem:[#allocation4 + $0x140] sm:$0xff]
    %v6158 = vld [vmem:[#allocation4 + $0x148] sm:$0xff]
    %v6159 = vld [vmem:[#allocation4 + $0x150] sm:$0xff]
    %v6160 = vld [vmem:[#allocation4 + $0x158] sm:$0xff]
    %v6161 = vld [vmem:[#allocation4 + $0x160] sm:$0xff]
    %v6162 = vld [vmem:[#allocation4 + $0x168] sm:$0xff]
    %v6163 = vld [vmem:[#allocation4 + $0x170] sm:$0xff]
    %v6164 = vld [vmem:[#allocation4 + $0x178] sm:$0xff]
    %v6165 = vld [vmem:[#allocation4 + $0x180] sm:$0xff]
    %v6166 = vld [vmem:[#allocation4 + $0x188] sm:$0xff]
    %v6167 = vld [vmem:[#allocation4 + $0x190] sm:$0xff]
    %v6168 = vld [vmem:[#allocation4 + $0x198] sm:$0xff]
    %v6169 = vld [vmem:[#allocation4 + $0x1a0] sm:$0xff]
    %v6170 = vld [vmem:[#allocation4 + $0x1a8] sm:$0xff]
    %v6171 = vpack.c.bf16 %v6123, %v6117
    %v6172 = vpack.c.bf16 %v6124, %v6118
    %v6173 = vpack.c.bf16 %v6125, %v6119
    %v6174 = vpack.c.bf16 %v6126, %v6120
    %v6175 = vpack.c.bf16 %v6127, %v6121
    %v6176 = vpack.c.bf16 %v6128, %v6122
    %v6177 = vpack.c.bf16 %v6135, %v6129
    %v6178 = vpack.c.bf16 %v6136, %v6130
    %v6179 = vpack.c.bf16 %v6137, %v6131
    %v6180 = vpack.c.bf16 %v6138, %v6132
    %v6181 = vpack.c.bf16 %v6139, %v6133
    %v6182 = vpack.c.bf16 %v6140, %v6134
    %v6183 = vpack.c.bf16 %v6147, %v6141
    %v6184 = vpack.c.bf16 %v6148, %v6142
    %v6185 = vpack.c.bf16 %v6149, %v6143
    %v6186 = vpack.c.bf16 %v6150, %v6144
    %v6187 = vpack.c.bf16 %v6151, %v6145
    %v6188 = vpack.c.bf16 %v6152, %v6146
    %v6189 = vpack.c.bf16 %v6159, %v6153
    %v6190 = vpack.c.bf16 %v6160, %v6154
    %v6191 = vpack.c.bf16 %v6161, %v6155
    %v6192 = vpack.c.bf16 %v6162, %v6156
    %v6193 = vpack.c.bf16 %v6163, %v6157
    %v6194 = vpack.c.bf16 %v6164, %v6158
    %v6195 = vpack.c.bf16 %v6165, %v6165
    %v6196 = vpack.c.bf16 %v6166, %v6166
    %v6197 = vpack.c.bf16 %v6167, %v6167
    %v6198 = vpack.c.bf16 %v6168, %v6168
    %v6199 = vpack.c.bf16 %v6169, %v6169
    %v6200 = vpack.c.bf16 %v6170, %v6170
    %v6202 = vsel %vm545, %v6116, 0
    %v6205 = vsel %vm549, %v6195, 0
    %v6208 = vsel %vm549, %v6196, 0
    %v6211 = vsel %vm549, %v6197, 0
    %v6214 = vsel %vm549, %v6198, 0
    %v6217 = vsel %vm549, %v6199, 0
    %v6220 = vsel %vm549, %v6200, 0
    %6222 = vmatprep.subr.bf16.mxu0 %v6172
    %6223 = vmatpush1.bf16.msra.mxu0 %v6171
    %6224 = vmatprep.subr.bf16.mxu0 %v6178
    %6225 = vmatpush1.bf16.msra.mxu0 %v6177
    %6226 = vmatprep.subr.bf16.mxu0 %v6184
    %6227 = vmatpush1.bf16.msra.mxu0 %v6183
    %6228 = vmatprep.subr.bf16.mxu0 %v6190
    %6229 = vmatpush1.bf16.msra.mxu0 %v6189
    %6230 = vmatprep.subr.bf16.mxu0 %v6208
    %6231 = vmatpush1.bf16.msra.mxu0 %v6205
    %6232 = vmatprep.subr.bf16.mxu0 0
    %6233 = vmatpush1.bf16.msra.mxu0 0
    %6234 = vmatprep.subr.bf16.mxu0 0
    %6235 = vmatpush1.bf16.msra.mxu0 0
    %6236 = vmatprep.subr.bf16.mxu0 0
    %6237 = vmatpush1.bf16.msra.mxu0 0
    %6238 = vmatprep.subr.bf16.mxu0 0
    %6239 = vmatpush1.bf16.msra.mxu0 0
    %6240 = vmatprep.subr.bf16.mxu0 0
    %6241 = vmatpush1.bf16.msra.mxu0 0
    %6242 = vmatprep.subr.bf16.mxu0 0
    %6243 = vmatpush1.bf16.msra.mxu0 0
    %6244 = vmatprep.subr.bf16.mxu0 0
    %6245 = vmatpush1.bf16.msra.mxu0 0
    %6246 = vmatprep.subr.bf16.mxu0 0
    %6247 = vmatpush1.bf16.msra.mxu0 0
    %6248 = vmatprep.subr.bf16.mxu0 0
    %6249 = vmatpush1.bf16.msra.mxu0 0
    %6250 = vmatprep.subr.bf16.mxu0 0
    %6251 = vmatpush1.bf16.msra.mxu0 0
    %6252 = vmatprep.subr.bf16.mxu0 0
    %6253 = vmatpush1.bf16.msra.mxu0 0
    %6254 = vmatprep.mubr.bf16.mxu0 0
    %6255 = vmatmul.mubr.bf16.gmra.mrb[0].mxu0 %v6202
    %v6256 = vpop.f32.mrb[0].mxu0
    %v6257 = vadd.f32 %v2425, %v6256
    %v6258 = vpop.f32.mrb[0].mxu0
    %v6259 = vadd.f32 %v2425, %v6258
    %v6260 = vpop.f32.mrb[0].mxu0
    %v6261 = vpop.f32.mrb[0].mxu0
    %6262 = vdwg.mxu0
    %6263 = vmatprep.subr.bf16.mxu0 %v6174
    %6264 = vmatpush1.bf16.msra.mxu0 %v6173
    %6265 = vmatprep.subr.bf16.mxu0 %v6180
    %6266 = vmatpush1.bf16.msra.mxu0 %v6179
    %6267 = vmatprep.subr.bf16.mxu0 %v6186
    %6268 = vmatpush1.bf16.msra.mxu0 %v6185
    %6269 = vmatprep.subr.bf16.mxu0 %v6192
    %6270 = vmatpush1.bf16.msra.mxu0 %v6191
    %6271 = vmatprep.subr.bf16.mxu0 %v6214
    %6272 = vmatpush1.bf16.msra.mxu0 %v6211
    %6273 = vmatprep.subr.bf16.mxu0 0
    %6274 = vmatpush1.bf16.msra.mxu0 0
    %6275 = vmatprep.subr.bf16.mxu0 0
    %6276 = vmatpush1.bf16.msra.mxu0 0
    %6277 = vmatprep.subr.bf16.mxu0 0
    %6278 = vmatpush1.bf16.msra.mxu0 0
    %6279 = vmatprep.subr.bf16.mxu0 0
    %6280 = vmatpush1.bf16.msra.mxu0 0
    %6281 = vmatprep.subr.bf16.mxu0 0
    %6282 = vmatpush1.bf16.msra.mxu0 0
    %6283 = vmatprep.subr.bf16.mxu0 0
    %6284 = vmatpush1.bf16.msra.mxu0 0
    %6285 = vmatprep.subr.bf16.mxu0 0
    %6286 = vmatpush1.bf16.msra.mxu0 0
    %6287 = vmatprep.subr.bf16.mxu0 0
    %6288 = vmatpush1.bf16.msra.mxu0 0
    %6289 = vmatprep.subr.bf16.mxu0 0
    %6290 = vmatpush1.bf16.msra.mxu0 0
    %6291 = vmatprep.subr.bf16.mxu0 0
    %6292 = vmatpush1.bf16.msra.mxu0 0
    %6293 = vmatprep.subr.bf16.mxu0 0
    %6294 = vmatpush1.bf16.msra.mxu0 0
    %6295 = vmatprep.mubr.bf16.mxu0 0
    %6296 = vmatmul.mubr.bf16.gmra.mrb[0].mxu0 %v6202
    %v6297 = vpop.f32.mrb[0].mxu0
    %v6298 = vadd.f32 %v2425, %v6297
    %v6299 = vpop.f32.mrb[0].mxu0
    %v6300 = vadd.f32 %v2425, %v6299
    %v6301 = vpop.f32.mrb[0].mxu0
    %v6302 = vpop.f32.mrb[0].mxu0
    %6303 = vdwg.mxu0
    %6304 = vmatprep.subr.bf16.mxu0 %v6176
    %6305 = vmatpush1.bf16.msra.mxu0 %v6175
    %6306 = vmatprep.subr.bf16.mxu0 %v6182
    %6307 = vmatpush1.bf16.msra.mxu0 %v6181
    %6308 = vmatprep.subr.bf16.mxu0 %v6188
    %6309 = vmatpush1.bf16.msra.mxu0 %v6187
    %6310 = vmatprep.subr.bf16.mxu0 %v6194
    %6311 = vmatpush1.bf16.msra.mxu0 %v6193
    %6312 = vmatprep.subr.bf16.mxu0 %v6220
    %6313 = vmatpush1.bf16.msra.mxu0 %v6217
    %6314 = vmatprep.subr.bf16.mxu0 0
    %6315 = vmatpush1.bf16.msra.mxu0 0
    %6316 = vmatprep.subr.bf16.mxu0 0
    %6317 = vmatpush1.bf16.msra.mxu0 0
    %6318 = vmatprep.subr.bf16.mxu0 0
    %6319 = vmatpush1.bf16.msra.mxu0 0
    %6320 = vmatprep.subr.bf16.mxu0 0
    %6321 = vmatpush1.bf16.msra.mxu0 0
    %6322 = vmatprep.subr.bf16.mxu0 0
    %6323 = vmatpush1.bf16.msra.mxu0 0
    %6324 = vmatprep.subr.bf16.mxu0 0
    %6325 = vmatpush1.bf16.msra.mxu0 0
    %6326 = vmatprep.subr.bf16.mxu0 0
    %6327 = vmatpush1.bf16.msra.mxu0 0
    %6328 = vmatprep.subr.bf16.mxu0 0
    %6329 = vmatpush1.bf16.msra.mxu0 0
    %6330 = vmatprep.subr.bf16.mxu0 0
    %6331 = vmatpush1.bf16.msra.mxu0 0
    %6332 = vmatprep.subr.bf16.mxu0 0
    %6333 = vmatpush1.bf16.msra.mxu0 0
    %6334 = vmatprep.subr.bf16.mxu0 0
    %6335 = vmatpush1.bf16.msra.mxu0 0
    %6336 = vmatprep.mubr.bf16.mxu0 0
    %6337 = vmatmul.mubr.bf16.gmra.mrb[0].mxu0 %v6202
    %v6338 = vpop.f32.mrb[0].mxu0
    %v6339 = vadd.f32 %v2425, %v6338
    %v6340 = vpop.f32.mrb[0].mxu0
    %v6341 = vadd.f32 %v2425, %v6340
    %v6342 = vpop.f32.mrb[0].mxu0
    %v6343 = vpop.f32.mrb[0].mxu0
    %6344 = vdwg.mxu0
    %v6345 = vtanh.pop %v6257
    %v6346 = vtanh.pop %v6259
    %v6347 = vtanh.pop %v6298
    %v6348 = vtanh.pop %v6300
    %v6349 = vtanh.pop %v6339
    %v6350 = vtanh.pop %v6341
    %v6351 = vmul.f32 %v59, %v6345
    %v6352 = vmul.f32 %v60, %v6346
    %v6353 = vmul.f32 %v61, %v6347
    %v6354 = vmul.f32 %v62, %v6348
    %v6355 = vmul.f32 %v63, %v6349
    %v6356 = vmul.f32 %v64, %v6350
    %6357 = vst [vmem:[#allocation3 + $0x8] sm:$0xff] %v6351
    %6358 = vst [vmem:[#allocation3 + $0x10] sm:$0xff] %v6352
    %6359 = vst [vmem:[#allocation3 + $0x18] sm:$0xff] %v6353
    %6360 = vst [vmem:[#allocation3 + $0x20] sm:$0xff] %v6354
    %6361 = vst [vmem:[#allocation3 + $0x28] sm:$0xff] %v6355
    %6362 = vst [vmem:[#allocation3 + $0x30] sm:$0xff] %v6356
    %v6363 = vld [vmem:[%s9] sm:$0x1]
    %v6364 = vld [vmem:[%s11] sm:$0x1]
    %v6365 = vld [vmem:[%s10] sm:$0xff]
    %v6366 = vld [vmem:[%s10 + $0x8] sm:$0xff]
    %v6367 = vld [vmem:[%s10 + $0x10] sm:$0xff]
    %v6368 = vld [vmem:[%s10 + $0x18] sm:$0xff]
    %s6369 = scalar_lea.vmem [#allocation2], 8
    %v6370 = vld [vmem:[%s6369] ss:$8 sm:$0x7]
    %v6371 = vld [vmem:[%s8] sm:$0xff]
    %v6372 = vld [vmem:[%s8 + $0x8] sm:$0xff]
    %v6373 = vld [vmem:[%s8 + $0x10] sm:$0xff]
    %v6374 = vld [vmem:[%s8 + $0x18] sm:$0xff]
    %v6375 = vld [vmem:[%s8 + $0x20] sm:$0xff]
    %v6376 = vld [vmem:[%s8 + $0x28] sm:$0xff]
    %v6377 = vld [vmem:[%s8 + $0x30] sm:$0xff]
    %v6378 = vld [vmem:[%s8 + $0x38] sm:$0xff]
    %v6379 = vld [vmem:[%s8 + $0x40] sm:$0xff]
    %v6380 = vld [vmem:[%s8 + $0x48] sm:$0xff]
    %v6381 = vld [vmem:[%s8 + $0x50] sm:$0xff]
    %v6382 = vld [vmem:[%s8 + $0x58] sm:$0xff]
    %v6383 = vld [vmem:[%s8 + $0x60] sm:$0xff]
    %v6384 = vld [vmem:[%s8 + $0x68] sm:$0xff]
    %v6385 = vld [vmem:[%s8 + $0x70] sm:$0xff]
    %v6386 = vld [vmem:[%s8 + $0x78] sm:$0xff]
    %v6387 = vld [vmem:[%s8 + $0x80] sm:$0xff]
    %v6388 = vld [vmem:[%s8 + $0x88] sm:$0xff]
    %v6389 = vld [vmem:[%s8 + $0x90] sm:$0xff]
    %v6390 = vld [vmem:[%s8 + $0x98] sm:$0xff]
    %v6391 = vld [vmem:[%s8 + $0xa0] sm:$0xff]
    %v6392 = vld [vmem:[%s8 + $0xa8] sm:$0xff]
    %v6393 = vld [vmem:[%s8 + $0xb0] sm:$0xff]
    %v6394 = vld [vmem:[%s8 + $0xb8] sm:$0xff]
    %v6395 = vld [vmem:[%s8 + $0xc0] sm:$0xff]
    %v6396 = vld [vmem:[%s8 + $0xc8] sm:$0xff]
    %v6397 = vld [vmem:[%s8 + $0xd0] sm:$0xff]
    %v6398 = vld [vmem:[%s8 + $0xd8] sm:$0xff]
    %v6399 = vld [vmem:[%s8 + $0xe0] sm:$0xff]
    %v6400 = vld [vmem:[%s8 + $0xe8] sm:$0xff]
    %v6401 = vld [vmem:[%s8 + $0xf0] sm:$0xff]
    %v6402 = vld [vmem:[%s8 + $0xf8] sm:$0xff]
    %v6403 = vld [vmem:[%s8 + $0x100] sm:$0xff]
    %v6404 = vld [vmem:[%s8 + $0x108] sm:$0xff]
    %v6405 = vld [vmem:[%s8 + $0x110] sm:$0xff]
    %v6406 = vld [vmem:[%s8 + $0x118] sm:$0xff]
    %v6407 = vld [vmem:[%s8 + $0x120] sm:$0xff]
    %v6408 = vld [vmem:[%s8 + $0x128] sm:$0xff]
    %v6409 = vld [vmem:[%s8 + $0x130] sm:$0xff]
    %v6410 = vld [vmem:[%s8 + $0x138] sm:$0xff]
    %v6411 = vld [vmem:[%s8 + $0x140] sm:$0xff]
    %v6412 = vld [vmem:[%s8 + $0x148] sm:$0xff]
    %v6413 = vld [vmem:[%s8 + $0x150] sm:$0xff]
    %v6414 = vld [vmem:[%s8 + $0x158] sm:$0xff]
    %v6415 = vld [vmem:[%s8 + $0x160] sm:$0xff]
    %v6416 = vld [vmem:[%s8 + $0x168] sm:$0xff]
    %v6417 = vld [vmem:[%s8 + $0x170] sm:$0xff]
    %v6418 = vld [vmem:[%s8 + $0x178] sm:$0xff]
    %v6420 = vlaneseq
    %v6421 = vshrl.u32 %v6420, 7
    %v6422 = vsub.s32 0, %v6421
    %v6423 = vrot.slane %v6370, %v6422
    %v6424 = vlaneseq
    %v6425 = vshrl.u32 %v6424, 7
    %v6426 = vsub.s32 1, %v6425
    %v6427 = vrot.slane %v6370, %v6426
    %v6428 = vlaneseq
    %v6429 = vshrl.u32 %v6428, 7
    %v6430 = vsub.s32 2, %v6429
    %v6431 = vrot.slane %v6370, %v6430
    %6435 = vmatprep.subr.mxu0 0.0
    %6436 = vmatpush1.msra.mxu0 %v6371
    %6437 = vmatprep.subr.mxu0 0.0
    %6438 = vmatpush1.msra.mxu0 %v6372
    %6439 = vmatprep.subr.mxu0 0.0
    %6440 = vmatpush1.msra.mxu0 %v6373
    %6441 = vmatprep.subr.mxu0 0.0
    %6442 = vmatpush1.msra.mxu0 %v6374
    %6443 = vmatprep.subr.mxu0 0.0
    %6444 = vmatpush1.msra.mxu0 %v6375
    %6445 = vmatprep.subr.mxu0 0.0
    %6446 = vmatpush1.msra.mxu0 %v6376
    %6447 = vmatprep.subr.mxu0 0.0
    %6448 = vmatpush1.msra.mxu0 %v6377
    %6449 = vmatprep.subr.mxu0 0.0
    %6450 = vmatpush1.msra.mxu0 %v6378
    %6451 = vmatprep.subr.mxu0 0.0
    %6452 = vmatpush1.msra.mxu0 %v6379
    %6453 = vmatprep.subr.mxu0 0.0
    %6454 = vmatpush1.msra.mxu0 %v6380
    %6455 = vmatprep.subr.mxu0 0.0
    %6456 = vmatpush1.msra.mxu0 %v6381
    %6457 = vmatprep.subr.mxu0 0.0
    %6458 = vmatpush1.msra.mxu0 %v6382
    %6459 = vmatprep.subr.mxu0 0.0
    %6460 = vmatpush1.msra.mxu0 %v6383
    %6461 = vmatprep.subr.mxu0 0.0
    %6462 = vmatpush1.msra.mxu0 %v6384
    %6463 = vmatprep.subr.mxu0 0.0
    %6464 = vmatpush1.msra.mxu0 %v6385
    %6465 = vmatprep.subr.mxu0 0.0
    %6466 = vmatpush1.msra.mxu0 %v6386
    %6467 = vmatprep.subr.mxu0 0.0
    %6468 = vmatpush1.msra.mxu0 %v6387
    %6469 = vmatprep.subr.mxu0 0.0
    %6470 = vmatpush1.msra.mxu0 %v6388
    %6471 = vmatprep.subr.mxu0 0.0
    %6472 = vmatpush1.msra.mxu0 %v6389
    %6473 = vmatprep.subr.mxu0 0.0
    %6474 = vmatpush1.msra.mxu0 %v6390
    %6475 = vmatprep.subr.mxu0 0.0
    %6476 = vmatpush1.msra.mxu0 %v6391
    %6477 = vmatprep.subr.mxu0 0.0
    %6478 = vmatpush1.msra.mxu0 %v6392
    %6479 = vmatprep.subr.mxu0 0.0
    %6480 = vmatpush1.msra.mxu0 %v6393
    %6481 = vmatprep.subr.mxu0 0.0
    %6482 = vmatpush1.msra.mxu0 %v6394
    %6483 = vmatprep.subr.mxu0 0.0
    %6484 = vmatpush1.msra.mxu0 %v6395
    %6485 = vmatprep.subr.mxu0 0.0
    %6486 = vmatpush1.msra.mxu0 %v6396
    %6487 = vmatprep.subr.mxu0 0.0
    %6488 = vmatpush1.msra.mxu0 %v6397
    %6489 = vmatprep.subr.mxu0 0.0
    %6490 = vmatpush1.msra.mxu0 %v6398
    %6491 = vmatprep.subr.mxu0 0.0
    %6492 = vmatpush1.msra.mxu0 %v6399
    %6493 = vmatprep.subr.mxu0 0.0
    %6494 = vmatpush1.msra.mxu0 %v6400
    %6495 = vmatprep.subr.mxu0 0.0
    %6496 = vmatpush1.msra.mxu0 %v6401
    %6497 = vmatprep.subr.mxu0 0.0
    %6498 = vmatpush1.msra.mxu0 %v6402
    %6499 = vmatprep.mubr.f32.mxu0 %v6427
    %6500 = vmatmul.mubr.f32.gmra.mrb[0].mxu0 %v6423
    %v6501 = vpop.f32.mrb[0].mxu0
    %v6502 = vadd.f32 0.0, %v6501
    %v6503 = vpop.f32.mrb[0].mxu0
    %6504 = vdwg.mxu0
    %6505 = vmatprep.subr.mxu0 0.0
    %6506 = vmatpush1.msra.mxu0 %v6403
    %6507 = vmatprep.subr.mxu0 0.0
    %6508 = vmatpush1.msra.mxu0 %v6404
    %6509 = vmatprep.subr.mxu0 0.0
    %6510 = vmatpush1.msra.mxu0 %v6405
    %6511 = vmatprep.subr.mxu0 0.0
    %6512 = vmatpush1.msra.mxu0 %v6406
    %6513 = vmatprep.subr.mxu0 0.0
    %6514 = vmatpush1.msra.mxu0 %v6407
    %6515 = vmatprep.subr.mxu0 0.0
    %6516 = vmatpush1.msra.mxu0 %v6408
    %6517 = vmatprep.subr.mxu0 0.0
    %6518 = vmatpush1.msra.mxu0 %v6409
    %6519 = vmatprep.subr.mxu0 0.0
    %6520 = vmatpush1.msra.mxu0 %v6410
    %6521 = vmatprep.subr.mxu0 0.0
    %6522 = vmatpush1.msra.mxu0 %v6411
    %6523 = vmatprep.subr.mxu0 0.0
    %6524 = vmatpush1.msra.mxu0 %v6412
    %6525 = vmatprep.subr.mxu0 0.0
    %6526 = vmatpush1.msra.mxu0 %v6413
    %6527 = vmatprep.subr.mxu0 0.0
    %6528 = vmatpush1.msra.mxu0 %v6414
    %6529 = vmatprep.subr.mxu0 0.0
    %6530 = vmatpush1.msra.mxu0 %v6415
    %6531 = vmatprep.subr.mxu0 0.0
    %6532 = vmatpush1.msra.mxu0 %v6416
    %6533 = vmatprep.subr.mxu0 0.0
    %6534 = vmatpush1.msra.mxu0 %v6417
    %6535 = vmatprep.subr.mxu0 0.0
    %6536 = vmatpush1.msra.mxu0 %v6418
    %6537 = vmatprep.subr.mxu0 0.0
    %6538 = vmatpush1.msra.mxu0 0.0
    %6539 = vmatprep.subr.mxu0 0.0
    %6540 = vmatpush1.msra.mxu0 0.0
    %6541 = vmatprep.subr.mxu0 0.0
    %6542 = vmatpush1.msra.mxu0 0.0
    %6543 = vmatprep.subr.mxu0 0.0
    %6544 = vmatpush1.msra.mxu0 0.0
    %6545 = vmatprep.subr.mxu0 0.0
    %6546 = vmatpush1.msra.mxu0 0.0
    %6547 = vmatprep.subr.mxu0 0.0
    %6548 = vmatpush1.msra.mxu0 0.0
    %6549 = vmatprep.subr.mxu0 0.0
    %6550 = vmatpush1.msra.mxu0 0.0
    %6551 = vmatprep.subr.mxu0 0.0
    %6552 = vmatpush1.msra.mxu0 0.0
    %6553 = vmatprep.subr.mxu0 0.0
    %6554 = vmatpush1.msra.mxu0 0.0
    %6555 = vmatprep.subr.mxu0 0.0
    %6556 = vmatpush1.msra.mxu0 0.0
    %6557 = vmatprep.subr.mxu0 0.0
    %6558 = vmatpush1.msra.mxu0 0.0
    %6559 = vmatprep.subr.mxu0 0.0
    %6560 = vmatpush1.msra.mxu0 0.0
    %6561 = vmatprep.subr.mxu0 0.0
    %6562 = vmatpush1.msra.mxu0 0.0
    %6563 = vmatprep.subr.mxu0 0.0
    %6564 = vmatpush1.msra.mxu0 0.0
    %6565 = vmatprep.subr.mxu0 0.0
    %6566 = vmatpush1.msra.mxu0 0.0
    %6567 = vmatprep.subr.mxu0 0.0
    %6568 = vmatpush1.msra.mxu0 0.0
    %6569 = vmatprep.mubr.f32.mxu0 0.0
    %6570 = vmatmul.mubr.f32.gmra.mrb[0].mxu0 %v6431
    %v6571 = vpop.f32.mrb[0].mxu0
    %v6572 = vadd.f32 %v6502, %v6571
    %v6573 = vpop.f32.mrb[0].mxu0
    %6574 = vdwg.mxu0
    %v6575 = vadd.f32 %v6363, %v6572
    %s6576 = scalar_lea.vmem [#allocation2], 9
    %v6577 = vld [vmem:[%s6576] ss:$8 sm:$0x7]
    %v6578 = vld [vmem:[%s8 + $0x180] sm:$0xff]
    %v6579 = vld [vmem:[%s8 + $0x188] sm:$0xff]
    %v6580 = vld [vmem:[%s8 + $0x190] sm:$0xff]
    %v6581 = vld [vmem:[%s8 + $0x198] sm:$0xff]
    %v6582 = vld [vmem:[%s8 + $0x1a0] sm:$0xff]
    %v6583 = vld [vmem:[%s8 + $0x1a8] sm:$0xff]
    %v6584 = vld [vmem:[%s8 + $0x1b0] sm:$0xff]
    %v6585 = vld [vmem:[%s8 + $0x1b8] sm:$0xff]
    %v6586 = vld [vmem:[%s8 + $0x1c0] sm:$0xff]
    %v6587 = vld [vmem:[%s8 + $0x1c8] sm:$0xff]
    %v6588 = vld [vmem:[%s8 + $0x1d0] sm:$0xff]
    %v6589 = vld [vmem:[%s8 + $0x1d8] sm:$0xff]
    %v6590 = vld [vmem:[%s8 + $0x1e0] sm:$0xff]
    %v6591 = vld [vmem:[%s8 + $0x1e8] sm:$0xff]
    %v6592 = vld [vmem:[%s8 + $0x1f0] sm:$0xff]
    %v6593 = vld [vmem:[%s8 + $0x1f8] sm:$0xff]
    %v6594 = vld [vmem:[%s8 + $0x200] sm:$0xff]
    %v6595 = vld [vmem:[%s8 + $0x208] sm:$0xff]
    %v6596 = vld [vmem:[%s8 + $0x210] sm:$0xff]
    %v6597 = vld [vmem:[%s8 + $0x218] sm:$0xff]
    %v6598 = vld [vmem:[%s8 + $0x220] sm:$0xff]
    %v6599 = vld [vmem:[%s8 + $0x228] sm:$0xff]
    %v6600 = vld [vmem:[%s8 + $0x230] sm:$0xff]
    %v6601 = vld [vmem:[%s8 + $0x238] sm:$0xff]
    %v6602 = vld [vmem:[%s8 + $0x240] sm:$0xff]
    %v6603 = vld [vmem:[%s8 + $0x248] sm:$0xff]
    %v6604 = vld [vmem:[%s8 + $0x250] sm:$0xff]
    %v6605 = vld [vmem:[%s8 + $0x258] sm:$0xff]
    %v6606 = vld [vmem:[%s8 + $0x260] sm:$0xff]
    %v6607 = vld [vmem:[%s8 + $0x268] sm:$0xff]
    %v6608 = vld [vmem:[%s8 + $0x270] sm:$0xff]
    %v6609 = vld [vmem:[%s8 + $0x278] sm:$0xff]
    %v6610 = vld [vmem:[%s8 + $0x280] sm:$0xff]
    %v6611 = vld [vmem:[%s8 + $0x288] sm:$0xff]
    %v6612 = vld [vmem:[%s8 + $0x290] sm:$0xff]
    %v6613 = vld [vmem:[%s8 + $0x298] sm:$0xff]
    %v6614 = vld [vmem:[%s8 + $0x2a0] sm:$0xff]
    %v6615 = vld [vmem:[%s8 + $0x2a8] sm:$0xff]
    %v6616 = vld [vmem:[%s8 + $0x2b0] sm:$0xff]
    %v6617 = vld [vmem:[%s8 + $0x2b8] sm:$0xff]
    %v6618 = vld [vmem:[%s8 + $0x2c0] sm:$0xff]
    %v6619 = vld [vmem:[%s8 + $0x2c8] sm:$0xff]
    %v6620 = vld [vmem:[%s8 + $0x2d0] sm:$0xff]
    %v6621 = vld [vmem:[%s8 + $0x2d8] sm:$0xff]
    %v6622 = vld [vmem:[%s8 + $0x2e0] sm:$0xff]
    %v6623 = vld [vmem:[%s8 + $0x2e8] sm:$0xff]
    %v6624 = vld [vmem:[%s8 + $0x2f0] sm:$0xff]
    %v6625 = vld [vmem:[%s8 + $0x2f8] sm:$0xff]
    %v6627 = vlaneseq
    %v6628 = vshrl.u32 %v6627, 7
    %v6629 = vsub.s32 0, %v6628
    %v6630 = vrot.slane %v6577, %v6629
    %v6631 = vlaneseq
    %v6632 = vshrl.u32 %v6631, 7
    %v6633 = vsub.s32 1, %v6632
    %v6634 = vrot.slane %v6577, %v6633
    %v6635 = vlaneseq
    %v6636 = vshrl.u32 %v6635, 7
    %v6637 = vsub.s32 2, %v6636
    %v6638 = vrot.slane %v6577, %v6637
    %6642 = vmatprep.subr.mxu0 0.0
    %6643 = vmatpush1.msra.mxu0 %v6578
    %6644 = vmatprep.subr.mxu0 0.0
    %6645 = vmatpush1.msra.mxu0 %v6579
    %6646 = vmatprep.subr.mxu0 0.0
    %6647 = vmatpush1.msra.mxu0 %v6580
    %6648 = vmatprep.subr.mxu0 0.0
    %6649 = vmatpush1.msra.mxu0 %v6581
    %6650 = vmatprep.subr.mxu0 0.0
    %6651 = vmatpush1.msra.mxu0 %v6582
    %6652 = vmatprep.subr.mxu0 0.0
    %6653 = vmatpush1.msra.mxu0 %v6583
    %6654 = vmatprep.subr.mxu0 0.0
    %6655 = vmatpush1.msra.mxu0 %v6584
    %6656 = vmatprep.subr.mxu0 0.0
    %6657 = vmatpush1.msra.mxu0 %v6585
    %6658 = vmatprep.subr.mxu0 0.0
    %6659 = vmatpush1.msra.mxu0 %v6586
    %6660 = vmatprep.subr.mxu0 0.0
    %6661 = vmatpush1.msra.mxu0 %v6587
    %6662 = vmatprep.subr.mxu0 0.0
    %6663 = vmatpush1.msra.mxu0 %v6588
    %6664 = vmatprep.subr.mxu0 0.0
    %6665 = vmatpush1.msra.mxu0 %v6589
    %6666 = vmatprep.subr.mxu0 0.0
    %6667 = vmatpush1.msra.mxu0 %v6590
    %6668 = vmatprep.subr.mxu0 0.0
    %6669 = vmatpush1.msra.mxu0 %v6591
    %6670 = vmatprep.subr.mxu0 0.0
    %6671 = vmatpush1.msra.mxu0 %v6592
    %6672 = vmatprep.subr.mxu0 0.0
    %6673 = vmatpush1.msra.mxu0 %v6593
    %6674 = vmatprep.subr.mxu0 0.0
    %6675 = vmatpush1.msra.mxu0 %v6594
    %6676 = vmatprep.subr.mxu0 0.0
    %6677 = vmatpush1.msra.mxu0 %v6595
    %6678 = vmatprep.subr.mxu0 0.0
    %6679 = vmatpush1.msra.mxu0 %v6596
    %6680 = vmatprep.subr.mxu0 0.0
    %6681 = vmatpush1.msra.mxu0 %v6597
    %6682 = vmatprep.subr.mxu0 0.0
    %6683 = vmatpush1.msra.mxu0 %v6598
    %6684 = vmatprep.subr.mxu0 0.0
    %6685 = vmatpush1.msra.mxu0 %v6599
    %6686 = vmatprep.subr.mxu0 0.0
    %6687 = vmatpush1.msra.mxu0 %v6600
    %6688 = vmatprep.subr.mxu0 0.0
    %6689 = vmatpush1.msra.mxu0 %v6601
    %6690 = vmatprep.subr.mxu0 0.0
    %6691 = vmatpush1.msra.mxu0 %v6602
    %6692 = vmatprep.subr.mxu0 0.0
    %6693 = vmatpush1.msra.mxu0 %v6603
    %6694 = vmatprep.subr.mxu0 0.0
    %6695 = vmatpush1.msra.mxu0 %v6604
    %6696 = vmatprep.subr.mxu0 0.0
    %6697 = vmatpush1.msra.mxu0 %v6605
    %6698 = vmatprep.subr.mxu0 0.0
    %6699 = vmatpush1.msra.mxu0 %v6606
    %6700 = vmatprep.subr.mxu0 0.0
    %6701 = vmatpush1.msra.mxu0 %v6607
    %6702 = vmatprep.subr.mxu0 0.0
    %6703 = vmatpush1.msra.mxu0 %v6608
    %6704 = vmatprep.subr.mxu0 0.0
    %6705 = vmatpush1.msra.mxu0 %v6609
    %6706 = vmatprep.mubr.f32.mxu0 %v6634
    %6707 = vmatmul.mubr.f32.gmra.mrb[0].mxu0 %v6630
    %v6708 = vpop.f32.mrb[0].mxu0
    %v6709 = vadd.f32 0.0, %v6708
    %v6710 = vpop.f32.mrb[0].mxu0
    %6711 = vdwg.mxu0
    %6712 = vmatprep.subr.mxu0 0.0
    %6713 = vmatpush1.msra.mxu0 %v6610
    %6714 = vmatprep.subr.mxu0 0.0
    %6715 = vmatpush1.msra.mxu0 %v6611
    %6716 = vmatprep.subr.mxu0 0.0
    %6717 = vmatpush1.msra.mxu0 %v6612
    %6718 = vmatprep.subr.mxu0 0.0
    %6719 = vmatpush1.msra.mxu0 %v6613
    %6720 = vmatprep.subr.mxu0 0.0
    %6721 = vmatpush1.msra.mxu0 %v6614
    %6722 = vmatprep.subr.mxu0 0.0
    %6723 = vmatpush1.msra.mxu0 %v6615
    %6724 = vmatprep.subr.mxu0 0.0
    %6725 = vmatpush1.msra.mxu0 %v6616
    %6726 = vmatprep.subr.mxu0 0.0
    %6727 = vmatpush1.msra.mxu0 %v6617
    %6728 = vmatprep.subr.mxu0 0.0
    %6729 = vmatpush1.msra.mxu0 %v6618
    %6730 = vmatprep.subr.mxu0 0.0
    %6731 = vmatpush1.msra.mxu0 %v6619
    %6732 = vmatprep.subr.mxu0 0.0
    %6733 = vmatpush1.msra.mxu0 %v6620
    %6734 = vmatprep.subr.mxu0 0.0
    %6735 = vmatpush1.msra.mxu0 %v6621
    %6736 = vmatprep.subr.mxu0 0.0
    %6737 = vmatpush1.msra.mxu0 %v6622
    %6738 = vmatprep.subr.mxu0 0.0
    %6739 = vmatpush1.msra.mxu0 %v6623
    %6740 = vmatprep.subr.mxu0 0.0
    %6741 = vmatpush1.msra.mxu0 %v6624
    %6742 = vmatprep.subr.mxu0 0.0
    %6743 = vmatpush1.msra.mxu0 %v6625
    %6744 = vmatprep.subr.mxu0 0.0
    %6745 = vmatpush1.msra.mxu0 0.0
    %6746 = vmatprep.subr.mxu0 0.0
    %6747 = vmatpush1.msra.mxu0 0.0
    %6748 = vmatprep.subr.mxu0 0.0
    %6749 = vmatpush1.msra.mxu0 0.0
    %6750 = vmatprep.subr.mxu0 0.0
    %6751 = vmatpush1.msra.mxu0 0.0
    %6752 = vmatprep.subr.mxu0 0.0
    %6753 = vmatpush1.msra.mxu0 0.0
    %6754 = vmatprep.subr.mxu0 0.0
    %6755 = vmatpush1.msra.mxu0 0.0
    %6756 = vmatprep.subr.mxu0 0.0
    %6757 = vmatpush1.msra.mxu0 0.0
    %6758 = vmatprep.subr.mxu0 0.0
    %6759 = vmatpush1.msra.mxu0 0.0
    %6760 = vmatprep.subr.mxu0 0.0
    %6761 = vmatpush1.msra.mxu0 0.0
    %6762 = vmatprep.subr.mxu0 0.0
    %6763 = vmatpush1.msra.mxu0 0.0
    %6764 = vmatprep.subr.mxu0 0.0
    %6765 = vmatpush1.msra.mxu0 0.0
    %6766 = vmatprep.subr.mxu0 0.0
    %6767 = vmatpush1.msra.mxu0 0.0
    %6768 = vmatprep.subr.mxu0 0.0
    %6769 = vmatpush1.msra.mxu0 0.0
    %6770 = vmatprep.subr.mxu0 0.0
    %6771 = vmatpush1.msra.mxu0 0.0
    %6772 = vmatprep.subr.mxu0 0.0
    %6773 = vmatpush1.msra.mxu0 0.0
    %6774 = vmatprep.subr.mxu0 0.0
    %6775 = vmatpush1.msra.mxu0 0.0
    %6776 = vmatprep.mubr.f32.mxu0 0.0
    %6777 = vmatmul.mubr.f32.gmra.mrb[0].mxu0 %v6638
    %v6778 = vpop.f32.mrb[0].mxu0
    %v6779 = vadd.f32 %v6709, %v6778
    %v6780 = vpop.f32.mrb[0].mxu0
    %6781 = vdwg.mxu0
    %v6782 = vadd.f32 %v6575, %v6779
    %s6783 = scalar_lea.vmem [#allocation2], 10
    %v6784 = vld [vmem:[%s6783] ss:$8 sm:$0x7]
    %v6785 = vld [vmem:[%s8 + $0x300] sm:$0xff]
    %v6786 = vld [vmem:[%s8 + $0x308] sm:$0xff]
    %v6787 = vld [vmem:[%s8 + $0x310] sm:$0xff]
    %v6788 = vld [vmem:[%s8 + $0x318] sm:$0xff]
    %v6789 = vld [vmem:[%s8 + $0x320] sm:$0xff]
    %v6790 = vld [vmem:[%s8 + $0x328] sm:$0xff]
    %v6791 = vld [vmem:[%s8 + $0x330] sm:$0xff]
    %v6792 = vld [vmem:[%s8 + $0x338] sm:$0xff]
    %v6793 = vld [vmem:[%s8 + $0x340] sm:$0xff]
    %v6794 = vld [vmem:[%s8 + $0x348] sm:$0xff]
    %v6795 = vld [vmem:[%s8 + $0x350] sm:$0xff]
    %v6796 = vld [vmem:[%s8 + $0x358] sm:$0xff]
    %v6797 = vld [vmem:[%s8 + $0x360] sm:$0xff]
    %v6798 = vld [vmem:[%s8 + $0x368] sm:$0xff]
    %v6799 = vld [vmem:[%s8 + $0x370] sm:$0xff]
    %v6800 = vld [vmem:[%s8 + $0x378] sm:$0xff]
    %v6801 = vld [vmem:[%s8 + $0x380] sm:$0xff]
    %v6802 = vld [vmem:[%s8 + $0x388] sm:$0xff]
    %v6803 = vld [vmem:[%s8 + $0x390] sm:$0xff]
    %v6804 = vld [vmem:[%s8 + $0x398] sm:$0xff]
    %v6805 = vld [vmem:[%s8 + $0x3a0] sm:$0xff]
    %v6806 = vld [vmem:[%s8 + $0x3a8] sm:$0xff]
    %v6807 = vld [vmem:[%s8 + $0x3b0] sm:$0xff]
    %v6808 = vld [vmem:[%s8 + $0x3b8] sm:$0xff]
    %v6809 = vld [vmem:[%s8 + $0x3c0] sm:$0xff]
    %v6810 = vld [vmem:[%s8 + $0x3c8] sm:$0xff]
    %v6811 = vld [vmem:[%s8 + $0x3d0] sm:$0xff]
    %v6812 = vld [vmem:[%s8 + $0x3d8] sm:$0xff]
    %v6813 = vld [vmem:[%s8 + $0x3e0] sm:$0xff]
    %v6814 = vld [vmem:[%s8 + $0x3e8] sm:$0xff]
    %v6815 = vld [vmem:[%s8 + $0x3f0] sm:$0xff]
    %v6816 = vld [vmem:[%s8 + $0x3f8] sm:$0xff]
    %v6817 = vld [vmem:[%s8 + $0x400] sm:$0xff]
    %v6818 = vld [vmem:[%s8 + $0x408] sm:$0xff]
    %v6819 = vld [vmem:[%s8 + $0x410] sm:$0xff]
    %v6820 = vld [vmem:[%s8 + $0x418] sm:$0xff]
    %v6821 = vld [vmem:[%s8 + $0x420] sm:$0xff]
    %v6822 = vld [vmem:[%s8 + $0x428] sm:$0xff]
    %v6823 = vld [vmem:[%s8 + $0x430] sm:$0xff]
    %v6824 = vld [vmem:[%s8 + $0x438] sm:$0xff]
    %v6825 = vld [vmem:[%s8 + $0x440] sm:$0xff]
    %v6826 = vld [vmem:[%s8 + $0x448] sm:$0xff]
    %v6827 = vld [vmem:[%s8 + $0x450] sm:$0xff]
    %v6828 = vld [vmem:[%s8 + $0x458] sm:$0xff]
    %v6829 = vld [vmem:[%s8 + $0x460] sm:$0xff]
    %v6830 = vld [vmem:[%s8 + $0x468] sm:$0xff]
    %v6831 = vld [vmem:[%s8 + $0x470] sm:$0xff]
    %v6832 = vld [vmem:[%s8 + $0x478] sm:$0xff]
    %v6834 = vlaneseq
    %v6835 = vshrl.u32 %v6834, 7
    %v6836 = vsub.s32 0, %v6835
    %v6837 = vrot.slane %v6784, %v6836
    %v6838 = vlaneseq
    %v6839 = vshrl.u32 %v6838, 7
    %v6840 = vsub.s32 1, %v6839
    %v6841 = vrot.slane %v6784, %v6840
    %v6842 = vlaneseq
    %v6843 = vshrl.u32 %v6842, 7
    %v6844 = vsub.s32 2, %v6843
    %v6845 = vrot.slane %v6784, %v6844
    %6849 = vmatprep.subr.mxu0 0.0
    %6850 = vmatpush1.msra.mxu0 %v6785
    %6851 = vmatprep.subr.mxu0 0.0
    %6852 = vmatpush1.msra.mxu0 %v6786
    %6853 = vmatprep.subr.mxu0 0.0
    %6854 = vmatpush1.msra.mxu0 %v6787
    %6855 = vmatprep.subr.mxu0 0.0
    %6856 = vmatpush1.msra.mxu0 %v6788
    %6857 = vmatprep.subr.mxu0 0.0
    %6858 = vmatpush1.msra.mxu0 %v6789
    %6859 = vmatprep.subr.mxu0 0.0
    %6860 = vmatpush1.msra.mxu0 %v6790
    %6861 = vmatprep.subr.mxu0 0.0
    %6862 = vmatpush1.msra.mxu0 %v6791
    %6863 = vmatprep.subr.mxu0 0.0
    %6864 = vmatpush1.msra.mxu0 %v6792
    %6865 = vmatprep.subr.mxu0 0.0
    %6866 = vmatpush1.msra.mxu0 %v6793
    %6867 = vmatprep.subr.mxu0 0.0
    %6868 = vmatpush1.msra.mxu0 %v6794
    %6869 = vmatprep.subr.mxu0 0.0
    %6870 = vmatpush1.msra.mxu0 %v6795
    %6871 = vmatprep.subr.mxu0 0.0
    %6872 = vmatpush1.msra.mxu0 %v6796
    %6873 = vmatprep.subr.mxu0 0.0
    %6874 = vmatpush1.msra.mxu0 %v6797
    %6875 = vmatprep.subr.mxu0 0.0
    %6876 = vmatpush1.msra.mxu0 %v6798
    %6877 = vmatprep.subr.mxu0 0.0
    %6878 = vmatpush1.msra.mxu0 %v6799
    %6879 = vmatprep.subr.mxu0 0.0
    %6880 = vmatpush1.msra.mxu0 %v6800
    %6881 = vmatprep.subr.mxu0 0.0
    %6882 = vmatpush1.msra.mxu0 %v6801
    %6883 = vmatprep.subr.mxu0 0.0
    %6884 = vmatpush1.msra.mxu0 %v6802
    %6885 = vmatprep.subr.mxu0 0.0
    %6886 = vmatpush1.msra.mxu0 %v6803
    %6887 = vmatprep.subr.mxu0 0.0
    %6888 = vmatpush1.msra.mxu0 %v6804
    %6889 = vmatprep.subr.mxu0 0.0
    %6890 = vmatpush1.msra.mxu0 %v6805
    %6891 = vmatprep.subr.mxu0 0.0
    %6892 = vmatpush1.msra.mxu0 %v6806
    %6893 = vmatprep.subr.mxu0 0.0
    %6894 = vmatpush1.msra.mxu0 %v6807
    %6895 = vmatprep.subr.mxu0 0.0
    %6896 = vmatpush1.msra.mxu0 %v6808
    %6897 = vmatprep.subr.mxu0 0.0
    %6898 = vmatpush1.msra.mxu0 %v6809
    %6899 = vmatprep.subr.mxu0 0.0
    %6900 = vmatpush1.msra.mxu0 %v6810
    %6901 = vmatprep.subr.mxu0 0.0
    %6902 = vmatpush1.msra.mxu0 %v6811
    %6903 = vmatprep.subr.mxu0 0.0
    %6904 = vmatpush1.msra.mxu0 %v6812
    %6905 = vmatprep.subr.mxu0 0.0
    %6906 = vmatpush1.msra.mxu0 %v6813
    %6907 = vmatprep.subr.mxu0 0.0
    %6908 = vmatpush1.msra.mxu0 %v6814
    %6909 = vmatprep.subr.mxu0 0.0
    %6910 = vmatpush1.msra.mxu0 %v6815
    %6911 = vmatprep.subr.mxu0 0.0
    %6912 = vmatpush1.msra.mxu0 %v6816
    %6913 = vmatprep.mubr.f32.mxu0 %v6841
    %6914 = vmatmul.mubr.f32.gmra.mrb[0].mxu0 %v6837
    %v6915 = vpop.f32.mrb[0].mxu0
    %v6916 = vadd.f32 0.0, %v6915
    %v6917 = vpop.f32.mrb[0].mxu0
    %6918 = vdwg.mxu0
    %6919 = vmatprep.subr.mxu0 0.0
    %6920 = vmatpush1.msra.mxu0 %v6817
    %6921 = vmatprep.subr.mxu0 0.0
    %6922 = vmatpush1.msra.mxu0 %v6818
    %6923 = vmatprep.subr.mxu0 0.0
    %6924 = vmatpush1.msra.mxu0 %v6819
    %6925 = vmatprep.subr.mxu0 0.0
    %6926 = vmatpush1.msra.mxu0 %v6820
    %6927 = vmatprep.subr.mxu0 0.0
    %6928 = vmatpush1.msra.mxu0 %v6821
    %6929 = vmatprep.subr.mxu0 0.0
    %6930 = vmatpush1.msra.mxu0 %v6822
    %6931 = vmatprep.subr.mxu0 0.0
    %6932 = vmatpush1.msra.mxu0 %v6823
    %6933 = vmatprep.subr.mxu0 0.0
    %6934 = vmatpush1.msra.mxu0 %v6824
    %6935 = vmatprep.subr.mxu0 0.0
    %6936 = vmatpush1.msra.mxu0 %v6825
    %6937 = vmatprep.subr.mxu0 0.0
    %6938 = vmatpush1.msra.mxu0 %v6826
    %6939 = vmatprep.subr.mxu0 0.0
    %6940 = vmatpush1.msra.mxu0 %v6827
    %6941 = vmatprep.subr.mxu0 0.0
    %6942 = vmatpush1.msra.mxu0 %v6828
    %6943 = vmatprep.subr.mxu0 0.0
    %6944 = vmatpush1.msra.mxu0 %v6829
    %6945 = vmatprep.subr.mxu0 0.0
    %6946 = vmatpush1.msra.mxu0 %v6830
    %6947 = vmatprep.subr.mxu0 0.0
    %6948 = vmatpush1.msra.mxu0 %v6831
    %6949 = vmatprep.subr.mxu0 0.0
    %6950 = vmatpush1.msra.mxu0 %v6832
    %6951 = vmatprep.subr.mxu0 0.0
    %6952 = vmatpush1.msra.mxu0 0.0
    %6953 = vmatprep.subr.mxu0 0.0
    %6954 = vmatpush1.msra.mxu0 0.0
    %6955 = vmatprep.subr.mxu0 0.0
    %6956 = vmatpush1.msra.mxu0 0.0
    %6957 = vmatprep.subr.mxu0 0.0
    %6958 = vmatpush1.msra.mxu0 0.0
    %6959 = vmatprep.subr.mxu0 0.0
    %6960 = vmatpush1.msra.mxu0 0.0
    %6961 = vmatprep.subr.mxu0 0.0
    %6962 = vmatpush1.msra.mxu0 0.0
    %6963 = vmatprep.subr.mxu0 0.0
    %6964 = vmatpush1.msra.mxu0 0.0
    %6965 = vmatprep.subr.mxu0 0.0
    %6966 = vmatpush1.msra.mxu0 0.0
    %6967 = vmatprep.subr.mxu0 0.0
    %6968 = vmatpush1.msra.mxu0 0.0
    %6969 = vmatprep.subr.mxu0 0.0
    %6970 = vmatpush1.msra.mxu0 0.0
    %6971 = vmatprep.subr.mxu0 0.0
    %6972 = vmatpush1.msra.mxu0 0.0
    %6973 = vmatprep.subr.mxu0 0.0
    %6974 = vmatpush1.msra.mxu0 0.0
    %6975 = vmatprep.subr.mxu0 0.0
    %6976 = vmatpush1.msra.mxu0 0.0
    %6977 = vmatprep.subr.mxu0 0.0
    %6978 = vmatpush1.msra.mxu0 0.0
    %6979 = vmatprep.subr.mxu0 0.0
    %6980 = vmatpush1.msra.mxu0 0.0
    %6981 = vmatprep.subr.mxu0 0.0
    %6982 = vmatpush1.msra.mxu0 0.0
    %6983 = vmatprep.mubr.f32.mxu0 0.0
    %6984 = vmatmul.mubr.f32.gmra.mrb[0].mxu0 %v6845
    %v6985 = vpop.f32.mrb[0].mxu0
    %v6986 = vadd.f32 %v6916, %v6985
    %v6987 = vpop.f32.mrb[0].mxu0
    %6988 = vdwg.mxu0
    %v6989 = vadd.f32 %v6782, %v6986
    %s6990 = scalar_lea.vmem [#allocation2], 11
    %v6991 = vld [vmem:[%s6990] ss:$8 sm:$0x7]
    %v6992 = vld [vmem:[%s8 + $0x480] sm:$0xff]
    %v6993 = vld [vmem:[%s8 + $0x488] sm:$0xff]
    %v6994 = vld [vmem:[%s8 + $0x490] sm:$0xff]
    %v6995 = vld [vmem:[%s8 + $0x498] sm:$0xff]
    %v6996 = vld [vmem:[%s8 + $0x4a0] sm:$0xff]
    %v6997 = vld [vmem:[%s8 + $0x4a8] sm:$0xff]
    %v6998 = vld [vmem:[%s8 + $0x4b0] sm:$0xff]
    %v6999 = vld [vmem:[%s8 + $0x4b8] sm:$0xff]
    %v7000 = vld [vmem:[%s8 + $0x4c0] sm:$0xff]
    %v7001 = vld [vmem:[%s8 + $0x4c8] sm:$0xff]
    %v7002 = vld [vmem:[%s8 + $0x4d0] sm:$0xff]
    %v7003 = vld [vmem:[%s8 + $0x4d8] sm:$0xff]
    %v7004 = vld [vmem:[%s8 + $0x4e0] sm:$0xff]
    %v7005 = vld [vmem:[%s8 + $0x4e8] sm:$0xff]
    %v7006 = vld [vmem:[%s8 + $0x4f0] sm:$0xff]
    %v7007 = vld [vmem:[%s8 + $0x4f8] sm:$0xff]
    %v7008 = vld [vmem:[%s8 + $0x500] sm:$0xff]
    %v7009 = vld [vmem:[%s8 + $0x508] sm:$0xff]
    %v7010 = vld [vmem:[%s8 + $0x510] sm:$0xff]
    %v7011 = vld [vmem:[%s8 + $0x518] sm:$0xff]
    %v7012 = vld [vmem:[%s8 + $0x520] sm:$0xff]
    %v7013 = vld [vmem:[%s8 + $0x528] sm:$0xff]
    %v7014 = vld [vmem:[%s8 + $0x530] sm:$0xff]
    %v7015 = vld [vmem:[%s8 + $0x538] sm:$0xff]
    %v7016 = vld [vmem:[%s8 + $0x540] sm:$0xff]
    %v7017 = vld [vmem:[%s8 + $0x548] sm:$0xff]
    %v7018 = vld [vmem:[%s8 + $0x550] sm:$0xff]
    %v7019 = vld [vmem:[%s8 + $0x558] sm:$0xff]
    %v7020 = vld [vmem:[%s8 + $0x560] sm:$0xff]
    %v7021 = vld [vmem:[%s8 + $0x568] sm:$0xff]
    %v7022 = vld [vmem:[%s8 + $0x570] sm:$0xff]
    %v7023 = vld [vmem:[%s8 + $0x578] sm:$0xff]
    %v7024 = vld [vmem:[%s8 + $0x580] sm:$0xff]
    %v7025 = vld [vmem:[%s8 + $0x588] sm:$0xff]
    %v7026 = vld [vmem:[%s8 + $0x590] sm:$0xff]
    %v7027 = vld [vmem:[%s8 + $0x598] sm:$0xff]
    %v7028 = vld [vmem:[%s8 + $0x5a0] sm:$0xff]
    %v7029 = vld [vmem:[%s8 + $0x5a8] sm:$0xff]
    %v7030 = vld [vmem:[%s8 + $0x5b0] sm:$0xff]
    %v7031 = vld [vmem:[%s8 + $0x5b8] sm:$0xff]
    %v7032 = vld [vmem:[%s8 + $0x5c0] sm:$0xff]
    %v7033 = vld [vmem:[%s8 + $0x5c8] sm:$0xff]
    %v7034 = vld [vmem:[%s8 + $0x5d0] sm:$0xff]
    %v7035 = vld [vmem:[%s8 + $0x5d8] sm:$0xff]
    %v7036 = vld [vmem:[%s8 + $0x5e0] sm:$0xff]
    %v7037 = vld [vmem:[%s8 + $0x5e8] sm:$0xff]
    %v7038 = vld [vmem:[%s8 + $0x5f0] sm:$0xff]
    %v7039 = vld [vmem:[%s8 + $0x5f8] sm:$0xff]
    %v7041 = vlaneseq
    %v7042 = vshrl.u32 %v7041, 7
    %v7043 = vsub.s32 0, %v7042
    %v7044 = vrot.slane %v6991, %v7043
    %v7045 = vlaneseq
    %v7046 = vshrl.u32 %v7045, 7
    %v7047 = vsub.s32 1, %v7046
    %v7048 = vrot.slane %v6991, %v7047
    %v7049 = vlaneseq
    %v7050 = vshrl.u32 %v7049, 7
    %v7051 = vsub.s32 2, %v7050
    %v7052 = vrot.slane %v6991, %v7051
    %7056 = vmatprep.subr.mxu0 0.0
    %7057 = vmatpush1.msra.mxu0 %v6992
    %7058 = vmatprep.subr.mxu0 0.0
    %7059 = vmatpush1.msra.mxu0 %v6993
    %7060 = vmatprep.subr.mxu0 0.0
    %7061 = vmatpush1.msra.mxu0 %v6994
    %7062 = vmatprep.subr.mxu0 0.0
    %7063 = vmatpush1.msra.mxu0 %v6995
    %7064 = vmatprep.subr.mxu0 0.0
    %7065 = vmatpush1.msra.mxu0 %v6996
    %7066 = vmatprep.subr.mxu0 0.0
    %7067 = vmatpush1.msra.mxu0 %v6997
    %7068 = vmatprep.subr.mxu0 0.0
    %7069 = vmatpush1.msra.mxu0 %v6998
    %7070 = vmatprep.subr.mxu0 0.0
    %7071 = vmatpush1.msra.mxu0 %v6999
    %7072 = vmatprep.subr.mxu0 0.0
    %7073 = vmatpush1.msra.mxu0 %v7000
    %7074 = vmatprep.subr.mxu0 0.0
    %7075 = vmatpush1.msra.mxu0 %v7001
    %7076 = vmatprep.subr.mxu0 0.0
    %7077 = vmatpush1.msra.mxu0 %v7002
    %7078 = vmatprep.subr.mxu0 0.0
    %7079 = vmatpush1.msra.mxu0 %v7003
    %7080 = vmatprep.subr.mxu0 0.0
    %7081 = vmatpush1.msra.mxu0 %v7004
    %7082 = vmatprep.subr.mxu0 0.0
    %7083 = vmatpush1.msra.mxu0 %v7005
    %7084 = vmatprep.subr.mxu0 0.0
    %7085 = vmatpush1.msra.mxu0 %v7006
    %7086 = vmatprep.subr.mxu0 0.0
    %7087 = vmatpush1.msra.mxu0 %v7007
    %7088 = vmatprep.subr.mxu0 0.0
    %7089 = vmatpush1.msra.mxu0 %v7008
    %7090 = vmatprep.subr.mxu0 0.0
    %7091 = vmatpush1.msra.mxu0 %v7009
    %7092 = vmatprep.subr.mxu0 0.0
    %7093 = vmatpush1.msra.mxu0 %v7010
    %7094 = vmatprep.subr.mxu0 0.0
    %7095 = vmatpush1.msra.mxu0 %v7011
    %7096 = vmatprep.subr.mxu0 0.0
    %7097 = vmatpush1.msra.mxu0 %v7012
    %7098 = vmatprep.subr.mxu0 0.0
    %7099 = vmatpush1.msra.mxu0 %v7013
    %7100 = vmatprep.subr.mxu0 0.0
    %7101 = vmatpush1.msra.mxu0 %v7014
    %7102 = vmatprep.subr.mxu0 0.0
    %7103 = vmatpush1.msra.mxu0 %v7015
    %7104 = vmatprep.subr.mxu0 0.0
    %7105 = vmatpush1.msra.mxu0 %v7016
    %7106 = vmatprep.subr.mxu0 0.0
    %7107 = vmatpush1.msra.mxu0 %v7017
    %7108 = vmatprep.subr.mxu0 0.0
    %7109 = vmatpush1.msra.mxu0 %v7018
    %7110 = vmatprep.subr.mxu0 0.0
    %7111 = vmatpush1.msra.mxu0 %v7019
    %7112 = vmatprep.subr.mxu0 0.0
    %7113 = vmatpush1.msra.mxu0 %v7020
    %7114 = vmatprep.subr.mxu0 0.0
    %7115 = vmatpush1.msra.mxu0 %v7021
    %7116 = vmatprep.subr.mxu0 0.0
    %7117 = vmatpush1.msra.mxu0 %v7022
    %7118 = vmatprep.subr.mxu0 0.0
    %7119 = vmatpush1.msra.mxu0 %v7023
    %7120 = vmatprep.mubr.f32.mxu0 %v7048
    %7121 = vmatmul.mubr.f32.gmra.mrb[0].mxu0 %v7044
    %v7122 = vpop.f32.mrb[0].mxu0
    %v7123 = vadd.f32 0.0, %v7122
    %v7124 = vpop.f32.mrb[0].mxu0
    %7125 = vdwg.mxu0
    %7126 = vmatprep.subr.mxu0 0.0
    %7127 = vmatpush1.msra.mxu0 %v7024
    %7128 = vmatprep.subr.mxu0 0.0
    %7129 = vmatpush1.msra.mxu0 %v7025
    %7130 = vmatprep.subr.mxu0 0.0
    %7131 = vmatpush1.msra.mxu0 %v7026
    %7132 = vmatprep.subr.mxu0 0.0
    %7133 = vmatpush1.msra.mxu0 %v7027
    %7134 = vmatprep.subr.mxu0 0.0
    %7135 = vmatpush1.msra.mxu0 %v7028
    %7136 = vmatprep.subr.mxu0 0.0
    %7137 = vmatpush1.msra.mxu0 %v7029
    %7138 = vmatprep.subr.mxu0 0.0
    %7139 = vmatpush1.msra.mxu0 %v7030
    %7140 = vmatprep.subr.mxu0 0.0
    %7141 = vmatpush1.msra.mxu0 %v7031
    %7142 = vmatprep.subr.mxu0 0.0
    %7143 = vmatpush1.msra.mxu0 %v7032
    %7144 = vmatprep.subr.mxu0 0.0
    %7145 = vmatpush1.msra.mxu0 %v7033
    %7146 = vmatprep.subr.mxu0 0.0
    %7147 = vmatpush1.msra.mxu0 %v7034
    %7148 = vmatprep.subr.mxu0 0.0
    %7149 = vmatpush1.msra.mxu0 %v7035
    %7150 = vmatprep.subr.mxu0 0.0
    %7151 = vmatpush1.msra.mxu0 %v7036
    %7152 = vmatprep.subr.mxu0 0.0
    %7153 = vmatpush1.msra.mxu0 %v7037
    %7154 = vmatprep.subr.mxu0 0.0
    %7155 = vmatpush1.msra.mxu0 %v7038
    %7156 = vmatprep.subr.mxu0 0.0
    %7157 = vmatpush1.msra.mxu0 %v7039
    %7158 = vmatprep.subr.mxu0 0.0
    %7159 = vmatpush1.msra.mxu0 0.0
    %7160 = vmatprep.subr.mxu0 0.0
    %7161 = vmatpush1.msra.mxu0 0.0
    %7162 = vmatprep.subr.mxu0 0.0
    %7163 = vmatpush1.msra.mxu0 0.0
    %7164 = vmatprep.subr.mxu0 0.0
    %7165 = vmatpush1.msra.mxu0 0.0
    %7166 = vmatprep.subr.mxu0 0.0
    %7167 = vmatpush1.msra.mxu0 0.0
    %7168 = vmatprep.subr.mxu0 0.0
    %7169 = vmatpush1.msra.mxu0 0.0
    %7170 = vmatprep.subr.mxu0 0.0
    %7171 = vmatpush1.msra.mxu0 0.0
    %7172 = vmatprep.subr.mxu0 0.0
    %7173 = vmatpush1.msra.mxu0 0.0
    %7174 = vmatprep.subr.mxu0 0.0
    %7175 = vmatpush1.msra.mxu0 0.0
    %7176 = vmatprep.subr.mxu0 0.0
    %7177 = vmatpush1.msra.mxu0 0.0
    %7178 = vmatprep.subr.mxu0 0.0
    %7179 = vmatpush1.msra.mxu0 0.0
    %7180 = vmatprep.subr.mxu0 0.0
    %7181 = vmatpush1.msra.mxu0 0.0
    %7182 = vmatprep.subr.mxu0 0.0
    %7183 = vmatpush1.msra.mxu0 0.0
    %7184 = vmatprep.subr.mxu0 0.0
    %7185 = vmatpush1.msra.mxu0 0.0
    %7186 = vmatprep.subr.mxu0 0.0
    %7187 = vmatpush1.msra.mxu0 0.0
    %7188 = vmatprep.subr.mxu0 0.0
    %7189 = vmatpush1.msra.mxu0 0.0
    %7190 = vmatprep.mubr.f32.mxu0 0.0
    %7191 = vmatmul.mubr.f32.gmra.mrb[0].mxu0 %v7052
    %v7192 = vpop.f32.mrb[0].mxu0
    %v7193 = vadd.f32 %v7123, %v7192
    %v7194 = vpop.f32.mrb[0].mxu0
    %7195 = vdwg.mxu0
    %v7196 = vadd.f32 %v6989, %v7193
    %s7197 = scalar_lea.vmem [#allocation2], 12
    %v7198 = vld [vmem:[%s7197] ss:$8 sm:$0x7]
    %v7199 = vld [vmem:[%s8 + $0x600] sm:$0xff]
    %v7200 = vld [vmem:[%s8 + $0x608] sm:$0xff]
    %v7201 = vld [vmem:[%s8 + $0x610] sm:$0xff]
    %v7202 = vld [vmem:[%s8 + $0x618] sm:$0xff]
    %v7203 = vld [vmem:[%s8 + $0x620] sm:$0xff]
    %v7204 = vld [vmem:[%s8 + $0x628] sm:$0xff]
    %v7205 = vld [vmem:[%s8 + $0x630] sm:$0xff]
    %v7206 = vld [vmem:[%s8 + $0x638] sm:$0xff]
    %v7207 = vld [vmem:[%s8 + $0x640] sm:$0xff]
    %v7208 = vld [vmem:[%s8 + $0x648] sm:$0xff]
    %v7209 = vld [vmem:[%s8 + $0x650] sm:$0xff]
    %v7210 = vld [vmem:[%s8 + $0x658] sm:$0xff]
    %v7211 = vld [vmem:[%s8 + $0x660] sm:$0xff]
    %v7212 = vld [vmem:[%s8 + $0x668] sm:$0xff]
    %v7213 = vld [vmem:[%s8 + $0x670] sm:$0xff]
    %v7214 = vld [vmem:[%s8 + $0x678] sm:$0xff]
    %v7215 = vld [vmem:[%s8 + $0x680] sm:$0xff]
    %v7216 = vld [vmem:[%s8 + $0x688] sm:$0xff]
    %v7217 = vld [vmem:[%s8 + $0x690] sm:$0xff]
    %v7218 = vld [vmem:[%s8 + $0x698] sm:$0xff]
    %v7219 = vld [vmem:[%s8 + $0x6a0] sm:$0xff]
    %v7220 = vld [vmem:[%s8 + $0x6a8] sm:$0xff]
    %v7221 = vld [vmem:[%s8 + $0x6b0] sm:$0xff]
    %v7222 = vld [vmem:[%s8 + $0x6b8] sm:$0xff]
    %v7223 = vld [vmem:[%s8 + $0x6c0] sm:$0xff]
    %v7224 = vld [vmem:[%s8 + $0x6c8] sm:$0xff]
    %v7225 = vld [vmem:[%s8 + $0x6d0] sm:$0xff]
    %v7226 = vld [vmem:[%s8 + $0x6d8] sm:$0xff]
    %v7227 = vld [vmem:[%s8 + $0x6e0] sm:$0xff]
    %v7228 = vld [vmem:[%s8 + $0x6e8] sm:$0xff]
    %v7229 = vld [vmem:[%s8 + $0x6f0] sm:$0xff]
    %v7230 = vld [vmem:[%s8 + $0x6f8] sm:$0xff]
    %v7231 = vld [vmem:[%s8 + $0x700] sm:$0xff]
    %v7232 = vld [vmem:[%s8 + $0x708] sm:$0xff]
    %v7233 = vld [vmem:[%s8 + $0x710] sm:$0xff]
    %v7234 = vld [vmem:[%s8 + $0x718] sm:$0xff]
    %v7235 = vld [vmem:[%s8 + $0x720] sm:$0xff]
    %v7236 = vld [vmem:[%s8 + $0x728] sm:$0xff]
    %v7237 = vld [vmem:[%s8 + $0x730] sm:$0xff]
    %v7238 = vld [vmem:[%s8 + $0x738] sm:$0xff]
    %v7239 = vld [vmem:[%s8 + $0x740] sm:$0xff]
    %v7240 = vld [vmem:[%s8 + $0x748] sm:$0xff]
    %v7241 = vld [vmem:[%s8 + $0x750] sm:$0xff]
    %v7242 = vld [vmem:[%s8 + $0x758] sm:$0xff]
    %v7243 = vld [vmem:[%s8 + $0x760] sm:$0xff]
    %v7244 = vld [vmem:[%s8 + $0x768] sm:$0xff]
    %v7245 = vld [vmem:[%s8 + $0x770] sm:$0xff]
    %v7246 = vld [vmem:[%s8 + $0x778] sm:$0xff]
    %v7248 = vlaneseq
    %v7249 = vshrl.u32 %v7248, 7
    %v7250 = vsub.s32 0, %v7249
    %v7251 = vrot.slane %v7198, %v7250
    %v7252 = vlaneseq
    %v7253 = vshrl.u32 %v7252, 7
    %v7254 = vsub.s32 1, %v7253
    %v7255 = vrot.slane %v7198, %v7254
    %v7256 = vlaneseq
    %v7257 = vshrl.u32 %v7256, 7
    %v7258 = vsub.s32 2, %v7257
    %v7259 = vrot.slane %v7198, %v7258
    %7263 = vmatprep.subr.mxu0 0.0
    %7264 = vmatpush1.msra.mxu0 %v7199
    %7265 = vmatprep.subr.mxu0 0.0
    %7266 = vmatpush1.msra.mxu0 %v7200
    %7267 = vmatprep.subr.mxu0 0.0
    %7268 = vmatpush1.msra.mxu0 %v7201
    %7269 = vmatprep.subr.mxu0 0.0
    %7270 = vmatpush1.msra.mxu0 %v7202
    %7271 = vmatprep.subr.mxu0 0.0
    %7272 = vmatpush1.msra.mxu0 %v7203
    %7273 = vmatprep.subr.mxu0 0.0
    %7274 = vmatpush1.msra.mxu0 %v7204
    %7275 = vmatprep.subr.mxu0 0.0
    %7276 = vmatpush1.msra.mxu0 %v7205
    %7277 = vmatprep.subr.mxu0 0.0
    %7278 = vmatpush1.msra.mxu0 %v7206
    %7279 = vmatprep.subr.mxu0 0.0
    %7280 = vmatpush1.msra.mxu0 %v7207
    %7281 = vmatprep.subr.mxu0 0.0
    %7282 = vmatpush1.msra.mxu0 %v7208
    %7283 = vmatprep.subr.mxu0 0.0
    %7284 = vmatpush1.msra.mxu0 %v7209
    %7285 = vmatprep.subr.mxu0 0.0
    %7286 = vmatpush1.msra.mxu0 %v7210
    %7287 = vmatprep.subr.mxu0 0.0
    %7288 = vmatpush1.msra.mxu0 %v7211
    %7289 = vmatprep.subr.mxu0 0.0
    %7290 = vmatpush1.msra.mxu0 %v7212
    %7291 = vmatprep.subr.mxu0 0.0
    %7292 = vmatpush1.msra.mxu0 %v7213
    %7293 = vmatprep.subr.mxu0 0.0
    %7294 = vmatpush1.msra.mxu0 %v7214
    %7295 = vmatprep.subr.mxu0 0.0
    %7296 = vmatpush1.msra.mxu0 %v7215
    %7297 = vmatprep.subr.mxu0 0.0
    %7298 = vmatpush1.msra.mxu0 %v7216
    %7299 = vmatprep.subr.mxu0 0.0
    %7300 = vmatpush1.msra.mxu0 %v7217
    %7301 = vmatprep.subr.mxu0 0.0
    %7302 = vmatpush1.msra.mxu0 %v7218
    %7303 = vmatprep.subr.mxu0 0.0
    %7304 = vmatpush1.msra.mxu0 %v7219
    %7305 = vmatprep.subr.mxu0 0.0
    %7306 = vmatpush1.msra.mxu0 %v7220
    %7307 = vmatprep.subr.mxu0 0.0
    %7308 = vmatpush1.msra.mxu0 %v7221
    %7309 = vmatprep.subr.mxu0 0.0
    %7310 = vmatpush1.msra.mxu0 %v7222
    %7311 = vmatprep.subr.mxu0 0.0
    %7312 = vmatpush1.msra.mxu0 %v7223
    %7313 = vmatprep.subr.mxu0 0.0
    %7314 = vmatpush1.msra.mxu0 %v7224
    %7315 = vmatprep.subr.mxu0 0.0
    %7316 = vmatpush1.msra.mxu0 %v7225
    %7317 = vmatprep.subr.mxu0 0.0
    %7318 = vmatpush1.msra.mxu0 %v7226
    %7319 = vmatprep.subr.mxu0 0.0
    %7320 = vmatpush1.msra.mxu0 %v7227
    %7321 = vmatprep.subr.mxu0 0.0
    %7322 = vmatpush1.msra.mxu0 %v7228
    %7323 = vmatprep.subr.mxu0 0.0
    %7324 = vmatpush1.msra.mxu0 %v7229
    %7325 = vmatprep.subr.mxu0 0.0
    %7326 = vmatpush1.msra.mxu0 %v7230
    %7327 = vmatprep.mubr.f32.mxu0 %v7255
    %7328 = vmatmul.mubr.f32.gmra.mrb[0].mxu0 %v7251
    %v7329 = vpop.f32.mrb[0].mxu0
    %v7330 = vadd.f32 0.0, %v7329
    %v7331 = vpop.f32.mrb[0].mxu0
    %7332 = vdwg.mxu0
    %7333 = vmatprep.subr.mxu0 0.0
    %7334 = vmatpush1.msra.mxu0 %v7231
    %7335 = vmatprep.subr.mxu0 0.0
    %7336 = vmatpush1.msra.mxu0 %v7232
    %7337 = vmatprep.subr.mxu0 0.0
    %7338 = vmatpush1.msra.mxu0 %v7233
    %7339 = vmatprep.subr.mxu0 0.0
    %7340 = vmatpush1.msra.mxu0 %v7234
    %7341 = vmatprep.subr.mxu0 0.0
    %7342 = vmatpush1.msra.mxu0 %v7235
    %7343 = vmatprep.subr.mxu0 0.0
    %7344 = vmatpush1.msra.mxu0 %v7236
    %7345 = vmatprep.subr.mxu0 0.0
    %7346 = vmatpush1.msra.mxu0 %v7237
    %7347 = vmatprep.subr.mxu0 0.0
    %7348 = vmatpush1.msra.mxu0 %v7238
    %7349 = vmatprep.subr.mxu0 0.0
    %7350 = vmatpush1.msra.mxu0 %v7239
    %7351 = vmatprep.subr.mxu0 0.0
    %7352 = vmatpush1.msra.mxu0 %v7240
    %7353 = vmatprep.subr.mxu0 0.0
    %7354 = vmatpush1.msra.mxu0 %v7241
    %7355 = vmatprep.subr.mxu0 0.0
    %7356 = vmatpush1.msra.mxu0 %v7242
    %7357 = vmatprep.subr.mxu0 0.0
    %7358 = vmatpush1.msra.mxu0 %v7243
    %7359 = vmatprep.subr.mxu0 0.0
    %7360 = vmatpush1.msra.mxu0 %v7244
    %7361 = vmatprep.subr.mxu0 0.0
    %7362 = vmatpush1.msra.mxu0 %v7245
    %7363 = vmatprep.subr.mxu0 0.0
    %7364 = vmatpush1.msra.mxu0 %v7246
    %7365 = vmatprep.subr.mxu0 0.0
    %7366 = vmatpush1.msra.mxu0 0.0
    %7367 = vmatprep.subr.mxu0 0.0
    %7368 = vmatpush1.msra.mxu0 0.0
    %7369 = vmatprep.subr.mxu0 0.0
    %7370 = vmatpush1.msra.mxu0 0.0
    %7371 = vmatprep.subr.mxu0 0.0
    %7372 = vmatpush1.msra.mxu0 0.0
    %7373 = vmatprep.subr.mxu0 0.0
    %7374 = vmatpush1.msra.mxu0 0.0
    %7375 = vmatprep.subr.mxu0 0.0
    %7376 = vmatpush1.msra.mxu0 0.0
    %7377 = vmatprep.subr.mxu0 0.0
    %7378 = vmatpush1.msra.mxu0 0.0
    %7379 = vmatprep.subr.mxu0 0.0
    %7380 = vmatpush1.msra.mxu0 0.0
    %7381 = vmatprep.subr.mxu0 0.0
    %7382 = vmatpush1.msra.mxu0 0.0
    %7383 = vmatprep.subr.mxu0 0.0
    %7384 = vmatpush1.msra.mxu0 0.0
    %7385 = vmatprep.subr.mxu0 0.0
    %7386 = vmatpush1.msra.mxu0 0.0
    %7387 = vmatprep.subr.mxu0 0.0
    %7388 = vmatpush1.msra.mxu0 0.0
    %7389 = vmatprep.subr.mxu0 0.0
    %7390 = vmatpush1.msra.mxu0 0.0
    %7391 = vmatprep.subr.mxu0 0.0
    %7392 = vmatpush1.msra.mxu0 0.0
    %7393 = vmatprep.subr.mxu0 0.0
    %7394 = vmatpush1.msra.mxu0 0.0
    %7395 = vmatprep.subr.mxu0 0.0
    %7396 = vmatpush1.msra.mxu0 0.0
    %7397 = vmatprep.mubr.f32.mxu0 0.0
    %7398 = vmatmul.mubr.f32.gmra.mrb[0].mxu0 %v7259
    %v7399 = vpop.f32.mrb[0].mxu0
    %v7400 = vadd.f32 %v7330, %v7399
    %v7401 = vpop.f32.mrb[0].mxu0
    %7402 = vdwg.mxu0
    %v7403 = vadd.f32 %v7196, %v7400
    %s7404 = scalar_lea.vmem [#allocation2], 13
    %v7405 = vld [vmem:[%s7404] ss:$8 sm:$0x7]
    %v7406 = vld [vmem:[%s8 + $0x780] sm:$0xff]
    %v7407 = vld [vmem:[%s8 + $0x788] sm:$0xff]
    %v7408 = vld [vmem:[%s8 + $0x790] sm:$0xff]
    %v7409 = vld [vmem:[%s8 + $0x798] sm:$0xff]
    %v7410 = vld [vmem:[%s8 + $0x7a0] sm:$0xff]
    %v7411 = vld [vmem:[%s8 + $0x7a8] sm:$0xff]
    %v7412 = vld [vmem:[%s8 + $0x7b0] sm:$0xff]
    %v7413 = vld [vmem:[%s8 + $0x7b8] sm:$0xff]
    %v7414 = vld [vmem:[%s8 + $0x7c0] sm:$0xff]
    %v7415 = vld [vmem:[%s8 + $0x7c8] sm:$0xff]
    %v7416 = vld [vmem:[%s8 + $0x7d0] sm:$0xff]
    %v7417 = vld [vmem:[%s8 + $0x7d8] sm:$0xff]
    %v7418 = vld [vmem:[%s8 + $0x7e0] sm:$0xff]
    %v7419 = vld [vmem:[%s8 + $0x7e8] sm:$0xff]
    %v7420 = vld [vmem:[%s8 + $0x7f0] sm:$0xff]
    %v7421 = vld [vmem:[%s8 + $0x7f8] sm:$0xff]
    %v7422 = vld [vmem:[%s8 + $0x800] sm:$0xff]
    %v7423 = vld [vmem:[%s8 + $0x808] sm:$0xff]
    %v7424 = vld [vmem:[%s8 + $0x810] sm:$0xff]
    %v7425 = vld [vmem:[%s8 + $0x818] sm:$0xff]
    %v7426 = vld [vmem:[%s8 + $0x820] sm:$0xff]
    %v7427 = vld [vmem:[%s8 + $0x828] sm:$0xff]
    %v7428 = vld [vmem:[%s8 + $0x830] sm:$0xff]
    %v7429 = vld [vmem:[%s8 + $0x838] sm:$0xff]
    %v7430 = vld [vmem:[%s8 + $0x840] sm:$0xff]
    %v7431 = vld [vmem:[%s8 + $0x848] sm:$0xff]
    %v7432 = vld [vmem:[%s8 + $0x850] sm:$0xff]
    %v7433 = vld [vmem:[%s8 + $0x858] sm:$0xff]
    %v7434 = vld [vmem:[%s8 + $0x860] sm:$0xff]
    %v7435 = vld [vmem:[%s8 + $0x868] sm:$0xff]
    %v7436 = vld [vmem:[%s8 + $0x870] sm:$0xff]
    %v7437 = vld [vmem:[%s8 + $0x878] sm:$0xff]
    %v7438 = vld [vmem:[%s8 + $0x880] sm:$0xff]
    %v7439 = vld [vmem:[%s8 + $0x888] sm:$0xff]
    %v7440 = vld [vmem:[%s8 + $0x890] sm:$0xff]
    %v7441 = vld [vmem:[%s8 + $0x898] sm:$0xff]
    %v7442 = vld [vmem:[%s8 + $0x8a0] sm:$0xff]
    %v7443 = vld [vmem:[%s8 + $0x8a8] sm:$0xff]
    %v7444 = vld [vmem:[%s8 + $0x8b0] sm:$0xff]
    %v7445 = vld [vmem:[%s8 + $0x8b8] sm:$0xff]
    %v7446 = vld [vmem:[%s8 + $0x8c0] sm:$0xff]
    %v7447 = vld [vmem:[%s8 + $0x8c8] sm:$0xff]
    %v7448 = vld [vmem:[%s8 + $0x8d0] sm:$0xff]
    %v7449 = vld [vmem:[%s8 + $0x8d8] sm:$0xff]
    %v7450 = vld [vmem:[%s8 + $0x8e0] sm:$0xff]
    %v7451 = vld [vmem:[%s8 + $0x8e8] sm:$0xff]
    %v7452 = vld [vmem:[%s8 + $0x8f0] sm:$0xff]
    %v7453 = vld [vmem:[%s8 + $0x8f8] sm:$0xff]
    %v7455 = vlaneseq
    %v7456 = vshrl.u32 %v7455, 7
    %v7457 = vsub.s32 0, %v7456
    %v7458 = vrot.slane %v7405, %v7457
    %v7459 = vlaneseq
    %v7460 = vshrl.u32 %v7459, 7
    %v7461 = vsub.s32 1, %v7460
    %v7462 = vrot.slane %v7405, %v7461
    %v7463 = vlaneseq
    %v7464 = vshrl.u32 %v7463, 7
    %v7465 = vsub.s32 2, %v7464
    %v7466 = vrot.slane %v7405, %v7465
    %7470 = vmatprep.subr.mxu0 0.0
    %7471 = vmatpush1.msra.mxu0 %v7406
    %7472 = vmatprep.subr.mxu0 0.0
    %7473 = vmatpush1.msra.mxu0 %v7407
    %7474 = vmatprep.subr.mxu0 0.0
    %7475 = vmatpush1.msra.mxu0 %v7408
    %7476 = vmatprep.subr.mxu0 0.0
    %7477 = vmatpush1.msra.mxu0 %v7409
    %7478 = vmatprep.subr.mxu0 0.0
    %7479 = vmatpush1.msra.mxu0 %v7410
    %7480 = vmatprep.subr.mxu0 0.0
    %7481 = vmatpush1.msra.mxu0 %v7411
    %7482 = vmatprep.subr.mxu0 0.0
    %7483 = vmatpush1.msra.mxu0 %v7412
    %7484 = vmatprep.subr.mxu0 0.0
    %7485 = vmatpush1.msra.mxu0 %v7413
    %7486 = vmatprep.subr.mxu0 0.0
    %7487 = vmatpush1.msra.mxu0 %v7414
    %7488 = vmatprep.subr.mxu0 0.0
    %7489 = vmatpush1.msra.mxu0 %v7415
    %7490 = vmatprep.subr.mxu0 0.0
    %7491 = vmatpush1.msra.mxu0 %v7416
    %7492 = vmatprep.subr.mxu0 0.0
    %7493 = vmatpush1.msra.mxu0 %v7417
    %7494 = vmatprep.subr.mxu0 0.0
    %7495 = vmatpush1.msra.mxu0 %v7418
    %7496 = vmatprep.subr.mxu0 0.0
    %7497 = vmatpush1.msra.mxu0 %v7419
    %7498 = vmatprep.subr.mxu0 0.0
    %7499 = vmatpush1.msra.mxu0 %v7420
    %7500 = vmatprep.subr.mxu0 0.0
    %7501 = vmatpush1.msra.mxu0 %v7421
    %7502 = vmatprep.subr.mxu0 0.0
    %7503 = vmatpush1.msra.mxu0 %v7422
    %7504 = vmatprep.subr.mxu0 0.0
    %7505 = vmatpush1.msra.mxu0 %v7423
    %7506 = vmatprep.subr.mxu0 0.0
    %7507 = vmatpush1.msra.mxu0 %v7424
    %7508 = vmatprep.subr.mxu0 0.0
    %7509 = vmatpush1.msra.mxu0 %v7425
    %7510 = vmatprep.subr.mxu0 0.0
    %7511 = vmatpush1.msra.mxu0 %v7426
    %7512 = vmatprep.subr.mxu0 0.0
    %7513 = vmatpush1.msra.mxu0 %v7427
    %7514 = vmatprep.subr.mxu0 0.0
    %7515 = vmatpush1.msra.mxu0 %v7428
    %7516 = vmatprep.subr.mxu0 0.0
    %7517 = vmatpush1.msra.mxu0 %v7429
    %7518 = vmatprep.subr.mxu0 0.0
    %7519 = vmatpush1.msra.mxu0 %v7430
    %7520 = vmatprep.subr.mxu0 0.0
    %7521 = vmatpush1.msra.mxu0 %v7431
    %7522 = vmatprep.subr.mxu0 0.0
    %7523 = vmatpush1.msra.mxu0 %v7432
    %7524 = vmatprep.subr.mxu0 0.0
    %7525 = vmatpush1.msra.mxu0 %v7433
    %7526 = vmatprep.subr.mxu0 0.0
    %7527 = vmatpush1.msra.mxu0 %v7434
    %7528 = vmatprep.subr.mxu0 0.0
    %7529 = vmatpush1.msra.mxu0 %v7435
    %7530 = vmatprep.subr.mxu0 0.0
    %7531 = vmatpush1.msra.mxu0 %v7436
    %7532 = vmatprep.subr.mxu0 0.0
    %7533 = vmatpush1.msra.mxu0 %v7437
    %7534 = vmatprep.mubr.f32.mxu0 %v7462
    %7535 = vmatmul.mubr.f32.gmra.mrb[0].mxu0 %v7458
    %v7536 = vpop.f32.mrb[0].mxu0
    %v7537 = vadd.f32 0.0, %v7536
    %v7538 = vpop.f32.mrb[0].mxu0
    %7539 = vdwg.mxu0
    %7540 = vmatprep.subr.mxu0 0.0
    %7541 = vmatpush1.msra.mxu0 %v7438
    %7542 = vmatprep.subr.mxu0 0.0
    %7543 = vmatpush1.msra.mxu0 %v7439
    %7544 = vmatprep.subr.mxu0 0.0
    %7545 = vmatpush1.msra.mxu0 %v7440
    %7546 = vmatprep.subr.mxu0 0.0
    %7547 = vmatpush1.msra.mxu0 %v7441
    %7548 = vmatprep.subr.mxu0 0.0
    %7549 = vmatpush1.msra.mxu0 %v7442
    %7550 = vmatprep.subr.mxu0 0.0
    %7551 = vmatpush1.msra.mxu0 %v7443
    %7552 = vmatprep.subr.mxu0 0.0
    %7553 = vmatpush1.msra.mxu0 %v7444
    %7554 = vmatprep.subr.mxu0 0.0
    %7555 = vmatpush1.msra.mxu0 %v7445
    %7556 = vmatprep.subr.mxu0 0.0
    %7557 = vmatpush1.msra.mxu0 %v7446
    %7558 = vmatprep.subr.mxu0 0.0
    %7559 = vmatpush1.msra.mxu0 %v7447
    %7560 = vmatprep.subr.mxu0 0.0
    %7561 = vmatpush1.msra.mxu0 %v7448
    %7562 = vmatprep.subr.mxu0 0.0
    %7563 = vmatpush1.msra.mxu0 %v7449
    %7564 = vmatprep.subr.mxu0 0.0
    %7565 = vmatpush1.msra.mxu0 %v7450
    %7566 = vmatprep.subr.mxu0 0.0
    %7567 = vmatpush1.msra.mxu0 %v7451
    %7568 = vmatprep.subr.mxu0 0.0
    %7569 = vmatpush1.msra.mxu0 %v7452
    %7570 = vmatprep.subr.mxu0 0.0
    %7571 = vmatpush1.msra.mxu0 %v7453
    %7572 = vmatprep.subr.mxu0 0.0
    %7573 = vmatpush1.msra.mxu0 0.0
    %7574 = vmatprep.subr.mxu0 0.0
    %7575 = vmatpush1.msra.mxu0 0.0
    %7576 = vmatprep.subr.mxu0 0.0
    %7577 = vmatpush1.msra.mxu0 0.0
    %7578 = vmatprep.subr.mxu0 0.0
    %7579 = vmatpush1.msra.mxu0 0.0
    %7580 = vmatprep.subr.mxu0 0.0
    %7581 = vmatpush1.msra.mxu0 0.0
    %7582 = vmatprep.subr.mxu0 0.0
    %7583 = vmatpush1.msra.mxu0 0.0
    %7584 = vmatprep.subr.mxu0 0.0
    %7585 = vmatpush1.msra.mxu0 0.0
    %7586 = vmatprep.subr.mxu0 0.0
    %7587 = vmatpush1.msra.mxu0 0.0
    %7588 = vmatprep.subr.mxu0 0.0
    %7589 = vmatpush1.msra.mxu0 0.0
    %7590 = vmatprep.subr.mxu0 0.0
    %7591 = vmatpush1.msra.mxu0 0.0
    %7592 = vmatprep.subr.mxu0 0.0
    %7593 = vmatpush1.msra.mxu0 0.0
    %7594 = vmatprep.subr.mxu0 0.0
    %7595 = vmatpush1.msra.mxu0 0.0
    %7596 = vmatprep.subr.mxu0 0.0
    %7597 = vmatpush1.msra.mxu0 0.0
    %7598 = vmatprep.subr.mxu0 0.0
    %7599 = vmatpush1.msra.mxu0 0.0
    %7600 = vmatprep.subr.mxu0 0.0
    %7601 = vmatpush1.msra.mxu0 0.0
    %7602 = vmatprep.subr.mxu0 0.0
    %7603 = vmatpush1.msra.mxu0 0.0
    %7604 = vmatprep.mubr.f32.mxu0 0.0
    %7605 = vmatmul.mubr.f32.gmra.mrb[0].mxu0 %v7466
    %v7606 = vpop.f32.mrb[0].mxu0
    %v7607 = vadd.f32 %v7537, %v7606
    %v7608 = vpop.f32.mrb[0].mxu0
    %7609 = vdwg.mxu0
    %v7610 = vadd.f32 %v7403, %v7607
    %s7611 = scalar_lea.vmem [#allocation2], 14
    %v7612 = vld [vmem:[%s7611] ss:$8 sm:$0x7]
    %v7613 = vld [vmem:[%s8 + $0x900] sm:$0xff]
    %v7614 = vld [vmem:[%s8 + $0x908] sm:$0xff]
    %v7615 = vld [vmem:[%s8 + $0x910] sm:$0xff]
    %v7616 = vld [vmem:[%s8 + $0x918] sm:$0xff]
    %v7617 = vld [vmem:[%s8 + $0x920] sm:$0xff]
    %v7618 = vld [vmem:[%s8 + $0x928] sm:$0xff]
    %v7619 = vld [vmem:[%s8 + $0x930] sm:$0xff]
    %v7620 = vld [vmem:[%s8 + $0x938] sm:$0xff]
    %v7621 = vld [vmem:[%s8 + $0x940] sm:$0xff]
    %v7622 = vld [vmem:[%s8 + $0x948] sm:$0xff]
    %v7623 = vld [vmem:[%s8 + $0x950] sm:$0xff]
    %v7624 = vld [vmem:[%s8 + $0x958] sm:$0xff]
    %v7625 = vld [vmem:[%s8 + $0x960] sm:$0xff]
    %v7626 = vld [vmem:[%s8 + $0x968] sm:$0xff]
    %v7627 = vld [vmem:[%s8 + $0x970] sm:$0xff]
    %v7628 = vld [vmem:[%s8 + $0x978] sm:$0xff]
    %v7629 = vld [vmem:[%s8 + $0x980] sm:$0xff]
    %v7630 = vld [vmem:[%s8 + $0x988] sm:$0xff]
    %v7631 = vld [vmem:[%s8 + $0x990] sm:$0xff]
    %v7632 = vld [vmem:[%s8 + $0x998] sm:$0xff]
    %v7633 = vld [vmem:[%s8 + $0x9a0] sm:$0xff]
    %v7634 = vld [vmem:[%s8 + $0x9a8] sm:$0xff]
    %v7635 = vld [vmem:[%s8 + $0x9b0] sm:$0xff]
    %v7636 = vld [vmem:[%s8 + $0x9b8] sm:$0xff]
    %v7637 = vld [vmem:[%s8 + $0x9c0] sm:$0xff]
    %v7638 = vld [vmem:[%s8 + $0x9c8] sm:$0xff]
    %v7639 = vld [vmem:[%s8 + $0x9d0] sm:$0xff]
    %v7640 = vld [vmem:[%s8 + $0x9d8] sm:$0xff]
    %v7641 = vld [vmem:[%s8 + $0x9e0] sm:$0xff]
    %v7642 = vld [vmem:[%s8 + $0x9e8] sm:$0xff]
    %v7643 = vld [vmem:[%s8 + $0x9f0] sm:$0xff]
    %v7644 = vld [vmem:[%s8 + $0x9f8] sm:$0xff]
    %v7645 = vld [vmem:[%s8 + $0xa00] sm:$0xff]
    %v7646 = vld [vmem:[%s8 + $0xa08] sm:$0xff]
    %v7647 = vld [vmem:[%s8 + $0xa10] sm:$0xff]
    %v7648 = vld [vmem:[%s8 + $0xa18] sm:$0xff]
    %v7649 = vld [vmem:[%s8 + $0xa20] sm:$0xff]
    %v7650 = vld [vmem:[%s8 + $0xa28] sm:$0xff]
    %v7651 = vld [vmem:[%s8 + $0xa30] sm:$0xff]
    %v7652 = vld [vmem:[%s8 + $0xa38] sm:$0xff]
    %v7653 = vld [vmem:[%s8 + $0xa40] sm:$0xff]
    %v7654 = vld [vmem:[%s8 + $0xa48] sm:$0xff]
    %v7655 = vld [vmem:[%s8 + $0xa50] sm:$0xff]
    %v7656 = vld [vmem:[%s8 + $0xa58] sm:$0xff]
    %v7657 = vld [vmem:[%s8 + $0xa60] sm:$0xff]
    %v7658 = vld [vmem:[%s8 + $0xa68] sm:$0xff]
    %v7659 = vld [vmem:[%s8 + $0xa70] sm:$0xff]
    %v7660 = vld [vmem:[%s8 + $0xa78] sm:$0xff]
    %v7662 = vlaneseq
    %v7663 = vshrl.u32 %v7662, 7
    %v7664 = vsub.s32 0, %v7663
    %v7665 = vrot.slane %v7612, %v7664
    %v7666 = vlaneseq
    %v7667 = vshrl.u32 %v7666, 7
    %v7668 = vsub.s32 1, %v7667
    %v7669 = vrot.slane %v7612, %v7668
    %v7670 = vlaneseq
    %v7671 = vshrl.u32 %v7670, 7
    %v7672 = vsub.s32 2, %v7671
    %v7673 = vrot.slane %v7612, %v7672
    %7677 = vmatprep.subr.mxu0 0.0
    %7678 = vmatpush1.msra.mxu0 %v7613
    %7679 = vmatprep.subr.mxu0 0.0
    %7680 = vmatpush1.msra.mxu0 %v7614
    %7681 = vmatprep.subr.mxu0 0.0
    %7682 = vmatpush1.msra.mxu0 %v7615
    %7683 = vmatprep.subr.mxu0 0.0
    %7684 = vmatpush1.msra.mxu0 %v7616
    %7685 = vmatprep.subr.mxu0 0.0
    %7686 = vmatpush1.msra.mxu0 %v7617
    %7687 = vmatprep.subr.mxu0 0.0
    %7688 = vmatpush1.msra.mxu0 %v7618
    %7689 = vmatprep.subr.mxu0 0.0
    %7690 = vmatpush1.msra.mxu0 %v7619
    %7691 = vmatprep.subr.mxu0 0.0
    %7692 = vmatpush1.msra.mxu0 %v7620
    %7693 = vmatprep.subr.mxu0 0.0
    %7694 = vmatpush1.msra.mxu0 %v7621
    %7695 = vmatprep.subr.mxu0 0.0
    %7696 = vmatpush1.msra.mxu0 %v7622
    %7697 = vmatprep.subr.mxu0 0.0
    %7698 = vmatpush1.msra.mxu0 %v7623
    %7699 = vmatprep.subr.mxu0 0.0
    %7700 = vmatpush1.msra.mxu0 %v7624
    %7701 = vmatprep.subr.mxu0 0.0
    %7702 = vmatpush1.msra.mxu0 %v7625
    %7703 = vmatprep.subr.mxu0 0.0
    %7704 = vmatpush1.msra.mxu0 %v7626
    %7705 = vmatprep.subr.mxu0 0.0
    %7706 = vmatpush1.msra.mxu0 %v7627
    %7707 = vmatprep.subr.mxu0 0.0
    %7708 = vmatpush1.msra.mxu0 %v7628
    %7709 = vmatprep.subr.mxu0 0.0
    %7710 = vmatpush1.msra.mxu0 %v7629
    %7711 = vmatprep.subr.mxu0 0.0
    %7712 = vmatpush1.msra.mxu0 %v7630
    %7713 = vmatprep.subr.mxu0 0.0
    %7714 = vmatpush1.msra.mxu0 %v7631
    %7715 = vmatprep.subr.mxu0 0.0
    %7716 = vmatpush1.msra.mxu0 %v7632
    %7717 = vmatprep.subr.mxu0 0.0
    %7718 = vmatpush1.msra.mxu0 %v7633
    %7719 = vmatprep.subr.mxu0 0.0
    %7720 = vmatpush1.msra.mxu0 %v7634
    %7721 = vmatprep.subr.mxu0 0.0
    %7722 = vmatpush1.msra.mxu0 %v7635
    %7723 = vmatprep.subr.mxu0 0.0
    %7724 = vmatpush1.msra.mxu0 %v7636
    %7725 = vmatprep.subr.mxu0 0.0
    %7726 = vmatpush1.msra.mxu0 %v7637
    %7727 = vmatprep.subr.mxu0 0.0
    %7728 = vmatpush1.msra.mxu0 %v7638
    %7729 = vmatprep.subr.mxu0 0.0
    %7730 = vmatpush1.msra.mxu0 %v7639
    %7731 = vmatprep.subr.mxu0 0.0
    %7732 = vmatpush1.msra.mxu0 %v7640
    %7733 = vmatprep.subr.mxu0 0.0
    %7734 = vmatpush1.msra.mxu0 %v7641
    %7735 = vmatprep.subr.mxu0 0.0
    %7736 = vmatpush1.msra.mxu0 %v7642
    %7737 = vmatprep.subr.mxu0 0.0
    %7738 = vmatpush1.msra.mxu0 %v7643
    %7739 = vmatprep.subr.mxu0 0.0
    %7740 = vmatpush1.msra.mxu0 %v7644
    %7741 = vmatprep.mubr.f32.mxu0 %v7669
    %7742 = vmatmul.mubr.f32.gmra.mrb[0].mxu0 %v7665
    %v7743 = vpop.f32.mrb[0].mxu0
    %v7744 = vadd.f32 0.0, %v7743
    %v7745 = vpop.f32.mrb[0].mxu0
    %7746 = vdwg.mxu0
    %7747 = vmatprep.subr.mxu0 0.0
    %7748 = vmatpush1.msra.mxu0 %v7645
    %7749 = vmatprep.subr.mxu0 0.0
    %7750 = vmatpush1.msra.mxu0 %v7646
    %7751 = vmatprep.subr.mxu0 0.0
    %7752 = vmatpush1.msra.mxu0 %v7647
    %7753 = vmatprep.subr.mxu0 0.0
    %7754 = vmatpush1.msra.mxu0 %v7648
    %7755 = vmatprep.subr.mxu0 0.0
    %7756 = vmatpush1.msra.mxu0 %v7649
    %7757 = vmatprep.subr.mxu0 0.0
    %7758 = vmatpush1.msra.mxu0 %v7650
    %7759 = vmatprep.subr.mxu0 0.0
    %7760 = vmatpush1.msra.mxu0 %v7651
    %7761 = vmatprep.subr.mxu0 0.0
    %7762 = vmatpush1.msra.mxu0 %v7652
    %7763 = vmatprep.subr.mxu0 0.0
    %7764 = vmatpush1.msra.mxu0 %v7653
    %7765 = vmatprep.subr.mxu0 0.0
    %7766 = vmatpush1.msra.mxu0 %v7654
    %7767 = vmatprep.subr.mxu0 0.0
    %7768 = vmatpush1.msra.mxu0 %v7655
    %7769 = vmatprep.subr.mxu0 0.0
    %7770 = vmatpush1.msra.mxu0 %v7656
    %7771 = vmatprep.subr.mxu0 0.0
    %7772 = vmatpush1.msra.mxu0 %v7657
    %7773 = vmatprep.subr.mxu0 0.0
    %7774 = vmatpush1.msra.mxu0 %v7658
    %7775 = vmatprep.subr.mxu0 0.0
    %7776 = vmatpush1.msra.mxu0 %v7659
    %7777 = vmatprep.subr.mxu0 0.0
    %7778 = vmatpush1.msra.mxu0 %v7660
    %7779 = vmatprep.subr.mxu0 0.0
    %7780 = vmatpush1.msra.mxu0 0.0
    %7781 = vmatprep.subr.mxu0 0.0
    %7782 = vmatpush1.msra.mxu0 0.0
    %7783 = vmatprep.subr.mxu0 0.0
    %7784 = vmatpush1.msra.mxu0 0.0
    %7785 = vmatprep.subr.mxu0 0.0
    %7786 = vmatpush1.msra.mxu0 0.0
    %7787 = vmatprep.subr.mxu0 0.0
    %7788 = vmatpush1.msra.mxu0 0.0
    %7789 = vmatprep.subr.mxu0 0.0
    %7790 = vmatpush1.msra.mxu0 0.0
    %7791 = vmatprep.subr.mxu0 0.0
    %7792 = vmatpush1.msra.mxu0 0.0
    %7793 = vmatprep.subr.mxu0 0.0
    %7794 = vmatpush1.msra.mxu0 0.0
    %7795 = vmatprep.subr.mxu0 0.0
    %7796 = vmatpush1.msra.mxu0 0.0
    %7797 = vmatprep.subr.mxu0 0.0
    %7798 = vmatpush1.msra.mxu0 0.0
    %7799 = vmatprep.subr.mxu0 0.0
    %7800 = vmatpush1.msra.mxu0 0.0
    %7801 = vmatprep.subr.mxu0 0.0
    %7802 = vmatpush1.msra.mxu0 0.0
    %7803 = vmatprep.subr.mxu0 0.0
    %7804 = vmatpush1.msra.mxu0 0.0
    %7805 = vmatprep.subr.mxu0 0.0
    %7806 = vmatpush1.msra.mxu0 0.0
    %7807 = vmatprep.subr.mxu0 0.0
    %7808 = vmatpush1.msra.mxu0 0.0
    %7809 = vmatprep.subr.mxu0 0.0
    %7810 = vmatpush1.msra.mxu0 0.0
    %7811 = vmatprep.mubr.f32.mxu0 0.0
    %7812 = vmatmul.mubr.f32.gmra.mrb[0].mxu0 %v7673
    %v7813 = vpop.f32.mrb[0].mxu0
    %v7814 = vadd.f32 %v7744, %v7813
    %v7815 = vpop.f32.mrb[0].mxu0
    %7816 = vdwg.mxu0
    %v7817 = vadd.f32 %v7610, %v7814
    %s7818 = scalar_lea.vmem [#allocation2], 15
    %v7819 = vld [vmem:[%s7818] ss:$8 sm:$0x7]
    %v7820 = vld [vmem:[%s8 + $0xa80] sm:$0xff]
    %v7821 = vld [vmem:[%s8 + $0xa88] sm:$0xff]
    %v7822 = vld [vmem:[%s8 + $0xa90] sm:$0xff]
    %v7823 = vld [vmem:[%s8 + $0xa98] sm:$0xff]
    %v7824 = vld [vmem:[%s8 + $0xaa0] sm:$0xff]
    %v7825 = vld [vmem:[%s8 + $0xaa8] sm:$0xff]
    %v7826 = vld [vmem:[%s8 + $0xab0] sm:$0xff]
    %v7827 = vld [vmem:[%s8 + $0xab8] sm:$0xff]
    %v7828 = vld [vmem:[%s8 + $0xac0] sm:$0xff]
    %v7829 = vld [vmem:[%s8 + $0xac8] sm:$0xff]
    %v7830 = vld [vmem:[%s8 + $0xad0] sm:$0xff]
    %v7831 = vld [vmem:[%s8 + $0xad8] sm:$0xff]
    %v7832 = vld [vmem:[%s8 + $0xae0] sm:$0xff]
    %v7833 = vld [vmem:[%s8 + $0xae8] sm:$0xff]
    %v7834 = vld [vmem:[%s8 + $0xaf0] sm:$0xff]
    %v7835 = vld [vmem:[%s8 + $0xaf8] sm:$0xff]
    %v7836 = vld [vmem:[%s8 + $0xb00] sm:$0xff]
    %v7837 = vld [vmem:[%s8 + $0xb08] sm:$0xff]
    %v7838 = vld [vmem:[%s8 + $0xb10] sm:$0xff]
    %v7839 = vld [vmem:[%s8 + $0xb18] sm:$0xff]
    %v7840 = vld [vmem:[%s8 + $0xb20] sm:$0xff]
    %v7841 = vld [vmem:[%s8 + $0xb28] sm:$0xff]
    %v7842 = vld [vmem:[%s8 + $0xb30] sm:$0xff]
    %v7843 = vld [vmem:[%s8 + $0xb38] sm:$0xff]
    %v7844 = vld [vmem:[%s8 + $0xb40] sm:$0xff]
    %v7845 = vld [vmem:[%s8 + $0xb48] sm:$0xff]
    %v7846 = vld [vmem:[%s8 + $0xb50] sm:$0xff]
    %v7847 = vld [vmem:[%s8 + $0xb58] sm:$0xff]
    %v7848 = vld [vmem:[%s8 + $0xb60] sm:$0xff]
    %v7849 = vld [vmem:[%s8 + $0xb68] sm:$0xff]
    %v7850 = vld [vmem:[%s8 + $0xb70] sm:$0xff]
    %v7851 = vld [vmem:[%s8 + $0xb78] sm:$0xff]
    %v7852 = vld [vmem:[%s8 + $0xb80] sm:$0xff]
    %v7853 = vld [vmem:[%s8 + $0xb88] sm:$0xff]
    %v7854 = vld [vmem:[%s8 + $0xb90] sm:$0xff]
    %v7855 = vld [vmem:[%s8 + $0xb98] sm:$0xff]
    %v7856 = vld [vmem:[%s8 + $0xba0] sm:$0xff]
    %v7857 = vld [vmem:[%s8 + $0xba8] sm:$0xff]
    %v7858 = vld [vmem:[%s8 + $0xbb0] sm:$0xff]
    %v7859 = vld [vmem:[%s8 + $0xbb8] sm:$0xff]
    %v7860 = vld [vmem:[%s8 + $0xbc0] sm:$0xff]
    %v7861 = vld [vmem:[%s8 + $0xbc8] sm:$0xff]
    %v7862 = vld [vmem:[%s8 + $0xbd0] sm:$0xff]
    %v7863 = vld [vmem:[%s8 + $0xbd8] sm:$0xff]
    %v7864 = vld [vmem:[%s8 + $0xbe0] sm:$0xff]
    %v7865 = vld [vmem:[%s8 + $0xbe8] sm:$0xff]
    %v7866 = vld [vmem:[%s8 + $0xbf0] sm:$0xff]
    %v7867 = vld [vmem:[%s8 + $0xbf8] sm:$0xff]
    %v7869 = vlaneseq
    %v7870 = vshrl.u32 %v7869, 7
    %v7871 = vsub.s32 0, %v7870
    %v7872 = vrot.slane %v7819, %v7871
    %v7873 = vlaneseq
    %v7874 = vshrl.u32 %v7873, 7
    %v7875 = vsub.s32 1, %v7874
    %v7876 = vrot.slane %v7819, %v7875
    %v7877 = vlaneseq
    %v7878 = vshrl.u32 %v7877, 7
    %v7879 = vsub.s32 2, %v7878
    %v7880 = vrot.slane %v7819, %v7879
    %7884 = vmatprep.subr.mxu0 0.0
    %7885 = vmatpush1.msra.mxu0 %v7820
    %7886 = vmatprep.subr.mxu0 0.0
    %7887 = vmatpush1.msra.mxu0 %v7821
    %7888 = vmatprep.subr.mxu0 0.0
    %7889 = vmatpush1.msra.mxu0 %v7822
    %7890 = vmatprep.subr.mxu0 0.0
    %7891 = vmatpush1.msra.mxu0 %v7823
    %7892 = vmatprep.subr.mxu0 0.0
    %7893 = vmatpush1.msra.mxu0 %v7824
    %7894 = vmatprep.subr.mxu0 0.0
    %7895 = vmatpush1.msra.mxu0 %v7825
    %7896 = vmatprep.subr.mxu0 0.0
    %7897 = vmatpush1.msra.mxu0 %v7826
    %7898 = vmatprep.subr.mxu0 0.0
    %7899 = vmatpush1.msra.mxu0 %v7827
    %7900 = vmatprep.subr.mxu0 0.0
    %7901 = vmatpush1.msra.mxu0 %v7828
    %7902 = vmatprep.subr.mxu0 0.0
    %7903 = vmatpush1.msra.mxu0 %v7829
    %7904 = vmatprep.subr.mxu0 0.0
    %7905 = vmatpush1.msra.mxu0 %v7830
    %7906 = vmatprep.subr.mxu0 0.0
    %7907 = vmatpush1.msra.mxu0 %v7831
    %7908 = vmatprep.subr.mxu0 0.0
    %7909 = vmatpush1.msra.mxu0 %v7832
    %7910 = vmatprep.subr.mxu0 0.0
    %7911 = vmatpush1.msra.mxu0 %v7833
    %7912 = vmatprep.subr.mxu0 0.0
    %7913 = vmatpush1.msra.mxu0 %v7834
    %7914 = vmatprep.subr.mxu0 0.0
    %7915 = vmatpush1.msra.mxu0 %v7835
    %7916 = vmatprep.subr.mxu0 0.0
    %7917 = vmatpush1.msra.mxu0 %v7836
    %7918 = vmatprep.subr.mxu0 0.0
    %7919 = vmatpush1.msra.mxu0 %v7837
    %7920 = vmatprep.subr.mxu0 0.0
    %7921 = vmatpush1.msra.mxu0 %v7838
    %7922 = vmatprep.subr.mxu0 0.0
    %7923 = vmatpush1.msra.mxu0 %v7839
    %7924 = vmatprep.subr.mxu0 0.0
    %7925 = vmatpush1.msra.mxu0 %v7840
    %7926 = vmatprep.subr.mxu0 0.0
    %7927 = vmatpush1.msra.mxu0 %v7841
    %7928 = vmatprep.subr.mxu0 0.0
    %7929 = vmatpush1.msra.mxu0 %v7842
    %7930 = vmatprep.subr.mxu0 0.0
    %7931 = vmatpush1.msra.mxu0 %v7843
    %7932 = vmatprep.subr.mxu0 0.0
    %7933 = vmatpush1.msra.mxu0 %v7844
    %7934 = vmatprep.subr.mxu0 0.0
    %7935 = vmatpush1.msra.mxu0 %v7845
    %7936 = vmatprep.subr.mxu0 0.0
    %7937 = vmatpush1.msra.mxu0 %v7846
    %7938 = vmatprep.subr.mxu0 0.0
    %7939 = vmatpush1.msra.mxu0 %v7847
    %7940 = vmatprep.subr.mxu0 0.0
    %7941 = vmatpush1.msra.mxu0 %v7848
    %7942 = vmatprep.subr.mxu0 0.0
    %7943 = vmatpush1.msra.mxu0 %v7849
    %7944 = vmatprep.subr.mxu0 0.0
    %7945 = vmatpush1.msra.mxu0 %v7850
    %7946 = vmatprep.subr.mxu0 0.0
    %7947 = vmatpush1.msra.mxu0 %v7851
    %7948 = vmatprep.mubr.f32.mxu0 %v7876
    %7949 = vmatmul.mubr.f32.gmra.mrb[0].mxu0 %v7872
    %v7950 = vpop.f32.mrb[0].mxu0
    %v7951 = vadd.f32 0.0, %v7950
    %v7952 = vpop.f32.mrb[0].mxu0
    %7953 = vdwg.mxu0
    %7954 = vmatprep.subr.mxu0 0.0
    %7955 = vmatpush1.msra.mxu0 %v7852
    %7956 = vmatprep.subr.mxu0 0.0
    %7957 = vmatpush1.msra.mxu0 %v7853
    %7958 = vmatprep.subr.mxu0 0.0
    %7959 = vmatpush1.msra.mxu0 %v7854
    %7960 = vmatprep.subr.mxu0 0.0
    %7961 = vmatpush1.msra.mxu0 %v7855
    %7962 = vmatprep.subr.mxu0 0.0
    %7963 = vmatpush1.msra.mxu0 %v7856
    %7964 = vmatprep.subr.mxu0 0.0
    %7965 = vmatpush1.msra.mxu0 %v7857
    %7966 = vmatprep.subr.mxu0 0.0
    %7967 = vmatpush1.msra.mxu0 %v7858
    %7968 = vmatprep.subr.mxu0 0.0
    %7969 = vmatpush1.msra.mxu0 %v7859
    %7970 = vmatprep.subr.mxu0 0.0
    %7971 = vmatpush1.msra.mxu0 %v7860
    %7972 = vmatprep.subr.mxu0 0.0
    %7973 = vmatpush1.msra.mxu0 %v7861
    %7974 = vmatprep.subr.mxu0 0.0
    %7975 = vmatpush1.msra.mxu0 %v7862
    %7976 = vmatprep.subr.mxu0 0.0
    %7977 = vmatpush1.msra.mxu0 %v7863
    %7978 = vmatprep.subr.mxu0 0.0
    %7979 = vmatpush1.msra.mxu0 %v7864
    %7980 = vmatprep.subr.mxu0 0.0
    %7981 = vmatpush1.msra.mxu0 %v7865
    %7982 = vmatprep.subr.mxu0 0.0
    %7983 = vmatpush1.msra.mxu0 %v7866
    %7984 = vmatprep.subr.mxu0 0.0
    %7985 = vmatpush1.msra.mxu0 %v7867
    %7986 = vmatprep.subr.mxu0 0.0
    %7987 = vmatpush1.msra.mxu0 0.0
    %7988 = vmatprep.subr.mxu0 0.0
    %7989 = vmatpush1.msra.mxu0 0.0
    %7990 = vmatprep.subr.mxu0 0.0
    %7991 = vmatpush1.msra.mxu0 0.0
    %7992 = vmatprep.subr.mxu0 0.0
    %7993 = vmatpush1.msra.mxu0 0.0
    %7994 = vmatprep.subr.mxu0 0.0
    %7995 = vmatpush1.msra.mxu0 0.0
    %7996 = vmatprep.subr.mxu0 0.0
    %7997 = vmatpush1.msra.mxu0 0.0
    %7998 = vmatprep.subr.mxu0 0.0
    %7999 = vmatpush1.msra.mxu0 0.0
    %8000 = vmatprep.subr.mxu0 0.0
    %8001 = vmatpush1.msra.mxu0 0.0
    %8002 = vmatprep.subr.mxu0 0.0
    %8003 = vmatpush1.msra.mxu0 0.0
    %8004 = vmatprep.subr.mxu0 0.0
    %8005 = vmatpush1.msra.mxu0 0.0
    %8006 = vmatprep.subr.mxu0 0.0
    %8007 = vmatpush1.msra.mxu0 0.0
    %8008 = vmatprep.subr.mxu0 0.0
    %8009 = vmatpush1.msra.mxu0 0.0
    %8010 = vmatprep.subr.mxu0 0.0
    %8011 = vmatpush1.msra.mxu0 0.0
    %8012 = vmatprep.subr.mxu0 0.0
    %8013 = vmatpush1.msra.mxu0 0.0
    %8014 = vmatprep.subr.mxu0 0.0
    %8015 = vmatpush1.msra.mxu0 0.0
    %8016 = vmatprep.subr.mxu0 0.0
    %8017 = vmatpush1.msra.mxu0 0.0
    %8018 = vmatprep.mubr.f32.mxu0 0.0
    %8019 = vmatmul.mubr.f32.gmra.mrb[0].mxu0 %v7880
    %v8020 = vpop.f32.mrb[0].mxu0
    %v8021 = vadd.f32 %v7951, %v8020
    %v8022 = vpop.f32.mrb[0].mxu0
    %8023 = vdwg.mxu0
    %v8024 = vadd.f32 %v7817, %v8021
    %v8025 = vmax.f32 %v8024, 0.0
    %vm8026 = vcmask 261120
    %v8028 = vsel %vm8026, %v8025, 0
    %8030 = vmatprep.subr.mxu0 0.0
    %8031 = vmatpush1.msra.mxu0 %v6365
    %8032 = vmatprep.subr.mxu0 0.0
    %8033 = vmatpush1.msra.mxu0 %v6366
    %8034 = vmatprep.subr.mxu0 0.0
    %8035 = vmatpush1.msra.mxu0 %v6367
    %8036 = vmatprep.subr.mxu0 0.0
    %8037 = vmatpush1.msra.mxu0 %v6368
    %8038 = vmatprep.subr.mxu0 0.0
    %8039 = vmatpush1.msra.mxu0 0.0
    %8040 = vmatprep.subr.mxu0 0.0
    %8041 = vmatpush1.msra.mxu0 0.0
    %8042 = vmatprep.subr.mxu0 0.0
    %8043 = vmatpush1.msra.mxu0 0.0
    %8044 = vmatprep.subr.mxu0 0.0
    %8045 = vmatpush1.msra.mxu0 0.0
    %8046 = vmatprep.subr.mxu0 0.0
    %8047 = vmatpush1.msra.mxu0 0.0
    %8048 = vmatprep.subr.mxu0 0.0
    %8049 = vmatpush1.msra.mxu0 0.0
    %8050 = vmatprep.subr.mxu0 0.0
    %8051 = vmatpush1.msra.mxu0 0.0
    %8052 = vmatprep.subr.mxu0 0.0
    %8053 = vmatpush1.msra.mxu0 0.0
    %8054 = vmatprep.subr.mxu0 0.0
    %8055 = vmatpush1.msra.mxu0 0.0
    %8056 = vmatprep.subr.mxu0 0.0
    %8057 = vmatpush1.msra.mxu0 0.0
    %8058 = vmatprep.subr.mxu0 0.0
    %8059 = vmatpush1.msra.mxu0 0.0
    %8060 = vmatprep.subr.mxu0 0.0
    %8061 = vmatpush1.msra.mxu0 0.0
    %8062 = vmatprep.subr.mxu0 0.0
    %8063 = vmatpush1.msra.mxu0 0.0
    %8064 = vmatprep.subr.mxu0 0.0
    %8065 = vmatpush1.msra.mxu0 0.0
    %8066 = vmatprep.subr.mxu0 0.0
    %8067 = vmatpush1.msra.mxu0 0.0
    %8068 = vmatprep.subr.mxu0 0.0
    %8069 = vmatpush1.msra.mxu0 0.0
    %8070 = vmatprep.subr.mxu0 0.0
    %8071 = vmatpush1.msra.mxu0 0.0
    %8072 = vmatprep.subr.mxu0 0.0
    %8073 = vmatpush1.msra.mxu0 0.0
    %8074 = vmatprep.subr.mxu0 0.0
    %8075 = vmatpush1.msra.mxu0 0.0
    %8076 = vmatprep.subr.mxu0 0.0
    %8077 = vmatpush1.msra.mxu0 0.0
    %8078 = vmatprep.subr.mxu0 0.0
    %8079 = vmatpush1.msra.mxu0 0.0
    %8080 = vmatprep.subr.mxu0 0.0
    %8081 = vmatpush1.msra.mxu0 0.0
    %8082 = vmatprep.subr.mxu0 0.0
    %8083 = vmatpush1.msra.mxu0 0.0
    %8084 = vmatprep.subr.mxu0 0.0
    %8085 = vmatpush1.msra.mxu0 0.0
    %8086 = vmatprep.subr.mxu0 0.0
    %8087 = vmatpush1.msra.mxu0 0.0
    %8088 = vmatprep.subr.mxu0 0.0
    %8089 = vmatpush1.msra.mxu0 0.0
    %8090 = vmatprep.subr.mxu0 0.0
    %8091 = vmatpush1.msra.mxu0 0.0
    %8092 = vmatprep.subr.mxu0 0.0
    %8093 = vmatpush1.msra.mxu0 0.0
    %8094 = vmatprep.mubr.f32.mxu0 0.0
    %8095 = vmatmul.mubr.f32.gmra.mrb[0].mxu0 %v8028
    %v8096 = vpop.f32.mrb[0].mxu0
    %v8097 = vadd.f32 %v6364, %v8096
    %v8098 = vpop.f32.mrb[0].mxu0
    %8099 = vdwg.mxu0
    %vm8100 = vcmask 40960
    %8101 = vst.msk [vmem:[#allocation6] sm:$0x1] %vm8100, %v8097
    %s8102 = scalar_lea.vmem [#allocation2], 32
    %v8103 = vld [vmem:[%s8102] ss:$8 sm:$0x7]
    %v8104 = vld [vmem:[%s8] sm:$0xff]
    %v8105 = vld [vmem:[%s8 + $0x8] sm:$0xff]
    %v8106 = vld [vmem:[%s8 + $0x10] sm:$0xff]
    %v8107 = vld [vmem:[%s8 + $0x18] sm:$0xff]
    %v8108 = vld [vmem:[%s8 + $0x20] sm:$0xff]
    %v8109 = vld [vmem:[%s8 + $0x28] sm:$0xff]
    %v8110 = vld [vmem:[%s8 + $0x30] sm:$0xff]
    %v8111 = vld [vmem:[%s8 + $0x38] sm:$0xff]
    %v8112 = vld [vmem:[%s8 + $0x40] sm:$0xff]
    %v8113 = vld [vmem:[%s8 + $0x48] sm:$0xff]
    %v8114 = vld [vmem:[%s8 + $0x50] sm:$0xff]
    %v8115 = vld [vmem:[%s8 + $0x58] sm:$0xff]
    %v8116 = vld [vmem:[%s8 + $0x60] sm:$0xff]
    %v8117 = vld [vmem:[%s8 + $0x68] sm:$0xff]
    %v8118 = vld [vmem:[%s8 + $0x70] sm:$0xff]
    %v8119 = vld [vmem:[%s8 + $0x78] sm:$0xff]
    %v8120 = vld [vmem:[%s8 + $0x80] sm:$0xff]
    %v8121 = vld [vmem:[%s8 + $0x88] sm:$0xff]
    %v8122 = vld [vmem:[%s8 + $0x90] sm:$0xff]
    %v8123 = vld [vmem:[%s8 + $0x98] sm:$0xff]
    %v8124 = vld [vmem:[%s8 + $0xa0] sm:$0xff]
    %v8125 = vld [vmem:[%s8 + $0xa8] sm:$0xff]
    %v8126 = vld [vmem:[%s8 + $0xb0] sm:$0xff]
    %v8127 = vld [vmem:[%s8 + $0xb8] sm:$0xff]
    %v8128 = vld [vmem:[%s8 + $0xc0] sm:$0xff]
    %v8129 = vld [vmem:[%s8 + $0xc8] sm:$0xff]
    %v8130 = vld [vmem:[%s8 + $0xd0] sm:$0xff]
    %v8131 = vld [vmem:[%s8 + $0xd8] sm:$0xff]
    %v8132 = vld [vmem:[%s8 + $0xe0] sm:$0xff]
    %v8133 = vld [vmem:[%s8 + $0xe8] sm:$0xff]
    %v8134 = vld [vmem:[%s8 + $0xf0] sm:$0xff]
    %v8135 = vld [vmem:[%s8 + $0xf8] sm:$0xff]
    %v8136 = vld [vmem:[%s8 + $0x100] sm:$0xff]
    %v8137 = vld [vmem:[%s8 + $0x108] sm:$0xff]
    %v8138 = vld [vmem:[%s8 + $0x110] sm:$0xff]
    %v8139 = vld [vmem:[%s8 + $0x118] sm:$0xff]
    %v8140 = vld [vmem:[%s8 + $0x120] sm:$0xff]
    %v8141 = vld [vmem:[%s8 + $0x128] sm:$0xff]
    %v8142 = vld [vmem:[%s8 + $0x130] sm:$0xff]
    %v8143 = vld [vmem:[%s8 + $0x138] sm:$0xff]
    %v8144 = vld [vmem:[%s8 + $0x140] sm:$0xff]
    %v8145 = vld [vmem:[%s8 + $0x148] sm:$0xff]
    %v8146 = vld [vmem:[%s8 + $0x150] sm:$0xff]
    %v8147 = vld [vmem:[%s8 + $0x158] sm:$0xff]
    %v8148 = vld [vmem:[%s8 + $0x160] sm:$0xff]
    %v8149 = vld [vmem:[%s8 + $0x168] sm:$0xff]
    %v8150 = vld [vmem:[%s8 + $0x170] sm:$0xff]
    %v8151 = vld [vmem:[%s8 + $0x178] sm:$0xff]
    %v8153 = vlaneseq
    %v8154 = vshrl.u32 %v8153, 7
    %v8155 = vsub.s32 0, %v8154
    %v8156 = vrot.slane %v8103, %v8155
    %v8157 = vlaneseq
    %v8158 = vshrl.u32 %v8157, 7
    %v8159 = vsub.s32 1, %v8158
    %v8160 = vrot.slane %v8103, %v8159
    %v8161 = vlaneseq
    %v8162 = vshrl.u32 %v8161, 7
    %v8163 = vsub.s32 2, %v8162
    %v8164 = vrot.slane %v8103, %v8163
    %8168 = vmatprep.subr.mxu0 0.0
    %8169 = vmatpush1.msra.mxu0 %v8104
    %8170 = vmatprep.subr.mxu0 0.0
    %8171 = vmatpush1.msra.mxu0 %v8105
    %8172 = vmatprep.subr.mxu0 0.0
    %8173 = vmatpush1.msra.mxu0 %v8106
    %8174 = vmatprep.subr.mxu0 0.0
    %8175 = vmatpush1.msra.mxu0 %v8107
    %8176 = vmatprep.subr.mxu0 0.0
    %8177 = vmatpush1.msra.mxu0 %v8108
    %8178 = vmatprep.subr.mxu0 0.0
    %8179 = vmatpush1.msra.mxu0 %v8109
    %8180 = vmatprep.subr.mxu0 0.0
    %8181 = vmatpush1.msra.mxu0 %v8110
    %8182 = vmatprep.subr.mxu0 0.0
    %8183 = vmatpush1.msra.mxu0 %v8111
    %8184 = vmatprep.subr.mxu0 0.0
    %8185 = vmatpush1.msra.mxu0 %v8112
    %8186 = vmatprep.subr.mxu0 0.0
    %8187 = vmatpush1.msra.mxu0 %v8113
    %8188 = vmatprep.subr.mxu0 0.0
    %8189 = vmatpush1.msra.mxu0 %v8114
    %8190 = vmatprep.subr.mxu0 0.0
    %8191 = vmatpush1.msra.mxu0 %v8115
    %8192 = vmatprep.subr.mxu0 0.0
    %8193 = vmatpush1.msra.mxu0 %v8116
    %8194 = vmatprep.subr.mxu0 0.0
    %8195 = vmatpush1.msra.mxu0 %v8117
    %8196 = vmatprep.subr.mxu0 0.0
    %8197 = vmatpush1.msra.mxu0 %v8118
    %8198 = vmatprep.subr.mxu0 0.0
    %8199 = vmatpush1.msra.mxu0 %v8119
    %8200 = vmatprep.subr.mxu0 0.0
    %8201 = vmatpush1.msra.mxu0 %v8120
    %8202 = vmatprep.subr.mxu0 0.0
    %8203 = vmatpush1.msra.mxu0 %v8121
    %8204 = vmatprep.subr.mxu0 0.0
    %8205 = vmatpush1.msra.mxu0 %v8122
    %8206 = vmatprep.subr.mxu0 0.0
    %8207 = vmatpush1.msra.mxu0 %v8123
    %8208 = vmatprep.subr.mxu0 0.0
    %8209 = vmatpush1.msra.mxu0 %v8124
    %8210 = vmatprep.subr.mxu0 0.0
    %8211 = vmatpush1.msra.mxu0 %v8125
    %8212 = vmatprep.subr.mxu0 0.0
    %8213 = vmatpush1.msra.mxu0 %v8126
    %8214 = vmatprep.subr.mxu0 0.0
    %8215 = vmatpush1.msra.mxu0 %v8127
    %8216 = vmatprep.subr.mxu0 0.0
    %8217 = vmatpush1.msra.mxu0 %v8128
    %8218 = vmatprep.subr.mxu0 0.0
    %8219 = vmatpush1.msra.mxu0 %v8129
    %8220 = vmatprep.subr.mxu0 0.0
    %8221 = vmatpush1.msra.mxu0 %v8130
    %8222 = vmatprep.subr.mxu0 0.0
    %8223 = vmatpush1.msra.mxu0 %v8131
    %8224 = vmatprep.subr.mxu0 0.0
    %8225 = vmatpush1.msra.mxu0 %v8132
    %8226 = vmatprep.subr.mxu0 0.0
    %8227 = vmatpush1.msra.mxu0 %v8133
    %8228 = vmatprep.subr.mxu0 0.0
    %8229 = vmatpush1.msra.mxu0 %v8134
    %8230 = vmatprep.subr.mxu0 0.0
    %8231 = vmatpush1.msra.mxu0 %v8135
    %8232 = vmatprep.mubr.f32.mxu0 %v8160
    %8233 = vmatmul.mubr.f32.gmra.mrb[0].mxu0 %v8156
    %v8234 = vpop.f32.mrb[0].mxu0
    %v8235 = vadd.f32 0.0, %v8234
    %v8236 = vpop.f32.mrb[0].mxu0
    %8237 = vdwg.mxu0
    %8238 = vmatprep.subr.mxu0 0.0
    %8239 = vmatpush1.msra.mxu0 %v8136
    %8240 = vmatprep.subr.mxu0 0.0
    %8241 = vmatpush1.msra.mxu0 %v8137
    %8242 = vmatprep.subr.mxu0 0.0
    %8243 = vmatpush1.msra.mxu0 %v8138
    %8244 = vmatprep.subr.mxu0 0.0
    %8245 = vmatpush1.msra.mxu0 %v8139
    %8246 = vmatprep.subr.mxu0 0.0
    %8247 = vmatpush1.msra.mxu0 %v8140
    %8248 = vmatprep.subr.mxu0 0.0
    %8249 = vmatpush1.msra.mxu0 %v8141
    %8250 = vmatprep.subr.mxu0 0.0
    %8251 = vmatpush1.msra.mxu0 %v8142
    %8252 = vmatprep.subr.mxu0 0.0
    %8253 = vmatpush1.msra.mxu0 %v8143
    %8254 = vmatprep.subr.mxu0 0.0
    %8255 = vmatpush1.msra.mxu0 %v8144
    %8256 = vmatprep.subr.mxu0 0.0
    %8257 = vmatpush1.msra.mxu0 %v8145
    %8258 = vmatprep.subr.mxu0 0.0
    %8259 = vmatpush1.msra.mxu0 %v8146
    %8260 = vmatprep.subr.mxu0 0.0
    %8261 = vmatpush1.msra.mxu0 %v8147
    %8262 = vmatprep.subr.mxu0 0.0
    %8263 = vmatpush1.msra.mxu0 %v8148
    %8264 = vmatprep.subr.mxu0 0.0
    %8265 = vmatpush1.msra.mxu0 %v8149
    %8266 = vmatprep.subr.mxu0 0.0
    %8267 = vmatpush1.msra.mxu0 %v8150
    %8268 = vmatprep.subr.mxu0 0.0
    %8269 = vmatpush1.msra.mxu0 %v8151
    %8270 = vmatprep.subr.mxu0 0.0
    %8271 = vmatpush1.msra.mxu0 0.0
    %8272 = vmatprep.subr.mxu0 0.0
    %8273 = vmatpush1.msra.mxu0 0.0
    %8274 = vmatprep.subr.mxu0 0.0
    %8275 = vmatpush1.msra.mxu0 0.0
    %8276 = vmatprep.subr.mxu0 0.0
    %8277 = vmatpush1.msra.mxu0 0.0
    %8278 = vmatprep.subr.mxu0 0.0
    %8279 = vmatpush1.msra.mxu0 0.0
    %8280 = vmatprep.subr.mxu0 0.0
    %8281 = vmatpush1.msra.mxu0 0.0
    %8282 = vmatprep.subr.mxu0 0.0
    %8283 = vmatpush1.msra.mxu0 0.0
    %8284 = vmatprep.subr.mxu0 0.0
    %8285 = vmatpush1.msra.mxu0 0.0
    %8286 = vmatprep.subr.mxu0 0.0
    %8287 = vmatpush1.msra.mxu0 0.0
    %8288 = vmatprep.subr.mxu0 0.0
    %8289 = vmatpush1.msra.mxu0 0.0
    %8290 = vmatprep.subr.mxu0 0.0
    %8291 = vmatpush1.msra.mxu0 0.0
    %8292 = vmatprep.subr.mxu0 0.0
    %8293 = vmatpush1.msra.mxu0 0.0
    %8294 = vmatprep.subr.mxu0 0.0
    %8295 = vmatpush1.msra.mxu0 0.0
    %8296 = vmatprep.subr.mxu0 0.0
    %8297 = vmatpush1.msra.mxu0 0.0
    %8298 = vmatprep.subr.mxu0 0.0
    %8299 = vmatpush1.msra.mxu0 0.0
    %8300 = vmatprep.subr.mxu0 0.0
    %8301 = vmatpush1.msra.mxu0 0.0
    %8302 = vmatprep.mubr.f32.mxu0 0.0
    %8303 = vmatmul.mubr.f32.gmra.mrb[0].mxu0 %v8164
    %v8304 = vpop.f32.mrb[0].mxu0
    %v8305 = vadd.f32 %v8235, %v8304
    %v8306 = vpop.f32.mrb[0].mxu0
    %8307 = vdwg.mxu0
    %v8308 = vadd.f32 %v6363, %v8305
    %s8309 = scalar_lea.vmem [#allocation2], 33
    %v8310 = vld [vmem:[%s8309] ss:$8 sm:$0x7]
    %v8311 = vld [vmem:[%s8 + $0x180] sm:$0xff]
    %v8312 = vld [vmem:[%s8 + $0x188] sm:$0xff]
    %v8313 = vld [vmem:[%s8 + $0x190] sm:$0xff]
    %v8314 = vld [vmem:[%s8 + $0x198] sm:$0xff]
    %v8315 = vld [vmem:[%s8 + $0x1a0] sm:$0xff]
    %v8316 = vld [vmem:[%s8 + $0x1a8] sm:$0xff]
    %v8317 = vld [vmem:[%s8 + $0x1b0] sm:$0xff]
    %v8318 = vld [vmem:[%s8 + $0x1b8] sm:$0xff]
    %v8319 = vld [vmem:[%s8 + $0x1c0] sm:$0xff]
    %v8320 = vld [vmem:[%s8 + $0x1c8] sm:$0xff]
    %v8321 = vld [vmem:[%s8 + $0x1d0] sm:$0xff]
    %v8322 = vld [vmem:[%s8 + $0x1d8] sm:$0xff]
    %v8323 = vld [vmem:[%s8 + $0x1e0] sm:$0xff]
    %v8324 = vld [vmem:[%s8 + $0x1e8] sm:$0xff]
    %v8325 = vld [vmem:[%s8 + $0x1f0] sm:$0xff]
    %v8326 = vld [vmem:[%s8 + $0x1f8] sm:$0xff]
    %v8327 = vld [vmem:[%s8 + $0x200] sm:$0xff]
    %v8328 = vld [vmem:[%s8 + $0x208] sm:$0xff]
    %v8329 = vld [vmem:[%s8 + $0x210] sm:$0xff]
    %v8330 = vld [vmem:[%s8 + $0x218] sm:$0xff]
    %v8331 = vld [vmem:[%s8 + $0x220] sm:$0xff]
    %v8332 = vld [vmem:[%s8 + $0x228] sm:$0xff]
    %v8333 = vld [vmem:[%s8 + $0x230] sm:$0xff]
    %v8334 = vld [vmem:[%s8 + $0x238] sm:$0xff]
    %v8335 = vld [vmem:[%s8 + $0x240] sm:$0xff]
    %v8336 = vld [vmem:[%s8 + $0x248] sm:$0xff]
    %v8337 = vld [vmem:[%s8 + $0x250] sm:$0xff]
    %v8338 = vld [vmem:[%s8 + $0x258] sm:$0xff]
    %v8339 = vld [vmem:[%s8 + $0x260] sm:$0xff]
    %v8340 = vld [vmem:[%s8 + $0x268] sm:$0xff]
    %v8341 = vld [vmem:[%s8 + $0x270] sm:$0xff]
    %v8342 = vld [vmem:[%s8 + $0x278] sm:$0xff]
    %v8343 = vld [vmem:[%s8 + $0x280] sm:$0xff]
    %v8344 = vld [vmem:[%s8 + $0x288] sm:$0xff]
    %v8345 = vld [vmem:[%s8 + $0x290] sm:$0xff]
    %v8346 = vld [vmem:[%s8 + $0x298] sm:$0xff]
    %v8347 = vld [vmem:[%s8 + $0x2a0] sm:$0xff]
    %v8348 = vld [vmem:[%s8 + $0x2a8] sm:$0xff]
    %v8349 = vld [vmem:[%s8 + $0x2b0] sm:$0xff]
    %v8350 = vld [vmem:[%s8 + $0x2b8] sm:$0xff]
    %v8351 = vld [vmem:[%s8 + $0x2c0] sm:$0xff]
    %v8352 = vld [vmem:[%s8 + $0x2c8] sm:$0xff]
    %v8353 = vld [vmem:[%s8 + $0x2d0] sm:$0xff]
    %v8354 = vld [vmem:[%s8 + $0x2d8] sm:$0xff]
    %v8355 = vld [vmem:[%s8 + $0x2e0] sm:$0xff]
    %v8356 = vld [vmem:[%s8 + $0x2e8] sm:$0xff]
    %v8357 = vld [vmem:[%s8 + $0x2f0] sm:$0xff]
    %v8358 = vld [vmem:[%s8 + $0x2f8] sm:$0xff]
    %v8360 = vlaneseq
    %v8361 = vshrl.u32 %v8360, 7
    %v8362 = vsub.s32 0, %v8361
    %v8363 = vrot.slane %v8310, %v8362
    %v8364 = vlaneseq
    %v8365 = vshrl.u32 %v8364, 7
    %v8366 = vsub.s32 1, %v8365
    %v8367 = vrot.slane %v8310, %v8366
    %v8368 = vlaneseq
    %v8369 = vshrl.u32 %v8368, 7
    %v8370 = vsub.s32 2, %v8369
    %v8371 = vrot.slane %v8310, %v8370
    %8375 = vmatprep.subr.mxu0 0.0
    %8376 = vmatpush1.msra.mxu0 %v8311
    %8377 = vmatprep.subr.mxu0 0.0
    %8378 = vmatpush1.msra.mxu0 %v8312
    %8379 = vmatprep.subr.mxu0 0.0
    %8380 = vmatpush1.msra.mxu0 %v8313
    %8381 = vmatprep.subr.mxu0 0.0
    %8382 = vmatpush1.msra.mxu0 %v8314
    %8383 = vmatprep.subr.mxu0 0.0
    %8384 = vmatpush1.msra.mxu0 %v8315
    %8385 = vmatprep.subr.mxu0 0.0
    %8386 = vmatpush1.msra.mxu0 %v8316
    %8387 = vmatprep.subr.mxu0 0.0
    %8388 = vmatpush1.msra.mxu0 %v8317
    %8389 = vmatprep.subr.mxu0 0.0
    %8390 = vmatpush1.msra.mxu0 %v8318
    %8391 = vmatprep.subr.mxu0 0.0
    %8392 = vmatpush1.msra.mxu0 %v8319
    %8393 = vmatprep.subr.mxu0 0.0
    %8394 = vmatpush1.msra.mxu0 %v8320
    %8395 = vmatprep.subr.mxu0 0.0
    %8396 = vmatpush1.msra.mxu0 %v8321
    %8397 = vmatprep.subr.mxu0 0.0
    %8398 = vmatpush1.msra.mxu0 %v8322
    %8399 = vmatprep.subr.mxu0 0.0
    %8400 = vmatpush1.msra.mxu0 %v8323
    %8401 = vmatprep.subr.mxu0 0.0
    %8402 = vmatpush1.msra.mxu0 %v8324
    %8403 = vmatprep.subr.mxu0 0.0
    %8404 = vmatpush1.msra.mxu0 %v8325
    %8405 = vmatprep.subr.mxu0 0.0
    %8406 = vmatpush1.msra.mxu0 %v8326
    %8407 = vmatprep.subr.mxu0 0.0
    %8408 = vmatpush1.msra.mxu0 %v8327
    %8409 = vmatprep.subr.mxu0 0.0
    %8410 = vmatpush1.msra.mxu0 %v8328
    %8411 = vmatprep.subr.mxu0 0.0
    %8412 = vmatpush1.msra.mxu0 %v8329
    %8413 = vmatprep.subr.mxu0 0.0
    %8414 = vmatpush1.msra.mxu0 %v8330
    %8415 = vmatprep.subr.mxu0 0.0
    %8416 = vmatpush1.msra.mxu0 %v8331
    %8417 = vmatprep.subr.mxu0 0.0
    %8418 = vmatpush1.msra.mxu0 %v8332
    %8419 = vmatprep.subr.mxu0 0.0
    %8420 = vmatpush1.msra.mxu0 %v8333
    %8421 = vmatprep.subr.mxu0 0.0
    %8422 = vmatpush1.msra.mxu0 %v8334
    %8423 = vmatprep.subr.mxu0 0.0
    %8424 = vmatpush1.msra.mxu0 %v8335
    %8425 = vmatprep.subr.mxu0 0.0
    %8426 = vmatpush1.msra.mxu0 %v8336
    %8427 = vmatprep.subr.mxu0 0.0
    %8428 = vmatpush1.msra.mxu0 %v8337
    %8429 = vmatprep.subr.mxu0 0.0
    %8430 = vmatpush1.msra.mxu0 %v8338
    %8431 = vmatprep.subr.mxu0 0.0
    %8432 = vmatpush1.msra.mxu0 %v8339
    %8433 = vmatprep.subr.mxu0 0.0
    %8434 = vmatpush1.msra.mxu0 %v8340
    %8435 = vmatprep.subr.mxu0 0.0
    %8436 = vmatpush1.msra.mxu0 %v8341
    %8437 = vmatprep.subr.mxu0 0.0
    %8438 = vmatpush1.msra.mxu0 %v8342
    %8439 = vmatprep.mubr.f32.mxu0 %v8367
    %8440 = vmatmul.mubr.f32.gmra.mrb[0].mxu0 %v8363
    %v8441 = vpop.f32.mrb[0].mxu0
    %v8442 = vadd.f32 0.0, %v8441
    %v8443 = vpop.f32.mrb[0].mxu0
    %8444 = vdwg.mxu0
    %8445 = vmatprep.subr.mxu0 0.0
    %8446 = vmatpush1.msra.mxu0 %v8343
    %8447 = vmatprep.subr.mxu0 0.0
    %8448 = vmatpush1.msra.mxu0 %v8344
    %8449 = vmatprep.subr.mxu0 0.0
    %8450 = vmatpush1.msra.mxu0 %v8345
    %8451 = vmatprep.subr.mxu0 0.0
    %8452 = vmatpush1.msra.mxu0 %v8346
    %8453 = vmatprep.subr.mxu0 0.0
    %8454 = vmatpush1.msra.mxu0 %v8347
    %8455 = vmatprep.subr.mxu0 0.0
    %8456 = vmatpush1.msra.mxu0 %v8348
    %8457 = vmatprep.subr.mxu0 0.0
    %8458 = vmatpush1.msra.mxu0 %v8349
    %8459 = vmatprep.subr.mxu0 0.0
    %8460 = vmatpush1.msra.mxu0 %v8350
    %8461 = vmatprep.subr.mxu0 0.0
    %8462 = vmatpush1.msra.mxu0 %v8351
    %8463 = vmatprep.subr.mxu0 0.0
    %8464 = vmatpush1.msra.mxu0 %v8352
    %8465 = vmatprep.subr.mxu0 0.0
    %8466 = vmatpush1.msra.mxu0 %v8353
    %8467 = vmatprep.subr.mxu0 0.0
    %8468 = vmatpush1.msra.mxu0 %v8354
    %8469 = vmatprep.subr.mxu0 0.0
    %8470 = vmatpush1.msra.mxu0 %v8355
    %8471 = vmatprep.subr.mxu0 0.0
    %8472 = vmatpush1.msra.mxu0 %v8356
    %8473 = vmatprep.subr.mxu0 0.0
    %8474 = vmatpush1.msra.mxu0 %v8357
    %8475 = vmatprep.subr.mxu0 0.0
    %8476 = vmatpush1.msra.mxu0 %v8358
    %8477 = vmatprep.subr.mxu0 0.0
    %8478 = vmatpush1.msra.mxu0 0.0
    %8479 = vmatprep.subr.mxu0 0.0
    %8480 = vmatpush1.msra.mxu0 0.0
    %8481 = vmatprep.subr.mxu0 0.0
    %8482 = vmatpush1.msra.mxu0 0.0
    %8483 = vmatprep.subr.mxu0 0.0
    %8484 = vmatpush1.msra.mxu0 0.0
    %8485 = vmatprep.subr.mxu0 0.0
    %8486 = vmatpush1.msra.mxu0 0.0
    %8487 = vmatprep.subr.mxu0 0.0
    %8488 = vmatpush1.msra.mxu0 0.0
    %8489 = vmatprep.subr.mxu0 0.0
    %8490 = vmatpush1.msra.mxu0 0.0
    %8491 = vmatprep.subr.mxu0 0.0
    %8492 = vmatpush1.msra.mxu0 0.0
    %8493 = vmatprep.subr.mxu0 0.0
    %8494 = vmatpush1.msra.mxu0 0.0
    %8495 = vmatprep.subr.mxu0 0.0
    %8496 = vmatpush1.msra.mxu0 0.0
    %8497 = vmatprep.subr.mxu0 0.0
    %8498 = vmatpush1.msra.mxu0 0.0
    %8499 = vmatprep.subr.mxu0 0.0
    %8500 = vmatpush1.msra.mxu0 0.0
    %8501 = vmatprep.subr.mxu0 0.0
    %8502 = vmatpush1.msra.mxu0 0.0
    %8503 = vmatprep.subr.mxu0 0.0
    %8504 = vmatpush1.msra.mxu0 0.0
    %8505 = vmatprep.subr.mxu0 0.0
    %8506 = vmatpush1.msra.mxu0 0.0
    %8507 = vmatprep.subr.mxu0 0.0
    %8508 = vmatpush1.msra.mxu0 0.0
    %8509 = vmatprep.mubr.f32.mxu0 0.0
    %8510 = vmatmul.mubr.f32.gmra.mrb[0].mxu0 %v8371
    %v8511 = vpop.f32.mrb[0].mxu0
    %v8512 = vadd.f32 %v8442, %v8511
    %v8513 = vpop.f32.mrb[0].mxu0
    %8514 = vdwg.mxu0
    %v8515 = vadd.f32 %v8308, %v8512
    %s8516 = scalar_lea.vmem [#allocation2], 34
    %v8517 = vld [vmem:[%s8516] ss:$8 sm:$0x7]
    %v8518 = vld [vmem:[%s8 + $0x300] sm:$0xff]
    %v8519 = vld [vmem:[%s8 + $0x308] sm:$0xff]
    %v8520 = vld [vmem:[%s8 + $0x310] sm:$0xff]
    %v8521 = vld [vmem:[%s8 + $0x318] sm:$0xff]
    %v8522 = vld [vmem:[%s8 + $0x320] sm:$0xff]
    %v8523 = vld [vmem:[%s8 + $0x328] sm:$0xff]
    %v8524 = vld [vmem:[%s8 + $0x330] sm:$0xff]
    %v8525 = vld [vmem:[%s8 + $0x338] sm:$0xff]
    %v8526 = vld [vmem:[%s8 + $0x340] sm:$0xff]
    %v8527 = vld [vmem:[%s8 + $0x348] sm:$0xff]
    %v8528 = vld [vmem:[%s8 + $0x350] sm:$0xff]
    %v8529 = vld [vmem:[%s8 + $0x358] sm:$0xff]
    %v8530 = vld [vmem:[%s8 + $0x360] sm:$0xff]
    %v8531 = vld [vmem:[%s8 + $0x368] sm:$0xff]
    %v8532 = vld [vmem:[%s8 + $0x370] sm:$0xff]
    %v8533 = vld [vmem:[%s8 + $0x378] sm:$0xff]
    %v8534 = vld [vmem:[%s8 + $0x380] sm:$0xff]
    %v8535 = vld [vmem:[%s8 + $0x388] sm:$0xff]
    %v8536 = vld [vmem:[%s8 + $0x390] sm:$0xff]
    %v8537 = vld [vmem:[%s8 + $0x398] sm:$0xff]
    %v8538 = vld [vmem:[%s8 + $0x3a0] sm:$0xff]
    %v8539 = vld [vmem:[%s8 + $0x3a8] sm:$0xff]
    %v8540 = vld [vmem:[%s8 + $0x3b0] sm:$0xff]
    %v8541 = vld [vmem:[%s8 + $0x3b8] sm:$0xff]
    %v8542 = vld [vmem:[%s8 + $0x3c0] sm:$0xff]
    %v8543 = vld [vmem:[%s8 + $0x3c8] sm:$0xff]
    %v8544 = vld [vmem:[%s8 + $0x3d0] sm:$0xff]
    %v8545 = vld [vmem:[%s8 + $0x3d8] sm:$0xff]
    %v8546 = vld [vmem:[%s8 + $0x3e0] sm:$0xff]
    %v8547 = vld [vmem:[%s8 + $0x3e8] sm:$0xff]
    %v8548 = vld [vmem:[%s8 + $0x3f0] sm:$0xff]
    %v8549 = vld [vmem:[%s8 + $0x3f8] sm:$0xff]
    %v8550 = vld [vmem:[%s8 + $0x400] sm:$0xff]
    %v8551 = vld [vmem:[%s8 + $0x408] sm:$0xff]
    %v8552 = vld [vmem:[%s8 + $0x410] sm:$0xff]
    %v8553 = vld [vmem:[%s8 + $0x418] sm:$0xff]
    %v8554 = vld [vmem:[%s8 + $0x420] sm:$0xff]
    %v8555 = vld [vmem:[%s8 + $0x428] sm:$0xff]
    %v8556 = vld [vmem:[%s8 + $0x430] sm:$0xff]
    %v8557 = vld [vmem:[%s8 + $0x438] sm:$0xff]
    %v8558 = vld [vmem:[%s8 + $0x440] sm:$0xff]
    %v8559 = vld [vmem:[%s8 + $0x448] sm:$0xff]
    %v8560 = vld [vmem:[%s8 + $0x450] sm:$0xff]
    %v8561 = vld [vmem:[%s8 + $0x458] sm:$0xff]
    %v8562 = vld [vmem:[%s8 + $0x460] sm:$0xff]
    %v8563 = vld [vmem:[%s8 + $0x468] sm:$0xff]
    %v8564 = vld [vmem:[%s8 + $0x470] sm:$0xff]
    %v8565 = vld [vmem:[%s8 + $0x478] sm:$0xff]
    %v8567 = vlaneseq
    %v8568 = vshrl.u32 %v8567, 7
    %v8569 = vsub.s32 0, %v8568
    %v8570 = vrot.slane %v8517, %v8569
    %v8571 = vlaneseq
    %v8572 = vshrl.u32 %v8571, 7
    %v8573 = vsub.s32 1, %v8572
    %v8574 = vrot.slane %v8517, %v8573
    %v8575 = vlaneseq
    %v8576 = vshrl.u32 %v8575, 7
    %v8577 = vsub.s32 2, %v8576
    %v8578 = vrot.slane %v8517, %v8577
    %8582 = vmatprep.subr.mxu0 0.0
    %8583 = vmatpush1.msra.mxu0 %v8518
    %8584 = vmatprep.subr.mxu0 0.0
    %8585 = vmatpush1.msra.mxu0 %v8519
    %8586 = vmatprep.subr.mxu0 0.0
    %8587 = vmatpush1.msra.mxu0 %v8520
    %8588 = vmatprep.subr.mxu0 0.0
    %8589 = vmatpush1.msra.mxu0 %v8521
    %8590 = vmatprep.subr.mxu0 0.0
    %8591 = vmatpush1.msra.mxu0 %v8522
    %8592 = vmatprep.subr.mxu0 0.0
    %8593 = vmatpush1.msra.mxu0 %v8523
    %8594 = vmatprep.subr.mxu0 0.0
    %8595 = vmatpush1.msra.mxu0 %v8524
    %8596 = vmatprep.subr.mxu0 0.0
    %8597 = vmatpush1.msra.mxu0 %v8525
    %8598 = vmatprep.subr.mxu0 0.0
    %8599 = vmatpush1.msra.mxu0 %v8526
    %8600 = vmatprep.subr.mxu0 0.0
    %8601 = vmatpush1.msra.mxu0 %v8527
    %8602 = vmatprep.subr.mxu0 0.0
    %8603 = vmatpush1.msra.mxu0 %v8528
    %8604 = vmatprep.subr.mxu0 0.0
    %8605 = vmatpush1.msra.mxu0 %v8529
    %8606 = vmatprep.subr.mxu0 0.0
    %8607 = vmatpush1.msra.mxu0 %v8530
    %8608 = vmatprep.subr.mxu0 0.0
    %8609 = vmatpush1.msra.mxu0 %v8531
    %8610 = vmatprep.subr.mxu0 0.0
    %8611 = vmatpush1.msra.mxu0 %v8532
    %8612 = vmatprep.subr.mxu0 0.0
    %8613 = vmatpush1.msra.mxu0 %v8533
    %8614 = vmatprep.subr.mxu0 0.0
    %8615 = vmatpush1.msra.mxu0 %v8534
    %8616 = vmatprep.subr.mxu0 0.0
    %8617 = vmatpush1.msra.mxu0 %v8535
    %8618 = vmatprep.subr.mxu0 0.0
    %8619 = vmatpush1.msra.mxu0 %v8536
    %8620 = vmatprep.subr.mxu0 0.0
    %8621 = vmatpush1.msra.mxu0 %v8537
    %8622 = vmatprep.subr.mxu0 0.0
    %8623 = vmatpush1.msra.mxu0 %v8538
    %8624 = vmatprep.subr.mxu0 0.0
    %8625 = vmatpush1.msra.mxu0 %v8539
    %8626 = vmatprep.subr.mxu0 0.0
    %8627 = vmatpush1.msra.mxu0 %v8540
    %8628 = vmatprep.subr.mxu0 0.0
    %8629 = vmatpush1.msra.mxu0 %v8541
    %8630 = vmatprep.subr.mxu0 0.0
    %8631 = vmatpush1.msra.mxu0 %v8542
    %8632 = vmatprep.subr.mxu0 0.0
    %8633 = vmatpush1.msra.mxu0 %v8543
    %8634 = vmatprep.subr.mxu0 0.0
    %8635 = vmatpush1.msra.mxu0 %v8544
    %8636 = vmatprep.subr.mxu0 0.0
    %8637 = vmatpush1.msra.mxu0 %v8545
    %8638 = vmatprep.subr.mxu0 0.0
    %8639 = vmatpush1.msra.mxu0 %v8546
    %8640 = vmatprep.subr.mxu0 0.0
    %8641 = vmatpush1.msra.mxu0 %v8547
    %8642 = vmatprep.subr.mxu0 0.0
    %8643 = vmatpush1.msra.mxu0 %v8548
    %8644 = vmatprep.subr.mxu0 0.0
    %8645 = vmatpush1.msra.mxu0 %v8549
    %8646 = vmatprep.mubr.f32.mxu0 %v8574
    %8647 = vmatmul.mubr.f32.gmra.mrb[0].mxu0 %v8570
    %v8648 = vpop.f32.mrb[0].mxu0
    %v8649 = vadd.f32 0.0, %v8648
    %v8650 = vpop.f32.mrb[0].mxu0
    %8651 = vdwg.mxu0
    %8652 = vmatprep.subr.mxu0 0.0
    %8653 = vmatpush1.msra.mxu0 %v8550
    %8654 = vmatprep.subr.mxu0 0.0
    %8655 = vmatpush1.msra.mxu0 %v8551
    %8656 = vmatprep.subr.mxu0 0.0
    %8657 = vmatpush1.msra.mxu0 %v8552
    %8658 = vmatprep.subr.mxu0 0.0
    %8659 = vmatpush1.msra.mxu0 %v8553
    %8660 = vmatprep.subr.mxu0 0.0
    %8661 = vmatpush1.msra.mxu0 %v8554
    %8662 = vmatprep.subr.mxu0 0.0
    %8663 = vmatpush1.msra.mxu0 %v8555
    %8664 = vmatprep.subr.mxu0 0.0
    %8665 = vmatpush1.msra.mxu0 %v8556
    %8666 = vmatprep.subr.mxu0 0.0
    %8667 = vmatpush1.msra.mxu0 %v8557
    %8668 = vmatprep.subr.mxu0 0.0
    %8669 = vmatpush1.msra.mxu0 %v8558
    %8670 = vmatprep.subr.mxu0 0.0
    %8671 = vmatpush1.msra.mxu0 %v8559
    %8672 = vmatprep.subr.mxu0 0.0
    %8673 = vmatpush1.msra.mxu0 %v8560
    %8674 = vmatprep.subr.mxu0 0.0
    %8675 = vmatpush1.msra.mxu0 %v8561
    %8676 = vmatprep.subr.mxu0 0.0
    %8677 = vmatpush1.msra.mxu0 %v8562
    %8678 = vmatprep.subr.mxu0 0.0
    %8679 = vmatpush1.msra.mxu0 %v8563
    %8680 = vmatprep.subr.mxu0 0.0
    %8681 = vmatpush1.msra.mxu0 %v8564
    %8682 = vmatprep.subr.mxu0 0.0
    %8683 = vmatpush1.msra.mxu0 %v8565
    %8684 = vmatprep.subr.mxu0 0.0
    %8685 = vmatpush1.msra.mxu0 0.0
    %8686 = vmatprep.subr.mxu0 0.0
    %8687 = vmatpush1.msra.mxu0 0.0
    %8688 = vmatprep.subr.mxu0 0.0
    %8689 = vmatpush1.msra.mxu0 0.0
    %8690 = vmatprep.subr.mxu0 0.0
    %8691 = vmatpush1.msra.mxu0 0.0
    %8692 = vmatprep.subr.mxu0 0.0
    %8693 = vmatpush1.msra.mxu0 0.0
    %8694 = vmatprep.subr.mxu0 0.0
    %8695 = vmatpush1.msra.mxu0 0.0
    %8696 = vmatprep.subr.mxu0 0.0
    %8697 = vmatpush1.msra.mxu0 0.0
    %8698 = vmatprep.subr.mxu0 0.0
    %8699 = vmatpush1.msra.mxu0 0.0
    %8700 = vmatprep.subr.mxu0 0.0
    %8701 = vmatpush1.msra.mxu0 0.0
    %8702 = vmatprep.subr.mxu0 0.0
    %8703 = vmatpush1.msra.mxu0 0.0
    %8704 = vmatprep.subr.mxu0 0.0
    %8705 = vmatpush1.msra.mxu0 0.0
    %8706 = vmatprep.subr.mxu0 0.0
    %8707 = vmatpush1.msra.mxu0 0.0
    %8708 = vmatprep.subr.mxu0 0.0
    %8709 = vmatpush1.msra.mxu0 0.0
    %8710 = vmatprep.subr.mxu0 0.0
    %8711 = vmatpush1.msra.mxu0 0.0
    %8712 = vmatprep.subr.mxu0 0.0
    %8713 = vmatpush1.msra.mxu0 0.0
    %8714 = vmatprep.subr.mxu0 0.0
    %8715 = vmatpush1.msra.mxu0 0.0
    %8716 = vmatprep.mubr.f32.mxu0 0.0
    %8717 = vmatmul.mubr.f32.gmra.mrb[0].mxu0 %v8578
    %v8718 = vpop.f32.mrb[0].mxu0
    %v8719 = vadd.f32 %v8649, %v8718
    %v8720 = vpop.f32.mrb[0].mxu0
    %8721 = vdwg.mxu0
    %v8722 = vadd.f32 %v8515, %v8719
    %s8723 = scalar_lea.vmem [#allocation2], 35
    %v8724 = vld [vmem:[%s8723] ss:$8 sm:$0x7]
    %v8725 = vld [vmem:[%s8 + $0x480] sm:$0xff]
    %v8726 = vld [vmem:[%s8 + $0x488] sm:$0xff]
    %v8727 = vld [vmem:[%s8 + $0x490] sm:$0xff]
    %v8728 = vld [vmem:[%s8 + $0x498] sm:$0xff]
    %v8729 = vld [vmem:[%s8 + $0x4a0] sm:$0xff]
    %v8730 = vld [vmem:[%s8 + $0x4a8] sm:$0xff]
    %v8731 = vld [vmem:[%s8 + $0x4b0] sm:$0xff]
    %v8732 = vld [vmem:[%s8 + $0x4b8] sm:$0xff]
    %v8733 = vld [vmem:[%s8 + $0x4c0] sm:$0xff]
    %v8734 = vld [vmem:[%s8 + $0x4c8] sm:$0xff]
    %v8735 = vld [vmem:[%s8 + $0x4d0] sm:$0xff]
    %v8736 = vld [vmem:[%s8 + $0x4d8] sm:$0xff]
    %v8737 = vld [vmem:[%s8 + $0x4e0] sm:$0xff]
    %v8738 = vld [vmem:[%s8 + $0x4e8] sm:$0xff]
    %v8739 = vld [vmem:[%s8 + $0x4f0] sm:$0xff]
    %v8740 = vld [vmem:[%s8 + $0x4f8] sm:$0xff]
    %v8741 = vld [vmem:[%s8 + $0x500] sm:$0xff]
    %v8742 = vld [vmem:[%s8 + $0x508] sm:$0xff]
    %v8743 = vld [vmem:[%s8 + $0x510] sm:$0xff]
    %v8744 = vld [vmem:[%s8 + $0x518] sm:$0xff]
    %v8745 = vld [vmem:[%s8 + $0x520] sm:$0xff]
    %v8746 = vld [vmem:[%s8 + $0x528] sm:$0xff]
    %v8747 = vld [vmem:[%s8 + $0x530] sm:$0xff]
    %v8748 = vld [vmem:[%s8 + $0x538] sm:$0xff]
    %v8749 = vld [vmem:[%s8 + $0x540] sm:$0xff]
    %v8750 = vld [vmem:[%s8 + $0x548] sm:$0xff]
    %v8751 = vld [vmem:[%s8 + $0x550] sm:$0xff]
    %v8752 = vld [vmem:[%s8 + $0x558] sm:$0xff]
    %v8753 = vld [vmem:[%s8 + $0x560] sm:$0xff]
    %v8754 = vld [vmem:[%s8 + $0x568] sm:$0xff]
    %v8755 = vld [vmem:[%s8 + $0x570] sm:$0xff]
    %v8756 = vld [vmem:[%s8 + $0x578] sm:$0xff]
    %v8757 = vld [vmem:[%s8 + $0x580] sm:$0xff]
    %v8758 = vld [vmem:[%s8 + $0x588] sm:$0xff]
    %v8759 = vld [vmem:[%s8 + $0x590] sm:$0xff]
    %v8760 = vld [vmem:[%s8 + $0x598] sm:$0xff]
    %v8761 = vld [vmem:[%s8 + $0x5a0] sm:$0xff]
    %v8762 = vld [vmem:[%s8 + $0x5a8] sm:$0xff]
    %v8763 = vld [vmem:[%s8 + $0x5b0] sm:$0xff]
    %v8764 = vld [vmem:[%s8 + $0x5b8] sm:$0xff]
    %v8765 = vld [vmem:[%s8 + $0x5c0] sm:$0xff]
    %v8766 = vld [vmem:[%s8 + $0x5c8] sm:$0xff]
    %v8767 = vld [vmem:[%s8 + $0x5d0] sm:$0xff]
    %v8768 = vld [vmem:[%s8 + $0x5d8] sm:$0xff]
    %v8769 = vld [vmem:[%s8 + $0x5e0] sm:$0xff]
    %v8770 = vld [vmem:[%s8 + $0x5e8] sm:$0xff]
    %v8771 = vld [vmem:[%s8 + $0x5f0] sm:$0xff]
    %v8772 = vld [vmem:[%s8 + $0x5f8] sm:$0xff]
    %v8774 = vlaneseq
    %v8775 = vshrl.u32 %v8774, 7
    %v8776 = vsub.s32 0, %v8775
    %v8777 = vrot.slane %v8724, %v8776
    %v8778 = vlaneseq
    %v8779 = vshrl.u32 %v8778, 7
    %v8780 = vsub.s32 1, %v8779
    %v8781 = vrot.slane %v8724, %v8780
    %v8782 = vlaneseq
    %v8783 = vshrl.u32 %v8782, 7
    %v8784 = vsub.s32 2, %v8783
    %v8785 = vrot.slane %v8724, %v8784
    %8789 = vmatprep.subr.mxu0 0.0
    %8790 = vmatpush1.msra.mxu0 %v8725
    %8791 = vmatprep.subr.mxu0 0.0
    %8792 = vmatpush1.msra.mxu0 %v8726
    %8793 = vmatprep.subr.mxu0 0.0
    %8794 = vmatpush1.msra.mxu0 %v8727
    %8795 = vmatprep.subr.mxu0 0.0
    %8796 = vmatpush1.msra.mxu0 %v8728
    %8797 = vmatprep.subr.mxu0 0.0
    %8798 = vmatpush1.msra.mxu0 %v8729
    %8799 = vmatprep.subr.mxu0 0.0
    %8800 = vmatpush1.msra.mxu0 %v8730
    %8801 = vmatprep.subr.mxu0 0.0
    %8802 = vmatpush1.msra.mxu0 %v8731
    %8803 = vmatprep.subr.mxu0 0.0
    %8804 = vmatpush1.msra.mxu0 %v8732
    %8805 = vmatprep.subr.mxu0 0.0
    %8806 = vmatpush1.msra.mxu0 %v8733
    %8807 = vmatprep.subr.mxu0 0.0
    %8808 = vmatpush1.msra.mxu0 %v8734
    %8809 = vmatprep.subr.mxu0 0.0
    %8810 = vmatpush1.msra.mxu0 %v8735
    %8811 = vmatprep.subr.mxu0 0.0
    %8812 = vmatpush1.msra.mxu0 %v8736
    %8813 = vmatprep.subr.mxu0 0.0
    %8814 = vmatpush1.msra.mxu0 %v8737
    %8815 = vmatprep.subr.mxu0 0.0
    %8816 = vmatpush1.msra.mxu0 %v8738
    %8817 = vmatprep.subr.mxu0 0.0
    %8818 = vmatpush1.msra.mxu0 %v8739
    %8819 = vmatprep.subr.mxu0 0.0
    %8820 = vmatpush1.msra.mxu0 %v8740
    %8821 = vmatprep.subr.mxu0 0.0
    %8822 = vmatpush1.msra.mxu0 %v8741
    %8823 = vmatprep.subr.mxu0 0.0
    %8824 = vmatpush1.msra.mxu0 %v8742
    %8825 = vmatprep.subr.mxu0 0.0
    %8826 = vmatpush1.msra.mxu0 %v8743
    %8827 = vmatprep.subr.mxu0 0.0
    %8828 = vmatpush1.msra.mxu0 %v8744
    %8829 = vmatprep.subr.mxu0 0.0
    %8830 = vmatpush1.msra.mxu0 %v8745
    %8831 = vmatprep.subr.mxu0 0.0
    %8832 = vmatpush1.msra.mxu0 %v8746
    %8833 = vmatprep.subr.mxu0 0.0
    %8834 = vmatpush1.msra.mxu0 %v8747
    %8835 = vmatprep.subr.mxu0 0.0
    %8836 = vmatpush1.msra.mxu0 %v8748
    %8837 = vmatprep.subr.mxu0 0.0
    %8838 = vmatpush1.msra.mxu0 %v8749
    %8839 = vmatprep.subr.mxu0 0.0
    %8840 = vmatpush1.msra.mxu0 %v8750
    %8841 = vmatprep.subr.mxu0 0.0
    %8842 = vmatpush1.msra.mxu0 %v8751
    %8843 = vmatprep.subr.mxu0 0.0
    %8844 = vmatpush1.msra.mxu0 %v8752
    %8845 = vmatprep.subr.mxu0 0.0
    %8846 = vmatpush1.msra.mxu0 %v8753
    %8847 = vmatprep.subr.mxu0 0.0
    %8848 = vmatpush1.msra.mxu0 %v8754
    %8849 = vmatprep.subr.mxu0 0.0
    %8850 = vmatpush1.msra.mxu0 %v8755
    %8851 = vmatprep.subr.mxu0 0.0
    %8852 = vmatpush1.msra.mxu0 %v8756
    %8853 = vmatprep.mubr.f32.mxu0 %v8781
    %8854 = vmatmul.mubr.f32.gmra.mrb[0].mxu0 %v8777
    %v8855 = vpop.f32.mrb[0].mxu0
    %v8856 = vadd.f32 0.0, %v8855
    %v8857 = vpop.f32.mrb[0].mxu0
    %8858 = vdwg.mxu0
    %8859 = vmatprep.subr.mxu0 0.0
    %8860 = vmatpush1.msra.mxu0 %v8757
    %8861 = vmatprep.subr.mxu0 0.0
    %8862 = vmatpush1.msra.mxu0 %v8758
    %8863 = vmatprep.subr.mxu0 0.0
    %8864 = vmatpush1.msra.mxu0 %v8759
    %8865 = vmatprep.subr.mxu0 0.0
    %8866 = vmatpush1.msra.mxu0 %v8760
    %8867 = vmatprep.subr.mxu0 0.0
    %8868 = vmatpush1.msra.mxu0 %v8761
    %8869 = vmatprep.subr.mxu0 0.0
    %8870 = vmatpush1.msra.mxu0 %v8762
    %8871 = vmatprep.subr.mxu0 0.0
    %8872 = vmatpush1.msra.mxu0 %v8763
    %8873 = vmatprep.subr.mxu0 0.0
    %8874 = vmatpush1.msra.mxu0 %v8764
    %8875 = vmatprep.subr.mxu0 0.0
    %8876 = vmatpush1.msra.mxu0 %v8765
    %8877 = vmatprep.subr.mxu0 0.0
    %8878 = vmatpush1.msra.mxu0 %v8766
    %8879 = vmatprep.subr.mxu0 0.0
    %8880 = vmatpush1.msra.mxu0 %v8767
    %8881 = vmatprep.subr.mxu0 0.0
    %8882 = vmatpush1.msra.mxu0 %v8768
    %8883 = vmatprep.subr.mxu0 0.0
    %8884 = vmatpush1.msra.mxu0 %v8769
    %8885 = vmatprep.subr.mxu0 0.0
    %8886 = vmatpush1.msra.mxu0 %v8770
    %8887 = vmatprep.subr.mxu0 0.0
    %8888 = vmatpush1.msra.mxu0 %v8771
    %8889 = vmatprep.subr.mxu0 0.0
    %8890 = vmatpush1.msra.mxu0 %v8772
    %8891 = vmatprep.subr.mxu0 0.0
    %8892 = vmatpush1.msra.mxu0 0.0
    %8893 = vmatprep.subr.mxu0 0.0
    %8894 = vmatpush1.msra.mxu0 0.0
    %8895 = vmatprep.subr.mxu0 0.0
    %8896 = vmatpush1.msra.mxu0 0.0
    %8897 = vmatprep.subr.mxu0 0.0
    %8898 = vmatpush1.msra.mxu0 0.0
    %8899 = vmatprep.subr.mxu0 0.0
    %8900 = vmatpush1.msra.mxu0 0.0
    %8901 = vmatprep.subr.mxu0 0.0
    %8902 = vmatpush1.msra.mxu0 0.0
    %8903 = vmatprep.subr.mxu0 0.0
    %8904 = vmatpush1.msra.mxu0 0.0
    %8905 = vmatprep.subr.mxu0 0.0
    %8906 = vmatpush1.msra.mxu0 0.0
    %8907 = vmatprep.subr.mxu0 0.0
    %8908 = vmatpush1.msra.mxu0 0.0
    %8909 = vmatprep.subr.mxu0 0.0
    %8910 = vmatpush1.msra.mxu0 0.0
    %8911 = vmatprep.subr.mxu0 0.0
    %8912 = vmatpush1.msra.mxu0 0.0
    %8913 = vmatprep.subr.mxu0 0.0
    %8914 = vmatpush1.msra.mxu0 0.0
    %8915 = vmatprep.subr.mxu0 0.0
    %8916 = vmatpush1.msra.mxu0 0.0
    %8917 = vmatprep.subr.mxu0 0.0
    %8918 = vmatpush1.msra.mxu0 0.0
    %8919 = vmatprep.subr.mxu0 0.0
    %8920 = vmatpush1.msra.mxu0 0.0
    %8921 = vmatprep.subr.mxu0 0.0
    %8922 = vmatpush1.msra.mxu0 0.0
    %8923 = vmatprep.mubr.f32.mxu0 0.0
    %8924 = vmatmul.mubr.f32.gmra.mrb[0].mxu0 %v8785
    %v8925 = vpop.f32.mrb[0].mxu0
    %v8926 = vadd.f32 %v8856, %v8925
    %v8927 = vpop.f32.mrb[0].mxu0
    %8928 = vdwg.mxu0
    %v8929 = vadd.f32 %v8722, %v8926
    %s8930 = scalar_lea.vmem [#allocation2], 36
    %v8931 = vld [vmem:[%s8930] ss:$8 sm:$0x7]
    %v8932 = vld [vmem:[%s8 + $0x600] sm:$0xff]
    %v8933 = vld [vmem:[%s8 + $0x608] sm:$0xff]
    %v8934 = vld [vmem:[%s8 + $0x610] sm:$0xff]
    %v8935 = vld [vmem:[%s8 + $0x618] sm:$0xff]
    %v8936 = vld [vmem:[%s8 + $0x620] sm:$0xff]
    %v8937 = vld [vmem:[%s8 + $0x628] sm:$0xff]
    %v8938 = vld [vmem:[%s8 + $0x630] sm:$0xff]
    %v8939 = vld [vmem:[%s8 + $0x638] sm:$0xff]
    %v8940 = vld [vmem:[%s8 + $0x640] sm:$0xff]
    %v8941 = vld [vmem:[%s8 + $0x648] sm:$0xff]
    %v8942 = vld [vmem:[%s8 + $0x650] sm:$0xff]
    %v8943 = vld [vmem:[%s8 + $0x658] sm:$0xff]
    %v8944 = vld [vmem:[%s8 + $0x660] sm:$0xff]
    %v8945 = vld [vmem:[%s8 + $0x668] sm:$0xff]
    %v8946 = vld [vmem:[%s8 + $0x670] sm:$0xff]
    %v8947 = vld [vmem:[%s8 + $0x678] sm:$0xff]
    %v8948 = vld [vmem:[%s8 + $0x680] sm:$0xff]
    %v8949 = vld [vmem:[%s8 + $0x688] sm:$0xff]
    %v8950 = vld [vmem:[%s8 + $0x690] sm:$0xff]
    %v8951 = vld [vmem:[%s8 + $0x698] sm:$0xff]
    %v8952 = vld [vmem:[%s8 + $0x6a0] sm:$0xff]
    %v8953 = vld [vmem:[%s8 + $0x6a8] sm:$0xff]
    %v8954 = vld [vmem:[%s8 + $0x6b0] sm:$0xff]
    %v8955 = vld [vmem:[%s8 + $0x6b8] sm:$0xff]
    %v8956 = vld [vmem:[%s8 + $0x6c0] sm:$0xff]
    %v8957 = vld [vmem:[%s8 + $0x6c8] sm:$0xff]
    %v8958 = vld [vmem:[%s8 + $0x6d0] sm:$0xff]
    %v8959 = vld [vmem:[%s8 + $0x6d8] sm:$0xff]
    %v8960 = vld [vmem:[%s8 + $0x6e0] sm:$0xff]
    %v8961 = vld [vmem:[%s8 + $0x6e8] sm:$0xff]
    %v8962 = vld [vmem:[%s8 + $0x6f0] sm:$0xff]
    %v8963 = vld [vmem:[%s8 + $0x6f8] sm:$0xff]
    %v8964 = vld [vmem:[%s8 + $0x700] sm:$0xff]
    %v8965 = vld [vmem:[%s8 + $0x708] sm:$0xff]
    %v8966 = vld [vmem:[%s8 + $0x710] sm:$0xff]
    %v8967 = vld [vmem:[%s8 + $0x718] sm:$0xff]
    %v8968 = vld [vmem:[%s8 + $0x720] sm:$0xff]
    %v8969 = vld [vmem:[%s8 + $0x728] sm:$0xff]
    %v8970 = vld [vmem:[%s8 + $0x730] sm:$0xff]
    %v8971 = vld [vmem:[%s8 + $0x738] sm:$0xff]
    %v8972 = vld [vmem:[%s8 + $0x740] sm:$0xff]
    %v8973 = vld [vmem:[%s8 + $0x748] sm:$0xff]
    %v8974 = vld [vmem:[%s8 + $0x750] sm:$0xff]
    %v8975 = vld [vmem:[%s8 + $0x758] sm:$0xff]
    %v8976 = vld [vmem:[%s8 + $0x760] sm:$0xff]
    %v8977 = vld [vmem:[%s8 + $0x768] sm:$0xff]
    %v8978 = vld [vmem:[%s8 + $0x770] sm:$0xff]
    %v8979 = vld [vmem:[%s8 + $0x778] sm:$0xff]
    %v8981 = vlaneseq
    %v8982 = vshrl.u32 %v8981, 7
    %v8983 = vsub.s32 0, %v8982
    %v8984 = vrot.slane %v8931, %v8983
    %v8985 = vlaneseq
    %v8986 = vshrl.u32 %v8985, 7
    %v8987 = vsub.s32 1, %v8986
    %v8988 = vrot.slane %v8931, %v8987
    %v8989 = vlaneseq
    %v8990 = vshrl.u32 %v8989, 7
    %v8991 = vsub.s32 2, %v8990
    %v8992 = vrot.slane %v8931, %v8991
    %8996 = vmatprep.subr.mxu0 0.0
    %8997 = vmatpush1.msra.mxu0 %v8932
    %8998 = vmatprep.subr.mxu0 0.0
    %8999 = vmatpush1.msra.mxu0 %v8933
    %9000 = vmatprep.subr.mxu0 0.0
    %9001 = vmatpush1.msra.mxu0 %v8934
    %9002 = vmatprep.subr.mxu0 0.0
    %9003 = vmatpush1.msra.mxu0 %v8935
    %9004 = vmatprep.subr.mxu0 0.0
    %9005 = vmatpush1.msra.mxu0 %v8936
    %9006 = vmatprep.subr.mxu0 0.0
    %9007 = vmatpush1.msra.mxu0 %v8937
    %9008 = vmatprep.subr.mxu0 0.0
    %9009 = vmatpush1.msra.mxu0 %v8938
    %9010 = vmatprep.subr.mxu0 0.0
    %9011 = vmatpush1.msra.mxu0 %v8939
    %9012 = vmatprep.subr.mxu0 0.0
    %9013 = vmatpush1.msra.mxu0 %v8940
    %9014 = vmatprep.subr.mxu0 0.0
    %9015 = vmatpush1.msra.mxu0 %v8941
    %9016 = vmatprep.subr.mxu0 0.0
    %9017 = vmatpush1.msra.mxu0 %v8942
    %9018 = vmatprep.subr.mxu0 0.0
    %9019 = vmatpush1.msra.mxu0 %v8943
    %9020 = vmatprep.subr.mxu0 0.0
    %9021 = vmatpush1.msra.mxu0 %v8944
    %9022 = vmatprep.subr.mxu0 0.0
    %9023 = vmatpush1.msra.mxu0 %v8945
    %9024 = vmatprep.subr.mxu0 0.0
    %9025 = vmatpush1.msra.mxu0 %v8946
    %9026 = vmatprep.subr.mxu0 0.0
    %9027 = vmatpush1.msra.mxu0 %v8947
    %9028 = vmatprep.subr.mxu0 0.0
    %9029 = vmatpush1.msra.mxu0 %v8948
    %9030 = vmatprep.subr.mxu0 0.0
    %9031 = vmatpush1.msra.mxu0 %v8949
    %9032 = vmatprep.subr.mxu0 0.0
    %9033 = vmatpush1.msra.mxu0 %v8950
    %9034 = vmatprep.subr.mxu0 0.0
    %9035 = vmatpush1.msra.mxu0 %v8951
    %9036 = vmatprep.subr.mxu0 0.0
    %9037 = vmatpush1.msra.mxu0 %v8952
    %9038 = vmatprep.subr.mxu0 0.0
    %9039 = vmatpush1.msra.mxu0 %v8953
    %9040 = vmatprep.subr.mxu0 0.0
    %9041 = vmatpush1.msra.mxu0 %v8954
    %9042 = vmatprep.subr.mxu0 0.0
    %9043 = vmatpush1.msra.mxu0 %v8955
    %9044 = vmatprep.subr.mxu0 0.0
    %9045 = vmatpush1.msra.mxu0 %v8956
    %9046 = vmatprep.subr.mxu0 0.0
    %9047 = vmatpush1.msra.mxu0 %v8957
    %9048 = vmatprep.subr.mxu0 0.0
    %9049 = vmatpush1.msra.mxu0 %v8958
    %9050 = vmatprep.subr.mxu0 0.0
    %9051 = vmatpush1.msra.mxu0 %v8959
    %9052 = vmatprep.subr.mxu0 0.0
    %9053 = vmatpush1.msra.mxu0 %v8960
    %9054 = vmatprep.subr.mxu0 0.0
    %9055 = vmatpush1.msra.mxu0 %v8961
    %9056 = vmatprep.subr.mxu0 0.0
    %9057 = vmatpush1.msra.mxu0 %v8962
    %9058 = vmatprep.subr.mxu0 0.0
    %9059 = vmatpush1.msra.mxu0 %v8963
    %9060 = vmatprep.mubr.f32.mxu0 %v8988
    %9061 = vmatmul.mubr.f32.gmra.mrb[0].mxu0 %v8984
    %v9062 = vpop.f32.mrb[0].mxu0
    %v9063 = vadd.f32 0.0, %v9062
    %v9064 = vpop.f32.mrb[0].mxu0
    %9065 = vdwg.mxu0
    %9066 = vmatprep.subr.mxu0 0.0
    %9067 = vmatpush1.msra.mxu0 %v8964
    %9068 = vmatprep.subr.mxu0 0.0
    %9069 = vmatpush1.msra.mxu0 %v8965
    %9070 = vmatprep.subr.mxu0 0.0
    %9071 = vmatpush1.msra.mxu0 %v8966
    %9072 = vmatprep.subr.mxu0 0.0
    %9073 = vmatpush1.msra.mxu0 %v8967
    %9074 = vmatprep.subr.mxu0 0.0
    %9075 = vmatpush1.msra.mxu0 %v8968
    %9076 = vmatprep.subr.mxu0 0.0
    %9077 = vmatpush1.msra.mxu0 %v8969
    %9078 = vmatprep.subr.mxu0 0.0
    %9079 = vmatpush1.msra.mxu0 %v8970
    %9080 = vmatprep.subr.mxu0 0.0
    %9081 = vmatpush1.msra.mxu0 %v8971
    %9082 = vmatprep.subr.mxu0 0.0
    %9083 = vmatpush1.msra.mxu0 %v8972
    %9084 = vmatprep.subr.mxu0 0.0
    %9085 = vmatpush1.msra.mxu0 %v8973
    %9086 = vmatprep.subr.mxu0 0.0
    %9087 = vmatpush1.msra.mxu0 %v8974
    %9088 = vmatprep.subr.mxu0 0.0
    %9089 = vmatpush1.msra.mxu0 %v8975
    %9090 = vmatprep.subr.mxu0 0.0
    %9091 = vmatpush1.msra.mxu0 %v8976
    %9092 = vmatprep.subr.mxu0 0.0
    %9093 = vmatpush1.msra.mxu0 %v8977
    %9094 = vmatprep.subr.mxu0 0.0
    %9095 = vmatpush1.msra.mxu0 %v8978
    %9096 = vmatprep.subr.mxu0 0.0
    %9097 = vmatpush1.msra.mxu0 %v8979
    %9098 = vmatprep.subr.mxu0 0.0
    %9099 = vmatpush1.msra.mxu0 0.0
    %9100 = vmatprep.subr.mxu0 0.0
    %9101 = vmatpush1.msra.mxu0 0.0
    %9102 = vmatprep.subr.mxu0 0.0
    %9103 = vmatpush1.msra.mxu0 0.0
    %9104 = vmatprep.subr.mxu0 0.0
    %9105 = vmatpush1.msra.mxu0 0.0
    %9106 = vmatprep.subr.mxu0 0.0
    %9107 = vmatpush1.msra.mxu0 0.0
    %9108 = vmatprep.subr.mxu0 0.0
    %9109 = vmatpush1.msra.mxu0 0.0
    %9110 = vmatprep.subr.mxu0 0.0
    %9111 = vmatpush1.msra.mxu0 0.0
    %9112 = vmatprep.subr.mxu0 0.0
    %9113 = vmatpush1.msra.mxu0 0.0
    %9114 = vmatprep.subr.mxu0 0.0
    %9115 = vmatpush1.msra.mxu0 0.0
    %9116 = vmatprep.subr.mxu0 0.0
    %9117 = vmatpush1.msra.mxu0 0.0
    %9118 = vmatprep.subr.mxu0 0.0
    %9119 = vmatpush1.msra.mxu0 0.0
    %9120 = vmatprep.subr.mxu0 0.0
    %9121 = vmatpush1.msra.mxu0 0.0
    %9122 = vmatprep.subr.mxu0 0.0
    %9123 = vmatpush1.msra.mxu0 0.0
    %9124 = vmatprep.subr.mxu0 0.0
    %9125 = vmatpush1.msra.mxu0 0.0
    %9126 = vmatprep.subr.mxu0 0.0
    %9127 = vmatpush1.msra.mxu0 0.0
    %9128 = vmatprep.subr.mxu0 0.0
    %9129 = vmatpush1.msra.mxu0 0.0
    %9130 = vmatprep.mubr.f32.mxu0 0.0
    %9131 = vmatmul.mubr.f32.gmra.mrb[0].mxu0 %v8992
    %v9132 = vpop.f32.mrb[0].mxu0
    %v9133 = vadd.f32 %v9063, %v9132
    %v9134 = vpop.f32.mrb[0].mxu0
    %9135 = vdwg.mxu0
    %v9136 = vadd.f32 %v8929, %v9133
    %s9137 = scalar_lea.vmem [#allocation2], 37
    %v9138 = vld [vmem:[%s9137] ss:$8 sm:$0x7]
    %v9139 = vld [vmem:[%s8 + $0x780] sm:$0xff]
    %v9140 = vld [vmem:[%s8 + $0x788] sm:$0xff]
    %v9141 = vld [vmem:[%s8 + $0x790] sm:$0xff]
    %v9142 = vld [vmem:[%s8 + $0x798] sm:$0xff]
    %v9143 = vld [vmem:[%s8 + $0x7a0] sm:$0xff]
    %v9144 = vld [vmem:[%s8 + $0x7a8] sm:$0xff]
    %v9145 = vld [vmem:[%s8 + $0x7b0] sm:$0xff]
    %v9146 = vld [vmem:[%s8 + $0x7b8] sm:$0xff]
    %v9147 = vld [vmem:[%s8 + $0x7c0] sm:$0xff]
    %v9148 = vld [vmem:[%s8 + $0x7c8] sm:$0xff]
    %v9149 = vld [vmem:[%s8 + $0x7d0] sm:$0xff]
    %v9150 = vld [vmem:[%s8 + $0x7d8] sm:$0xff]
    %v9151 = vld [vmem:[%s8 + $0x7e0] sm:$0xff]
    %v9152 = vld [vmem:[%s8 + $0x7e8] sm:$0xff]
    %v9153 = vld [vmem:[%s8 + $0x7f0] sm:$0xff]
    %v9154 = vld [vmem:[%s8 + $0x7f8] sm:$0xff]
    %v9155 = vld [vmem:[%s8 + $0x800] sm:$0xff]
    %v9156 = vld [vmem:[%s8 + $0x808] sm:$0xff]
    %v9157 = vld [vmem:[%s8 + $0x810] sm:$0xff]
    %v9158 = vld [vmem:[%s8 + $0x818] sm:$0xff]
    %v9159 = vld [vmem:[%s8 + $0x820] sm:$0xff]
    %v9160 = vld [vmem:[%s8 + $0x828] sm:$0xff]
    %v9161 = vld [vmem:[%s8 + $0x830] sm:$0xff]
    %v9162 = vld [vmem:[%s8 + $0x838] sm:$0xff]
    %v9163 = vld [vmem:[%s8 + $0x840] sm:$0xff]
    %v9164 = vld [vmem:[%s8 + $0x848] sm:$0xff]
    %v9165 = vld [vmem:[%s8 + $0x850] sm:$0xff]
    %v9166 = vld [vmem:[%s8 + $0x858] sm:$0xff]
    %v9167 = vld [vmem:[%s8 + $0x860] sm:$0xff]
    %v9168 = vld [vmem:[%s8 + $0x868] sm:$0xff]
    %v9169 = vld [vmem:[%s8 + $0x870] sm:$0xff]
    %v9170 = vld [vmem:[%s8 + $0x878] sm:$0xff]
    %v9171 = vld [vmem:[%s8 + $0x880] sm:$0xff]
    %v9172 = vld [vmem:[%s8 + $0x888] sm:$0xff]
    %v9173 = vld [vmem:[%s8 + $0x890] sm:$0xff]
    %v9174 = vld [vmem:[%s8 + $0x898] sm:$0xff]
    %v9175 = vld [vmem:[%s8 + $0x8a0] sm:$0xff]
    %v9176 = vld [vmem:[%s8 + $0x8a8] sm:$0xff]
    %v9177 = vld [vmem:[%s8 + $0x8b0] sm:$0xff]
    %v9178 = vld [vmem:[%s8 + $0x8b8] sm:$0xff]
    %v9179 = vld [vmem:[%s8 + $0x8c0] sm:$0xff]
    %v9180 = vld [vmem:[%s8 + $0x8c8] sm:$0xff]
    %v9181 = vld [vmem:[%s8 + $0x8d0] sm:$0xff]
    %v9182 = vld [vmem:[%s8 + $0x8d8] sm:$0xff]
    %v9183 = vld [vmem:[%s8 + $0x8e0] sm:$0xff]
    %v9184 = vld [vmem:[%s8 + $0x8e8] sm:$0xff]
    %v9185 = vld [vmem:[%s8 + $0x8f0] sm:$0xff]
    %v9186 = vld [vmem:[%s8 + $0x8f8] sm:$0xff]
    %v9188 = vlaneseq
    %v9189 = vshrl.u32 %v9188, 7
    %v9190 = vsub.s32 0, %v9189
    %v9191 = vrot.slane %v9138, %v9190
    %v9192 = vlaneseq
    %v9193 = vshrl.u32 %v9192, 7
    %v9194 = vsub.s32 1, %v9193
    %v9195 = vrot.slane %v9138, %v9194
    %v9196 = vlaneseq
    %v9197 = vshrl.u32 %v9196, 7
    %v9198 = vsub.s32 2, %v9197
    %v9199 = vrot.slane %v9138, %v9198
    %9203 = vmatprep.subr.mxu0 0.0
    %9204 = vmatpush1.msra.mxu0 %v9139
    %9205 = vmatprep.subr.mxu0 0.0
    %9206 = vmatpush1.msra.mxu0 %v9140
    %9207 = vmatprep.subr.mxu0 0.0
    %9208 = vmatpush1.msra.mxu0 %v9141
    %9209 = vmatprep.subr.mxu0 0.0
    %9210 = vmatpush1.msra.mxu0 %v9142
    %9211 = vmatprep.subr.mxu0 0.0
    %9212 = vmatpush1.msra.mxu0 %v9143
    %9213 = vmatprep.subr.mxu0 0.0
    %9214 = vmatpush1.msra.mxu0 %v9144
    %9215 = vmatprep.subr.mxu0 0.0
    %9216 = vmatpush1.msra.mxu0 %v9145
    %9217 = vmatprep.subr.mxu0 0.0
    %9218 = vmatpush1.msra.mxu0 %v9146
    %9219 = vmatprep.subr.mxu0 0.0
    %9220 = vmatpush1.msra.mxu0 %v9147
    %9221 = vmatprep.subr.mxu0 0.0
    %9222 = vmatpush1.msra.mxu0 %v9148
    %9223 = vmatprep.subr.mxu0 0.0
    %9224 = vmatpush1.msra.mxu0 %v9149
    %9225 = vmatprep.subr.mxu0 0.0
    %9226 = vmatpush1.msra.mxu0 %v9150
    %9227 = vmatprep.subr.mxu0 0.0
    %9228 = vmatpush1.msra.mxu0 %v9151
    %9229 = vmatprep.subr.mxu0 0.0
    %9230 = vmatpush1.msra.mxu0 %v9152
    %9231 = vmatprep.subr.mxu0 0.0
    %9232 = vmatpush1.msra.mxu0 %v9153
    %9233 = vmatprep.subr.mxu0 0.0
    %9234 = vmatpush1.msra.mxu0 %v9154
    %9235 = vmatprep.subr.mxu0 0.0
    %9236 = vmatpush1.msra.mxu0 %v9155
    %9237 = vmatprep.subr.mxu0 0.0
    %9238 = vmatpush1.msra.mxu0 %v9156
    %9239 = vmatprep.subr.mxu0 0.0
    %9240 = vmatpush1.msra.mxu0 %v9157
    %9241 = vmatprep.subr.mxu0 0.0
    %9242 = vmatpush1.msra.mxu0 %v9158
    %9243 = vmatprep.subr.mxu0 0.0
    %9244 = vmatpush1.msra.mxu0 %v9159
    %9245 = vmatprep.subr.mxu0 0.0
    %9246 = vmatpush1.msra.mxu0 %v9160
    %9247 = vmatprep.subr.mxu0 0.0
    %9248 = vmatpush1.msra.mxu0 %v9161
    %9249 = vmatprep.subr.mxu0 0.0
    %9250 = vmatpush1.msra.mxu0 %v9162
    %9251 = vmatprep.subr.mxu0 0.0
    %9252 = vmatpush1.msra.mxu0 %v9163
    %9253 = vmatprep.subr.mxu0 0.0
    %9254 = vmatpush1.msra.mxu0 %v9164
    %9255 = vmatprep.subr.mxu0 0.0
    %9256 = vmatpush1.msra.mxu0 %v9165
    %9257 = vmatprep.subr.mxu0 0.0
    %9258 = vmatpush1.msra.mxu0 %v9166
    %9259 = vmatprep.subr.mxu0 0.0
    %9260 = vmatpush1.msra.mxu0 %v9167
    %9261 = vmatprep.subr.mxu0 0.0
    %9262 = vmatpush1.msra.mxu0 %v9168
    %9263 = vmatprep.subr.mxu0 0.0
    %9264 = vmatpush1.msra.mxu0 %v9169
    %9265 = vmatprep.subr.mxu0 0.0
    %9266 = vmatpush1.msra.mxu0 %v9170
    %9267 = vmatprep.mubr.f32.mxu0 %v9195
    %9268 = vmatmul.mubr.f32.gmra.mrb[0].mxu0 %v9191
    %v9269 = vpop.f32.mrb[0].mxu0
    %v9270 = vadd.f32 0.0, %v9269
    %v9271 = vpop.f32.mrb[0].mxu0
    %9272 = vdwg.mxu0
    %9273 = vmatprep.subr.mxu0 0.0
    %9274 = vmatpush1.msra.mxu0 %v9171
    %9275 = vmatprep.subr.mxu0 0.0
    %9276 = vmatpush1.msra.mxu0 %v9172
    %9277 = vmatprep.subr.mxu0 0.0
    %9278 = vmatpush1.msra.mxu0 %v9173
    %9279 = vmatprep.subr.mxu0 0.0
    %9280 = vmatpush1.msra.mxu0 %v9174
    %9281 = vmatprep.subr.mxu0 0.0
    %9282 = vmatpush1.msra.mxu0 %v9175
    %9283 = vmatprep.subr.mxu0 0.0
    %9284 = vmatpush1.msra.mxu0 %v9176
    %9285 = vmatprep.subr.mxu0 0.0
    %9286 = vmatpush1.msra.mxu0 %v9177
    %9287 = vmatprep.subr.mxu0 0.0
    %9288 = vmatpush1.msra.mxu0 %v9178
    %9289 = vmatprep.subr.mxu0 0.0
    %9290 = vmatpush1.msra.mxu0 %v9179
    %9291 = vmatprep.subr.mxu0 0.0
    %9292 = vmatpush1.msra.mxu0 %v9180
    %9293 = vmatprep.subr.mxu0 0.0
    %9294 = vmatpush1.msra.mxu0 %v9181
    %9295 = vmatprep.subr.mxu0 0.0
    %9296 = vmatpush1.msra.mxu0 %v9182
    %9297 = vmatprep.subr.mxu0 0.0
    %9298 = vmatpush1.msra.mxu0 %v9183
    %9299 = vmatprep.subr.mxu0 0.0
    %9300 = vmatpush1.msra.mxu0 %v9184
    %9301 = vmatprep.subr.mxu0 0.0
    %9302 = vmatpush1.msra.mxu0 %v9185
    %9303 = vmatprep.subr.mxu0 0.0
    %9304 = vmatpush1.msra.mxu0 %v9186
    %9305 = vmatprep.subr.mxu0 0.0
    %9306 = vmatpush1.msra.mxu0 0.0
    %9307 = vmatprep.subr.mxu0 0.0
    %9308 = vmatpush1.msra.mxu0 0.0
    %9309 = vmatprep.subr.mxu0 0.0
    %9310 = vmatpush1.msra.mxu0 0.0
    %9311 = vmatprep.subr.mxu0 0.0
    %9312 = vmatpush1.msra.mxu0 0.0
    %9313 = vmatprep.subr.mxu0 0.0
    %9314 = vmatpush1.msra.mxu0 0.0
    %9315 = vmatprep.subr.mxu0 0.0
    %9316 = vmatpush1.msra.mxu0 0.0
    %9317 = vmatprep.subr.mxu0 0.0
    %9318 = vmatpush1.msra.mxu0 0.0
    %9319 = vmatprep.subr.mxu0 0.0
    %9320 = vmatpush1.msra.mxu0 0.0
    %9321 = vmatprep.subr.mxu0 0.0
    %9322 = vmatpush1.msra.mxu0 0.0
    %9323 = vmatprep.subr.mxu0 0.0
    %9324 = vmatpush1.msra.mxu0 0.0
    %9325 = vmatprep.subr.mxu0 0.0
    %9326 = vmatpush1.msra.mxu0 0.0
    %9327 = vmatprep.subr.mxu0 0.0
    %9328 = vmatpush1.msra.mxu0 0.0
    %9329 = vmatprep.subr.mxu0 0.0
    %9330 = vmatpush1.msra.mxu0 0.0
    %9331 = vmatprep.subr.mxu0 0.0
    %9332 = vmatpush1.msra.mxu0 0.0
    %9333 = vmatprep.subr.mxu0 0.0
    %9334 = vmatpush1.msra.mxu0 0.0
    %9335 = vmatprep.subr.mxu0 0.0
    %9336 = vmatpush1.msra.mxu0 0.0
    %9337 = vmatprep.mubr.f32.mxu0 0.0
    %9338 = vmatmul.mubr.f32.gmra.mrb[0].mxu0 %v9199
    %v9339 = vpop.f32.mrb[0].mxu0
    %v9340 = vadd.f32 %v9270, %v9339
    %v9341 = vpop.f32.mrb[0].mxu0
    %9342 = vdwg.mxu0
    %v9343 = vadd.f32 %v9136, %v9340
    %s9344 = scalar_lea.vmem [#allocation2], 38
    %v9345 = vld [vmem:[%s9344] ss:$8 sm:$0x7]
    %v9346 = vld [vmem:[%s8 + $0x900] sm:$0xff]
    %v9347 = vld [vmem:[%s8 + $0x908] sm:$0xff]
    %v9348 = vld [vmem:[%s8 + $0x910] sm:$0xff]
    %v9349 = vld [vmem:[%s8 + $0x918] sm:$0xff]
    %v9350 = vld [vmem:[%s8 + $0x920] sm:$0xff]
    %v9351 = vld [vmem:[%s8 + $0x928] sm:$0xff]
    %v9352 = vld [vmem:[%s8 + $0x930] sm:$0xff]
    %v9353 = vld [vmem:[%s8 + $0x938] sm:$0xff]
    %v9354 = vld [vmem:[%s8 + $0x940] sm:$0xff]
    %v9355 = vld [vmem:[%s8 + $0x948] sm:$0xff]
    %v9356 = vld [vmem:[%s8 + $0x950] sm:$0xff]
    %v9357 = vld [vmem:[%s8 + $0x958] sm:$0xff]
    %v9358 = vld [vmem:[%s8 + $0x960] sm:$0xff]
    %v9359 = vld [vmem:[%s8 + $0x968] sm:$0xff]
    %v9360 = vld [vmem:[%s8 + $0x970] sm:$0xff]
    %v9361 = vld [vmem:[%s8 + $0x978] sm:$0xff]
    %v9362 = vld [vmem:[%s8 + $0x980] sm:$0xff]
    %v9363 = vld [vmem:[%s8 + $0x988] sm:$0xff]
    %v9364 = vld [vmem:[%s8 + $0x990] sm:$0xff]
    %v9365 = vld [vmem:[%s8 + $0x998] sm:$0xff]
    %v9366 = vld [vmem:[%s8 + $0x9a0] sm:$0xff]
    %v9367 = vld [vmem:[%s8 + $0x9a8] sm:$0xff]
    %v9368 = vld [vmem:[%s8 + $0x9b0] sm:$0xff]
    %v9369 = vld [vmem:[%s8 + $0x9b8] sm:$0xff]
    %v9370 = vld [vmem:[%s8 + $0x9c0] sm:$0xff]
    %v9371 = vld [vmem:[%s8 + $0x9c8] sm:$0xff]
    %v9372 = vld [vmem:[%s8 + $0x9d0] sm:$0xff]
    %v9373 = vld [vmem:[%s8 + $0x9d8] sm:$0xff]
    %v9374 = vld [vmem:[%s8 + $0x9e0] sm:$0xff]
    %v9375 = vld [vmem:[%s8 + $0x9e8] sm:$0xff]
    %v9376 = vld [vmem:[%s8 + $0x9f0] sm:$0xff]
    %v9377 = vld [vmem:[%s8 + $0x9f8] sm:$0xff]
    %v9378 = vld [vmem:[%s8 + $0xa00] sm:$0xff]
    %v9379 = vld [vmem:[%s8 + $0xa08] sm:$0xff]
    %v9380 = vld [vmem:[%s8 + $0xa10] sm:$0xff]
    %v9381 = vld [vmem:[%s8 + $0xa18] sm:$0xff]
    %v9382 = vld [vmem:[%s8 + $0xa20] sm:$0xff]
    %v9383 = vld [vmem:[%s8 + $0xa28] sm:$0xff]
    %v9384 = vld [vmem:[%s8 + $0xa30] sm:$0xff]
    %v9385 = vld [vmem:[%s8 + $0xa38] sm:$0xff]
    %v9386 = vld [vmem:[%s8 + $0xa40] sm:$0xff]
    %v9387 = vld [vmem:[%s8 + $0xa48] sm:$0xff]
    %v9388 = vld [vmem:[%s8 + $0xa50] sm:$0xff]
    %v9389 = vld [vmem:[%s8 + $0xa58] sm:$0xff]
    %v9390 = vld [vmem:[%s8 + $0xa60] sm:$0xff]
    %v9391 = vld [vmem:[%s8 + $0xa68] sm:$0xff]
    %v9392 = vld [vmem:[%s8 + $0xa70] sm:$0xff]
    %v9393 = vld [vmem:[%s8 + $0xa78] sm:$0xff]
    %v9395 = vlaneseq
    %v9396 = vshrl.u32 %v9395, 7
    %v9397 = vsub.s32 0, %v9396
    %v9398 = vrot.slane %v9345, %v9397
    %v9399 = vlaneseq
    %v9400 = vshrl.u32 %v9399, 7
    %v9401 = vsub.s32 1, %v9400
    %v9402 = vrot.slane %v9345, %v9401
    %v9403 = vlaneseq
    %v9404 = vshrl.u32 %v9403, 7
    %v9405 = vsub.s32 2, %v9404
    %v9406 = vrot.slane %v9345, %v9405
    %9410 = vmatprep.subr.mxu0 0.0
    %9411 = vmatpush1.msra.mxu0 %v9346
    %9412 = vmatprep.subr.mxu0 0.0
    %9413 = vmatpush1.msra.mxu0 %v9347
    %9414 = vmatprep.subr.mxu0 0.0
    %9415 = vmatpush1.msra.mxu0 %v9348
    %9416 = vmatprep.subr.mxu0 0.0
    %9417 = vmatpush1.msra.mxu0 %v9349
    %9418 = vmatprep.subr.mxu0 0.0
    %9419 = vmatpush1.msra.mxu0 %v9350
    %9420 = vmatprep.subr.mxu0 0.0
    %9421 = vmatpush1.msra.mxu0 %v9351
    %9422 = vmatprep.subr.mxu0 0.0
    %9423 = vmatpush1.msra.mxu0 %v9352
    %9424 = vmatprep.subr.mxu0 0.0
    %9425 = vmatpush1.msra.mxu0 %v9353
    %9426 = vmatprep.subr.mxu0 0.0
    %9427 = vmatpush1.msra.mxu0 %v9354
    %9428 = vmatprep.subr.mxu0 0.0
    %9429 = vmatpush1.msra.mxu0 %v9355
    %9430 = vmatprep.subr.mxu0 0.0
    %9431 = vmatpush1.msra.mxu0 %v9356
    %9432 = vmatprep.subr.mxu0 0.0
    %9433 = vmatpush1.msra.mxu0 %v9357
    %9434 = vmatprep.subr.mxu0 0.0
    %9435 = vmatpush1.msra.mxu0 %v9358
    %9436 = vmatprep.subr.mxu0 0.0
    %9437 = vmatpush1.msra.mxu0 %v9359
    %9438 = vmatprep.subr.mxu0 0.0
    %9439 = vmatpush1.msra.mxu0 %v9360
    %9440 = vmatprep.subr.mxu0 0.0
    %9441 = vmatpush1.msra.mxu0 %v9361
    %9442 = vmatprep.subr.mxu0 0.0
    %9443 = vmatpush1.msra.mxu0 %v9362
    %9444 = vmatprep.subr.mxu0 0.0
    %9445 = vmatpush1.msra.mxu0 %v9363
    %9446 = vmatprep.subr.mxu0 0.0
    %9447 = vmatpush1.msra.mxu0 %v9364
    %9448 = vmatprep.subr.mxu0 0.0
    %9449 = vmatpush1.msra.mxu0 %v9365
    %9450 = vmatprep.subr.mxu0 0.0
    %9451 = vmatpush1.msra.mxu0 %v9366
    %9452 = vmatprep.subr.mxu0 0.0
    %9453 = vmatpush1.msra.mxu0 %v9367
    %9454 = vmatprep.subr.mxu0 0.0
    %9455 = vmatpush1.msra.mxu0 %v9368
    %9456 = vmatprep.subr.mxu0 0.0
    %9457 = vmatpush1.msra.mxu0 %v9369
    %9458 = vmatprep.subr.mxu0 0.0
    %9459 = vmatpush1.msra.mxu0 %v9370
    %9460 = vmatprep.subr.mxu0 0.0
    %9461 = vmatpush1.msra.mxu0 %v9371
    %9462 = vmatprep.subr.mxu0 0.0
    %9463 = vmatpush1.msra.mxu0 %v9372
    %9464 = vmatprep.subr.mxu0 0.0
    %9465 = vmatpush1.msra.mxu0 %v9373
    %9466 = vmatprep.subr.mxu0 0.0
    %9467 = vmatpush1.msra.mxu0 %v9374
    %9468 = vmatprep.subr.mxu0 0.0
    %9469 = vmatpush1.msra.mxu0 %v9375
    %9470 = vmatprep.subr.mxu0 0.0
    %9471 = vmatpush1.msra.mxu0 %v9376
    %9472 = vmatprep.subr.mxu0 0.0
    %9473 = vmatpush1.msra.mxu0 %v9377
    %9474 = vmatprep.mubr.f32.mxu0 %v9402
    %9475 = vmatmul.mubr.f32.gmra.mrb[0].mxu0 %v9398
    %v9476 = vpop.f32.mrb[0].mxu0
    %v9477 = vadd.f32 0.0, %v9476
    %v9478 = vpop.f32.mrb[0].mxu0
    %9479 = vdwg.mxu0
    %9480 = vmatprep.subr.mxu0 0.0
    %9481 = vmatpush1.msra.mxu0 %v9378
    %9482 = vmatprep.subr.mxu0 0.0
    %9483 = vmatpush1.msra.mxu0 %v9379
    %9484 = vmatprep.subr.mxu0 0.0
    %9485 = vmatpush1.msra.mxu0 %v9380
    %9486 = vmatprep.subr.mxu0 0.0
    %9487 = vmatpush1.msra.mxu0 %v9381
    %9488 = vmatprep.subr.mxu0 0.0
    %9489 = vmatpush1.msra.mxu0 %v9382
    %9490 = vmatprep.subr.mxu0 0.0
    %9491 = vmatpush1.msra.mxu0 %v9383
    %9492 = vmatprep.subr.mxu0 0.0
    %9493 = vmatpush1.msra.mxu0 %v9384
    %9494 = vmatprep.subr.mxu0 0.0
    %9495 = vmatpush1.msra.mxu0 %v9385
    %9496 = vmatprep.subr.mxu0 0.0
    %9497 = vmatpush1.msra.mxu0 %v9386
    %9498 = vmatprep.subr.mxu0 0.0
    %9499 = vmatpush1.msra.mxu0 %v9387
    %9500 = vmatprep.subr.mxu0 0.0
    %9501 = vmatpush1.msra.mxu0 %v9388
    %9502 = vmatprep.subr.mxu0 0.0
    %9503 = vmatpush1.msra.mxu0 %v9389
    %9504 = vmatprep.subr.mxu0 0.0
    %9505 = vmatpush1.msra.mxu0 %v9390
    %9506 = vmatprep.subr.mxu0 0.0
    %9507 = vmatpush1.msra.mxu0 %v9391
    %9508 = vmatprep.subr.mxu0 0.0
    %9509 = vmatpush1.msra.mxu0 %v9392
    %9510 = vmatprep.subr.mxu0 0.0
    %9511 = vmatpush1.msra.mxu0 %v9393
    %9512 = vmatprep.subr.mxu0 0.0
    %9513 = vmatpush1.msra.mxu0 0.0
    %9514 = vmatprep.subr.mxu0 0.0
    %9515 = vmatpush1.msra.mxu0 0.0
    %9516 = vmatprep.subr.mxu0 0.0
    %9517 = vmatpush1.msra.mxu0 0.0
    %9518 = vmatprep.subr.mxu0 0.0
    %9519 = vmatpush1.msra.mxu0 0.0
    %9520 = vmatprep.subr.mxu0 0.0
    %9521 = vmatpush1.msra.mxu0 0.0
    %9522 = vmatprep.subr.mxu0 0.0
    %9523 = vmatpush1.msra.mxu0 0.0
    %9524 = vmatprep.subr.mxu0 0.0
    %9525 = vmatpush1.msra.mxu0 0.0
    %9526 = vmatprep.subr.mxu0 0.0
    %9527 = vmatpush1.msra.mxu0 0.0
    %9528 = vmatprep.subr.mxu0 0.0
    %9529 = vmatpush1.msra.mxu0 0.0
    %9530 = vmatprep.subr.mxu0 0.0
    %9531 = vmatpush1.msra.mxu0 0.0
    %9532 = vmatprep.subr.mxu0 0.0
    %9533 = vmatpush1.msra.mxu0 0.0
    %9534 = vmatprep.subr.mxu0 0.0
    %9535 = vmatpush1.msra.mxu0 0.0
    %9536 = vmatprep.subr.mxu0 0.0
    %9537 = vmatpush1.msra.mxu0 0.0
    %9538 = vmatprep.subr.mxu0 0.0
    %9539 = vmatpush1.msra.mxu0 0.0
    %9540 = vmatprep.subr.mxu0 0.0
    %9541 = vmatpush1.msra.mxu0 0.0
    %9542 = vmatprep.subr.mxu0 0.0
    %9543 = vmatpush1.msra.mxu0 0.0
    %9544 = vmatprep.mubr.f32.mxu0 0.0
    %9545 = vmatmul.mubr.f32.gmra.mrb[0].mxu0 %v9406
    %v9546 = vpop.f32.mrb[0].mxu0
    %v9547 = vadd.f32 %v9477, %v9546
    %v9548 = vpop.f32.mrb[0].mxu0
    %9549 = vdwg.mxu0
    %v9550 = vadd.f32 %v9343, %v9547
    %s9551 = scalar_lea.vmem [#allocation2], 39
    %v9552 = vld [vmem:[%s9551] ss:$8 sm:$0x7]
    %v9553 = vld [vmem:[%s8 + $0xa80] sm:$0xff]
    %v9554 = vld [vmem:[%s8 + $0xa88] sm:$0xff]
    %v9555 = vld [vmem:[%s8 + $0xa90] sm:$0xff]
    %v9556 = vld [vmem:[%s8 + $0xa98] sm:$0xff]
    %v9557 = vld [vmem:[%s8 + $0xaa0] sm:$0xff]
    %v9558 = vld [vmem:[%s8 + $0xaa8] sm:$0xff]
    %v9559 = vld [vmem:[%s8 + $0xab0] sm:$0xff]
    %v9560 = vld [vmem:[%s8 + $0xab8] sm:$0xff]
    %v9561 = vld [vmem:[%s8 + $0xac0] sm:$0xff]
    %v9562 = vld [vmem:[%s8 + $0xac8] sm:$0xff]
    %v9563 = vld [vmem:[%s8 + $0xad0] sm:$0xff]
    %v9564 = vld [vmem:[%s8 + $0xad8] sm:$0xff]
    %v9565 = vld [vmem:[%s8 + $0xae0] sm:$0xff]
    %v9566 = vld [vmem:[%s8 + $0xae8] sm:$0xff]
    %v9567 = vld [vmem:[%s8 + $0xaf0] sm:$0xff]
    %v9568 = vld [vmem:[%s8 + $0xaf8] sm:$0xff]
    %v9569 = vld [vmem:[%s8 + $0xb00] sm:$0xff]
    %v9570 = vld [vmem:[%s8 + $0xb08] sm:$0xff]
    %v9571 = vld [vmem:[%s8 + $0xb10] sm:$0xff]
    %v9572 = vld [vmem:[%s8 + $0xb18] sm:$0xff]
    %v9573 = vld [vmem:[%s8 + $0xb20] sm:$0xff]
    %v9574 = vld [vmem:[%s8 + $0xb28] sm:$0xff]
    %v9575 = vld [vmem:[%s8 + $0xb30] sm:$0xff]
    %v9576 = vld [vmem:[%s8 + $0xb38] sm:$0xff]
    %v9577 = vld [vmem:[%s8 + $0xb40] sm:$0xff]
    %v9578 = vld [vmem:[%s8 + $0xb48] sm:$0xff]
    %v9579 = vld [vmem:[%s8 + $0xb50] sm:$0xff]
    %v9580 = vld [vmem:[%s8 + $0xb58] sm:$0xff]
    %v9581 = vld [vmem:[%s8 + $0xb60] sm:$0xff]
    %v9582 = vld [vmem:[%s8 + $0xb68] sm:$0xff]
    %v9583 = vld [vmem:[%s8 + $0xb70] sm:$0xff]
    %v9584 = vld [vmem:[%s8 + $0xb78] sm:$0xff]
    %v9585 = vld [vmem:[%s8 + $0xb80] sm:$0xff]
    %v9586 = vld [vmem:[%s8 + $0xb88] sm:$0xff]
    %v9587 = vld [vmem:[%s8 + $0xb90] sm:$0xff]
    %v9588 = vld [vmem:[%s8 + $0xb98] sm:$0xff]
    %v9589 = vld [vmem:[%s8 + $0xba0] sm:$0xff]
    %v9590 = vld [vmem:[%s8 + $0xba8] sm:$0xff]
    %v9591 = vld [vmem:[%s8 + $0xbb0] sm:$0xff]
    %v9592 = vld [vmem:[%s8 + $0xbb8] sm:$0xff]
    %v9593 = vld [vmem:[%s8 + $0xbc0] sm:$0xff]
    %v9594 = vld [vmem:[%s8 + $0xbc8] sm:$0xff]
    %v9595 = vld [vmem:[%s8 + $0xbd0] sm:$0xff]
    %v9596 = vld [vmem:[%s8 + $0xbd8] sm:$0xff]
    %v9597 = vld [vmem:[%s8 + $0xbe0] sm:$0xff]
    %v9598 = vld [vmem:[%s8 + $0xbe8] sm:$0xff]
    %v9599 = vld [vmem:[%s8 + $0xbf0] sm:$0xff]
    %v9600 = vld [vmem:[%s8 + $0xbf8] sm:$0xff]
    %v9602 = vlaneseq
    %v9603 = vshrl.u32 %v9602, 7
    %v9604 = vsub.s32 0, %v9603
    %v9605 = vrot.slane %v9552, %v9604
    %v9606 = vlaneseq
    %v9607 = vshrl.u32 %v9606, 7
    %v9608 = vsub.s32 1, %v9607
    %v9609 = vrot.slane %v9552, %v9608
    %v9610 = vlaneseq
    %v9611 = vshrl.u32 %v9610, 7
    %v9612 = vsub.s32 2, %v9611
    %v9613 = vrot.slane %v9552, %v9612
    %9617 = vmatprep.subr.mxu0 0.0
    %9618 = vmatpush1.msra.mxu0 %v9553
    %9619 = vmatprep.subr.mxu0 0.0
    %9620 = vmatpush1.msra.mxu0 %v9554
    %9621 = vmatprep.subr.mxu0 0.0
    %9622 = vmatpush1.msra.mxu0 %v9555
    %9623 = vmatprep.subr.mxu0 0.0
    %9624 = vmatpush1.msra.mxu0 %v9556
    %9625 = vmatprep.subr.mxu0 0.0
    %9626 = vmatpush1.msra.mxu0 %v9557
    %9627 = vmatprep.subr.mxu0 0.0
    %9628 = vmatpush1.msra.mxu0 %v9558
    %9629 = vmatprep.subr.mxu0 0.0
    %9630 = vmatpush1.msra.mxu0 %v9559
    %9631 = vmatprep.subr.mxu0 0.0
    %9632 = vmatpush1.msra.mxu0 %v9560
    %9633 = vmatprep.subr.mxu0 0.0
    %9634 = vmatpush1.msra.mxu0 %v9561
    %9635 = vmatprep.subr.mxu0 0.0
    %9636 = vmatpush1.msra.mxu0 %v9562
    %9637 = vmatprep.subr.mxu0 0.0
    %9638 = vmatpush1.msra.mxu0 %v9563
    %9639 = vmatprep.subr.mxu0 0.0
    %9640 = vmatpush1.msra.mxu0 %v9564
    %9641 = vmatprep.subr.mxu0 0.0
    %9642 = vmatpush1.msra.mxu0 %v9565
    %9643 = vmatprep.subr.mxu0 0.0
    %9644 = vmatpush1.msra.mxu0 %v9566
    %9645 = vmatprep.subr.mxu0 0.0
    %9646 = vmatpush1.msra.mxu0 %v9567
    %9647 = vmatprep.subr.mxu0 0.0
    %9648 = vmatpush1.msra.mxu0 %v9568
    %9649 = vmatprep.subr.mxu0 0.0
    %9650 = vmatpush1.msra.mxu0 %v9569
    %9651 = vmatprep.subr.mxu0 0.0
    %9652 = vmatpush1.msra.mxu0 %v9570
    %9653 = vmatprep.subr.mxu0 0.0
    %9654 = vmatpush1.msra.mxu0 %v9571
    %9655 = vmatprep.subr.mxu0 0.0
    %9656 = vmatpush1.msra.mxu0 %v9572
    %9657 = vmatprep.subr.mxu0 0.0
    %9658 = vmatpush1.msra.mxu0 %v9573
    %9659 = vmatprep.subr.mxu0 0.0
    %9660 = vmatpush1.msra.mxu0 %v9574
    %9661 = vmatprep.subr.mxu0 0.0
    %9662 = vmatpush1.msra.mxu0 %v9575
    %9663 = vmatprep.subr.mxu0 0.0
    %9664 = vmatpush1.msra.mxu0 %v9576
    %9665 = vmatprep.subr.mxu0 0.0
    %9666 = vmatpush1.msra.mxu0 %v9577
    %9667 = vmatprep.subr.mxu0 0.0
    %9668 = vmatpush1.msra.mxu0 %v9578
    %9669 = vmatprep.subr.mxu0 0.0
    %9670 = vmatpush1.msra.mxu0 %v9579
    %9671 = vmatprep.subr.mxu0 0.0
    %9672 = vmatpush1.msra.mxu0 %v9580
    %9673 = vmatprep.subr.mxu0 0.0
    %9674 = vmatpush1.msra.mxu0 %v9581
    %9675 = vmatprep.subr.mxu0 0.0
    %9676 = vmatpush1.msra.mxu0 %v9582
    %9677 = vmatprep.subr.mxu0 0.0
    %9678 = vmatpush1.msra.mxu0 %v9583
    %9679 = vmatprep.subr.mxu0 0.0
    %9680 = vmatpush1.msra.mxu0 %v9584
    %9681 = vmatprep.mubr.f32.mxu0 %v9609
    %9682 = vmatmul.mubr.f32.gmra.mrb[0].mxu0 %v9605
    %v9683 = vpop.f32.mrb[0].mxu0
    %v9684 = vadd.f32 0.0, %v9683
    %v9685 = vpop.f32.mrb[0].mxu0
    %9686 = vdwg.mxu0
    %9687 = vmatprep.subr.mxu0 0.0
    %9688 = vmatpush1.msra.mxu0 %v9585
    %9689 = vmatprep.subr.mxu0 0.0
    %9690 = vmatpush1.msra.mxu0 %v9586
    %9691 = vmatprep.subr.mxu0 0.0
    %9692 = vmatpush1.msra.mxu0 %v9587
    %9693 = vmatprep.subr.mxu0 0.0
    %9694 = vmatpush1.msra.mxu0 %v9588
    %9695 = vmatprep.subr.mxu0 0.0
    %9696 = vmatpush1.msra.mxu0 %v9589
    %9697 = vmatprep.subr.mxu0 0.0
    %9698 = vmatpush1.msra.mxu0 %v9590
    %9699 = vmatprep.subr.mxu0 0.0
    %9700 = vmatpush1.msra.mxu0 %v9591
    %9701 = vmatprep.subr.mxu0 0.0
    %9702 = vmatpush1.msra.mxu0 %v9592
    %9703 = vmatprep.subr.mxu0 0.0
    %9704 = vmatpush1.msra.mxu0 %v9593
    %9705 = vmatprep.subr.mxu0 0.0
    %9706 = vmatpush1.msra.mxu0 %v9594
    %9707 = vmatprep.subr.mxu0 0.0
    %9708 = vmatpush1.msra.mxu0 %v9595
    %9709 = vmatprep.subr.mxu0 0.0
    %9710 = vmatpush1.msra.mxu0 %v9596
    %9711 = vmatprep.subr.mxu0 0.0
    %9712 = vmatpush1.msra.mxu0 %v9597
    %9713 = vmatprep.subr.mxu0 0.0
    %9714 = vmatpush1.msra.mxu0 %v9598
    %9715 = vmatprep.subr.mxu0 0.0
    %9716 = vmatpush1.msra.mxu0 %v9599
    %9717 = vmatprep.subr.mxu0 0.0
    %9718 = vmatpush1.msra.mxu0 %v9600
    %9719 = vmatprep.subr.mxu0 0.0
    %9720 = vmatpush1.msra.mxu0 0.0
    %9721 = vmatprep.subr.mxu0 0.0
    %9722 = vmatpush1.msra.mxu0 0.0
    %9723 = vmatprep.subr.mxu0 0.0
    %9724 = vmatpush1.msra.mxu0 0.0
    %9725 = vmatprep.subr.mxu0 0.0
    %9726 = vmatpush1.msra.mxu0 0.0
    %9727 = vmatprep.subr.mxu0 0.0
    %9728 = vmatpush1.msra.mxu0 0.0
    %9729 = vmatprep.subr.mxu0 0.0
    %9730 = vmatpush1.msra.mxu0 0.0
    %9731 = vmatprep.subr.mxu0 0.0
    %9732 = vmatpush1.msra.mxu0 0.0
    %9733 = vmatprep.subr.mxu0 0.0
    %9734 = vmatpush1.msra.mxu0 0.0
    %9735 = vmatprep.subr.mxu0 0.0
    %9736 = vmatpush1.msra.mxu0 0.0
    %9737 = vmatprep.subr.mxu0 0.0
    %9738 = vmatpush1.msra.mxu0 0.0
    %9739 = vmatprep.subr.mxu0 0.0
    %9740 = vmatpush1.msra.mxu0 0.0
    %9741 = vmatprep.subr.mxu0 0.0
    %9742 = vmatpush1.msra.mxu0 0.0
    %9743 = vmatprep.subr.mxu0 0.0
    %9744 = vmatpush1.msra.mxu0 0.0
    %9745 = vmatprep.subr.mxu0 0.0
    %9746 = vmatpush1.msra.mxu0 0.0
    %9747 = vmatprep.subr.mxu0 0.0
    %9748 = vmatpush1.msra.mxu0 0.0
    %9749 = vmatprep.subr.mxu0 0.0
    %9750 = vmatpush1.msra.mxu0 0.0
    %9751 = vmatprep.mubr.f32.mxu0 0.0
    %9752 = vmatmul.mubr.f32.gmra.mrb[0].mxu0 %v9613
    %v9753 = vpop.f32.mrb[0].mxu0
    %v9754 = vadd.f32 %v9684, %v9753
    %v9755 = vpop.f32.mrb[0].mxu0
    %9756 = vdwg.mxu0
    %v9757 = vadd.f32 %v9550, %v9754
    %v9758 = vmax.f32 %v9757, 0.0
    %v9760 = vsel %vm8026, %v9758, 0
    %9762 = vmatprep.subr.mxu0 0.0
    %9763 = vmatpush1.msra.mxu0 %v6365
    %9764 = vmatprep.subr.mxu0 0.0
    %9765 = vmatpush1.msra.mxu0 %v6366
    %9766 = vmatprep.subr.mxu0 0.0
    %9767 = vmatpush1.msra.mxu0 %v6367
    %9768 = vmatprep.subr.mxu0 0.0
    %9769 = vmatpush1.msra.mxu0 %v6368
    %9770 = vmatprep.subr.mxu0 0.0
    %9771 = vmatpush1.msra.mxu0 0.0
    %9772 = vmatprep.subr.mxu0 0.0
    %9773 = vmatpush1.msra.mxu0 0.0
    %9774 = vmatprep.subr.mxu0 0.0
    %9775 = vmatpush1.msra.mxu0 0.0
    %9776 = vmatprep.subr.mxu0 0.0
    %9777 = vmatpush1.msra.mxu0 0.0
    %9778 = vmatprep.subr.mxu0 0.0
    %9779 = vmatpush1.msra.mxu0 0.0
    %9780 = vmatprep.subr.mxu0 0.0
    %9781 = vmatpush1.msra.mxu0 0.0
    %9782 = vmatprep.subr.mxu0 0.0
    %9783 = vmatpush1.msra.mxu0 0.0
    %9784 = vmatprep.subr.mxu0 0.0
    %9785 = vmatpush1.msra.mxu0 0.0
    %9786 = vmatprep.subr.mxu0 0.0
    %9787 = vmatpush1.msra.mxu0 0.0
    %9788 = vmatprep.subr.mxu0 0.0
    %9789 = vmatpush1.msra.mxu0 0.0
    %9790 = vmatprep.subr.mxu0 0.0
    %9791 = vmatpush1.msra.mxu0 0.0
    %9792 = vmatprep.subr.mxu0 0.0
    %9793 = vmatpush1.msra.mxu0 0.0
    %9794 = vmatprep.subr.mxu0 0.0
    %9795 = vmatpush1.msra.mxu0 0.0
    %9796 = vmatprep.subr.mxu0 0.0
    %9797 = vmatpush1.msra.mxu0 0.0
    %9798 = vmatprep.subr.mxu0 0.0
    %9799 = vmatpush1.msra.mxu0 0.0
    %9800 = vmatprep.subr.mxu0 0.0
    %9801 = vmatpush1.msra.mxu0 0.0
    %9802 = vmatprep.subr.mxu0 0.0
    %9803 = vmatpush1.msra.mxu0 0.0
    %9804 = vmatprep.subr.mxu0 0.0
    %9805 = vmatpush1.msra.mxu0 0.0
    %9806 = vmatprep.subr.mxu0 0.0
    %9807 = vmatpush1.msra.mxu0 0.0
    %9808 = vmatprep.subr.mxu0 0.0
    %9809 = vmatpush1.msra.mxu0 0.0
    %9810 = vmatprep.subr.mxu0 0.0
    %9811 = vmatpush1.msra.mxu0 0.0
    %9812 = vmatprep.subr.mxu0 0.0
    %9813 = vmatpush1.msra.mxu0 0.0
    %9814 = vmatprep.subr.mxu0 0.0
    %9815 = vmatpush1.msra.mxu0 0.0
    %9816 = vmatprep.subr.mxu0 0.0
    %9817 = vmatpush1.msra.mxu0 0.0
    %9818 = vmatprep.subr.mxu0 0.0
    %9819 = vmatpush1.msra.mxu0 0.0
    %9820 = vmatprep.subr.mxu0 0.0
    %9821 = vmatpush1.msra.mxu0 0.0
    %9822 = vmatprep.subr.mxu0 0.0
    %9823 = vmatpush1.msra.mxu0 0.0
    %9824 = vmatprep.subr.mxu0 0.0
    %9825 = vmatpush1.msra.mxu0 0.0
    %9826 = vmatprep.mubr.f32.mxu0 0.0
    %9827 = vmatmul.mubr.f32.gmra.mrb[0].mxu0 %v9760
    %v9828 = vpop.f32.mrb[0].mxu0
    %v9829 = vadd.f32 %v6364, %v9828
    %v9830 = vpop.f32.mrb[0].mxu0
    %9831 = vdwg.mxu0
    %9832 = vst.msk [vmem:[#allocation6 + $0x1] sm:$0x1] %vm8100, %v9829
    // Predicated region
    $region50: #{image_classifier_forward.1} parent=1 // pred_check
      _
    $region51: #{image_classifier_forward.1} parent=1 // pred_check_branch
      %9834 = sbr.rel (0) target = $region53
    $region52: #{image_classifier_forward.1} parent=1 // pred_region
      %s9836 = ssub.s32 32, 32
      %9837 = vsyncadd [#allocation7], %s9836
      %s9839 = sshll.u32 [#allocation6], 4
      %s9840 = int_to_ptr.vmem [resolvable:$true] %s9839
      %9842 = dma.vmem_to_hbm [thread:$0]  %s9840, 32, %s12, [#allocation7]
    $region53: #{image_classifier_forward.1} parent=1 // pred_fallthru
      _
    // Predicated region
    $region54: #{image_classifier_forward.1} parent=1 // pred_check
      _
    $region55: #{image_classifier_forward.1} parent=1 // pred_check_branch
      %9844 = sbr.rel (0) target = $region57
    $region56: #{image_classifier_forward.1} parent=1 // pred_region
      %9845 = dma.done [#allocation7], 32
    $region57: #{image_classifier_forward.1} parent=1 // pred_fallthru
      _
    %9846 = vsyncpa [#allocation7], 1

</llo_original>
